<compile_context>
chip_gen: v7x
topology: tpu7x:2x2x1
jax: 0.10.0
libtpu: 0.0.40
codegen_flags: <defaults>
</compile_context>

<pallas_src>
import functools
import math

import jax
import jax.numpy as jnp
from jax import lax
from jax.experimental import pallas as pl
from jax.experimental.pallas import tpu as pltpu


# ------------------------------- kernel ------------------------------------

def _vit_kernel(patch_ref, in_w_ref, in_b_ref, cls_ref, pos_ref,
                hg_ref, hb_ref, hw_ref, hbias_ref,
                lng_ref, lnb_ref, wqkv_ref, bqkv_ref, wo_ref, bo_ref,
                w1_ref, b1_ref, w2_ref, b2_ref,
                o_ref, tok_ref, *, num_heads):
    """Grid axis = transformer layer index (sequential).

    Step 0 additionally performs the patch embedding; the last step
    additionally performs the classification head.  Tokens [B, S, D] stay
    resident in VMEM scratch for the whole call.
    """
    l = pl.program_id(0)
    B, S, D = tok_ref.shape
    dh = D // num_heads

    # ---- layer 0 only: patch-embed linear + cls token + pos embedding ----
    @pl.when(l == 0)
    def _embed():
        tok = lax.dot_general(
            patch_ref[...], in_w_ref[...], (((2,), (0,)), ((), ())),
            preferred_element_type=jnp.float32) + in_b_ref[...]        # [B,T,D]
        cls_row = cls_ref[...] + pos_ref[0:1, :]                       # [1,D]
        tok_ref[:, 0:1, :] = jnp.broadcast_to(cls_row, (B, 1, D))
        tok_ref[:, 1:, :] = tok + pos_ref[1:, :]

    # ------------------------- transformer block l -------------------------
    x = tok_ref[...]                                                   # [B,S,D]

    # hoisted broadcasts (layer_norm is used twice; JAX does not CSE these)
    gamma = jnp.broadcast_to(lng_ref[...], (B, S, D))
    beta = jnp.broadcast_to(lnb_ref[...], (B, S, D))

    def layer_norm(t):
        mu = jnp.mean(t, axis=-1, keepdims=True)
        var = jnp.mean(jnp.square(t - mu), axis=-1, keepdims=True)
        return (t - mu) * lax.rsqrt(var + 1e-5) * gamma + beta

    # LN -> packed QKV projection (scale already folded into Q weights/bias)
    inp = layer_norm(x)
    qkv = lax.dot_general(inp, wqkv_ref[...], (((2,), (0,)), ((), ())),
                          preferred_element_type=jnp.float32) + bqkv_ref[...]
    q = qkv[:, :, 0:D]
    k = qkv[:, :, D:2 * D]
    v = qkv[:, :, 2 * D:3 * D]

    # per-head attention (static unroll, batched over B), heads packed along
    # lanes, then ONE out-projection matmul with bias + residual folded in.
    heads = []
    for h in range(num_heads):
        lo, hi = h * dh, (h + 1) * dh
        s = lax.dot_general(q[:, :, lo:hi], k[:, :, lo:hi],
                            (((2,), (2,)), ((0,), (0,))),
                            preferred_element_type=jnp.float32)        # [B,S,S]
        s = s - jnp.max(s, axis=-1, keepdims=True)
        p = jnp.exp(s)
        p = p * pl.reciprocal(jnp.sum(p, axis=-1, keepdims=True), approx=True)
        heads.append(lax.dot_general(p, v[:, :, lo:hi],
                                     (((2,), (1,)), ((0,), (0,))),
                                     preferred_element_type=jnp.float32))
    attn = jnp.concatenate(heads, axis=-1)                             # [B,S,D]

    acc = x + bo_ref[...] + lax.dot_general(
        attn, wo_ref[...], (((2,), (0,)), ((), ())),
        preferred_element_type=jnp.float32)

    # LN -> MLP (erf-GELU).  Residual from the POST-LN tensor (reference!).
    x2 = layer_norm(acc)
    h1 = lax.dot_general(x2, w1_ref[...], (((2,), (0,)), ((), ())),
                         preferred_element_type=jnp.float32) + b1_ref[...]
    h1 = 0.5 * h1 * (1.0 + lax.erf(h1 * (1.0 / math.sqrt(2.0))))
    out = x2 + lax.dot_general(h1, w2_ref[...], (((2,), (0,)), ((), ())),
                               preferred_element_type=jnp.float32) + b2_ref[...]
    tok_ref[...] = out

    # ---- last layer only: mlp_head = LayerNorm(cls) @ W + b ----
    @pl.when(l == pl.num_programs(0) - 1)
    def _head():
        cls_tok = out[:, 0:1, :]                                       # [B,1,D]
        mu = jnp.mean(cls_tok, axis=-1, keepdims=True)
        var = jnp.mean(jnp.square(cls_tok - mu), axis=-1, keepdims=True)
        xn = (cls_tok - mu) * lax.rsqrt(var + 1e-5) * hg_ref[...] + hb_ref[...]
        o_ref[...] = lax.dot_general(
            xn, hw_ref[...], (((2,), (0,)), ((), ())),
            preferred_element_type=jnp.float32) + hbias_ref[...]       # [B,1,nC]


# ------------------------------ wrapper -------------------------------------

def vit_forward_pallas(params, patches, num_heads):
    """patches: [B, T, Fin]  ->  logits [B, num_classes] via one pallas_call."""
    B, T, Fin = patches.shape
    D = params["in_w"].shape[1]
    S = T + 1
    nC = params["head_w"].shape[1]
    L = len(params["layers"])
    Hd = params["layers"][0]["fc1_w"].shape[1]
    scale = 1.0 / math.sqrt(D // num_heads)

    # stack per-layer params along a leading L axis (streamed by BlockSpec)
    def stack(name):
        return jnp.stack([lp[name] for lp in params["layers"]], axis=0)

    # fold the attention scale into the Q columns of the packed projection
    wqkv = stack("in_proj_w").at[:, :, :D].multiply(scale)             # [L,D,3D]
    bqkv = stack("in_proj_b").at[:, :D].multiply(scale)[:, None, :]    # [L,1,3D]
    ln_g = stack("ln_g")[:, None, :]
    ln_b = stack("ln_b")[:, None, :]
    wo = stack("out_proj_w")
    bo = stack("out_proj_b")[:, None, :]
    w1 = stack("fc1_w")
    b1 = stack("fc1_b")[:, None, :]
    w2 = stack("fc2_w")
    b2 = stack("fc2_b")[:, None, :]

    cls = params["cls_token"].reshape(1, D)
    pos = params["pos_embedding"][0, :S]                               # [S,D]
    in_b = params["in_b"].reshape(1, D)
    head_g = params["head_ln_g"].reshape(1, D)
    head_bt = params["head_ln_b"].reshape(1, D)
    head_b = params["head_b"].reshape(1, nC)

    def const2(shape):
        return pl.BlockSpec(shape, lambda l: (0, 0))        # resident, 2-D

    def const3(shape):
        return pl.BlockSpec(shape, lambda l: (0, 0, 0))     # resident, 3-D

    def layer(shape):
        # leading L axis squeezed out of the kernel view; stream slab l
        return pl.BlockSpec((None,) + shape, lambda l: (l, 0, 0))

    out = pl.pallas_call(
        functools.partial(_vit_kernel, num_heads=num_heads),
        out_shape=jax.ShapeDtypeStruct((B, 1, nC), jnp.float32),
        grid=(L,),
        in_specs=[
            const3((B, T, Fin)),        # patches (resident)
            const2((Fin, D)),           # patch-embed weight
            const2((1, D)),             # patch-embed bias
            const2((1, D)),             # cls token
            const2((S, D)),             # positional embedding
            const2((1, D)),             # head LN gamma
            const2((1, D)),             # head LN beta
            const2((D, nC)),            # head weight
            const2((1, nC)),            # head bias
            layer((1, D)),              # block LN gamma
            layer((1, D)),              # block LN beta
            layer((D, 3 * D)),          # packed qkv weight (scale folded)
            layer((1, 3 * D)),          # packed qkv bias   (scale folded)
            layer((D, D)),              # out-proj weight
            layer((1, D)),              # out-proj bias
            layer((D, Hd)),             # fc1 weight
            layer((1, Hd)),             # fc1 bias
            layer((Hd, D)),             # fc2 weight
            layer((1, D)),              # fc2 bias
        ],
        out_specs=pl.BlockSpec((B, 1, nC), lambda l: (0, 0, 0)),
        scratch_shapes=[pltpu.VMEM((B, S, D), jnp.float32)],   # resident tokens
        compiler_params=pltpu.CompilerParams(
            dimension_semantics=("arbitrary",)),               # sequential layers
    )(patches, params["in_w"], in_b, cls, pos,
      head_g, head_bt, params["head_w"], head_b,
      ln_g, ln_b, wqkv, bqkv, wo, bo, w1, b1, w2, b2)
    return out.reshape(B, nC)


# ------------------------------ model glue ----------------------------------

def img_to_patch(x, patch_size):
    # x: [B, C, H, W] -> [B, T, C*p*p], same permute/flatten order as PyTorch.
    B, C, H, W = x.shape
    p = patch_size
    x = x.reshape(B, C, H // p, p, W // p, p)
    x = x.transpose(0, 2, 4, 1, 3, 5)                    # [B, Hp, Wp, C, p, p]
    return x.reshape(B, (H // p) * (W // p), C * p * p)


def vision_transformer_forward(params, x, cfg):
    patches = img_to_patch(x, cfg["patch_size"])         # [B, T, C*p*p]
    return vit_forward_pallas(patches=patches, params=params,
                              num_heads=cfg["num_heads"])


# ------------------------------ params init ---------------------------------

def init_params(key, cfg):
    D, Hd = cfg["embed_dim"], cfg["hidden_dim"]
    Fin = cfg["num_channels"] * cfg["patch_size"] ** 2
    nP, nC = cfg["num_patches"], cfg["num_classes"]

    def nxt():
        nonlocal key
        key, sub = jax.random.split(key)
        return sub

    def w(shape, scale=0.02):
        return (scale * jax.random.normal(nxt(), shape)).astype(jnp.float32)

    params = {
        "in_w": w((Fin, D)), "in_b": jnp.zeros((D,), jnp.float32),
        "cls_token": jax.random.uniform(nxt(), (1, 1, D), jnp.float32),
        "pos_embedding": jax.random.uniform(nxt(), (1, 1 + nP, D), jnp.float32),
        "head_ln_g": jnp.ones((D,), jnp.float32),
        "head_ln_b": jnp.zeros((D,), jnp.float32),
        "head_w": w((D, nC)), "head_b": jnp.zeros((nC,), jnp.float32),
        "layers": [],
    }
    for _ in range(cfg["num_layers"]):
        params["layers"].append({
            "ln_g": jnp.ones((D,), jnp.float32),
            "ln_b": jnp.zeros((D,), jnp.float32),
            "in_proj_w": w((D, 3 * D)),
            "in_proj_b": jnp.zeros((3 * D,), jnp.float32),
            "out_proj_w": w((D, D)),
            "out_proj_b": jnp.zeros((D,), jnp.float32),
            "fc1_w": w((D, Hd)), "fc1_b": jnp.zeros((Hd,), jnp.float32),
            "fc2_w": w((Hd, D)), "fc2_b": jnp.zeros((D,), jnp.float32),
        })
    return params


# --------------------------------- main --------------------------------------

if __name__ == "__main__":
    cfg = dict(
        embed_dim=32, hidden_dim=64, num_channels=4, num_heads=4,
        num_layers=2, num_classes=10, patch_size=4, num_patches=16,
        dropout=0.0,
    )
    key = jax.random.PRNGKey(0)
    pkey, xkey = jax.random.split(key)
    params = init_params(pkey, cfg)
    # input image: [B=2, C=4, H=16, W=16]  (NCHW, like PyTorch)
    x = jax.random.normal(xkey, (2, cfg["num_channels"], 16, 16), jnp.float32)

    fwd = jax.jit(functools.partial(vision_transformer_forward, cfg=cfg))
    out = fwd(params, x)
    jax.block_until_ready(out)
    assert out.shape == (2, cfg["num_classes"]), out.shape
    print("KERNEL_OK")
</pallas_src>

<mosaic_0001>
module attributes {stable_mosaic.version = 11 : i64} {
  func.func @_vit_kernel(%arg0: i32, %arg1: memref<2x16x64xf32, #tpu.memory_space<vmem>>, %arg2: memref<64x32xf32, #tpu.memory_space<vmem>>, %arg3: memref<1x32xf32, #tpu.memory_space<vmem>>, %arg4: memref<1x32xf32, #tpu.memory_space<vmem>>, %arg5: memref<17x32xf32, #tpu.memory_space<vmem>>, %arg6: memref<1x32xf32, #tpu.memory_space<vmem>>, %arg7: memref<1x32xf32, #tpu.memory_space<vmem>>, %arg8: memref<32x10xf32, #tpu.memory_space<vmem>>, %arg9: memref<1x10xf32, #tpu.memory_space<vmem>>, %arg10: memref<1x1x32xf32, #tpu.memory_space<vmem>>, %arg11: memref<1x1x32xf32, #tpu.memory_space<vmem>>, %arg12: memref<1x32x96xf32, #tpu.memory_space<vmem>>, %arg13: memref<1x1x96xf32, #tpu.memory_space<vmem>>, %arg14: memref<1x32x32xf32, #tpu.memory_space<vmem>>, %arg15: memref<1x1x32xf32, #tpu.memory_space<vmem>>, %arg16: memref<1x32x64xf32, #tpu.memory_space<vmem>>, %arg17: memref<1x1x64xf32, #tpu.memory_space<vmem>>, %arg18: memref<1x64x32xf32, #tpu.memory_space<vmem>>, %arg19: memref<1x1x32xf32, #tpu.memory_space<vmem>>, %arg20: memref<2x1x10xf32, #tpu.memory_space<vmem>>, %arg21: memref<2x17x32xf32, #tpu.memory_space<vmem>>) attributes {dimension_semantics = [#tpu.dimension_semantics<arbitrary>], iteration_bounds = array<i64: 2>, scalar_prefetch = 0 : i64, scratch_operands = 1 : i64, tpu.core_type = #tpu.core_type<tc>, window_params = [{pipeline_mode = #tpu.pipeline_mode<synchronous>, transform_indices = @transform_0, window_bounds = array<i64: 2, 16, 64>}, {pipeline_mode = #tpu.pipeline_mode<synchronous>, transform_indices = @transform_1, window_bounds = array<i64: 64, 32>}, {pipeline_mode = #tpu.pipeline_mode<synchronous>, transform_indices = @transform_2, window_bounds = array<i64: 1, 32>}, {pipeline_mode = #tpu.pipeline_mode<synchronous>, transform_indices = @transform_3, window_bounds = array<i64: 1, 32>}, {pipeline_mode = #tpu.pipeline_mode<synchronous>, transform_indices = @transform_4, window_bounds = array<i64: 17, 32>}, {pipeline_mode = #tpu.pipeline_mode<synchronous>, transform_indices = @transform_5, window_bounds = array<i64: 1, 32>}, {pipeline_mode = #tpu.pipeline_mode<synchronous>, transform_indices = @transform_6, window_bounds = array<i64: 1, 32>}, {pipeline_mode = #tpu.pipeline_mode<synchronous>, transform_indices = @transform_7, window_bounds = array<i64: 32, 10>}, {pipeline_mode = #tpu.pipeline_mode<synchronous>, transform_indices = @transform_8, window_bounds = array<i64: 1, 10>}, {transform_indices = @transform_9, window_bounds = array<i64: 1, 1, 32>}, {transform_indices = @transform_10, window_bounds = array<i64: 1, 1, 32>}, {transform_indices = @transform_11, window_bounds = array<i64: 1, 32, 96>}, {transform_indices = @transform_12, window_bounds = array<i64: 1, 1, 96>}, {transform_indices = @transform_13, window_bounds = array<i64: 1, 32, 32>}, {transform_indices = @transform_14, window_bounds = array<i64: 1, 1, 32>}, {transform_indices = @transform_15, window_bounds = array<i64: 1, 32, 64>}, {transform_indices = @transform_16, window_bounds = array<i64: 1, 1, 64>}, {transform_indices = @transform_17, window_bounds = array<i64: 1, 64, 32>}, {transform_indices = @transform_18, window_bounds = array<i64: 1, 1, 32>}, {pipeline_mode = #tpu.pipeline_mode<synchronous>, transform_indices = @transform_19, window_bounds = array<i64: 2, 1, 10>}]} {
    %c0_i32 = arith.constant 0 : i32
    %0 = arith.cmpi eq, %arg0, %c0_i32 : i32
    %1 = arith.extui %0 : i1 to i32
    %c0_i32_0 = arith.constant 0 : i32
    %2 = arith.cmpi ne, %1, %c0_i32_0 : i32
    scf.if %2 {
      %c0_69 = arith.constant 0 : index
      %c0_70 = arith.constant 0 : index
      %c0_71 = arith.constant 0 : index
      %162 = vector.load %arg1[%c0_69, %c0_70, %c0_71] : memref<2x16x64xf32, #tpu.memory_space<vmem>>, vector<2x16x64xf32>
      %c0_72 = arith.constant 0 : index
      %c0_73 = arith.constant 0 : index
      %163 = vector.load %arg2[%c0_72, %c0_73] : memref<64x32xf32, #tpu.memory_space<vmem>>, vector<64x32xf32>
      %cst_74 = arith.constant dense<0.000000e+00> : vector<2x16x32xf32>
      %164 = tpu.matmul %162, %163, %cst_74 {dimension_numbers = #tpu.dot_dimension_numbers<[2], [0], [0, 1], [1], [0, 0, 0, 1, 1, 1], [], []>} : vector<2x16x64xf32>, vector<64x32xf32>, vector<2x16x32xf32> -> vector<2x16x32xf32>
      %c0_75 = arith.constant 0 : index
      %c0_76 = arith.constant 0 : index
      %165 = vector.load %arg3[%c0_75, %c0_76] : memref<1x32xf32, #tpu.memory_space<vmem>>, vector<1x32xf32>
      %166 = vector.shape_cast %165 : vector<1x32xf32> to vector<1x1x32xf32>
      %167 = vector.broadcast %166 : vector<1x1x32xf32> to vector<2x16x32xf32>
      %168 = arith.addf %164, %167 : vector<2x16x32xf32>
      %c0_77 = arith.constant 0 : index
      %c0_78 = arith.constant 0 : index
      %169 = vector.load %arg4[%c0_77, %c0_78] : memref<1x32xf32, #tpu.memory_space<vmem>>, vector<1x32xf32>
      %c0_79 = arith.constant 0 : index
      %c0_80 = arith.constant 0 : index
      %170 = vector.load %arg5[%c0_79, %c0_80] : memref<17x32xf32, #tpu.memory_space<vmem>>, vector<1x32xf32>
      %171 = arith.addf %169, %170 : vector<1x32xf32>
      %172 = vector.shape_cast %171 : vector<1x32xf32> to vector<1x1x32xf32>
      %173 = vector.broadcast %172 : vector<1x1x32xf32> to vector<2x1x32xf32>
      %c0_81 = arith.constant 0 : index
      %c0_82 = arith.constant 0 : index
      %c0_83 = arith.constant 0 : index
      %174 = vector.load %arg21[%c0_81, %c0_82, %c0_83] : memref<2x17x32xf32, #tpu.memory_space<vmem>>, vector<2x1x32xf32>
      tpu.vector_store %arg21[%c0_81, %c0_82, %c0_83], %173 {strides = array<i32>} : memref<2x17x32xf32, #tpu.memory_space<vmem>>, vector<2x1x32xf32>,
      %c1 = arith.constant 1 : index
      %c0_84 = arith.constant 0 : index
      %175 = vector.load %arg5[%c1, %c0_84] : memref<17x32xf32, #tpu.memory_space<vmem>>, vector<16x32xf32>
      %176 = vector.shape_cast %175 : vector<16x32xf32> to vector<1x16x32xf32>
      %177 = vector.broadcast %176 : vector<1x16x32xf32> to vector<2x16x32xf32>
      %178 = arith.addf %168, %177 : vector<2x16x32xf32>
      %c0_85 = arith.constant 0 : index
      %c1_86 = arith.constant 1 : index
      %c0_87 = arith.constant 0 : index
      %179 = vector.load %arg21[%c0_85, %c1_86, %c0_87] : memref<2x17x32xf32, #tpu.memory_space<vmem>>, vector<2x16x32xf32>
      tpu.vector_store %arg21[%c0_85, %c1_86, %c0_87], %178 {strides = array<i32>} : memref<2x17x32xf32, #tpu.memory_space<vmem>>, vector<2x16x32xf32>,
    } else {
    }
    %c0 = arith.constant 0 : index
    %c0_1 = arith.constant 0 : index
    %c0_2 = arith.constant 0 : index
    %3 = vector.load %arg21[%c0, %c0_1, %c0_2] : memref<2x17x32xf32, #tpu.memory_space<vmem>>, vector<2x17x32xf32>
    %c0_3 = arith.constant 0 : index
    %c0_4 = arith.constant 0 : index
    %c0_5 = arith.constant 0 : index
    %4 = vector.load %arg10[%c0_3, %c0_4, %c0_5] : memref<1x1x32xf32, #tpu.memory_space<vmem>>, vector<1x1x32xf32>
    %5 = vector.shape_cast %4 : vector<1x1x32xf32> to vector<1x32xf32>
    %6 = vector.shape_cast %5 : vector<1x32xf32> to vector<1x1x32xf32>
    %7 = vector.broadcast %6 : vector<1x1x32xf32> to vector<2x17x32xf32>
    %c0_6 = arith.constant 0 : index
    %c0_7 = arith.constant 0 : index
    %c0_8 = arith.constant 0 : index
    %8 = vector.load %arg11[%c0_6, %c0_7, %c0_8] : memref<1x1x32xf32, #tpu.memory_space<vmem>>, vector<1x1x32xf32>
    %9 = vector.shape_cast %8 : vector<1x1x32xf32> to vector<1x32xf32>
    %10 = vector.shape_cast %9 : vector<1x32xf32> to vector<1x1x32xf32>
    %11 = vector.broadcast %10 : vector<1x1x32xf32> to vector<2x17x32xf32>
    %cst = arith.constant dense<0.000000e+00> : vector<2x17xf32>
    %12 = vector.multi_reduction <add>, %3, %cst [2] : vector<2x17x32xf32> to vector<2x17xf32>
    %13 = vector.shape_cast %12 : vector<2x17xf32> to vector<2x17x1xf32>
    %cst_9 = arith.constant 3.200000e+01 : f32
    %14 = vector.broadcast %cst_9 : f32 to vector<2x17x1xf32>
    %15 = arith.divf %13, %14 : vector<2x17x1xf32>
    %16 = vector.broadcast %15 : vector<2x17x1xf32> to vector<2x17x32xf32>
    %17 = arith.subf %3, %16 : vector<2x17x32xf32>
    %18 = arith.mulf %17, %17 : vector<2x17x32xf32>
    %cst_10 = arith.constant dense<0.000000e+00> : vector<2x17xf32>
    %19 = vector.multi_reduction <add>, %18, %cst_10 [2] : vector<2x17x32xf32> to vector<2x17xf32>
    %20 = vector.shape_cast %19 : vector<2x17xf32> to vector<2x17x1xf32>
    %cst_11 = arith.constant 3.200000e+01 : f32
    %21 = vector.broadcast %cst_11 : f32 to vector<2x17x1xf32>
    %22 = arith.divf %20, %21 : vector<2x17x1xf32>
    %23 = vector.broadcast %15 : vector<2x17x1xf32> to vector<2x17x32xf32>
    %24 = arith.subf %3, %23 : vector<2x17x32xf32>
    %cst_12 = arith.constant 9.99999974E-6 : f32
    %25 = vector.broadcast %cst_12 : f32 to vector<2x17x1xf32>
    %26 = arith.addf %22, %25 : vector<2x17x1xf32>
    %27 = math.rsqrt %26 : vector<2x17x1xf32>
    %28 = vector.broadcast %27 : vector<2x17x1xf32> to vector<2x17x32xf32>
    %29 = arith.mulf %24, %28 : vector<2x17x32xf32>
    %30 = arith.mulf %29, %7 : vector<2x17x32xf32>
    %31 = arith.addf %30, %11 : vector<2x17x32xf32>
    %c0_13 = arith.constant 0 : index
    %c0_14 = arith.constant 0 : index
    %c0_15 = arith.constant 0 : index
    %32 = vector.load %arg12[%c0_13, %c0_14, %c0_15] : memref<1x32x96xf32, #tpu.memory_space<vmem>>, vector<1x32x96xf32>
    %33 = vector.shape_cast %32 : vector<1x32x96xf32> to vector<32x96xf32>
    %cst_16 = arith.constant dense<0.000000e+00> : vector<2x17x96xf32>
    %34 = tpu.matmul %31, %33, %cst_16 {dimension_numbers = #tpu.dot_dimension_numbers<[2], [0], [0, 1], [1], [0, 0, 0, 1, 1, 1], [], []>} : vector<2x17x32xf32>, vector<32x96xf32>, vector<2x17x96xf32> -> vector<2x17x96xf32>
    %c0_17 = arith.constant 0 : index
    %c0_18 = arith.constant 0 : index
    %c0_19 = arith.constant 0 : index
    %35 = vector.load %arg13[%c0_17, %c0_18, %c0_19] : memref<1x1x96xf32, #tpu.memory_space<vmem>>, vector<1x1x96xf32>
    %36 = vector.shape_cast %35 : vector<1x1x96xf32> to vector<1x96xf32>
    %37 = vector.shape_cast %36 : vector<1x96xf32> to vector<1x1x96xf32>
    %38 = vector.broadcast %37 : vector<1x1x96xf32> to vector<2x17x96xf32>
    %39 = arith.addf %34, %38 : vector<2x17x96xf32>
    %40 = vector.extract_strided_slice %39 {offsets = [0, 0, 0], sizes = [2, 17, 32], strides = [1, 1, 1]} : vector<2x17x96xf32> to vector<2x17x32xf32>
    %41 = vector.extract_strided_slice %39 {offsets = [0, 0, 32], sizes = [2, 17, 32], strides = [1, 1, 1]} : vector<2x17x96xf32> to vector<2x17x32xf32>
    %42 = vector.extract_strided_slice %39 {offsets = [0, 0, 64], sizes = [2, 17, 32], strides = [1, 1, 1]} : vector<2x17x96xf32> to vector<2x17x32xf32>
    %43 = vector.extract_strided_slice %40 {offsets = [0, 0, 0], sizes = [2, 17, 8], strides = [1, 1, 1]} : vector<2x17x32xf32> to vector<2x17x8xf32>
    %44 = vector.extract_strided_slice %41 {offsets = [0, 0, 0], sizes = [2, 17, 8], strides = [1, 1, 1]} : vector<2x17x32xf32> to vector<2x17x8xf32>
    %cst_20 = arith.constant dense<0.000000e+00> : vector<2x17x17xf32>
    %45 = tpu.matmul %43, %44, %cst_20 {dimension_numbers = #tpu.dot_dimension_numbers<[2], [2], [1], [1], [0, 0, 0, 1, 1, 1], [0], [0]>} : vector<2x17x8xf32>, vector<2x17x8xf32>, vector<2x17x17xf32> -> vector<2x17x17xf32>
    %cst_21 = arith.constant dense<0xFF800000> : vector<2x17xf32>
    %46 = vector.multi_reduction <maximumf>, %45, %cst_21 [2] : vector<2x17x17xf32> to vector<2x17xf32>
    %47 = vector.shape_cast %46 : vector<2x17xf32> to vector<2x17x1xf32>
    %48 = vector.broadcast %47 : vector<2x17x1xf32> to vector<2x17x17xf32>
    %49 = arith.subf %45, %48 : vector<2x17x17xf32>
    %50 = math.exp %49 : vector<2x17x17xf32>
    %cst_22 = arith.constant dense<0.000000e+00> : vector<2x17xf32>
    %51 = vector.multi_reduction <add>, %50, %cst_22 [2] : vector<2x17x17xf32> to vector<2x17xf32>
    %52 = vector.shape_cast %51 : vector<2x17xf32> to vector<2x17x1xf32>
    %53 = tpu.reciprocal %52 {approx = true} : vector<2x17x1xf32> -> vector<2x17x1xf32>
    %54 = vector.broadcast %53 : vector<2x17x1xf32> to vector<2x17x17xf32>
    %55 = arith.mulf %50, %54 : vector<2x17x17xf32>
    %56 = vector.extract_strided_slice %42 {offsets = [0, 0, 0], sizes = [2, 17, 8], strides = [1, 1, 1]} : vector<2x17x32xf32> to vector<2x17x8xf32>
    %cst_23 = arith.constant dense<0.000000e+00> : vector<2x17x8xf32>
    %57 = tpu.matmul %55, %56, %cst_23 {dimension_numbers = #tpu.dot_dimension_numbers<[2], [1], [1], [2], [0, 0, 0, 1, 1, 2], [0], [0]>} : vector<2x17x17xf32>, vector<2x17x8xf32>, vector<2x17x8xf32> -> vector<2x17x8xf32>
    %58 = vector.extract_strided_slice %40 {offsets = [0, 0, 8], sizes = [2, 17, 8], strides = [1, 1, 1]} : vector<2x17x32xf32> to vector<2x17x8xf32>
    %59 = vector.extract_strided_slice %41 {offsets = [0, 0, 8], sizes = [2, 17, 8], strides = [1, 1, 1]} : vector<2x17x32xf32> to vector<2x17x8xf32>
    %cst_24 = arith.constant dense<0.000000e+00> : vector<2x17x17xf32>
    %60 = tpu.matmul %58, %59, %cst_24 {dimension_numbers = #tpu.dot_dimension_numbers<[2], [2], [1], [1], [0, 0, 0, 1, 1, 1], [0], [0]>} : vector<2x17x8xf32>, vector<2x17x8xf32>, vector<2x17x17xf32> -> vector<2x17x17xf32>
    %cst_25 = arith.constant dense<0xFF800000> : vector<2x17xf32>
    %61 = vector.multi_reduction <maximumf>, %60, %cst_25 [2] : vector<2x17x17xf32> to vector<2x17xf32>
    %62 = vector.shape_cast %61 : vector<2x17xf32> to vector<2x17x1xf32>
    %63 = vector.broadcast %62 : vector<2x17x1xf32> to vector<2x17x17xf32>
    %64 = arith.subf %60, %63 : vector<2x17x17xf32>
    %65 = math.exp %64 : vector<2x17x17xf32>
    %cst_26 = arith.constant dense<0.000000e+00> : vector<2x17xf32>
    %66 = vector.multi_reduction <add>, %65, %cst_26 [2] : vector<2x17x17xf32> to vector<2x17xf32>
    %67 = vector.shape_cast %66 : vector<2x17xf32> to vector<2x17x1xf32>
    %68 = tpu.reciprocal %67 {approx = true} : vector<2x17x1xf32> -> vector<2x17x1xf32>
    %69 = vector.broadcast %68 : vector<2x17x1xf32> to vector<2x17x17xf32>
    %70 = arith.mulf %65, %69 : vector<2x17x17xf32>
    %71 = vector.extract_strided_slice %42 {offsets = [0, 0, 8], sizes = [2, 17, 8], strides = [1, 1, 1]} : vector<2x17x32xf32> to vector<2x17x8xf32>
    %cst_27 = arith.constant dense<0.000000e+00> : vector<2x17x8xf32>
    %72 = tpu.matmul %70, %71, %cst_27 {dimension_numbers = #tpu.dot_dimension_numbers<[2], [1], [1], [2], [0, 0, 0, 1, 1, 2], [0], [0]>} : vector<2x17x17xf32>, vector<2x17x8xf32>, vector<2x17x8xf32> -> vector<2x17x8xf32>
    %73 = vector.extract_strided_slice %40 {offsets = [0, 0, 16], sizes = [2, 17, 8], strides = [1, 1, 1]} : vector<2x17x32xf32> to vector<2x17x8xf32>
    %74 = vector.extract_strided_slice %41 {offsets = [0, 0, 16], sizes = [2, 17, 8], strides = [1, 1, 1]} : vector<2x17x32xf32> to vector<2x17x8xf32>
    %cst_28 = arith.constant dense<0.000000e+00> : vector<2x17x17xf32>
    %75 = tpu.matmul %73, %74, %cst_28 {dimension_numbers = #tpu.dot_dimension_numbers<[2], [2], [1], [1], [0, 0, 0, 1, 1, 1], [0], [0]>} : vector<2x17x8xf32>, vector<2x17x8xf32>, vector<2x17x17xf32> -> vector<2x17x17xf32>
    %cst_29 = arith.constant dense<0xFF800000> : vector<2x17xf32>
    %76 = vector.multi_reduction <maximumf>, %75, %cst_29 [2] : vector<2x17x17xf32> to vector<2x17xf32>
    %77 = vector.shape_cast %76 : vector<2x17xf32> to vector<2x17x1xf32>
    %78 = vector.broadcast %77 : vector<2x17x1xf32> to vector<2x17x17xf32>
    %79 = arith.subf %75, %78 : vector<2x17x17xf32>
    %80 = math.exp %79 : vector<2x17x17xf32>
    %cst_30 = arith.constant dense<0.000000e+00> : vector<2x17xf32>
    %81 = vector.multi_reduction <add>, %80, %cst_30 [2] : vector<2x17x17xf32> to vector<2x17xf32>
    %82 = vector.shape_cast %81 : vector<2x17xf32> to vector<2x17x1xf32>
    %83 = tpu.reciprocal %82 {approx = true} : vector<2x17x1xf32> -> vector<2x17x1xf32>
    %84 = vector.broadcast %83 : vector<2x17x1xf32> to vector<2x17x17xf32>
    %85 = arith.mulf %80, %84 : vector<2x17x17xf32>
    %86 = vector.extract_strided_slice %42 {offsets = [0, 0, 16], sizes = [2, 17, 8], strides = [1, 1, 1]} : vector<2x17x32xf32> to vector<2x17x8xf32>
    %cst_31 = arith.constant dense<0.000000e+00> : vector<2x17x8xf32>
    %87 = tpu.matmul %85, %86, %cst_31 {dimension_numbers = #tpu.dot_dimension_numbers<[2], [1], [1], [2], [0, 0, 0, 1, 1, 2], [0], [0]>} : vector<2x17x17xf32>, vector<2x17x8xf32>, vector<2x17x8xf32> -> vector<2x17x8xf32>
    %88 = vector.extract_strided_slice %40 {offsets = [0, 0, 24], sizes = [2, 17, 8], strides = [1, 1, 1]} : vector<2x17x32xf32> to vector<2x17x8xf32>
    %89 = vector.extract_strided_slice %41 {offsets = [0, 0, 24], sizes = [2, 17, 8], strides = [1, 1, 1]} : vector<2x17x32xf32> to vector<2x17x8xf32>
    %cst_32 = arith.constant dense<0.000000e+00> : vector<2x17x17xf32>
    %90 = tpu.matmul %88, %89, %cst_32 {dimension_numbers = #tpu.dot_dimension_numbers<[2], [2], [1], [1], [0, 0, 0, 1, 1, 1], [0], [0]>} : vector<2x17x8xf32>, vector<2x17x8xf32>, vector<2x17x17xf32> -> vector<2x17x17xf32>
    %cst_33 = arith.constant dense<0xFF800000> : vector<2x17xf32>
    %91 = vector.multi_reduction <maximumf>, %90, %cst_33 [2] : vector<2x17x17xf32> to vector<2x17xf32>
    %92 = vector.shape_cast %91 : vector<2x17xf32> to vector<2x17x1xf32>
    %93 = vector.broadcast %92 : vector<2x17x1xf32> to vector<2x17x17xf32>
    %94 = arith.subf %90, %93 : vector<2x17x17xf32>
    %95 = math.exp %94 : vector<2x17x17xf32>
    %cst_34 = arith.constant dense<0.000000e+00> : vector<2x17xf32>
    %96 = vector.multi_reduction <add>, %95, %cst_34 [2] : vector<2x17x17xf32> to vector<2x17xf32>
    %97 = vector.shape_cast %96 : vector<2x17xf32> to vector<2x17x1xf32>
    %98 = tpu.reciprocal %97 {approx = true} : vector<2x17x1xf32> -> vector<2x17x1xf32>
    %99 = vector.broadcast %98 : vector<2x17x1xf32> to vector<2x17x17xf32>
    %100 = arith.mulf %95, %99 : vector<2x17x17xf32>
    %101 = vector.extract_strided_slice %42 {offsets = [0, 0, 24], sizes = [2, 17, 8], strides = [1, 1, 1]} : vector<2x17x32xf32> to vector<2x17x8xf32>
    %cst_35 = arith.constant dense<0.000000e+00> : vector<2x17x8xf32>
    %102 = tpu.matmul %100, %101, %cst_35 {dimension_numbers = #tpu.dot_dimension_numbers<[2], [1], [1], [2], [0, 0, 0, 1, 1, 2], [0], [0]>} : vector<2x17x17xf32>, vector<2x17x8xf32>, vector<2x17x8xf32> -> vector<2x17x8xf32>
    %103 = tpu.concatenate %57, %72, %87, %102 in 2 : vector<2x17x8xf32>, vector<2x17x8xf32>, vector<2x17x8xf32>, vector<2x17x8xf32> -> vector<2x17x32xf32>
    %c0_36 = arith.constant 0 : index
    %c0_37 = arith.constant 0 : index
    %c0_38 = arith.constant 0 : index
    %104 = vector.load %arg15[%c0_36, %c0_37, %c0_38] : memref<1x1x32xf32, #tpu.memory_space<vmem>>, vector<1x1x32xf32>
    %105 = vector.shape_cast %104 : vector<1x1x32xf32> to vector<1x32xf32>
    %106 = vector.shape_cast %105 : vector<1x32xf32> to vector<1x1x32xf32>
    %107 = vector.broadcast %106 : vector<1x1x32xf32> to vector<2x17x32xf32>
    %108 = arith.addf %3, %107 : vector<2x17x32xf32>
    %c0_39 = arith.constant 0 : index
    %c0_40 = arith.constant 0 : index
    %c0_41 = arith.constant 0 : index
    %109 = vector.load %arg14[%c0_39, %c0_40, %c0_41] : memref<1x32x32xf32, #tpu.memory_space<vmem>>, vector<1x32x32xf32>
    %110 = vector.shape_cast %109 : vector<1x32x32xf32> to vector<32x32xf32>
    %cst_42 = arith.constant dense<0.000000e+00> : vector<2x17x32xf32>
    %111 = tpu.matmul %103, %110, %cst_42 {dimension_numbers = #tpu.dot_dimension_numbers<[2], [0], [0, 1], [1], [0, 0, 0, 1, 1, 1], [], []>} : vector<2x17x32xf32>, vector<32x32xf32>, vector<2x17x32xf32> -> vector<2x17x32xf32>
    %112 = arith.addf %108, %111 : vector<2x17x32xf32>
    %cst_43 = arith.constant dense<0.000000e+00> : vector<2x17xf32>
    %113 = vector.multi_reduction <add>, %112, %cst_43 [2] : vector<2x17x32xf32> to vector<2x17xf32>
    %114 = vector.shape_cast %113 : vector<2x17xf32> to vector<2x17x1xf32>
    %cst_44 = arith.constant 3.200000e+01 : f32
    %115 = vector.broadcast %cst_44 : f32 to vector<2x17x1xf32>
    %116 = arith.divf %114, %115 : vector<2x17x1xf32>
    %117 = vector.broadcast %116 : vector<2x17x1xf32> to vector<2x17x32xf32>
    %118 = arith.subf %112, %117 : vector<2x17x32xf32>
    %119 = arith.mulf %118, %118 : vector<2x17x32xf32>
    %cst_45 = arith.constant dense<0.000000e+00> : vector<2x17xf32>
    %120 = vector.multi_reduction <add>, %119, %cst_45 [2] : vector<2x17x32xf32> to vector<2x17xf32>
    %121 = vector.shape_cast %120 : vector<2x17xf32> to vector<2x17x1xf32>
    %cst_46 = arith.constant 3.200000e+01 : f32
    %122 = vector.broadcast %cst_46 : f32 to vector<2x17x1xf32>
    %123 = arith.divf %121, %122 : vector<2x17x1xf32>
    %124 = vector.broadcast %116 : vector<2x17x1xf32> to vector<2x17x32xf32>
    %125 = arith.subf %112, %124 : vector<2x17x32xf32>
    %cst_47 = arith.constant 9.99999974E-6 : f32
    %126 = vector.broadcast %cst_47 : f32 to vector<2x17x1xf32>
    %127 = arith.addf %123, %126 : vector<2x17x1xf32>
    %128 = math.rsqrt %127 : vector<2x17x1xf32>
    %129 = vector.broadcast %128 : vector<2x17x1xf32> to vector<2x17x32xf32>
    %130 = arith.mulf %125, %129 : vector<2x17x32xf32>
    %131 = arith.mulf %130, %7 : vector<2x17x32xf32>
    %132 = arith.addf %131, %11 : vector<2x17x32xf32>
    %c0_48 = arith.constant 0 : index
    %c0_49 = arith.constant 0 : index
    %c0_50 = arith.constant 0 : index
    %133 = vector.load %arg16[%c0_48, %c0_49, %c0_50] : memref<1x32x64xf32, #tpu.memory_space<vmem>>, vector<1x32x64xf32>
    %134 = vector.shape_cast %133 : vector<1x32x64xf32> to vector<32x64xf32>
    %cst_51 = arith.constant dense<0.000000e+00> : vector<2x17x64xf32>
    %135 = tpu.matmul %132, %134, %cst_51 {dimension_numbers = #tpu.dot_dimension_numbers<[2], [0], [0, 1], [1], [0, 0, 0, 1, 1, 1], [], []>} : vector<2x17x32xf32>, vector<32x64xf32>, vector<2x17x64xf32> -> vector<2x17x64xf32>
    %c0_52 = arith.constant 0 : index
    %c0_53 = arith.constant 0 : index
    %c0_54 = arith.constant 0 : index
    %136 = vector.load %arg17[%c0_52, %c0_53, %c0_54] : memref<1x1x64xf32, #tpu.memory_space<vmem>>, vector<1x1x64xf32>
    %137 = vector.shape_cast %136 : vector<1x1x64xf32> to vector<1x64xf32>
    %138 = vector.shape_cast %137 : vector<1x64xf32> to vector<1x1x64xf32>
    %139 = vector.broadcast %138 : vector<1x1x64xf32> to vector<2x17x64xf32>
    %140 = arith.addf %135, %139 : vector<2x17x64xf32>
    %cst_55 = arith.constant 5.000000e-01 : f32
    %141 = vector.broadcast %cst_55 : f32 to vector<2x17x64xf32>
    %142 = arith.mulf %141, %140 : vector<2x17x64xf32>
    %cst_56 = arith.constant 0.707106769 : f32
    %143 = vector.broadcast %cst_56 : f32 to vector<2x17x64xf32>
    %144 = arith.mulf %140, %143 : vector<2x17x64xf32>
    %145 = math.erf %144 : vector<2x17x64xf32>
    %cst_57 = arith.constant 1.000000e+00 : f32
    %146 = vector.broadcast %cst_57 : f32 to vector<2x17x64xf32>
    %147 = arith.addf %146, %145 : vector<2x17x64xf32>
    %148 = arith.mulf %142, %147 : vector<2x17x64xf32>
    %c0_58 = arith.constant 0 : index
    %c0_59 = arith.constant 0 : index
    %c0_60 = arith.constant 0 : index
    %149 = vector.load %arg18[%c0_58, %c0_59, %c0_60] : memref<1x64x32xf32, #tpu.memory_space<vmem>>, vector<1x64x32xf32>
    %150 = vector.shape_cast %149 : vector<1x64x32xf32> to vector<64x32xf32>
    %cst_61 = arith.constant dense<0.000000e+00> : vector<2x17x32xf32>
    %151 = tpu.matmul %148, %150, %cst_61 {dimension_numbers = #tpu.dot_dimension_numbers<[2], [0], [0, 1], [1], [0, 0, 0, 1, 1, 1], [], []>} : vector<2x17x64xf32>, vector<64x32xf32>, vector<2x17x32xf32> -> vector<2x17x32xf32>
    %152 = arith.addf %132, %151 : vector<2x17x32xf32>
    %c0_62 = arith.constant 0 : index
    %c0_63 = arith.constant 0 : index
    %c0_64 = arith.constant 0 : index
    %153 = vector.load %arg19[%c0_62, %c0_63, %c0_64] : memref<1x1x32xf32, #tpu.memory_space<vmem>>, vector<1x1x32xf32>
    %154 = vector.shape_cast %153 : vector<1x1x32xf32> to vector<1x32xf32>
    %155 = vector.shape_cast %154 : vector<1x32xf32> to vector<1x1x32xf32>
    %156 = vector.broadcast %155 : vector<1x1x32xf32> to vector<2x17x32xf32>
    %157 = arith.addf %152, %156 : vector<2x17x32xf32>
    %c0_65 = arith.constant 0 : index
    %c0_66 = arith.constant 0 : index
    %c0_67 = arith.constant 0 : index
    %158 = vector.load %arg21[%c0_65, %c0_66, %c0_67] : memref<2x17x32xf32, #tpu.memory_space<vmem>>, vector<2x17x32xf32>
    tpu.vector_store %arg21[%c0_65, %c0_66, %c0_67], %157 {strides = array<i32>} : memref<2x17x32xf32, #tpu.memory_space<vmem>>, vector<2x17x32xf32>,
    %c1_i32 = arith.constant 1 : i32
    %159 = arith.cmpi eq, %arg0, %c1_i32 : i32
    %160 = arith.extui %159 : i1 to i32
    %c0_i32_68 = arith.constant 0 : i32
    %161 = arith.cmpi ne, %160, %c0_i32_68 : i32
    scf.if %161 {
      %162 = vector.extract_strided_slice %157 {offsets = [0, 0, 0], sizes = [2, 1, 32], strides = [1, 1, 1]} : vector<2x17x32xf32> to vector<2x1x32xf32>
      %cst_69 = arith.constant dense<0.000000e+00> : vector<2x1xf32>
      %163 = vector.multi_reduction <add>, %162, %cst_69 [2] : vector<2x1x32xf32> to vector<2x1xf32>
      %164 = vector.shape_cast %163 : vector<2x1xf32> to vector<2x1x1xf32>
      %cst_70 = arith.constant 3.200000e+01 : f32
      %165 = vector.broadcast %cst_70 : f32 to vector<2x1x1xf32>
      %166 = arith.divf %164, %165 : vector<2x1x1xf32>
      %167 = vector.broadcast %166 : vector<2x1x1xf32> to vector<2x1x32xf32>
      %168 = arith.subf %162, %167 : vector<2x1x32xf32>
      %169 = arith.mulf %168, %168 : vector<2x1x32xf32>
      %cst_71 = arith.constant dense<0.000000e+00> : vector<2x1xf32>
      %170 = vector.multi_reduction <add>, %169, %cst_71 [2] : vector<2x1x32xf32> to vector<2x1xf32>
      %171 = vector.shape_cast %170 : vector<2x1xf32> to vector<2x1x1xf32>
      %cst_72 = arith.constant 3.200000e+01 : f32
      %172 = vector.broadcast %cst_72 : f32 to vector<2x1x1xf32>
      %173 = arith.divf %171, %172 : vector<2x1x1xf32>
      %174 = vector.broadcast %166 : vector<2x1x1xf32> to vector<2x1x32xf32>
      %175 = arith.subf %162, %174 : vector<2x1x32xf32>
      %cst_73 = arith.constant 9.99999974E-6 : f32
      %176 = vector.broadcast %cst_73 : f32 to vector<2x1x1xf32>
      %177 = arith.addf %173, %176 : vector<2x1x1xf32>
      %178 = math.rsqrt %177 : vector<2x1x1xf32>
      %179 = vector.broadcast %178 : vector<2x1x1xf32> to vector<2x1x32xf32>
      %180 = arith.mulf %175, %179 : vector<2x1x32xf32>
      %c0_74 = arith.constant 0 : index
      %c0_75 = arith.constant 0 : index
      %181 = vector.load %arg6[%c0_74, %c0_75] : memref<1x32xf32, #tpu.memory_space<vmem>>, vector<1x32xf32>
      %182 = vector.shape_cast %181 : vector<1x32xf32> to vector<1x1x32xf32>
      %183 = vector.broadcast %182 : vector<1x1x32xf32> to vector<2x1x32xf32>
      %184 = arith.mulf %180, %183 : vector<2x1x32xf32>
      %c0_76 = arith.constant 0 : index
      %c0_77 = arith.constant 0 : index
      %185 = vector.load %arg7[%c0_76, %c0_77] : memref<1x32xf32, #tpu.memory_space<vmem>>, vector<1x32xf32>
      %186 = vector.shape_cast %185 : vector<1x32xf32> to vector<1x1x32xf32>
      %187 = vector.broadcast %186 : vector<1x1x32xf32> to vector<2x1x32xf32>
      %188 = arith.addf %184, %187 : vector<2x1x32xf32>
      %c0_78 = arith.constant 0 : index
      %c0_79 = arith.constant 0 : index
      %189 = vector.load %arg8[%c0_78, %c0_79] : memref<32x10xf32, #tpu.memory_space<vmem>>, vector<32x10xf32>
      %cst_80 = arith.constant dense<0.000000e+00> : vector<2x1x10xf32>
      %190 = tpu.matmul %188, %189, %cst_80 {dimension_numbers = #tpu.dot_dimension_numbers<[2], [0], [0, 1], [1], [0, 0, 0, 1, 1, 1], [], []>} : vector<2x1x32xf32>, vector<32x10xf32>, vector<2x1x10xf32> -> vector<2x1x10xf32>
      %c0_81 = arith.constant 0 : index
      %c0_82 = arith.constant 0 : index
      %191 = vector.load %arg9[%c0_81, %c0_82] : memref<1x10xf32, #tpu.memory_space<vmem>>, vector<1x10xf32>
      %192 = vector.shape_cast %191 : vector<1x10xf32> to vector<1x1x10xf32>
      %193 = vector.broadcast %192 : vector<1x1x10xf32> to vector<2x1x10xf32>
      %194 = arith.addf %190, %193 : vector<2x1x10xf32>
      %c0_83 = arith.constant 0 : index
      %c0_84 = arith.constant 0 : index
      %c0_85 = arith.constant 0 : index
      %195 = vector.load %arg20[%c0_83, %c0_84, %c0_85] : memref<2x1x10xf32, #tpu.memory_space<vmem>>, vector<2x1x10xf32>
      tpu.vector_store %arg20[%c0_83, %c0_84, %c0_85], %194 {strides = array<i32>} : memref<2x1x10xf32, #tpu.memory_space<vmem>>, vector<2x1x10xf32>,
    } else {
    }
    return
  }
  func.func @transform_0(%arg0: i32) -> (i32, i32, i32) {
    %c0_i32 = arith.constant 0 : i32
    %c0_i32_0 = arith.constant 0 : i32
    %c0_i32_1 = arith.constant 0 : i32
    %c0_i32_2 = arith.constant 0 : i32
    return %c0_i32, %c0_i32_0, %c0_i32_1 : i32, i32, i32
  }
  func.func @transform_1(%arg0: i32) -> (i32, i32) {
    %c0_i32 = arith.constant 0 : i32
    %c0_i32_0 = arith.constant 0 : i32
    %c0_i32_1 = arith.constant 0 : i32
    return %c0_i32, %c0_i32_0 : i32, i32
  }
  func.func @transform_2(%arg0: i32) -> (i32, i32) {
    %c0_i32 = arith.constant 0 : i32
    %c0_i32_0 = arith.constant 0 : i32
    %c0_i32_1 = arith.constant 0 : i32
    return %c0_i32, %c0_i32_0 : i32, i32
  }
  func.func @transform_3(%arg0: i32) -> (i32, i32) {
    %c0_i32 = arith.constant 0 : i32
    %c0_i32_0 = arith.constant 0 : i32
    %c0_i32_1 = arith.constant 0 : i32
    return %c0_i32, %c0_i32_0 : i32, i32
  }
  func.func @transform_4(%arg0: i32) -> (i32, i32) {
    %c0_i32 = arith.constant 0 : i32
    %c0_i32_0 = arith.constant 0 : i32
    %c0_i32_1 = arith.constant 0 : i32
    return %c0_i32, %c0_i32_0 : i32, i32
  }
  func.func @transform_5(%arg0: i32) -> (i32, i32) {
    %c0_i32 = arith.constant 0 : i32
    %c0_i32_0 = arith.constant 0 : i32
    %c0_i32_1 = arith.constant 0 : i32
    return %c0_i32, %c0_i32_0 : i32, i32
  }
  func.func @transform_6(%arg0: i32) -> (i32, i32) {
    %c0_i32 = arith.constant 0 : i32
    %c0_i32_0 = arith.constant 0 : i32
    %c0_i32_1 = arith.constant 0 : i32
    return %c0_i32, %c0_i32_0 : i32, i32
  }
  func.func @transform_7(%arg0: i32) -> (i32, i32) {
    %c0_i32 = arith.constant 0 : i32
    %c0_i32_0 = arith.constant 0 : i32
    %c0_i32_1 = arith.constant 0 : i32
    return %c0_i32, %c0_i32_0 : i32, i32
  }
  func.func @transform_8(%arg0: i32) -> (i32, i32) {
    %c0_i32 = arith.constant 0 : i32
    %c0_i32_0 = arith.constant 0 : i32
    %c0_i32_1 = arith.constant 0 : i32
    return %c0_i32, %c0_i32_0 : i32, i32
  }
  func.func @transform_9(%arg0: i32) -> (i32, i32, i32) {
    %c0_i32 = arith.constant 0 : i32
    %c0_i32_0 = arith.constant 0 : i32
    %c0_i32_1 = arith.constant 0 : i32
    return %arg0, %c0_i32, %c0_i32_0 : i32, i32, i32
  }
  func.func @transform_10(%arg0: i32) -> (i32, i32, i32) {
    %c0_i32 = arith.constant 0 : i32
    %c0_i32_0 = arith.constant 0 : i32
    %c0_i32_1 = arith.constant 0 : i32
    return %arg0, %c0_i32, %c0_i32_0 : i32, i32, i32
  }
  func.func @transform_11(%arg0: i32) -> (i32, i32, i32) {
    %c0_i32 = arith.constant 0 : i32
    %c0_i32_0 = arith.constant 0 : i32
    %c0_i32_1 = arith.constant 0 : i32
    return %arg0, %c0_i32, %c0_i32_0 : i32, i32, i32
  }
  func.func @transform_12(%arg0: i32) -> (i32, i32, i32) {
    %c0_i32 = arith.constant 0 : i32
    %c0_i32_0 = arith.constant 0 : i32
    %c0_i32_1 = arith.constant 0 : i32
    return %arg0, %c0_i32, %c0_i32_0 : i32, i32, i32
  }
  func.func @transform_13(%arg0: i32) -> (i32, i32, i32) {
    %c0_i32 = arith.constant 0 : i32
    %c0_i32_0 = arith.constant 0 : i32
    %c0_i32_1 = arith.constant 0 : i32
    return %arg0, %c0_i32, %c0_i32_0 : i32, i32, i32
  }
  func.func @transform_14(%arg0: i32) -> (i32, i32, i32) {
    %c0_i32 = arith.constant 0 : i32
    %c0_i32_0 = arith.constant 0 : i32
    %c0_i32_1 = arith.constant 0 : i32
    return %arg0, %c0_i32, %c0_i32_0 : i32, i32, i32
  }
  func.func @transform_15(%arg0: i32) -> (i32, i32, i32) {
    %c0_i32 = arith.constant 0 : i32
    %c0_i32_0 = arith.constant 0 : i32
    %c0_i32_1 = arith.constant 0 : i32
    return %arg0, %c0_i32, %c0_i32_0 : i32, i32, i32
  }
  func.func @transform_16(%arg0: i32) -> (i32, i32, i32) {
    %c0_i32 = arith.constant 0 : i32
    %c0_i32_0 = arith.constant 0 : i32
    %c0_i32_1 = arith.constant 0 : i32
    return %arg0, %c0_i32, %c0_i32_0 : i32, i32, i32
  }
  func.func @transform_17(%arg0: i32) -> (i32, i32, i32) {
    %c0_i32 = arith.constant 0 : i32
    %c0_i32_0 = arith.constant 0 : i32
    %c0_i32_1 = arith.constant 0 : i32
    return %arg0, %c0_i32, %c0_i32_0 : i32, i32, i32
  }
  func.func @transform_18(%arg0: i32) -> (i32, i32, i32) {
    %c0_i32 = arith.constant 0 : i32
    %c0_i32_0 = arith.constant 0 : i32
    %c0_i32_1 = arith.constant 0 : i32
    return %arg0, %c0_i32, %c0_i32_0 : i32, i32, i32
  }
  func.func @transform_19(%arg0: i32) -> (i32, i32, i32) {
    %c0_i32 = arith.constant 0 : i32
    %c0_i32_0 = arith.constant 0 : i32
    %c0_i32_1 = arith.constant 0 : i32
    %c0_i32_2 = arith.constant 0 : i32
    return %c0_i32, %c0_i32_0, %c0_i32_1 : i32, i32, i32
  }
}

</mosaic_0001>

<llo_original>
// kernel: vision_transformer_forward.1
$region0: #{vision_transformer_forward.1}
  #allocation0 [shape = 'u32[]', space=smem, size = 0x4, offset = 0x4, fixed_abs, tag = 'smem constant byte address 0x4 - core index']
  #allocation1 [shape = 'u32[144,128]{1,0:T(1,128)}', space=vmem, size = 0x12000, scoped, tag = 'internal scratch']
  #allocation2 [shape = 'f32[2,17,32]{2,1,0:T(8,128)}', space=vmem, size = 0x6000, scoped, tag = 'scratch operand']
  %s0 = inlined_call_operand.vmem [shape: f32[2,16,64], index: 0, kind: input, shape index: {}]
  %s1 = inlined_call_operand.vmem [shape: f32[64,32], index: 1, kind: input, shape index: {}]
  %s2 = inlined_call_operand.vmem [shape: f32[1,32], index: 2, kind: input, shape index: {}]
  %s3 = inlined_call_operand.vmem [shape: f32[1,32], index: 3, kind: input, shape index: {}]
  %s4 = inlined_call_operand.vmem [shape: f32[17,32], index: 4, kind: input, shape index: {}]
  %s5 = inlined_call_operand.vmem [shape: f32[1,32], index: 5, kind: input, shape index: {}]
  %s6 = inlined_call_operand.vmem [shape: f32[1,32], index: 6, kind: input, shape index: {}]
  %s7 = inlined_call_operand.vmem [shape: f32[32,10], index: 7, kind: input, shape index: {}]
  %s8 = inlined_call_operand.vmem [shape: f32[1,10], index: 8, kind: input, shape index: {}]
  %s9 = inlined_call_operand.vmem [shape: f32[2,1,32], index: 9, kind: input, shape index: {}]
  %s10 = inlined_call_operand.vmem [shape: f32[2,1,32], index: 10, kind: input, shape index: {}]
  %s11 = inlined_call_operand.vmem [shape: f32[2,32,96], index: 11, kind: input, shape index: {}]
  %s12 = inlined_call_operand.vmem [shape: f32[2,1,96], index: 12, kind: input, shape index: {}]
  %s13 = inlined_call_operand.vmem [shape: f32[2,32,32], index: 13, kind: input, shape index: {}]
  %s14 = inlined_call_operand.vmem [shape: f32[2,1,32], index: 14, kind: input, shape index: {}]
  %s15 = inlined_call_operand.vmem [shape: f32[2,32,64], index: 15, kind: input, shape index: {}]
  %s16 = inlined_call_operand.vmem [shape: f32[2,1,64], index: 16, kind: input, shape index: {}]
  %s17 = inlined_call_operand.vmem [shape: f32[2,64,32], index: 17, kind: input, shape index: {}]
  %s18 = inlined_call_operand.vmem [shape: f32[2,1,32], index: 18, kind: input, shape index: {}]
  %s19 = inlined_call_operand.hbm [shape: f32[2,1,10], index: 19, kind: output, shape index: {}]
  %s20 = sld [smem:[#allocation0]]
  $region117: #{vision_transformer_forward.1} parent=0
    _
  %s22 = ssub.s32 1, %s20
  %s23 = scalar_select 0, %s22, %s20
  $region1: #{vision_transformer_forward.1} parent=0
    #allocation3 [shape = 'u8[1024]{0}', space=vmem, size = 0x400, scoped, tag = 'output window, operand 0, single buffered']
    #allocation4 [shape = 's32[2]{0}', space=sflag, size = 0x8, scoped, tag = 'scoped memory for vision_transformer_forward.1']
    %24 = vsyncpa [#allocation4], 0
    loop: start=0, step=1, limit=4
    $region2: #{vision_transformer_forward.1} parent=1 // loop_pre_header
      _
    $region3: #{vision_transformer_forward.1} parent=1 // loop_header
      %s26 = sphi 0, %s30
      %p27 = scmp.ge.s32.totalorder %s26, 4
      %s34 = sphi 0, %s34
      %s36 = sphi 0, %s34
      %s37 = sphi 0, %s36
      %s51 = sphi 0, %s37
      %s55 = sphi 0, %s55
      %s57 = sphi 0, %s55
      %s58 = sphi 0, %s57
      %s72 = sphi 0, %s58
      %s76 = sphi 0, %s76
      %s78 = sphi 0, %s76
      %s79 = sphi 0, %s78
      %s93 = sphi 0, %s79
      %s97 = sphi 0, %s97
      %s99 = sphi 0, %s97
      %s100 = sphi 0, %s99
      %s114 = sphi 0, %s100
      %s118 = sphi 0, %s118
      %s120 = sphi 0, %s118
      %s121 = sphi 0, %s120
      %s135 = sphi 0, %s121
      %s139 = sphi 0, %s139
      %s141 = sphi 0, %s139
      %s142 = sphi 0, %s141
      %s156 = sphi 0, %s142
      %s160 = sphi 0, %s160
      %s162 = sphi 0, %s160
      %s163 = sphi 0, %s162
      %s177 = sphi 0, %s163
      %s181 = sphi 0, %s181
      %s183 = sphi 0, %s181
      %s184 = sphi 0, %s183
      %s198 = sphi 0, %s184
      %s202 = sphi 0, %s202
      %s204 = sphi 0, %s202
      %s205 = sphi 0, %s204
      %s219 = sphi 0, %s205
      %s225 = sphi 0, %s227
      %s228 = sphi 0, %s225
      %s229 = sphi 0, %s228
      %s245 = sphi 0, %s229
      %s251 = sphi 0, %s253
      %s254 = sphi 0, %s251
      %s255 = sphi 0, %s254
      %s271 = sphi 0, %s255
      %s277 = sphi 0, %s279
      %s280 = sphi 0, %s277
      %s281 = sphi 0, %s280
      %s297 = sphi 0, %s281
      %s303 = sphi 0, %s305
      %s306 = sphi 0, %s303
      %s307 = sphi 0, %s306
      %s323 = sphi 0, %s307
      %s329 = sphi 0, %s331
      %s332 = sphi 0, %s329
      %s333 = sphi 0, %s332
      %s349 = sphi 0, %s333
      %s355 = sphi 0, %s357
      %s358 = sphi 0, %s355
      %s359 = sphi 0, %s358
      %s375 = sphi 0, %s359
      %s381 = sphi 0, %s383
      %s384 = sphi 0, %s381
      %s385 = sphi 0, %s384
      %s401 = sphi 0, %s385
      %s407 = sphi 0, %s409
      %s410 = sphi 0, %s407
      %s411 = sphi 0, %s410
      %s427 = sphi 0, %s411
      %s433 = sphi 0, %s435
      %s436 = sphi 0, %s433
      %s437 = sphi 0, %s436
      %s453 = sphi 0, %s437
      %s459 = sphi 0, %s461
      %s462 = sphi 0, %s459
      %s463 = sphi 0, %s462
      %s479 = sphi 0, %s463
      %s483 = sphi 0, %s483
      %s485 = sphi 0, %s483
      %s486 = sphi 0, %s485
      %s500 = sphi 0, %s486
    $region4: #{vision_transformer_forward.1} parent=1 // loop_header_branch
      %29 = sbr.rel (%p27) target = $region8
    $region5: #{vision_transformer_forward.1} parent=1 // loop_body
      %s31 = ssub.s32 %s26, 1
      %s32 = ssub.s32 %s26, 2
      %s33 = sadd.s32 %s26, 1
      %s35 = sadd.s32 %s34, 1
      %p38 = scmp.eq.s32.totalorder %s26, 1
      %p39 = scmp.ne.s32.totalorder %s34, %s36
      %p40 = scmp.eq.s32.totalorder %s26, 0
      %p41 = por %p39, %p40
      %p42 = scmp.ne.s32.totalorder %s34, %s36
      %p43 = scmp.eq.s32.totalorder %s31, 1
      %p44 = por %p42, %p43
      %p45 = scmp.ne.s32.totalorder %s36, %s37
      %p46 = scmp.eq.s32.totalorder %s31, 0
      %p47 = por %p45, %p46
      %p48 = scmp.ne.s32.totalorder %s36, %s37
      %p49 = scmp.eq.s32.totalorder %s32, 1
      %p50 = por %p48, %p49
      %p52 = scmp.ne.s32.totalorder %s37, %s51
      %p53 = scmp.eq.s32.totalorder %s32, 0
      %p54 = por %p52, %p53
      %s56 = sadd.s32 %s55, 1
      %p59 = scmp.eq.s32.totalorder %s26, 1
      %p60 = scmp.ne.s32.totalorder %s55, %s57
      %p61 = scmp.eq.s32.totalorder %s26, 0
      %p62 = por %p60, %p61
      %p63 = scmp.ne.s32.totalorder %s55, %s57
      %p64 = scmp.eq.s32.totalorder %s31, 1
      %p65 = por %p63, %p64
      %p66 = scmp.ne.s32.totalorder %s57, %s58
      %p67 = scmp.eq.s32.totalorder %s31, 0
      %p68 = por %p66, %p67
      %p69 = scmp.ne.s32.totalorder %s57, %s58
      %p70 = scmp.eq.s32.totalorder %s32, 1
      %p71 = por %p69, %p70
      %p73 = scmp.ne.s32.totalorder %s58, %s72
      %p74 = scmp.eq.s32.totalorder %s32, 0
      %p75 = por %p73, %p74
      %s77 = sadd.s32 %s76, 1
      %p80 = scmp.eq.s32.totalorder %s26, 1
      %p81 = scmp.ne.s32.totalorder %s76, %s78
      %p82 = scmp.eq.s32.totalorder %s26, 0
      %p83 = por %p81, %p82
      %p84 = scmp.ne.s32.totalorder %s76, %s78
      %p85 = scmp.eq.s32.totalorder %s31, 1
      %p86 = por %p84, %p85
      %p87 = scmp.ne.s32.totalorder %s78, %s79
      %p88 = scmp.eq.s32.totalorder %s31, 0
      %p89 = por %p87, %p88
      %p90 = scmp.ne.s32.totalorder %s78, %s79
      %p91 = scmp.eq.s32.totalorder %s32, 1
      %p92 = por %p90, %p91
      %p94 = scmp.ne.s32.totalorder %s79, %s93
      %p95 = scmp.eq.s32.totalorder %s32, 0
      %p96 = por %p94, %p95
      %s98 = sadd.s32 %s97, 1
      %p101 = scmp.eq.s32.totalorder %s26, 1
      %p102 = scmp.ne.s32.totalorder %s97, %s99
      %p103 = scmp.eq.s32.totalorder %s26, 0
      %p104 = por %p102, %p103
      %p105 = scmp.ne.s32.totalorder %s97, %s99
      %p106 = scmp.eq.s32.totalorder %s31, 1
      %p107 = por %p105, %p106
      %p108 = scmp.ne.s32.totalorder %s99, %s100
      %p109 = scmp.eq.s32.totalorder %s31, 0
      %p110 = por %p108, %p109
      %p111 = scmp.ne.s32.totalorder %s99, %s100
      %p112 = scmp.eq.s32.totalorder %s32, 1
      %p113 = por %p111, %p112
      %p115 = scmp.ne.s32.totalorder %s100, %s114
      %p116 = scmp.eq.s32.totalorder %s32, 0
      %p117 = por %p115, %p116
      %s119 = sadd.s32 %s118, 1
      %p122 = scmp.eq.s32.totalorder %s26, 1
      %p123 = scmp.ne.s32.totalorder %s118, %s120
      %p124 = scmp.eq.s32.totalorder %s26, 0
      %p125 = por %p123, %p124
      %p126 = scmp.ne.s32.totalorder %s118, %s120
      %p127 = scmp.eq.s32.totalorder %s31, 1
      %p128 = por %p126, %p127
      %p129 = scmp.ne.s32.totalorder %s120, %s121
      %p130 = scmp.eq.s32.totalorder %s31, 0
      %p131 = por %p129, %p130
      %p132 = scmp.ne.s32.totalorder %s120, %s121
      %p133 = scmp.eq.s32.totalorder %s32, 1
      %p134 = por %p132, %p133
      %p136 = scmp.ne.s32.totalorder %s121, %s135
      %p137 = scmp.eq.s32.totalorder %s32, 0
      %p138 = por %p136, %p137
      %s140 = sadd.s32 %s139, 1
      %p143 = scmp.eq.s32.totalorder %s26, 1
      %p144 = scmp.ne.s32.totalorder %s139, %s141
      %p145 = scmp.eq.s32.totalorder %s26, 0
      %p146 = por %p144, %p145
      %p147 = scmp.ne.s32.totalorder %s139, %s141
      %p148 = scmp.eq.s32.totalorder %s31, 1
      %p149 = por %p147, %p148
      %p150 = scmp.ne.s32.totalorder %s141, %s142
      %p151 = scmp.eq.s32.totalorder %s31, 0
      %p152 = por %p150, %p151
      %p153 = scmp.ne.s32.totalorder %s141, %s142
      %p154 = scmp.eq.s32.totalorder %s32, 1
      %p155 = por %p153, %p154
      %p157 = scmp.ne.s32.totalorder %s142, %s156
      %p158 = scmp.eq.s32.totalorder %s32, 0
      %p159 = por %p157, %p158
      %s161 = sadd.s32 %s160, 1
      %p164 = scmp.eq.s32.totalorder %s26, 1
      %p165 = scmp.ne.s32.totalorder %s160, %s162
      %p166 = scmp.eq.s32.totalorder %s26, 0
      %p167 = por %p165, %p166
      %p168 = scmp.ne.s32.totalorder %s160, %s162
      %p169 = scmp.eq.s32.totalorder %s31, 1
      %p170 = por %p168, %p169
      %p171 = scmp.ne.s32.totalorder %s162, %s163
      %p172 = scmp.eq.s32.totalorder %s31, 0
      %p173 = por %p171, %p172
      %p174 = scmp.ne.s32.totalorder %s162, %s163
      %p175 = scmp.eq.s32.totalorder %s32, 1
      %p176 = por %p174, %p175
      %p178 = scmp.ne.s32.totalorder %s163, %s177
      %p179 = scmp.eq.s32.totalorder %s32, 0
      %p180 = por %p178, %p179
      %s182 = sadd.s32 %s181, 1
      %p185 = scmp.eq.s32.totalorder %s26, 1
      %p186 = scmp.ne.s32.totalorder %s181, %s183
      %p187 = scmp.eq.s32.totalorder %s26, 0
      %p188 = por %p186, %p187
      %p189 = scmp.ne.s32.totalorder %s181, %s183
      %p190 = scmp.eq.s32.totalorder %s31, 1
      %p191 = por %p189, %p190
      %p192 = scmp.ne.s32.totalorder %s183, %s184
      %p193 = scmp.eq.s32.totalorder %s31, 0
      %p194 = por %p192, %p193
      %p195 = scmp.ne.s32.totalorder %s183, %s184
      %p196 = scmp.eq.s32.totalorder %s32, 1
      %p197 = por %p195, %p196
      %p199 = scmp.ne.s32.totalorder %s184, %s198
      %p200 = scmp.eq.s32.totalorder %s32, 0
      %p201 = por %p199, %p200
      %s203 = sadd.s32 %s202, 1
      %p206 = scmp.eq.s32.totalorder %s26, 1
      %p207 = scmp.ne.s32.totalorder %s202, %s204
      %p208 = scmp.eq.s32.totalorder %s26, 0
      %p209 = por %p207, %p208
      %p210 = scmp.ne.s32.totalorder %s202, %s204
      %p211 = scmp.eq.s32.totalorder %s31, 1
      %p212 = por %p210, %p211
      %p213 = scmp.ne.s32.totalorder %s204, %s205
      %p214 = scmp.eq.s32.totalorder %s31, 0
      %p215 = por %p213, %p214
      %p216 = scmp.ne.s32.totalorder %s204, %s205
      %p217 = scmp.eq.s32.totalorder %s32, 1
      %p218 = por %p216, %p217
      %p220 = scmp.ne.s32.totalorder %s205, %s219
      %p221 = scmp.eq.s32.totalorder %s32, 0
      %p222 = por %p220, %p221
      %s223 = ssub.s32 %s26, %s33
      %p224 = scmp.eq.s32.totalorder %s223, 0
      %s226 = sadd.s32 %s225, 1
      %s227 = scalar_select %p224, %s225, %s226
      %p230 = pneg %p224
      %p231 = scmp.eq.s32.totalorder %s26, 1
      %p232 = por %p230, %p231
      %p233 = scmp.ne.s32.totalorder %s225, %s228
      %p234 = scmp.eq.s32.totalorder %s26, 0
      %p235 = por %p233, %p234
      %p236 = scmp.ne.s32.totalorder %s225, %s228
      %p237 = scmp.eq.s32.totalorder %s31, 1
      %p238 = por %p236, %p237
      %p239 = scmp.ne.s32.totalorder %s228, %s229
      %p240 = scmp.eq.s32.totalorder %s31, 0
      %p241 = por %p239, %p240
      %p242 = scmp.ne.s32.totalorder %s228, %s229
      %p243 = scmp.eq.s32.totalorder %s32, 1
      %p244 = por %p242, %p243
      %p246 = scmp.ne.s32.totalorder %s229, %s245
      %p247 = scmp.eq.s32.totalorder %s32, 0
      %p248 = por %p246, %p247
      %s249 = ssub.s32 %s26, %s33
      %p250 = scmp.eq.s32.totalorder %s249, 0
      %s252 = sadd.s32 %s251, 1
      %s253 = scalar_select %p250, %s251, %s252
      %p256 = pneg %p250
      %p257 = scmp.eq.s32.totalorder %s26, 1
      %p258 = por %p256, %p257
      %p259 = scmp.ne.s32.totalorder %s251, %s254
      %p260 = scmp.eq.s32.totalorder %s26, 0
      %p261 = por %p259, %p260
      %p262 = scmp.ne.s32.totalorder %s251, %s254
      %p263 = scmp.eq.s32.totalorder %s31, 1
      %p264 = por %p262, %p263
      %p265 = scmp.ne.s32.totalorder %s254, %s255
      %p266 = scmp.eq.s32.totalorder %s31, 0
      %p267 = por %p265, %p266
      %p268 = scmp.ne.s32.totalorder %s254, %s255
      %p269 = scmp.eq.s32.totalorder %s32, 1
      %p270 = por %p268, %p269
      %p272 = scmp.ne.s32.totalorder %s255, %s271
      %p273 = scmp.eq.s32.totalorder %s32, 0
      %p274 = por %p272, %p273
      %s275 = ssub.s32 %s26, %s33
      %p276 = scmp.eq.s32.totalorder %s275, 0
      %s278 = sadd.s32 %s277, 1
      %s279 = scalar_select %p276, %s277, %s278
      %p282 = pneg %p276
      %p283 = scmp.eq.s32.totalorder %s26, 1
      %p284 = por %p282, %p283
      %p285 = scmp.ne.s32.totalorder %s277, %s280
      %p286 = scmp.eq.s32.totalorder %s26, 0
      %p287 = por %p285, %p286
      %p288 = scmp.ne.s32.totalorder %s277, %s280
      %p289 = scmp.eq.s32.totalorder %s31, 1
      %p290 = por %p288, %p289
      %p291 = scmp.ne.s32.totalorder %s280, %s281
      %p292 = scmp.eq.s32.totalorder %s31, 0
      %p293 = por %p291, %p292
      %p294 = scmp.ne.s32.totalorder %s280, %s281
      %p295 = scmp.eq.s32.totalorder %s32, 1
      %p296 = por %p294, %p295
      %p298 = scmp.ne.s32.totalorder %s281, %s297
      %p299 = scmp.eq.s32.totalorder %s32, 0
      %p300 = por %p298, %p299
      %s301 = ssub.s32 %s26, %s33
      %p302 = scmp.eq.s32.totalorder %s301, 0
      %s304 = sadd.s32 %s303, 1
      %s305 = scalar_select %p302, %s303, %s304
      %p308 = pneg %p302
      %p309 = scmp.eq.s32.totalorder %s26, 1
      %p310 = por %p308, %p309
      %p311 = scmp.ne.s32.totalorder %s303, %s306
      %p312 = scmp.eq.s32.totalorder %s26, 0
      %p313 = por %p311, %p312
      %p314 = scmp.ne.s32.totalorder %s303, %s306
      %p315 = scmp.eq.s32.totalorder %s31, 1
      %p316 = por %p314, %p315
      %p317 = scmp.ne.s32.totalorder %s306, %s307
      %p318 = scmp.eq.s32.totalorder %s31, 0
      %p319 = por %p317, %p318
      %p320 = scmp.ne.s32.totalorder %s306, %s307
      %p321 = scmp.eq.s32.totalorder %s32, 1
      %p322 = por %p320, %p321
      %p324 = scmp.ne.s32.totalorder %s307, %s323
      %p325 = scmp.eq.s32.totalorder %s32, 0
      %p326 = por %p324, %p325
      %s327 = ssub.s32 %s26, %s33
      %p328 = scmp.eq.s32.totalorder %s327, 0
      %s330 = sadd.s32 %s329, 1
      %s331 = scalar_select %p328, %s329, %s330
      %p334 = pneg %p328
      %p335 = scmp.eq.s32.totalorder %s26, 1
      %p336 = por %p334, %p335
      %p337 = scmp.ne.s32.totalorder %s329, %s332
      %p338 = scmp.eq.s32.totalorder %s26, 0
      %p339 = por %p337, %p338
      %p340 = scmp.ne.s32.totalorder %s329, %s332
      %p341 = scmp.eq.s32.totalorder %s31, 1
      %p342 = por %p340, %p341
      %p343 = scmp.ne.s32.totalorder %s332, %s333
      %p344 = scmp.eq.s32.totalorder %s31, 0
      %p345 = por %p343, %p344
      %p346 = scmp.ne.s32.totalorder %s332, %s333
      %p347 = scmp.eq.s32.totalorder %s32, 1
      %p348 = por %p346, %p347
      %p350 = scmp.ne.s32.totalorder %s333, %s349
      %p351 = scmp.eq.s32.totalorder %s32, 0
      %p352 = por %p350, %p351
      %s353 = ssub.s32 %s26, %s33
      %p354 = scmp.eq.s32.totalorder %s353, 0
      %s356 = sadd.s32 %s355, 1
      %s357 = scalar_select %p354, %s355, %s356
      %p360 = pneg %p354
      %p361 = scmp.eq.s32.totalorder %s26, 1
      %p362 = por %p360, %p361
      %p363 = scmp.ne.s32.totalorder %s355, %s358
      %p364 = scmp.eq.s32.totalorder %s26, 0
      %p365 = por %p363, %p364
      %p366 = scmp.ne.s32.totalorder %s355, %s358
      %p367 = scmp.eq.s32.totalorder %s31, 1
      %p368 = por %p366, %p367
      %p369 = scmp.ne.s32.totalorder %s358, %s359
      %p370 = scmp.eq.s32.totalorder %s31, 0
      %p371 = por %p369, %p370
      %p372 = scmp.ne.s32.totalorder %s358, %s359
      %p373 = scmp.eq.s32.totalorder %s32, 1
      %p374 = por %p372, %p373
      %p376 = scmp.ne.s32.totalorder %s359, %s375
      %p377 = scmp.eq.s32.totalorder %s32, 0
      %p378 = por %p376, %p377
      %s379 = ssub.s32 %s26, %s33
      %p380 = scmp.eq.s32.totalorder %s379, 0
      %s382 = sadd.s32 %s381, 1
      %s383 = scalar_select %p380, %s381, %s382
      %p386 = pneg %p380
      %p387 = scmp.eq.s32.totalorder %s26, 1
      %p388 = por %p386, %p387
      %p389 = scmp.ne.s32.totalorder %s381, %s384
      %p390 = scmp.eq.s32.totalorder %s26, 0
      %p391 = por %p389, %p390
      %p392 = scmp.ne.s32.totalorder %s381, %s384
      %p393 = scmp.eq.s32.totalorder %s31, 1
      %p394 = por %p392, %p393
      %p395 = scmp.ne.s32.totalorder %s384, %s385
      %p396 = scmp.eq.s32.totalorder %s31, 0
      %p397 = por %p395, %p396
      %p398 = scmp.ne.s32.totalorder %s384, %s385
      %p399 = scmp.eq.s32.totalorder %s32, 1
      %p400 = por %p398, %p399
      %p402 = scmp.ne.s32.totalorder %s385, %s401
      %p403 = scmp.eq.s32.totalorder %s32, 0
      %p404 = por %p402, %p403
      %s405 = ssub.s32 %s26, %s33
      %p406 = scmp.eq.s32.totalorder %s405, 0
      %s408 = sadd.s32 %s407, 1
      %s409 = scalar_select %p406, %s407, %s408
      %p412 = pneg %p406
      %p413 = scmp.eq.s32.totalorder %s26, 1
      %p414 = por %p412, %p413
      %p415 = scmp.ne.s32.totalorder %s407, %s410
      %p416 = scmp.eq.s32.totalorder %s26, 0
      %p417 = por %p415, %p416
      %p418 = scmp.ne.s32.totalorder %s407, %s410
      %p419 = scmp.eq.s32.totalorder %s31, 1
      %p420 = por %p418, %p419
      %p421 = scmp.ne.s32.totalorder %s410, %s411
      %p422 = scmp.eq.s32.totalorder %s31, 0
      %p423 = por %p421, %p422
      %p424 = scmp.ne.s32.totalorder %s410, %s411
      %p425 = scmp.eq.s32.totalorder %s32, 1
      %p426 = por %p424, %p425
      %p428 = scmp.ne.s32.totalorder %s411, %s427
      %p429 = scmp.eq.s32.totalorder %s32, 0
      %p430 = por %p428, %p429
      %s431 = ssub.s32 %s26, %s33
      %p432 = scmp.eq.s32.totalorder %s431, 0
      %s434 = sadd.s32 %s433, 1
      %s435 = scalar_select %p432, %s433, %s434
      %p438 = pneg %p432
      %p439 = scmp.eq.s32.totalorder %s26, 1
      %p440 = por %p438, %p439
      %p441 = scmp.ne.s32.totalorder %s433, %s436
      %p442 = scmp.eq.s32.totalorder %s26, 0
      %p443 = por %p441, %p442
      %p444 = scmp.ne.s32.totalorder %s433, %s436
      %p445 = scmp.eq.s32.totalorder %s31, 1
      %p446 = por %p444, %p445
      %p447 = scmp.ne.s32.totalorder %s436, %s437
      %p448 = scmp.eq.s32.totalorder %s31, 0
      %p449 = por %p447, %p448
      %p450 = scmp.ne.s32.totalorder %s436, %s437
      %p451 = scmp.eq.s32.totalorder %s32, 1
      %p452 = por %p450, %p451
      %p454 = scmp.ne.s32.totalorder %s437, %s453
      %p455 = scmp.eq.s32.totalorder %s32, 0
      %p456 = por %p454, %p455
      %s457 = ssub.s32 %s26, %s33
      %p458 = scmp.eq.s32.totalorder %s457, 0
      %s460 = sadd.s32 %s459, 1
      %s461 = scalar_select %p458, %s459, %s460
      %p464 = pneg %p458
      %p465 = scmp.eq.s32.totalorder %s26, 1
      %p466 = por %p464, %p465
      %p467 = scmp.ne.s32.totalorder %s459, %s462
      %p468 = scmp.eq.s32.totalorder %s26, 0
      %p469 = por %p467, %p468
      %p470 = scmp.ne.s32.totalorder %s459, %s462
      %p471 = scmp.eq.s32.totalorder %s31, 1
      %p472 = por %p470, %p471
      %p473 = scmp.ne.s32.totalorder %s462, %s463
      %p474 = scmp.eq.s32.totalorder %s31, 0
      %p475 = por %p473, %p474
      %p476 = scmp.ne.s32.totalorder %s462, %s463
      %p477 = scmp.eq.s32.totalorder %s32, 1
      %p478 = por %p476, %p477
      %p480 = scmp.ne.s32.totalorder %s463, %s479
      %p481 = scmp.eq.s32.totalorder %s32, 0
      %p482 = por %p480, %p481
      %s484 = sadd.s32 %s483, 1
      %p487 = scmp.eq.s32.totalorder %s26, 1
      %p488 = scmp.ne.s32.totalorder %s483, %s485
      %p489 = scmp.eq.s32.totalorder %s26, 0
      %p490 = por %p488, %p489
      %p491 = scmp.ne.s32.totalorder %s483, %s485
      %p492 = scmp.eq.s32.totalorder %s31, 1
      %p493 = por %p491, %p492
      %p494 = scmp.ne.s32.totalorder %s485, %s486
      %p495 = scmp.eq.s32.totalorder %s31, 0
      %p496 = por %p494, %p495
      %p497 = scmp.ne.s32.totalorder %s485, %s486
      %p498 = scmp.eq.s32.totalorder %s32, 1
      %p499 = por %p497, %p498
      %p501 = scmp.ne.s32.totalorder %s486, %s500
      %p502 = scmp.eq.s32.totalorder %s32, 0
      %p503 = por %p501, %p502
      %p504 = scmp.le.s32.totalorder 1, %s26
      %p505 = scmp.lt.s32.totalorder %s26, 3
      %p506 = pnand %p504, %p505
      %p507 = pneg %p506
      // Predicated region
      $region9: #{vision_transformer_forward.1} parent=5 // pred_check
        _
      $region10: #{vision_transformer_forward.1} parent=5 // pred_check_branch
        %509 = sbr.rel (%p506) target = $region12
      $region11: #{vision_transformer_forward.1} parent=5 // pred_region
        %s510 = ssub.s32 %s26, 1
        // Predicated region
        $region13: #{vision_transformer_forward.1} parent=11 // pred_check
          %p511 = pneg %p47
        $region14: #{vision_transformer_forward.1} parent=11 // pred_check_branch
          %513 = sbr.rel (%p511) target = $region16
        $region15: #{vision_transformer_forward.1} parent=11 // pred_region
          _
        $region16: #{vision_transformer_forward.1} parent=11 // pred_fallthru
          _
        // Predicated region
        $region17: #{vision_transformer_forward.1} parent=11 // pred_check
          %p514 = pneg %p68
        $region18: #{vision_transformer_forward.1} parent=11 // pred_check_branch
          %516 = sbr.rel (%p514) target = $region20
        $region19: #{vision_transformer_forward.1} parent=11 // pred_region
          _
        $region20: #{vision_transformer_forward.1} parent=11 // pred_fallthru
          _
        // Predicated region
        $region21: #{vision_transformer_forward.1} parent=11 // pred_check
          %p517 = pneg %p89
        $region22: #{vision_transformer_forward.1} parent=11 // pred_check_branch
          %519 = sbr.rel (%p517) target = $region24
        $region23: #{vision_transformer_forward.1} parent=11 // pred_region
          _
        $region24: #{vision_transformer_forward.1} parent=11 // pred_fallthru
          _
        // Predicated region
        $region25: #{vision_transformer_forward.1} parent=11 // pred_check
          %p520 = pneg %p110
        $region26: #{vision_transformer_forward.1} parent=11 // pred_check_branch
          %522 = sbr.rel (%p520) target = $region28
        $region27: #{vision_transformer_forward.1} parent=11 // pred_region
          _
        $region28: #{vision_transformer_forward.1} parent=11 // pred_fallthru
          _
        // Predicated region
        $region29: #{vision_transformer_forward.1} parent=11 // pred_check
          %p523 = pneg %p131
        $region30: #{vision_transformer_forward.1} parent=11 // pred_check_branch
          %525 = sbr.rel (%p523) target = $region32
        $region31: #{vision_transformer_forward.1} parent=11 // pred_region
          _
        $region32: #{vision_transformer_forward.1} parent=11 // pred_fallthru
          _
        // Predicated region
        $region33: #{vision_transformer_forward.1} parent=11 // pred_check
          %p526 = pneg %p152
        $region34: #{vision_transformer_forward.1} parent=11 // pred_check_branch
          %528 = sbr.rel (%p526) target = $region36
        $region35: #{vision_transformer_forward.1} parent=11 // pred_region
          _
        $region36: #{vision_transformer_forward.1} parent=11 // pred_fallthru
          _
        // Predicated region
        $region37: #{vision_transformer_forward.1} parent=11 // pred_check
          %p529 = pneg %p173
        $region38: #{vision_transformer_forward.1} parent=11 // pred_check_branch
          %531 = sbr.rel (%p529) target = $region40
        $region39: #{vision_transformer_forward.1} parent=11 // pred_region
          _
        $region40: #{vision_transformer_forward.1} parent=11 // pred_fallthru
          _
        // Predicated region
        $region41: #{vision_transformer_forward.1} parent=11 // pred_check
          %p532 = pneg %p194
        $region42: #{vision_transformer_forward.1} parent=11 // pred_check_branch
          %534 = sbr.rel (%p532) target = $region44
        $region43: #{vision_transformer_forward.1} parent=11 // pred_region
          _
        $region44: #{vision_transformer_forward.1} parent=11 // pred_fallthru
          _
        // Predicated region
        $region45: #{vision_transformer_forward.1} parent=11 // pred_check
          %p535 = pneg %p215
        $region46: #{vision_transformer_forward.1} parent=11 // pred_check_branch
          %537 = sbr.rel (%p535) target = $region48
        $region47: #{vision_transformer_forward.1} parent=11 // pred_region
          _
        $region48: #{vision_transformer_forward.1} parent=11 // pred_fallthru
          _
      $region12: #{vision_transformer_forward.1} parent=5 // pred_fallthru
        _
      %p538 = scmp.lt.s32.totalorder %s26, 2
      // Predicated region
      $region49: #{vision_transformer_forward.1} parent=5 // pred_check
        %p539 = pneg %p538
      $region50: #{vision_transformer_forward.1} parent=5 // pred_check_branch
        %541 = sbr.rel (%p539) target = $region52
      $region51: #{vision_transformer_forward.1} parent=5 // pred_region
        // Predicated region
        $region53: #{vision_transformer_forward.1} parent=51 // pred_check
          %p542 = pneg %p235
        $region54: #{vision_transformer_forward.1} parent=51 // pred_check_branch
          %544 = sbr.rel (%p542) target = $region56
        $region55: #{vision_transformer_forward.1} parent=51 // pred_region
          %p545 = scmp.lt.s32.totalorder %s26, 1
          %s546 = scalar_select %p545, %s26, 1
          %s547 = scalar_lea.vmem %s9, %s546
        $region56: #{vision_transformer_forward.1} parent=51 // pred_fallthru
          _
        // Predicated region
        $region57: #{vision_transformer_forward.1} parent=51 // pred_check
          %p548 = pneg %p261
        $region58: #{vision_transformer_forward.1} parent=51 // pred_check_branch
          %550 = sbr.rel (%p548) target = $region60
        $region59: #{vision_transformer_forward.1} parent=51 // pred_region
          %p551 = scmp.lt.s32.totalorder %s26, 1
          %s552 = scalar_select %p551, %s26, 1
          %s553 = scalar_lea.vmem %s10, %s552
        $region60: #{vision_transformer_forward.1} parent=51 // pred_fallthru
          _
        // Predicated region
        $region61: #{vision_transformer_forward.1} parent=51 // pred_check
          %p554 = pneg %p287
        $region62: #{vision_transformer_forward.1} parent=51 // pred_check_branch
          %556 = sbr.rel (%p554) target = $region64
        $region63: #{vision_transformer_forward.1} parent=51 // pred_region
          %p557 = scmp.lt.s32.totalorder %s26, 1
          %s558 = scalar_select %p557, %s26, 1
          %s559 = smul.addr %s558, 4
          %s560 = smul.addr %s559, 8
          %s561 = scalar_lea.vmem %s11, %s560
        $region64: #{vision_transformer_forward.1} parent=51 // pred_fallthru
          _
        // Predicated region
        $region65: #{vision_transformer_forward.1} parent=51 // pred_check
          %p562 = pneg %p313
        $region66: #{vision_transformer_forward.1} parent=51 // pred_check_branch
          %564 = sbr.rel (%p562) target = $region68
        $region67: #{vision_transformer_forward.1} parent=51 // pred_region
          %p565 = scmp.lt.s32.totalorder %s26, 1
          %s566 = scalar_select %p565, %s26, 1
          %s567 = scalar_lea.vmem %s12, %s566
        $region68: #{vision_transformer_forward.1} parent=51 // pred_fallthru
          _
        // Predicated region
        $region69: #{vision_transformer_forward.1} parent=51 // pred_check
          %p568 = pneg %p339
        $region70: #{vision_transformer_forward.1} parent=51 // pred_check_branch
          %570 = sbr.rel (%p568) target = $region72
        $region71: #{vision_transformer_forward.1} parent=51 // pred_region
          %p571 = scmp.lt.s32.totalorder %s26, 1
          %s572 = scalar_select %p571, %s26, 1
          %s573 = smul.addr %s572, 4
          %s574 = smul.addr %s573, 8
          %s575 = scalar_lea.vmem %s13, %s574
        $region72: #{vision_transformer_forward.1} parent=51 // pred_fallthru
          _
        // Predicated region
        $region73: #{vision_transformer_forward.1} parent=51 // pred_check
          %p576 = pneg %p365
        $region74: #{vision_transformer_forward.1} parent=51 // pred_check_branch
          %578 = sbr.rel (%p576) target = $region76
        $region75: #{vision_transformer_forward.1} parent=51 // pred_region
          %p579 = scmp.lt.s32.totalorder %s26, 1
          %s580 = scalar_select %p579, %s26, 1
          %s581 = scalar_lea.vmem %s14, %s580
        $region76: #{vision_transformer_forward.1} parent=51 // pred_fallthru
          _
        // Predicated region
        $region77: #{vision_transformer_forward.1} parent=51 // pred_check
          %p582 = pneg %p391
        $region78: #{vision_transformer_forward.1} parent=51 // pred_check_branch
          %584 = sbr.rel (%p582) target = $region80
        $region79: #{vision_transformer_forward.1} parent=51 // pred_region
          %p585 = scmp.lt.s32.totalorder %s26, 1
          %s586 = scalar_select %p585, %s26, 1
          %s587 = smul.addr %s586, 4
          %s588 = smul.addr %s587, 8
          %s589 = scalar_lea.vmem %s15, %s588
        $region80: #{vision_transformer_forward.1} parent=51 // pred_fallthru
          _
        // Predicated region
        $region81: #{vision_transformer_forward.1} parent=51 // pred_check
          %p590 = pneg %p417
        $region82: #{vision_transformer_forward.1} parent=51 // pred_check_branch
          %592 = sbr.rel (%p590) target = $region84
        $region83: #{vision_transformer_forward.1} parent=51 // pred_region
          %p593 = scmp.lt.s32.totalorder %s26, 1
          %s594 = scalar_select %p593, %s26, 1
          %s595 = scalar_lea.vmem %s16, %s594
        $region84: #{vision_transformer_forward.1} parent=51 // pred_fallthru
          _
        // Predicated region
        $region85: #{vision_transformer_forward.1} parent=51 // pred_check
          %p596 = pneg %p443
        $region86: #{vision_transformer_forward.1} parent=51 // pred_check_branch
          %598 = sbr.rel (%p596) target = $region88
        $region87: #{vision_transformer_forward.1} parent=51 // pred_region
          %p599 = scmp.lt.s32.totalorder %s26, 1
          %s600 = scalar_select %p599, %s26, 1
          %s601 = smul.addr %s600, 8
          %s602 = smul.addr %s601, 8
          %s603 = scalar_lea.vmem %s17, %s602
        $region88: #{vision_transformer_forward.1} parent=51 // pred_fallthru
          _
        // Predicated region
        $region89: #{vision_transformer_forward.1} parent=51 // pred_check
          %p604 = pneg %p469
        $region90: #{vision_transformer_forward.1} parent=51 // pred_check_branch
          %606 = sbr.rel (%p604) target = $region92
        $region91: #{vision_transformer_forward.1} parent=51 // pred_region
          %p607 = scmp.lt.s32.totalorder %s26, 1
          %s608 = scalar_select %p607, %s26, 1
          %s609 = scalar_lea.vmem %s18, %s608
        $region92: #{vision_transformer_forward.1} parent=51 // pred_fallthru
          _
      $region52: #{vision_transformer_forward.1} parent=5 // pred_fallthru
        _
      %p610 = scmp.le.s32.totalorder 1, %s26
      %p611 = scmp.lt.s32.totalorder %s26, 3
      %p612 = pnand %p610, %p611
      %p613 = pneg %p612
      // Predicated region
      $region93: #{vision_transformer_forward.1} parent=5 // pred_check
        _
      $region94: #{vision_transformer_forward.1} parent=5 // pred_check_branch
        %615 = sbr.rel (%p612) target = $region96
      $region95: #{vision_transformer_forward.1} parent=5 // pred_region
        %s616 = ssub.s32 %s26, 1
        %p617 = pneg %p47
        %p618 = pneg %p44
        %p619 = pneg %p68
        %p620 = pneg %p65
        %p621 = pneg %p89
        %p622 = pneg %p86
        %p623 = pneg %p110
        %p624 = pneg %p107
        %p625 = pneg %p131
        %p626 = pneg %p128
        %p627 = pneg %p152
        %p628 = pneg %p149
        %p629 = pneg %p173
        %p630 = pneg %p170
        %p631 = pneg %p194
        %p632 = pneg %p191
        %p633 = pneg %p215
        %p634 = pneg %p212
        %p635 = scmp.lt.s32.totalorder %s31, 1
        %s636 = scalar_select %p635, %s31, 1
        %s637 = scalar_lea.vmem %s9, %s636
        %p638 = pneg %p241
        %p639 = pneg %p238
        %p640 = scmp.lt.s32.totalorder %s31, 1
        %s641 = scalar_select %p640, %s31, 1
        %s642 = scalar_lea.vmem %s10, %s641
        %p643 = pneg %p267
        %p644 = pneg %p264
        %p645 = scmp.lt.s32.totalorder %s31, 1
        %s646 = scalar_select %p645, %s31, 1
        %s647 = smul.addr %s646, 4
        %s648 = smul.addr %s647, 8
        %s649 = scalar_lea.vmem %s11, %s648
        %p650 = pneg %p293
        %p651 = pneg %p290
        %p652 = scmp.lt.s32.totalorder %s31, 1
        %s653 = scalar_select %p652, %s31, 1
        %s654 = scalar_lea.vmem %s12, %s653
        %p655 = pneg %p319
        %p656 = pneg %p316
        %p657 = scmp.lt.s32.totalorder %s31, 1
        %s658 = scalar_select %p657, %s31, 1
        %s659 = smul.addr %s658, 4
        %s660 = smul.addr %s659, 8
        %s661 = scalar_lea.vmem %s13, %s660
        %p662 = pneg %p345
        %p663 = pneg %p342
        %p664 = scmp.lt.s32.totalorder %s31, 1
        %s665 = scalar_select %p664, %s31, 1
        %s666 = scalar_lea.vmem %s14, %s665
        %p667 = pneg %p371
        %p668 = pneg %p368
        %p669 = scmp.lt.s32.totalorder %s31, 1
        %s670 = scalar_select %p669, %s31, 1
        %s671 = smul.addr %s670, 4
        %s672 = smul.addr %s671, 8
        %s673 = scalar_lea.vmem %s15, %s672
        %p674 = pneg %p397
        %p675 = pneg %p394
        %p676 = scmp.lt.s32.totalorder %s31, 1
        %s677 = scalar_select %p676, %s31, 1
        %s678 = scalar_lea.vmem %s16, %s677
        %p679 = pneg %p423
        %p680 = pneg %p420
        %p681 = scmp.lt.s32.totalorder %s31, 1
        %s682 = scalar_select %p681, %s31, 1
        %s683 = smul.addr %s682, 8
        %s684 = smul.addr %s683, 8
        %s685 = scalar_lea.vmem %s17, %s684
        %p686 = pneg %p449
        %p687 = pneg %p446
        %p688 = scmp.lt.s32.totalorder %s31, 1
        %s689 = scalar_select %p688, %s31, 1
        %s690 = scalar_lea.vmem %s18, %s689
        %p691 = pneg %p475
        %p692 = pneg %p472
        %p693 = pneg %p496
        %p694 = pneg %p493
        %p695 = scmp.lt.s32.totalorder %s31, 1
        %s696 = scalar_select %p695, %s31, 1
        %s697 = scalar_lea.vmem %s9, %s696
        %p698 = scmp.lt.s32.totalorder %s31, 1
        %s699 = scalar_select %p698, %s31, 1
        %s700 = scalar_lea.vmem %s10, %s699
        %p701 = scmp.lt.s32.totalorder %s31, 1
        %s702 = scalar_select %p701, %s31, 1
        %s703 = smul.addr %s702, 4
        %s704 = smul.addr %s703, 8
        %s705 = scalar_lea.vmem %s11, %s704
        %p706 = scmp.lt.s32.totalorder %s31, 1
        %s707 = scalar_select %p706, %s31, 1
        %s708 = scalar_lea.vmem %s12, %s707
        %p709 = scmp.lt.s32.totalorder %s31, 1
        %s710 = scalar_select %p709, %s31, 1
        %s711 = smul.addr %s710, 4
        %s712 = smul.addr %s711, 8
        %s713 = scalar_lea.vmem %s13, %s712
        %p714 = scmp.lt.s32.totalorder %s31, 1
        %s715 = scalar_select %p714, %s31, 1
        %s716 = scalar_lea.vmem %s14, %s715
        %p717 = scmp.lt.s32.totalorder %s31, 1
        %s718 = scalar_select %p717, %s31, 1
        %s719 = smul.addr %s718, 4
        %s720 = smul.addr %s719, 8
        %s721 = scalar_lea.vmem %s15, %s720
        %p722 = scmp.lt.s32.totalorder %s31, 1
        %s723 = scalar_select %p722, %s31, 1
        %s724 = scalar_lea.vmem %s16, %s723
        %p725 = scmp.lt.s32.totalorder %s31, 1
        %s726 = scalar_select %p725, %s31, 1
        %s727 = smul.addr %s726, 8
        %s728 = smul.addr %s727, 8
        %s729 = scalar_lea.vmem %s17, %s728
        %p730 = scmp.lt.s32.totalorder %s31, 1
        %s731 = scalar_select %p730, %s31, 1
        %s732 = scalar_lea.vmem %s18, %s731
        %p733 = scmp.eq.s32.totalorder %s31, 0
        // Predicated region
        $region97: #{vision_transformer_forward.1} parent=95 // pred_check
          %p734 = pneg %p733
        $region98: #{vision_transformer_forward.1} parent=95 // pred_check_branch
          %736 = sbr.rel (%p734) target = $region100
        $region99: #{vision_transformer_forward.1} parent=95 // pred_region
          %v737 = vld [vmem:[%s0] sm:$0xff]
          %v738 = vld [vmem:[%s0 + $0x8] sm:$0xff]
          %v739 = vld [vmem:[%s0 + $0x10] sm:$0xff]
          %v740 = vld [vmem:[%s0 + $0x18] sm:$0xff]
          %v741 = vld [vmem:[%s1] sm:$0xff]
          %v742 = vld [vmem:[%s1 + $0x8] sm:$0xff]
          %v743 = vld [vmem:[%s1 + $0x10] sm:$0xff]
          %v744 = vld [vmem:[%s1 + $0x18] sm:$0xff]
          %v745 = vld [vmem:[%s1 + $0x20] sm:$0xff]
          %v746 = vld [vmem:[%s1 + $0x28] sm:$0xff]
          %v747 = vld [vmem:[%s1 + $0x30] sm:$0xff]
          %v748 = vld [vmem:[%s1 + $0x38] sm:$0xff]
          %v749 = vld [vmem:[%s2] sm:$0x1]
          %v751 = vlaneseq
          %v752 = vshrl.u32 %v751, 7
          %v753 = vsub.s32 0, %v752
          %v754 = vrot.slane %v749, %v753
          %vm756 = vcmask 523264
          %v758 = vsel %vm756, %v737, 0
          %v761 = vsel %vm756, %v738, 0
          %v764 = vsel %vm756, %v739, 0
          %v767 = vsel %vm756, %v740, 0
          %769 = vmatprep.subr.mxu0 0.0
          %770 = vmatpush1.msra.mxu0 %v741
          %771 = vmatprep.subr.mxu0 0.0
          %772 = vmatpush1.msra.mxu0 %v742
          %773 = vmatprep.subr.mxu0 0.0
          %774 = vmatpush1.msra.mxu0 %v743
          %775 = vmatprep.subr.mxu0 0.0
          %776 = vmatpush1.msra.mxu0 %v744
          %777 = vmatprep.subr.mxu0 0.0
          %778 = vmatpush1.msra.mxu0 %v745
          %779 = vmatprep.subr.mxu0 0.0
          %780 = vmatpush1.msra.mxu0 %v746
          %781 = vmatprep.subr.mxu0 0.0
          %782 = vmatpush1.msra.mxu0 %v747
          %783 = vmatprep.subr.mxu0 0.0
          %784 = vmatpush1.msra.mxu0 %v748
          %785 = vmatprep.subr.mxu0 0.0
          %786 = vmatpush1.msra.mxu0 0.0
          %787 = vmatprep.subr.mxu0 0.0
          %788 = vmatpush1.msra.mxu0 0.0
          %789 = vmatprep.subr.mxu0 0.0
          %790 = vmatpush1.msra.mxu0 0.0
          %791 = vmatprep.subr.mxu0 0.0
          %792 = vmatpush1.msra.mxu0 0.0
          %793 = vmatprep.subr.mxu0 0.0
          %794 = vmatpush1.msra.mxu0 0.0
          %795 = vmatprep.subr.mxu0 0.0
          %796 = vmatpush1.msra.mxu0 0.0
          %797 = vmatprep.subr.mxu0 0.0
          %798 = vmatpush1.msra.mxu0 0.0
          %799 = vmatprep.subr.mxu0 0.0
          %800 = vmatpush1.msra.mxu0 0.0
          %801 = vmatprep.subr.mxu0 0.0
          %802 = vmatpush1.msra.mxu0 0.0
          %803 = vmatprep.subr.mxu0 0.0
          %804 = vmatpush1.msra.mxu0 0.0
          %805 = vmatprep.subr.mxu0 0.0
          %806 = vmatpush1.msra.mxu0 0.0
          %807 = vmatprep.subr.mxu0 0.0
          %808 = vmatpush1.msra.mxu0 0.0
          %809 = vmatprep.subr.mxu0 0.0
          %810 = vmatpush1.msra.mxu0 0.0
          %811 = vmatprep.subr.mxu0 0.0
          %812 = vmatpush1.msra.mxu0 0.0
          %813 = vmatprep.subr.mxu0 0.0
          %814 = vmatpush1.msra.mxu0 0.0
          %815 = vmatprep.subr.mxu0 0.0
          %816 = vmatpush1.msra.mxu0 0.0
          %817 = vmatprep.subr.mxu0 0.0
          %818 = vmatpush1.msra.mxu0 0.0
          %819 = vmatprep.subr.mxu0 0.0
          %820 = vmatpush1.msra.mxu0 0.0
          %821 = vmatprep.subr.mxu0 0.0
          %822 = vmatpush1.msra.mxu0 0.0
          %823 = vmatprep.subr.mxu0 0.0
          %824 = vmatpush1.msra.mxu0 0.0
          %825 = vmatprep.subr.mxu0 0.0
          %826 = vmatpush1.msra.mxu0 0.0
          %827 = vmatprep.subr.mxu0 0.0
          %828 = vmatpush1.msra.mxu0 0.0
          %829 = vmatprep.subr.mxu0 0.0
          %830 = vmatpush1.msra.mxu0 0.0
          %831 = vmatprep.subr.mxu0 0.0
          %832 = vmatpush1.msra.mxu0 0.0
          %833 = vmatprep.mubr.f32.mxu0 0.0
          %834 = vmatmul.mubr.f32.gmra.mrb[0].mxu0 %v758
          %v835 = vpop.f32.mrb[0].mxu0
          %v836 = vadd.f32 %v754, %v835
          %v837 = vpop.f32.mrb[0].mxu0
          %838 = vmatprep.mubr.f32.mxu0 0.0
          %839 = vmatmul.mubr.f32.gmra.mrb[0].mxu0 %v761
          %v840 = vpop.f32.mrb[0].mxu0
          %v841 = vadd.f32 %v754, %v840
          %v842 = vpop.f32.mrb[0].mxu0
          %843 = vmatprep.mubr.f32.mxu0 0.0
          %844 = vmatmul.mubr.f32.gmra.mrb[0].mxu0 %v764
          %v845 = vpop.f32.mrb[0].mxu0
          %v846 = vadd.f32 %v754, %v845
          %v847 = vpop.f32.mrb[0].mxu0
          %848 = vmatprep.mubr.f32.mxu0 0.0
          %849 = vmatmul.mubr.f32.gmra.mrb[0].mxu0 %v767
          %v850 = vpop.f32.mrb[0].mxu0
          %v851 = vadd.f32 %v754, %v850
          %v852 = vpop.f32.mrb[0].mxu0
          %853 = vdwg.mxu0
          %v854 = vld [vmem:[%s3] sm:$0x1]
          %v855 = vld [vmem:[%s4] sm:$0x1]
          %v856 = vadd.f32 %v854, %v855
          %vm857 = vcmask 253952
          %858 = vst.msk [vmem:[#allocation2] sm:$0x1] %vm857, %v856
          %859 = vst.msk [vmem:[#allocation2 + $0x18] sm:$0x1] %vm857, %v856
          %v860 = vld [vmem:[%s4 + $0x1] sm:$0xff]
          %v861 = vld [vmem:[%s4 + $0x9] sm:$0xff]
          %v862 = vadd.f32 %v836, %v860
          %v863 = vadd.f32 %v841, %v861
          %v864 = vadd.f32 %v846, %v860
          %v865 = vadd.f32 %v851, %v861
          %vm866 = vcmask 261120
          %867 = vst.msk [vmem:[#allocation2 + $0x1] sm:$0xff] %vm866, %v862
          %868 = vst.msk [vmem:[#allocation2 + $0x9] sm:$0xff] %vm866, %v863
          %869 = vst.msk [vmem:[#allocation2 + $0x19] sm:$0xff] %vm866, %v864
          %870 = vst.msk [vmem:[#allocation2 + $0x21] sm:$0xff] %vm866, %v865
        $region100: #{vision_transformer_forward.1} parent=95 // pred_fallthru
          _
        %v871 = vld [vmem:[#allocation2] sm:$0xff]
        %v872 = vld [vmem:[#allocation2 + $0x8] sm:$0xff]
        %v873 = vld [vmem:[#allocation2 + $0x10] sm:$0x1]
        %v874 = vld [vmem:[#allocation2 + $0x18] sm:$0xff]
        %v875 = vld [vmem:[#allocation2 + $0x20] sm:$0xff]
        %v876 = vld [vmem:[#allocation2 + $0x28] sm:$0x1]
        %v877 = vld [vmem:[%s697] sm:$0x1]
        %v879 = vlaneseq
        %v880 = vshrl.u32 %v879, 7
        %v881 = vsub.s32 0, %v880
        %v882 = vrot.slane %v877, %v881
        %v884 = vld [vmem:[%s700] sm:$0x1]
        %v886 = vlaneseq
        %v887 = vshrl.u32 %v886, 7
        %v888 = vsub.s32 0, %v887
        %v889 = vrot.slane %v884, %v888
        %vm891 = vcmask 261120
        %v892 = vsel %vm891, %v871, 0.0
        %893 = vadd.xlane.f32.xlu0 %v892
        %v894 = vpop.xlane.xlu0 %893
        %v895 = vsel %vm891, %v872, 0.0
        %896 = vadd.xlane.f32.xlu0 %v895
        %v897 = vpop.xlane.xlu0 %896
        %vm898 = vcmask 253952
        %v899 = vsel %vm898, %v873, 0.0
        %900 = vadd.xlane.f32.xlu0 %v899
        %v901 = vpop.xlane.xlu0 %900
        %v902 = vsel %vm891, %v874, 0.0
        %903 = vadd.xlane.f32.xlu0 %v902
        %v904 = vpop.xlane.xlu0 %903
        %v905 = vsel %vm891, %v875, 0.0
        %906 = vadd.xlane.f32.xlu0 %v905
        %v907 = vpop.xlane.xlu0 %906
        %v908 = vsel %vm898, %v876, 0.0
        %909 = vadd.xlane.f32.xlu0 %v908
        %v910 = vpop.xlane.xlu0 %909
        %v911 = vrcp.pop 32.0
        %v912 = vmul.f32 %v894, %v911
        %v913 = vmul.f32 %v897, %v911
        %v914 = vmul.f32 %v901, %v911
        %v915 = vmul.f32 %v904, %v911
        %v916 = vmul.f32 %v907, %v911
        %v917 = vmul.f32 %v910, %v911
        %v918 = vsub.f32 %v871, %v912
        %v919 = vsub.f32 %v872, %v913
        %v920 = vsub.f32 %v873, %v914
        %v921 = vsub.f32 %v874, %v915
        %v922 = vsub.f32 %v875, %v916
        %v923 = vsub.f32 %v876, %v917
        %v924 = vmul.f32 %v918, %v918
        %v925 = vmul.f32 %v919, %v919
        %v926 = vmul.f32 %v920, %v920
        %v927 = vmul.f32 %v921, %v921
        %v928 = vmul.f32 %v922, %v922
        %v929 = vmul.f32 %v923, %v923
        %v930 = vsel %vm891, %v924, 0.0
        %931 = vadd.xlane.f32.xlu0 %v930
        %v932 = vpop.xlane.xlu0 %931
        %v933 = vsel %vm891, %v925, 0.0
        %934 = vadd.xlane.f32.xlu0 %v933
        %v935 = vpop.xlane.xlu0 %934
        %v936 = vsel %vm898, %v926, 0.0
        %937 = vadd.xlane.f32.xlu0 %v936
        %v938 = vpop.xlane.xlu0 %937
        %v939 = vsel %vm891, %v927, 0.0
        %940 = vadd.xlane.f32.xlu0 %v939
        %v941 = vpop.xlane.xlu0 %940
        %v942 = vsel %vm891, %v928, 0.0
        %943 = vadd.xlane.f32.xlu0 %v942
        %v944 = vpop.xlane.xlu0 %943
        %v945 = vsel %vm898, %v929, 0.0
        %946 = vadd.xlane.f32.xlu0 %v945
        %v947 = vpop.xlane.xlu0 %946
        %v948 = vmul.f32 %v932, %v911
        %v949 = vmul.f32 %v935, %v911
        %v950 = vmul.f32 %v938, %v911
        %v951 = vmul.f32 %v941, %v911
        %v952 = vmul.f32 %v944, %v911
        %v953 = vmul.f32 %v947, %v911
        %v954 = vadd.f32 %v948, 1e-05
        %v955 = vadd.f32 %v949, 1e-05
        %v956 = vadd.f32 %v950, 1e-05
        %v957 = vadd.f32 %v951, 1e-05
        %v958 = vadd.f32 %v952, 1e-05
        %v959 = vadd.f32 %v953, 1e-05
        %v960 = vrsqrt.pop %v954
        %v961 = vrsqrt.pop %v955
        %v962 = vrsqrt.pop %v956
        %v963 = vrsqrt.pop %v957
        %v964 = vrsqrt.pop %v958
        %v965 = vrsqrt.pop %v959
        %v966 = vmul.f32 %v918, %v960
        %v967 = vmul.f32 %v919, %v961
        %v968 = vmul.f32 %v920, %v962
        %v969 = vmul.f32 %v921, %v963
        %v970 = vmul.f32 %v922, %v964
        %v971 = vmul.f32 %v923, %v965
        %v972 = vmul.f32 %v966, %v882
        %v973 = vmul.f32 %v967, %v882
        %v974 = vmul.f32 %v968, %v882
        %v975 = vmul.f32 %v969, %v882
        %v976 = vmul.f32 %v970, %v882
        %v977 = vmul.f32 %v971, %v882
        %v978 = vadd.f32 %v972, %v889
        %v979 = vadd.f32 %v973, %v889
        %v980 = vadd.f32 %v974, %v889
        %v981 = vadd.f32 %v975, %v889
        %v982 = vadd.f32 %v976, %v889
        %v983 = vadd.f32 %v977, %v889
        %v984 = vld [vmem:[%s705] sm:$0xff]
        %v985 = vld [vmem:[%s705 + $0x8] sm:$0xff]
        %v986 = vld [vmem:[%s705 + $0x10] sm:$0xff]
        %v987 = vld [vmem:[%s705 + $0x18] sm:$0xff]
        %v988 = vld [vmem:[%s708] sm:$0x1]
        %v990 = vlaneseq
        %v991 = vshrl.u32 %v990, 7
        %v992 = vsub.s32 0, %v991
        %v993 = vrot.slane %v988, %v992
        %v1000 = vcombine.high %v978, %v978
        %v1002 = vunpack.c.l.s4 1966171168
        %v1003 = vunpack.c.0.s8 %v1002
        %v1004 = vlaneseq
        %v1005 = vshrl.u32 %v1004, 7
        %v1006 = vsub.s32 %v1003, %v1005
        %v1007 = vrot.slane %v978, %v1006
        %v1009 = vunpack.c.l.s4 1966171168
        %v1010 = vunpack.c.0.s8 %v1009
        %v1011 = vlaneseq
        %v1012 = vshrl.u32 %v1011, 7
        %v1013 = vsub.s32 %v1010, %v1012
        %v1014 = vrot.slane %v1000, %v1013
        %v1015 = vcombine.high %v1007, %v1007
        %v1016 = vcombine.high %v1014, %v1014
        %v1018 = vunpack.c.l.s4 1966171168
        %v1019 = vunpack.c.0.s8 %v1018
        %v1020 = vlaneseq
        %v1021 = vshrl.u32 %v1020, 7
        %v1022 = vsub.s32 %v1019, %v1021
        %v1023 = vrot.slane %v1007, %v1022
        %v1025 = vunpack.c.l.s4 1966171168
        %v1026 = vunpack.c.0.s8 %v1025
        %v1027 = vlaneseq
        %v1028 = vshrl.u32 %v1027, 7
        %v1029 = vsub.s32 %v1026, %v1028
        %v1030 = vrot.slane %v1014, %v1029
        %v1032 = vunpack.c.l.s4 1966171168
        %v1033 = vunpack.c.0.s8 %v1032
        %v1034 = vlaneseq
        %v1035 = vshrl.u32 %v1034, 7
        %v1036 = vsub.s32 %v1033, %v1035
        %v1037 = vrot.slane %v1015, %v1036
        %v1039 = vunpack.c.l.s4 1966171168
        %v1040 = vunpack.c.0.s8 %v1039
        %v1041 = vlaneseq
        %v1042 = vshrl.u32 %v1041, 7
        %v1043 = vsub.s32 %v1040, %v1042
        %v1044 = vrot.slane %v1016, %v1043
        %v1045 = vcombine.high %v1023, %v1023
        %v1046 = vcombine.high %v1030, %v1030
        %v1047 = vcombine.high %v1037, %v1037
        %v1048 = vcombine.high %v1044, %v1044
        %v1049 = vcombine.high %v979, %v979
        %v1051 = vunpack.c.l.s4 1966171168
        %v1052 = vunpack.c.0.s8 %v1051
        %v1053 = vlaneseq
        %v1054 = vshrl.u32 %v1053, 7
        %v1055 = vsub.s32 %v1052, %v1054
        %v1056 = vrot.slane %v979, %v1055
        %v1058 = vunpack.c.l.s4 1966171168
        %v1059 = vunpack.c.0.s8 %v1058
        %v1060 = vlaneseq
        %v1061 = vshrl.u32 %v1060, 7
        %v1062 = vsub.s32 %v1059, %v1061
        %v1063 = vrot.slane %v1049, %v1062
        %v1064 = vcombine.high %v1056, %v1056
        %v1065 = vcombine.high %v1063, %v1063
        %v1067 = vunpack.c.l.s4 1966171168
        %v1068 = vunpack.c.0.s8 %v1067
        %v1069 = vlaneseq
        %v1070 = vshrl.u32 %v1069, 7
        %v1071 = vsub.s32 %v1068, %v1070
        %v1072 = vrot.slane %v1056, %v1071
        %v1074 = vunpack.c.l.s4 1966171168
        %v1075 = vunpack.c.0.s8 %v1074
        %v1076 = vlaneseq
        %v1077 = vshrl.u32 %v1076, 7
        %v1078 = vsub.s32 %v1075, %v1077
        %v1079 = vrot.slane %v1063, %v1078
        %v1081 = vunpack.c.l.s4 1966171168
        %v1082 = vunpack.c.0.s8 %v1081
        %v1083 = vlaneseq
        %v1084 = vshrl.u32 %v1083, 7
        %v1085 = vsub.s32 %v1082, %v1084
        %v1086 = vrot.slane %v1064, %v1085
        %v1088 = vunpack.c.l.s4 1966171168
        %v1089 = vunpack.c.0.s8 %v1088
        %v1090 = vlaneseq
        %v1091 = vshrl.u32 %v1090, 7
        %v1092 = vsub.s32 %v1089, %v1091
        %v1093 = vrot.slane %v1065, %v1092
        %v1094 = vcombine.high %v1072, %v1072
        %v1095 = vcombine.high %v1079, %v1079
        %v1096 = vcombine.high %v1086, %v1086
        %v1097 = vcombine.high %v1093, %v1093
        %v1099 = vunpack.c.l.s4 1966171168
        %v1100 = vunpack.c.0.s8 %v1099
        %v1101 = vlaneseq
        %v1102 = vshrl.u32 %v1101, 7
        %v1103 = vsub.s32 %v1100, %v1102
        %v1104 = vrot.slane %v980, %v1103
        %v1106 = vunpack.c.l.s4 1966171168
        %v1107 = vunpack.c.0.s8 %v1106
        %v1108 = vlaneseq
        %v1109 = vshrl.u32 %v1108, 7
        %v1110 = vsub.s32 %v1107, %v1109
        %v1111 = vrot.slane %v1104, %v1110
        %v1112 = vcombine.high %v981, %v981
        %v1114 = vunpack.c.l.s4 1966171168
        %v1115 = vunpack.c.0.s8 %v1114
        %v1116 = vlaneseq
        %v1117 = vshrl.u32 %v1116, 7
        %v1118 = vsub.s32 %v1115, %v1117
        %v1119 = vrot.slane %v981, %v1118
        %v1121 = vunpack.c.l.s4 1966171168
        %v1122 = vunpack.c.0.s8 %v1121
        %v1123 = vlaneseq
        %v1124 = vshrl.u32 %v1123, 7
        %v1125 = vsub.s32 %v1122, %v1124
        %v1126 = vrot.slane %v1112, %v1125
        %v1127 = vcombine.high %v1119, %v1119
        %v1128 = vcombine.high %v1126, %v1126
        %v1130 = vunpack.c.l.s4 1966171168
        %v1131 = vunpack.c.0.s8 %v1130
        %v1132 = vlaneseq
        %v1133 = vshrl.u32 %v1132, 7
        %v1134 = vsub.s32 %v1131, %v1133
        %v1135 = vrot.slane %v1119, %v1134
        %v1137 = vunpack.c.l.s4 1966171168
        %v1138 = vunpack.c.0.s8 %v1137
        %v1139 = vlaneseq
        %v1140 = vshrl.u32 %v1139, 7
        %v1141 = vsub.s32 %v1138, %v1140
        %v1142 = vrot.slane %v1126, %v1141
        %v1144 = vunpack.c.l.s4 1966171168
        %v1145 = vunpack.c.0.s8 %v1144
        %v1146 = vlaneseq
        %v1147 = vshrl.u32 %v1146, 7
        %v1148 = vsub.s32 %v1145, %v1147
        %v1149 = vrot.slane %v1127, %v1148
        %v1151 = vunpack.c.l.s4 1966171168
        %v1152 = vunpack.c.0.s8 %v1151
        %v1153 = vlaneseq
        %v1154 = vshrl.u32 %v1153, 7
        %v1155 = vsub.s32 %v1152, %v1154
        %v1156 = vrot.slane %v1128, %v1155
        %v1157 = vcombine.high %v1135, %v1135
        %v1158 = vcombine.high %v1142, %v1142
        %v1159 = vcombine.high %v1149, %v1149
        %v1160 = vcombine.high %v1156, %v1156
        %v1161 = vcombine.high %v982, %v982
        %v1163 = vunpack.c.l.s4 1966171168
        %v1164 = vunpack.c.0.s8 %v1163
        %v1165 = vlaneseq
        %v1166 = vshrl.u32 %v1165, 7
        %v1167 = vsub.s32 %v1164, %v1166
        %v1168 = vrot.slane %v982, %v1167
        %v1170 = vunpack.c.l.s4 1966171168
        %v1171 = vunpack.c.0.s8 %v1170
        %v1172 = vlaneseq
        %v1173 = vshrl.u32 %v1172, 7
        %v1174 = vsub.s32 %v1171, %v1173
        %v1175 = vrot.slane %v1161, %v1174
        %v1176 = vcombine.high %v1168, %v1168
        %v1177 = vcombine.high %v1175, %v1175
        %v1179 = vunpack.c.l.s4 1966171168
        %v1180 = vunpack.c.0.s8 %v1179
        %v1181 = vlaneseq
        %v1182 = vshrl.u32 %v1181, 7
        %v1183 = vsub.s32 %v1180, %v1182
        %v1184 = vrot.slane %v1168, %v1183
        %v1186 = vunpack.c.l.s4 1966171168
        %v1187 = vunpack.c.0.s8 %v1186
        %v1188 = vlaneseq
        %v1189 = vshrl.u32 %v1188, 7
        %v1190 = vsub.s32 %v1187, %v1189
        %v1191 = vrot.slane %v1175, %v1190
        %v1193 = vunpack.c.l.s4 1966171168
        %v1194 = vunpack.c.0.s8 %v1193
        %v1195 = vlaneseq
        %v1196 = vshrl.u32 %v1195, 7
        %v1197 = vsub.s32 %v1194, %v1196
        %v1198 = vrot.slane %v1176, %v1197
        %v1200 = vunpack.c.l.s4 1966171168
        %v1201 = vunpack.c.0.s8 %v1200
        %v1202 = vlaneseq
        %v1203 = vshrl.u32 %v1202, 7
        %v1204 = vsub.s32 %v1201, %v1203
        %v1205 = vrot.slane %v1177, %v1204
        %v1206 = vcombine.high %v1184, %v1184
        %v1207 = vcombine.high %v1191, %v1191
        %v1208 = vcombine.high %v1198, %v1198
        %v1209 = vcombine.high %v1205, %v1205
        %v1211 = vunpack.c.l.s4 1966171168
        %v1212 = vunpack.c.0.s8 %v1211
        %v1213 = vlaneseq
        %v1214 = vshrl.u32 %v1213, 7
        %v1215 = vsub.s32 %v1212, %v1214
        %v1216 = vrot.slane %v983, %v1215
        %v1218 = vunpack.c.l.s4 1966171168
        %v1219 = vunpack.c.0.s8 %v1218
        %v1220 = vlaneseq
        %v1221 = vshrl.u32 %v1220, 7
        %v1222 = vsub.s32 %v1219, %v1221
        %v1223 = vrot.slane %v1216, %v1222
        %v1224 = vcombine.high %v993, %v993
        %v1226 = vunpack.c.l.s4 1966171168
        %v1227 = vunpack.c.0.s8 %v1226
        %v1228 = vlaneseq
        %v1229 = vshrl.u32 %v1228, 7
        %v1230 = vsub.s32 %v1227, %v1229
        %v1231 = vrot.slane %v993, %v1230
        %v1233 = vunpack.c.l.s4 1966171168
        %v1234 = vunpack.c.0.s8 %v1233
        %v1235 = vlaneseq
        %v1236 = vshrl.u32 %v1235, 7
        %v1237 = vsub.s32 %v1234, %v1236
        %v1238 = vrot.slane %v1224, %v1237
        %v1239 = vcombine.high %v1231, %v1231
        %v1240 = vcombine.high %v1238, %v1238
        %v1242 = vunpack.c.l.s4 1966171168
        %v1243 = vunpack.c.0.s8 %v1242
        %v1244 = vlaneseq
        %v1245 = vshrl.u32 %v1244, 7
        %v1246 = vsub.s32 %v1243, %v1245
        %v1247 = vrot.slane %v1231, %v1246
        %v1249 = vunpack.c.l.s4 1966171168
        %v1250 = vunpack.c.0.s8 %v1249
        %v1251 = vlaneseq
        %v1252 = vshrl.u32 %v1251, 7
        %v1253 = vsub.s32 %v1250, %v1252
        %v1254 = vrot.slane %v1238, %v1253
        %v1256 = vunpack.c.l.s4 1966171168
        %v1257 = vunpack.c.0.s8 %v1256
        %v1258 = vlaneseq
        %v1259 = vshrl.u32 %v1258, 7
        %v1260 = vsub.s32 %v1257, %v1259
        %v1261 = vrot.slane %v1239, %v1260
        %v1263 = vunpack.c.l.s4 1966171168
        %v1264 = vunpack.c.0.s8 %v1263
        %v1265 = vlaneseq
        %v1266 = vshrl.u32 %v1265, 7
        %v1267 = vsub.s32 %v1264, %v1266
        %v1268 = vrot.slane %v1240, %v1267
        %v1269 = vcombine.high %v1247, %v1247
        %v1270 = vcombine.high %v1254, %v1254
        %v1271 = vcombine.high %v1261, %v1261
        %v1272 = vcombine.high %v1268, %v1268
        %v1273 = vcombine.low %v1023, %v1037
        %v1274 = vcombine.low %v1045, %v1047
        %v1275 = vcombine.low %v1030, %v1044
        %v1276 = vcombine.low %v1046, %v1048
        %v1278 = vunpack.c.l.s4 1966171168
        %v1279 = vunpack.c.0.s8 %v1278
        %v1280 = vlaneseq
        %v1281 = vshrl.u32 %v1280, 7
        %v1282 = vsub.s32 %v1279, %v1281
        %v1283 = vrot.slane %v1273, %v1282
        %v1285 = vunpack.c.l.s4 1966171168
        %v1286 = vunpack.c.0.s8 %v1285
        %v1287 = vlaneseq
        %v1288 = vshrl.u32 %v1287, 7
        %v1289 = vsub.s32 %v1286, %v1288
        %v1290 = vrot.slane %v1274, %v1289
        %v1292 = vunpack.c.l.s4 1966171168
        %v1293 = vunpack.c.0.s8 %v1292
        %v1294 = vlaneseq
        %v1295 = vshrl.u32 %v1294, 7
        %v1296 = vsub.s32 %v1293, %v1295
        %v1297 = vrot.slane %v1275, %v1296
        %v1299 = vunpack.c.l.s4 1966171168
        %v1300 = vunpack.c.0.s8 %v1299
        %v1301 = vlaneseq
        %v1302 = vshrl.u32 %v1301, 7
        %v1303 = vsub.s32 %v1300, %v1302
        %v1304 = vrot.slane %v1276, %v1303
        %v1305 = vcombine.low %v1283, %v1290
        %v1306 = vcombine.low %v1297, %v1304
        %v1308 = vunpack.c.l.s4 1966171168
        %v1309 = vunpack.c.0.s8 %v1308
        %v1310 = vlaneseq
        %v1311 = vshrl.u32 %v1310, 7
        %v1312 = vsub.s32 %v1309, %v1311
        %v1313 = vrot.slane %v1305, %v1312
        %v1315 = vunpack.c.l.s4 1966171168
        %v1316 = vunpack.c.0.s8 %v1315
        %v1317 = vlaneseq
        %v1318 = vshrl.u32 %v1317, 7
        %v1319 = vsub.s32 %v1316, %v1318
        %v1320 = vrot.slane %v1306, %v1319
        %v1321 = vcombine.low %v1313, %v1320
        %v1322 = vcombine.low %v1072, %v1086
        %v1323 = vcombine.low %v1094, %v1096
        %v1324 = vcombine.low %v1079, %v1093
        %v1325 = vcombine.low %v1095, %v1097
        %v1327 = vunpack.c.l.s4 1966171168
        %v1328 = vunpack.c.0.s8 %v1327
        %v1329 = vlaneseq
        %v1330 = vshrl.u32 %v1329, 7
        %v1331 = vsub.s32 %v1328, %v1330
        %v1332 = vrot.slane %v1322, %v1331
        %v1334 = vunpack.c.l.s4 1966171168
        %v1335 = vunpack.c.0.s8 %v1334
        %v1336 = vlaneseq
        %v1337 = vshrl.u32 %v1336, 7
        %v1338 = vsub.s32 %v1335, %v1337
        %v1339 = vrot.slane %v1323, %v1338
        %v1341 = vunpack.c.l.s4 1966171168
        %v1342 = vunpack.c.0.s8 %v1341
        %v1343 = vlaneseq
        %v1344 = vshrl.u32 %v1343, 7
        %v1345 = vsub.s32 %v1342, %v1344
        %v1346 = vrot.slane %v1324, %v1345
        %v1348 = vunpack.c.l.s4 1966171168
        %v1349 = vunpack.c.0.s8 %v1348
        %v1350 = vlaneseq
        %v1351 = vshrl.u32 %v1350, 7
        %v1352 = vsub.s32 %v1349, %v1351
        %v1353 = vrot.slane %v1325, %v1352
        %v1354 = vcombine.low %v1332, %v1339
        %v1355 = vcombine.low %v1346, %v1353
        %v1357 = vunpack.c.l.s4 1966171168
        %v1358 = vunpack.c.0.s8 %v1357
        %v1359 = vlaneseq
        %v1360 = vshrl.u32 %v1359, 7
        %v1361 = vsub.s32 %v1358, %v1360
        %v1362 = vrot.slane %v1354, %v1361
        %v1364 = vunpack.c.l.s4 1966171168
        %v1365 = vunpack.c.0.s8 %v1364
        %v1366 = vlaneseq
        %v1367 = vshrl.u32 %v1366, 7
        %v1368 = vsub.s32 %v1365, %v1367
        %v1369 = vrot.slane %v1355, %v1368
        %v1370 = vcombine.low %v1362, %v1369
        %v1371 = vcombine.low %v1111, %v1135
        %v1372 = vcombine.low %v1149, %v1157
        %v1373 = vcombine.low %v1159, %v1142
        %v1374 = vcombine.low %v1156, %v1158
        %v1376 = vunpack.c.l.s4 1966171168
        %v1377 = vunpack.c.0.s8 %v1376
        %v1378 = vlaneseq
        %v1379 = vshrl.u32 %v1378, 7
        %v1380 = vsub.s32 %v1377, %v1379
        %v1381 = vrot.slane %v1371, %v1380
        %v1383 = vunpack.c.l.s4 1966171168
        %v1384 = vunpack.c.0.s8 %v1383
        %v1385 = vlaneseq
        %v1386 = vshrl.u32 %v1385, 7
        %v1387 = vsub.s32 %v1384, %v1386
        %v1388 = vrot.slane %v1372, %v1387
        %v1390 = vunpack.c.l.s4 1966171168
        %v1391 = vunpack.c.0.s8 %v1390
        %v1392 = vlaneseq
        %v1393 = vshrl.u32 %v1392, 7
        %v1394 = vsub.s32 %v1391, %v1393
        %v1395 = vrot.slane %v1373, %v1394
        %v1397 = vunpack.c.l.s4 1966171168
        %v1398 = vunpack.c.0.s8 %v1397
        %v1399 = vlaneseq
        %v1400 = vshrl.u32 %v1399, 7
        %v1401 = vsub.s32 %v1398, %v1400
        %v1402 = vrot.slane %v1374, %v1401
        %v1403 = vcombine.low %v1381, %v1388
        %v1404 = vcombine.low %v1395, %v1402
        %v1406 = vunpack.c.l.s4 1966171168
        %v1407 = vunpack.c.0.s8 %v1406
        %v1408 = vlaneseq
        %v1409 = vshrl.u32 %v1408, 7
        %v1410 = vsub.s32 %v1407, %v1409
        %v1411 = vrot.slane %v1403, %v1410
        %v1413 = vunpack.c.l.s4 1966171168
        %v1414 = vunpack.c.0.s8 %v1413
        %v1415 = vlaneseq
        %v1416 = vshrl.u32 %v1415, 7
        %v1417 = vsub.s32 %v1414, %v1416
        %v1418 = vrot.slane %v1404, %v1417
        %v1419 = vcombine.low %v1411, %v1418
        %v1420 = vcombine.low %v1160, %v1184
        %v1421 = vcombine.low %v1198, %v1206
        %v1422 = vcombine.low %v1208, %v1191
        %v1423 = vcombine.low %v1205, %v1207
        %v1425 = vunpack.c.l.s4 1966171168
        %v1426 = vunpack.c.0.s8 %v1425
        %v1427 = vlaneseq
        %v1428 = vshrl.u32 %v1427, 7
        %v1429 = vsub.s32 %v1426, %v1428
        %v1430 = vrot.slane %v1420, %v1429
        %v1432 = vunpack.c.l.s4 1966171168
        %v1433 = vunpack.c.0.s8 %v1432
        %v1434 = vlaneseq
        %v1435 = vshrl.u32 %v1434, 7
        %v1436 = vsub.s32 %v1433, %v1435
        %v1437 = vrot.slane %v1421, %v1436
        %v1439 = vunpack.c.l.s4 1966171168
        %v1440 = vunpack.c.0.s8 %v1439
        %v1441 = vlaneseq
        %v1442 = vshrl.u32 %v1441, 7
        %v1443 = vsub.s32 %v1440, %v1442
        %v1444 = vrot.slane %v1422, %v1443
        %v1446 = vunpack.c.l.s4 1966171168
        %v1447 = vunpack.c.0.s8 %v1446
        %v1448 = vlaneseq
        %v1449 = vshrl.u32 %v1448, 7
        %v1450 = vsub.s32 %v1447, %v1449
        %v1451 = vrot.slane %v1423, %v1450
        %v1452 = vcombine.low %v1430, %v1437
        %v1453 = vcombine.low %v1444, %v1451
        %v1455 = vunpack.c.l.s4 1966171168
        %v1456 = vunpack.c.0.s8 %v1455
        %v1457 = vlaneseq
        %v1458 = vshrl.u32 %v1457, 7
        %v1459 = vsub.s32 %v1456, %v1458
        %v1460 = vrot.slane %v1452, %v1459
        %v1462 = vunpack.c.l.s4 1966171168
        %v1463 = vunpack.c.0.s8 %v1462
        %v1464 = vlaneseq
        %v1465 = vshrl.u32 %v1464, 7
        %v1466 = vsub.s32 %v1463, %v1465
        %v1467 = vrot.slane %v1453, %v1466
        %v1468 = vcombine.low %v1460, %v1467
        %v1469 = vcombine.low %v1209, %v1223
        %v1471 = vunpack.c.l.s4 1966171168
        %v1472 = vunpack.c.0.s8 %v1471
        %v1473 = vlaneseq
        %v1474 = vshrl.u32 %v1473, 7
        %v1475 = vsub.s32 %v1472, %v1474
        %v1476 = vrot.slane %v1469, %v1475
        %v1478 = vunpack.c.l.s4 1966171168
        %v1479 = vunpack.c.0.s8 %v1478
        %v1480 = vlaneseq
        %v1481 = vshrl.u32 %v1480, 7
        %v1482 = vsub.s32 %v1479, %v1481
        %v1483 = vrot.slane %v1476, %v1482
        %v1484 = vcombine.low %v1247, %v1261
        %v1485 = vcombine.low %v1269, %v1271
        %v1486 = vcombine.low %v1254, %v1268
        %v1487 = vcombine.low %v1270, %v1272
        %v1489 = vunpack.c.l.s4 1966171168
        %v1490 = vunpack.c.0.s8 %v1489
        %v1491 = vlaneseq
        %v1492 = vshrl.u32 %v1491, 7
        %v1493 = vsub.s32 %v1490, %v1492
        %v1494 = vrot.slane %v1484, %v1493
        %v1496 = vunpack.c.l.s4 1966171168
        %v1497 = vunpack.c.0.s8 %v1496
        %v1498 = vlaneseq
        %v1499 = vshrl.u32 %v1498, 7
        %v1500 = vsub.s32 %v1497, %v1499
        %v1501 = vrot.slane %v1485, %v1500
        %v1503 = vunpack.c.l.s4 1966171168
        %v1504 = vunpack.c.0.s8 %v1503
        %v1505 = vlaneseq
        %v1506 = vshrl.u32 %v1505, 7
        %v1507 = vsub.s32 %v1504, %v1506
        %v1508 = vrot.slane %v1486, %v1507
        %v1510 = vunpack.c.l.s4 1966171168
        %v1511 = vunpack.c.0.s8 %v1510
        %v1512 = vlaneseq
        %v1513 = vshrl.u32 %v1512, 7
        %v1514 = vsub.s32 %v1511, %v1513
        %v1515 = vrot.slane %v1487, %v1514
        %v1516 = vcombine.low %v1494, %v1501
        %v1517 = vcombine.low %v1508, %v1515
        %v1519 = vunpack.c.l.s4 1966171168
        %v1520 = vunpack.c.0.s8 %v1519
        %v1521 = vlaneseq
        %v1522 = vshrl.u32 %v1521, 7
        %v1523 = vsub.s32 %v1520, %v1522
        %v1524 = vrot.slane %v1516, %v1523
        %v1526 = vunpack.c.l.s4 1966171168
        %v1527 = vunpack.c.0.s8 %v1526
        %v1528 = vlaneseq
        %v1529 = vshrl.u32 %v1528, 7
        %v1530 = vsub.s32 %v1527, %v1529
        %v1531 = vrot.slane %v1517, %v1530
        %v1532 = vcombine.low %v1524, %v1531
        %v1533 = vcombine.low %v1247, %v1247
        %v1534 = vcombine.low %v1261, %v1269
        %v1535 = vcombine.low %v1271, %v1254
        %v1536 = vcombine.low %v1268, %v1270
        %v1538 = vunpack.c.l.s4 1966171168
        %v1539 = vunpack.c.0.s8 %v1538
        %v1540 = vlaneseq
        %v1541 = vshrl.u32 %v1540, 7
        %v1542 = vsub.s32 %v1539, %v1541
        %v1543 = vrot.slane %v1533, %v1542
        %v1545 = vunpack.c.l.s4 1966171168
        %v1546 = vunpack.c.0.s8 %v1545
        %v1547 = vlaneseq
        %v1548 = vshrl.u32 %v1547, 7
        %v1549 = vsub.s32 %v1546, %v1548
        %v1550 = vrot.slane %v1534, %v1549
        %v1552 = vunpack.c.l.s4 1966171168
        %v1553 = vunpack.c.0.s8 %v1552
        %v1554 = vlaneseq
        %v1555 = vshrl.u32 %v1554, 7
        %v1556 = vsub.s32 %v1553, %v1555
        %v1557 = vrot.slane %v1535, %v1556
        %v1559 = vunpack.c.l.s4 1966171168
        %v1560 = vunpack.c.0.s8 %v1559
        %v1561 = vlaneseq
        %v1562 = vshrl.u32 %v1561, 7
        %v1563 = vsub.s32 %v1560, %v1562
        %v1564 = vrot.slane %v1536, %v1563
        %v1565 = vcombine.low %v1543, %v1550
        %v1566 = vcombine.low %v1557, %v1564
        %v1568 = vunpack.c.l.s4 1966171168
        %v1569 = vunpack.c.0.s8 %v1568
        %v1570 = vlaneseq
        %v1571 = vshrl.u32 %v1570, 7
        %v1572 = vsub.s32 %v1569, %v1571
        %v1573 = vrot.slane %v1565, %v1572
        %v1575 = vunpack.c.l.s4 1966171168
        %v1576 = vunpack.c.0.s8 %v1575
        %v1577 = vlaneseq
        %v1578 = vshrl.u32 %v1577, 7
        %v1579 = vsub.s32 %v1576, %v1578
        %v1580 = vrot.slane %v1566, %v1579
        %v1581 = vcombine.low %v1573, %v1580
        %v1582 = vcombine.low %v1272, %v1247
        %v1584 = vunpack.c.l.s4 1966171168
        %v1585 = vunpack.c.0.s8 %v1584
        %v1586 = vlaneseq
        %v1587 = vshrl.u32 %v1586, 7
        %v1588 = vsub.s32 %v1585, %v1587
        %v1589 = vrot.slane %v1582, %v1588
        %v1590 = vcombine.low %v1589, %v1550
        %v1592 = vunpack.c.l.s4 1966171168
        %v1593 = vunpack.c.0.s8 %v1592
        %v1594 = vlaneseq
        %v1595 = vshrl.u32 %v1594, 7
        %v1596 = vsub.s32 %v1593, %v1595
        %v1597 = vrot.slane %v1590, %v1596
        %v1598 = vcombine.low %v1597, %v1580
        %v1600 = vunpack.c.l.s4 1966171168
        %v1601 = vunpack.c.0.s8 %v1600
        %v1602 = vlaneseq
        %v1603 = vshrl.u32 %v1602, 7
        %v1604 = vsub.s32 %v1601, %v1603
        %v1605 = vrot.slane %v1589, %v1604
        %v1610 = vsel %vm891, %v1321, 0
        %v1612 = vsel %vm891, %v1370, 0
        %v1614 = vsel %vm891, %v1419, 0
        %v1616 = vsel %vm891, %v1468, 0
        %v1618 = vsel %vm891, %v1483, 0
        %1620 = vmatprep.subr.mxu0 0.0
        %1621 = vmatpush1.msra.mxu0 %v984
        %1622 = vmatprep.subr.mxu0 0.0
        %1623 = vmatpush1.msra.mxu0 %v985
        %1624 = vmatprep.subr.mxu0 0.0
        %1625 = vmatpush1.msra.mxu0 %v986
        %1626 = vmatprep.subr.mxu0 0.0
        %1627 = vmatpush1.msra.mxu0 %v987
        %1628 = vmatprep.subr.mxu0 0.0
        %1629 = vmatpush1.msra.mxu0 0.0
        %1630 = vmatprep.subr.mxu0 0.0
        %1631 = vmatpush1.msra.mxu0 0.0
        %1632 = vmatprep.subr.mxu0 0.0
        %1633 = vmatpush1.msra.mxu0 0.0
        %1634 = vmatprep.subr.mxu0 0.0
        %1635 = vmatpush1.msra.mxu0 0.0
        %1636 = vmatprep.subr.mxu0 0.0
        %1637 = vmatpush1.msra.mxu0 0.0
        %1638 = vmatprep.subr.mxu0 0.0
        %1639 = vmatpush1.msra.mxu0 0.0
        %1640 = vmatprep.subr.mxu0 0.0
        %1641 = vmatpush1.msra.mxu0 0.0
        %1642 = vmatprep.subr.mxu0 0.0
        %1643 = vmatpush1.msra.mxu0 0.0
        %1644 = vmatprep.subr.mxu0 0.0
        %1645 = vmatpush1.msra.mxu0 0.0
        %1646 = vmatprep.subr.mxu0 0.0
        %1647 = vmatpush1.msra.mxu0 0.0
        %1648 = vmatprep.subr.mxu0 0.0
        %1649 = vmatpush1.msra.mxu0 0.0
        %1650 = vmatprep.subr.mxu0 0.0
        %1651 = vmatpush1.msra.mxu0 0.0
        %1652 = vmatprep.subr.mxu0 0.0
        %1653 = vmatpush1.msra.mxu0 0.0
        %1654 = vmatprep.subr.mxu0 0.0
        %1655 = vmatpush1.msra.mxu0 0.0
        %1656 = vmatprep.subr.mxu0 0.0
        %1657 = vmatpush1.msra.mxu0 0.0
        %1658 = vmatprep.subr.mxu0 0.0
        %1659 = vmatpush1.msra.mxu0 0.0
        %1660 = vmatprep.subr.mxu0 0.0
        %1661 = vmatpush1.msra.mxu0 0.0
        %1662 = vmatprep.subr.mxu0 0.0
        %1663 = vmatpush1.msra.mxu0 0.0
        %1664 = vmatprep.subr.mxu0 0.0
        %1665 = vmatpush1.msra.mxu0 0.0
        %1666 = vmatprep.subr.mxu0 0.0
        %1667 = vmatpush1.msra.mxu0 0.0
        %1668 = vmatprep.subr.mxu0 0.0
        %1669 = vmatpush1.msra.mxu0 0.0
        %1670 = vmatprep.subr.mxu0 0.0
        %1671 = vmatpush1.msra.mxu0 0.0
        %1672 = vmatprep.subr.mxu0 0.0
        %1673 = vmatpush1.msra.mxu0 0.0
        %1674 = vmatprep.subr.mxu0 0.0
        %1675 = vmatpush1.msra.mxu0 0.0
        %1676 = vmatprep.subr.mxu0 0.0
        %1677 = vmatpush1.msra.mxu0 0.0
        %1678 = vmatprep.subr.mxu0 0.0
        %1679 = vmatpush1.msra.mxu0 0.0
        %1680 = vmatprep.subr.mxu0 0.0
        %1681 = vmatpush1.msra.mxu0 0.0
        %1682 = vmatprep.subr.mxu0 0.0
        %1683 = vmatpush1.msra.mxu0 0.0
        %1684 = vmatprep.mubr.f32.mxu0 0.0
        %1685 = vmatmul.mubr.f32.gmra.mrb[0].mxu0 %v1610
        %v1686 = vpop.f32.mrb[0].mxu0
        %v1687 = vadd.f32 %v1532, %v1686
        %v1688 = vpop.f32.mrb[0].mxu0
        %1689 = vmatprep.mubr.f32.mxu0 0.0
        %1690 = vmatmul.mubr.f32.gmra.mrb[0].mxu0 %v1612
        %v1691 = vpop.f32.mrb[0].mxu0
        %v1692 = vadd.f32 %v1532, %v1691
        %v1693 = vpop.f32.mrb[0].mxu0
        %1694 = vmatprep.mubr.f32.mxu0 0.0
        %1695 = vmatmul.mubr.f32.gmra.mrb[0].mxu0 %v1614
        %v1696 = vpop.f32.mrb[0].mxu0
        %v1697 = vadd.f32 %v1581, %v1696
        %v1698 = vpop.f32.mrb[0].mxu0
        %1699 = vmatprep.mubr.f32.mxu0 0.0
        %1700 = vmatmul.mubr.f32.gmra.mrb[0].mxu0 %v1616
        %v1701 = vpop.f32.mrb[0].mxu0
        %v1702 = vadd.f32 %v1598, %v1701
        %v1703 = vpop.f32.mrb[0].mxu0
        %1704 = vmatprep.mubr.f32.mxu0 0.0
        %1705 = vmatmul.mubr.f32.gmra.mrb[0].mxu0 %v1618
        %v1706 = vpop.f32.mrb[0].mxu0
        %v1707 = vadd.f32 %v1605, %v1706
        %v1708 = vpop.f32.mrb[0].mxu0
        %1709 = vdwg.mxu0
        %v1715 = vcombine.high %v1687, %v1687
        %v1717 = vunpack.c.l.s4 1966171168
        %v1718 = vunpack.c.0.s8 %v1717
        %v1719 = vlaneseq
        %v1720 = vshrl.u32 %v1719, 7
        %v1721 = vsub.s32 %v1718, %v1720
        %v1722 = vrot.slane %v1687, %v1721
        %v1724 = vunpack.c.l.s4 1966171168
        %v1725 = vunpack.c.0.s8 %v1724
        %v1726 = vlaneseq
        %v1727 = vshrl.u32 %v1726, 7
        %v1728 = vsub.s32 %v1725, %v1727
        %v1729 = vrot.slane %v1715, %v1728
        %v1730 = vcombine.high %v1722, %v1722
        %v1731 = vcombine.high %v1729, %v1729
        %v1733 = vunpack.c.l.s4 1966171168
        %v1734 = vunpack.c.0.s8 %v1733
        %v1735 = vlaneseq
        %v1736 = vshrl.u32 %v1735, 7
        %v1737 = vsub.s32 %v1734, %v1736
        %v1738 = vrot.slane %v1722, %v1737
        %v1740 = vunpack.c.l.s4 1966171168
        %v1741 = vunpack.c.0.s8 %v1740
        %v1742 = vlaneseq
        %v1743 = vshrl.u32 %v1742, 7
        %v1744 = vsub.s32 %v1741, %v1743
        %v1745 = vrot.slane %v1729, %v1744
        %v1747 = vunpack.c.l.s4 1966171168
        %v1748 = vunpack.c.0.s8 %v1747
        %v1749 = vlaneseq
        %v1750 = vshrl.u32 %v1749, 7
        %v1751 = vsub.s32 %v1748, %v1750
        %v1752 = vrot.slane %v1730, %v1751
        %v1754 = vunpack.c.l.s4 1966171168
        %v1755 = vunpack.c.0.s8 %v1754
        %v1756 = vlaneseq
        %v1757 = vshrl.u32 %v1756, 7
        %v1758 = vsub.s32 %v1755, %v1757
        %v1759 = vrot.slane %v1731, %v1758
        %v1760 = vcombine.high %v1738, %v1738
        %v1761 = vcombine.high %v1745, %v1745
        %v1762 = vcombine.high %v1752, %v1752
        %v1763 = vcombine.high %v1759, %v1759
        %v1764 = vcombine.high %v1692, %v1692
        %v1766 = vunpack.c.l.s4 1966171168
        %v1767 = vunpack.c.0.s8 %v1766
        %v1768 = vlaneseq
        %v1769 = vshrl.u32 %v1768, 7
        %v1770 = vsub.s32 %v1767, %v1769
        %v1771 = vrot.slane %v1692, %v1770
        %v1773 = vunpack.c.l.s4 1966171168
        %v1774 = vunpack.c.0.s8 %v1773
        %v1775 = vlaneseq
        %v1776 = vshrl.u32 %v1775, 7
        %v1777 = vsub.s32 %v1774, %v1776
        %v1778 = vrot.slane %v1764, %v1777
        %v1779 = vcombine.high %v1771, %v1771
        %v1780 = vcombine.high %v1778, %v1778
        %v1782 = vunpack.c.l.s4 1966171168
        %v1783 = vunpack.c.0.s8 %v1782
        %v1784 = vlaneseq
        %v1785 = vshrl.u32 %v1784, 7
        %v1786 = vsub.s32 %v1783, %v1785
        %v1787 = vrot.slane %v1771, %v1786
        %v1789 = vunpack.c.l.s4 1966171168
        %v1790 = vunpack.c.0.s8 %v1789
        %v1791 = vlaneseq
        %v1792 = vshrl.u32 %v1791, 7
        %v1793 = vsub.s32 %v1790, %v1792
        %v1794 = vrot.slane %v1778, %v1793
        %v1796 = vunpack.c.l.s4 1966171168
        %v1797 = vunpack.c.0.s8 %v1796
        %v1798 = vlaneseq
        %v1799 = vshrl.u32 %v1798, 7
        %v1800 = vsub.s32 %v1797, %v1799
        %v1801 = vrot.slane %v1779, %v1800
        %v1803 = vunpack.c.l.s4 1966171168
        %v1804 = vunpack.c.0.s8 %v1803
        %v1805 = vlaneseq
        %v1806 = vshrl.u32 %v1805, 7
        %v1807 = vsub.s32 %v1804, %v1806
        %v1808 = vrot.slane %v1780, %v1807
        %v1809 = vcombine.high %v1787, %v1787
        %v1810 = vcombine.high %v1794, %v1794
        %v1811 = vcombine.high %v1801, %v1801
        %v1812 = vcombine.high %v1808, %v1808
        %v1813 = vcombine.high %v1697, %v1697
        %v1815 = vunpack.c.l.s4 1966171168
        %v1816 = vunpack.c.0.s8 %v1815
        %v1817 = vlaneseq
        %v1818 = vshrl.u32 %v1817, 7
        %v1819 = vsub.s32 %v1816, %v1818
        %v1820 = vrot.slane %v1697, %v1819
        %v1822 = vunpack.c.l.s4 1966171168
        %v1823 = vunpack.c.0.s8 %v1822
        %v1824 = vlaneseq
        %v1825 = vshrl.u32 %v1824, 7
        %v1826 = vsub.s32 %v1823, %v1825
        %v1827 = vrot.slane %v1813, %v1826
        %v1828 = vcombine.high %v1820, %v1820
        %v1829 = vcombine.high %v1827, %v1827
        %v1831 = vunpack.c.l.s4 1966171168
        %v1832 = vunpack.c.0.s8 %v1831
        %v1833 = vlaneseq
        %v1834 = vshrl.u32 %v1833, 7
        %v1835 = vsub.s32 %v1832, %v1834
        %v1836 = vrot.slane %v1820, %v1835
        %v1838 = vunpack.c.l.s4 1966171168
        %v1839 = vunpack.c.0.s8 %v1838
        %v1840 = vlaneseq
        %v1841 = vshrl.u32 %v1840, 7
        %v1842 = vsub.s32 %v1839, %v1841
        %v1843 = vrot.slane %v1827, %v1842
        %v1845 = vunpack.c.l.s4 1966171168
        %v1846 = vunpack.c.0.s8 %v1845
        %v1847 = vlaneseq
        %v1848 = vshrl.u32 %v1847, 7
        %v1849 = vsub.s32 %v1846, %v1848
        %v1850 = vrot.slane %v1828, %v1849
        %v1852 = vunpack.c.l.s4 1966171168
        %v1853 = vunpack.c.0.s8 %v1852
        %v1854 = vlaneseq
        %v1855 = vshrl.u32 %v1854, 7
        %v1856 = vsub.s32 %v1853, %v1855
        %v1857 = vrot.slane %v1829, %v1856
        %v1858 = vcombine.high %v1836, %v1836
        %v1859 = vcombine.high %v1843, %v1843
        %v1860 = vcombine.high %v1850, %v1850
        %v1861 = vcombine.high %v1857, %v1857
        %v1862 = vcombine.high %v1702, %v1702
        %v1864 = vunpack.c.l.s4 1966171168
        %v1865 = vunpack.c.0.s8 %v1864
        %v1866 = vlaneseq
        %v1867 = vshrl.u32 %v1866, 7
        %v1868 = vsub.s32 %v1865, %v1867
        %v1869 = vrot.slane %v1702, %v1868
        %v1871 = vunpack.c.l.s4 1966171168
        %v1872 = vunpack.c.0.s8 %v1871
        %v1873 = vlaneseq
        %v1874 = vshrl.u32 %v1873, 7
        %v1875 = vsub.s32 %v1872, %v1874
        %v1876 = vrot.slane %v1862, %v1875
        %v1877 = vcombine.high %v1869, %v1869
        %v1878 = vcombine.high %v1876, %v1876
        %v1880 = vunpack.c.l.s4 1966171168
        %v1881 = vunpack.c.0.s8 %v1880
        %v1882 = vlaneseq
        %v1883 = vshrl.u32 %v1882, 7
        %v1884 = vsub.s32 %v1881, %v1883
        %v1885 = vrot.slane %v1869, %v1884
        %v1887 = vunpack.c.l.s4 1966171168
        %v1888 = vunpack.c.0.s8 %v1887
        %v1889 = vlaneseq
        %v1890 = vshrl.u32 %v1889, 7
        %v1891 = vsub.s32 %v1888, %v1890
        %v1892 = vrot.slane %v1876, %v1891
        %v1894 = vunpack.c.l.s4 1966171168
        %v1895 = vunpack.c.0.s8 %v1894
        %v1896 = vlaneseq
        %v1897 = vshrl.u32 %v1896, 7
        %v1898 = vsub.s32 %v1895, %v1897
        %v1899 = vrot.slane %v1877, %v1898
        %v1901 = vunpack.c.l.s4 1966171168
        %v1902 = vunpack.c.0.s8 %v1901
        %v1903 = vlaneseq
        %v1904 = vshrl.u32 %v1903, 7
        %v1905 = vsub.s32 %v1902, %v1904
        %v1906 = vrot.slane %v1878, %v1905
        %v1907 = vcombine.high %v1885, %v1885
        %v1908 = vcombine.high %v1892, %v1892
        %v1909 = vcombine.high %v1899, %v1899
        %v1910 = vcombine.high %v1906, %v1906
        %v1912 = vunpack.c.l.s4 1966171168
        %v1913 = vunpack.c.0.s8 %v1912
        %v1914 = vlaneseq
        %v1915 = vshrl.u32 %v1914, 7
        %v1916 = vsub.s32 %v1913, %v1915
        %v1917 = vrot.slane %v1707, %v1916
        %v1918 = vcombine.high %v1917, %v1917
        %v1920 = vunpack.c.l.s4 1966171168
        %v1921 = vunpack.c.0.s8 %v1920
        %v1922 = vlaneseq
        %v1923 = vshrl.u32 %v1922, 7
        %v1924 = vsub.s32 %v1921, %v1923
        %v1925 = vrot.slane %v1917, %v1924
        %v1927 = vunpack.c.l.s4 1966171168
        %v1928 = vunpack.c.0.s8 %v1927
        %v1929 = vlaneseq
        %v1930 = vshrl.u32 %v1929, 7
        %v1931 = vsub.s32 %v1928, %v1930
        %v1932 = vrot.slane %v1918, %v1931
        %v1933 = vcombine.low %v1738, %v1752
        %v1934 = vcombine.low %v1760, %v1762
        %v1935 = vcombine.low %v1745, %v1759
        %v1936 = vcombine.low %v1761, %v1763
        %v1938 = vunpack.c.l.s4 1966171168
        %v1939 = vunpack.c.0.s8 %v1938
        %v1940 = vlaneseq
        %v1941 = vshrl.u32 %v1940, 7
        %v1942 = vsub.s32 %v1939, %v1941
        %v1943 = vrot.slane %v1933, %v1942
        %v1945 = vunpack.c.l.s4 1966171168
        %v1946 = vunpack.c.0.s8 %v1945
        %v1947 = vlaneseq
        %v1948 = vshrl.u32 %v1947, 7
        %v1949 = vsub.s32 %v1946, %v1948
        %v1950 = vrot.slane %v1934, %v1949
        %v1952 = vunpack.c.l.s4 1966171168
        %v1953 = vunpack.c.0.s8 %v1952
        %v1954 = vlaneseq
        %v1955 = vshrl.u32 %v1954, 7
        %v1956 = vsub.s32 %v1953, %v1955
        %v1957 = vrot.slane %v1935, %v1956
        %v1959 = vunpack.c.l.s4 1966171168
        %v1960 = vunpack.c.0.s8 %v1959
        %v1961 = vlaneseq
        %v1962 = vshrl.u32 %v1961, 7
        %v1963 = vsub.s32 %v1960, %v1962
        %v1964 = vrot.slane %v1936, %v1963
        %v1965 = vcombine.low %v1943, %v1950
        %v1966 = vcombine.low %v1957, %v1964
        %v1968 = vunpack.c.l.s4 1966171168
        %v1969 = vunpack.c.0.s8 %v1968
        %v1970 = vlaneseq
        %v1971 = vshrl.u32 %v1970, 7
        %v1972 = vsub.s32 %v1969, %v1971
        %v1973 = vrot.slane %v1965, %v1972
        %v1975 = vunpack.c.l.s4 1966171168
        %v1976 = vunpack.c.0.s8 %v1975
        %v1977 = vlaneseq
        %v1978 = vshrl.u32 %v1977, 7
        %v1979 = vsub.s32 %v1976, %v1978
        %v1980 = vrot.slane %v1966, %v1979
        %v1981 = vcombine.low %v1973, %v1980
        %v1982 = vcombine.low %v1787, %v1801
        %v1983 = vcombine.low %v1809, %v1811
        %v1984 = vcombine.low %v1794, %v1808
        %v1985 = vcombine.low %v1810, %v1812
        %v1987 = vunpack.c.l.s4 1966171168
        %v1988 = vunpack.c.0.s8 %v1987
        %v1989 = vlaneseq
        %v1990 = vshrl.u32 %v1989, 7
        %v1991 = vsub.s32 %v1988, %v1990
        %v1992 = vrot.slane %v1982, %v1991
        %v1994 = vunpack.c.l.s4 1966171168
        %v1995 = vunpack.c.0.s8 %v1994
        %v1996 = vlaneseq
        %v1997 = vshrl.u32 %v1996, 7
        %v1998 = vsub.s32 %v1995, %v1997
        %v1999 = vrot.slane %v1983, %v1998
        %v2001 = vunpack.c.l.s4 1966171168
        %v2002 = vunpack.c.0.s8 %v2001
        %v2003 = vlaneseq
        %v2004 = vshrl.u32 %v2003, 7
        %v2005 = vsub.s32 %v2002, %v2004
        %v2006 = vrot.slane %v1984, %v2005
        %v2008 = vunpack.c.l.s4 1966171168
        %v2009 = vunpack.c.0.s8 %v2008
        %v2010 = vlaneseq
        %v2011 = vshrl.u32 %v2010, 7
        %v2012 = vsub.s32 %v2009, %v2011
        %v2013 = vrot.slane %v1985, %v2012
        %v2014 = vcombine.low %v1992, %v1999
        %v2015 = vcombine.low %v2006, %v2013
        %v2017 = vunpack.c.l.s4 1966171168
        %v2018 = vunpack.c.0.s8 %v2017
        %v2019 = vlaneseq
        %v2020 = vshrl.u32 %v2019, 7
        %v2021 = vsub.s32 %v2018, %v2020
        %v2022 = vrot.slane %v2014, %v2021
        %v2024 = vunpack.c.l.s4 1966171168
        %v2025 = vunpack.c.0.s8 %v2024
        %v2026 = vlaneseq
        %v2027 = vshrl.u32 %v2026, 7
        %v2028 = vsub.s32 %v2025, %v2027
        %v2029 = vrot.slane %v2015, %v2028
        %v2030 = vcombine.low %v2022, %v2029
        %v2032 = vunpack.c.l.s4 1966171168
        %v2033 = vunpack.c.0.s8 %v2032
        %v2034 = vlaneseq
        %v2035 = vshrl.u32 %v2034, 7
        %v2036 = vsub.s32 %v2033, %v2035
        %v2037 = vrot.slane %v1836, %v2036
        %v2039 = vunpack.c.l.s4 1966171168
        %v2040 = vunpack.c.0.s8 %v2039
        %v2041 = vlaneseq
        %v2042 = vshrl.u32 %v2041, 7
        %v2043 = vsub.s32 %v2040, %v2042
        %v2044 = vrot.slane %v2037, %v2043
        %2045 = vrot.lane.b32.xlu0 %v1981, 96
        %v2046 = vpop.permute.xlu0 %2045
        %2047 = vrot.lane.b32.xlu0 %v2030, 96
        %v2048 = vpop.permute.xlu0 %2047
        %2049 = vrot.lane.b32.xlu0 %v2044, 96
        %v2050 = vpop.permute.xlu0 %2049
        %vm2051 = vcmask 64512
        %v2052 = vsel %vm2051, %v1981, 0
        %v2054 = vsel %vm2051, %v2030, 0
        %v2056 = vsel %vm2051, %v2044, 0
        %v2058 = vsel %vm2051, %v2046, 0
        %v2060 = vsel %vm2051, %v2048, 0
        %v2062 = vsel %vm2051, %v2050, 0
        %2064 = vmatprep.subr.mxu0 0.0
        %2065 = vmatpush1.xpose.msra.mxu0 %v2058
        %2066 = vmatprep.subr.mxu0 0.0
        %2067 = vmatpush1.xpose.msra.mxu0 %v2060
        %2068 = vmatprep.subr.mxu0 0.0
        %2069 = vmatpush1.xpose.msra.mxu0 %v2062
        %2070 = vmatprep.subr.mxu0 0.0
        %2071 = vmatpush1.xpose.msra.mxu0 0.0
        %2072 = vmatprep.subr.mxu0 0.0
        %2073 = vmatpush1.xpose.msra.mxu0 0.0
        %2074 = vmatprep.subr.mxu0 0.0
        %2075 = vmatpush1.xpose.msra.mxu0 0.0
        %2076 = vmatprep.subr.mxu0 0.0
        %2077 = vmatpush1.xpose.msra.mxu0 0.0
        %2078 = vmatprep.subr.mxu0 0.0
        %2079 = vmatpush1.xpose.msra.mxu0 0.0
        %2080 = vmatprep.subr.mxu0 0.0
        %2081 = vmatpush1.xpose.msra.mxu0 0.0
        %2082 = vmatprep.subr.mxu0 0.0
        %2083 = vmatpush1.xpose.msra.mxu0 0.0
        %2084 = vmatprep.subr.mxu0 0.0
        %2085 = vmatpush1.xpose.msra.mxu0 0.0
        %2086 = vmatprep.subr.mxu0 0.0
        %2087 = vmatpush1.xpose.msra.mxu0 0.0
        %2088 = vmatprep.subr.mxu0 0.0
        %2089 = vmatpush1.xpose.msra.mxu0 0.0
        %2090 = vmatprep.subr.mxu0 0.0
        %2091 = vmatpush1.xpose.msra.mxu0 0.0
        %2092 = vmatprep.subr.mxu0 0.0
        %2093 = vmatpush1.xpose.msra.mxu0 0.0
        %2094 = vmatprep.subr.mxu0 0.0
        %2095 = vmatpush1.xpose.msra.mxu0 0.0
        %2096 = vmatprep.subr.mxu0 0.0
        %2097 = vmatpush1.xpose.msra.mxu0 0.0
        %2098 = vmatprep.subr.mxu0 0.0
        %2099 = vmatpush1.xpose.msra.mxu0 0.0
        %2100 = vmatprep.subr.mxu0 0.0
        %2101 = vmatpush1.xpose.msra.mxu0 0.0
        %2102 = vmatprep.subr.mxu0 0.0
        %2103 = vmatpush1.xpose.msra.mxu0 0.0
        %2104 = vmatprep.subr.mxu0 0.0
        %2105 = vmatpush1.xpose.msra.mxu0 0.0
        %2106 = vmatprep.subr.mxu0 0.0
        %2107 = vmatpush1.xpose.msra.mxu0 0.0
        %2108 = vmatprep.subr.mxu0 0.0
        %2109 = vmatpush1.xpose.msra.mxu0 0.0
        %2110 = vmatprep.subr.mxu0 0.0
        %2111 = vmatpush1.xpose.msra.mxu0 0.0
        %2112 = vmatprep.subr.mxu0 0.0
        %2113 = vmatpush1.xpose.msra.mxu0 0.0
        %2114 = vmatprep.subr.mxu0 0.0
        %2115 = vmatpush1.xpose.msra.mxu0 0.0
        %2116 = vmatprep.subr.mxu0 0.0
        %2117 = vmatpush1.xpose.msra.mxu0 0.0
        %2118 = vmatprep.subr.mxu0 0.0
        %2119 = vmatpush1.xpose.msra.mxu0 0.0
        %2120 = vmatprep.subr.mxu0 0.0
        %2121 = vmatpush1.xpose.msra.mxu0 0.0
        %2122 = vmatprep.subr.mxu0 0.0
        %2123 = vmatpush1.xpose.msra.mxu0 0.0
        %2124 = vmatprep.subr.mxu0 0.0
        %2125 = vmatpush1.xpose.msra.mxu0 0.0
        %2126 = vmatprep.subr.mxu0 0.0
        %2127 = vmatpush1.xpose.msra.mxu0 0.0
        %2128 = vmatprep.mubr.f32.mxu0 0.0
        %2129 = vmatmul.mubr.f32.gmra.mrb[0].mxu0 %v2052
        %v2130 = vpop.f32.mrb[0].mxu0
        %v2131 = vadd.f32 0.0, %v2130
        %v2132 = vpop.f32.mrb[0].mxu0
        %2133 = vmatprep.mubr.f32.mxu0 0.0
        %2134 = vmatmul.mubr.f32.gmra.mrb[0].mxu0 %v2054
        %v2135 = vpop.f32.mrb[0].mxu0
        %v2136 = vadd.f32 0.0, %v2135
        %v2137 = vpop.f32.mrb[0].mxu0
        %2138 = vmatprep.mubr.f32.mxu0 0.0
        %2139 = vmatmul.mubr.f32.gmra.mrb[0].mxu0 %v2056
        %v2140 = vpop.f32.mrb[0].mxu0
        %v2141 = vadd.f32 0.0, %v2140
        %v2142 = vpop.f32.mrb[0].mxu0
        %2143 = vdwg.mxu0
        %v2144 = vcombine.low %v1850, %v1858
        %v2145 = vcombine.low %v1860, %v1843
        %v2146 = vcombine.low %v1857, %v1859
        %v2147 = vcombine.low %v1861, %v1885
        %v2149 = vunpack.c.l.s4 1966171168
        %v2150 = vunpack.c.0.s8 %v2149
        %v2151 = vlaneseq
        %v2152 = vshrl.u32 %v2151, 7
        %v2153 = vsub.s32 %v2150, %v2152
        %v2154 = vrot.slane %v2144, %v2153
        %v2156 = vunpack.c.l.s4 1966171168
        %v2157 = vunpack.c.0.s8 %v2156
        %v2158 = vlaneseq
        %v2159 = vshrl.u32 %v2158, 7
        %v2160 = vsub.s32 %v2157, %v2159
        %v2161 = vrot.slane %v2145, %v2160
        %v2163 = vunpack.c.l.s4 1966171168
        %v2164 = vunpack.c.0.s8 %v2163
        %v2165 = vlaneseq
        %v2166 = vshrl.u32 %v2165, 7
        %v2167 = vsub.s32 %v2164, %v2166
        %v2168 = vrot.slane %v2146, %v2167
        %v2170 = vunpack.c.l.s4 1966171168
        %v2171 = vunpack.c.0.s8 %v2170
        %v2172 = vlaneseq
        %v2173 = vshrl.u32 %v2172, 7
        %v2174 = vsub.s32 %v2171, %v2173
        %v2175 = vrot.slane %v2147, %v2174
        %v2176 = vcombine.low %v2154, %v2161
        %v2177 = vcombine.low %v2168, %v2175
        %v2179 = vunpack.c.l.s4 1966171168
        %v2180 = vunpack.c.0.s8 %v2179
        %v2181 = vlaneseq
        %v2182 = vshrl.u32 %v2181, 7
        %v2183 = vsub.s32 %v2180, %v2182
        %v2184 = vrot.slane %v2176, %v2183
        %v2186 = vunpack.c.l.s4 1966171168
        %v2187 = vunpack.c.0.s8 %v2186
        %v2188 = vlaneseq
        %v2189 = vshrl.u32 %v2188, 7
        %v2190 = vsub.s32 %v2187, %v2189
        %v2191 = vrot.slane %v2177, %v2190
        %v2192 = vcombine.low %v2184, %v2191
        %v2193 = vcombine.low %v1899, %v1907
        %v2194 = vcombine.low %v1909, %v1892
        %v2195 = vcombine.low %v1906, %v1908
        %v2196 = vcombine.low %v1910, %v1925
        %v2198 = vunpack.c.l.s4 1966171168
        %v2199 = vunpack.c.0.s8 %v2198
        %v2200 = vlaneseq
        %v2201 = vshrl.u32 %v2200, 7
        %v2202 = vsub.s32 %v2199, %v2201
        %v2203 = vrot.slane %v2193, %v2202
        %v2205 = vunpack.c.l.s4 1966171168
        %v2206 = vunpack.c.0.s8 %v2205
        %v2207 = vlaneseq
        %v2208 = vshrl.u32 %v2207, 7
        %v2209 = vsub.s32 %v2206, %v2208
        %v2210 = vrot.slane %v2194, %v2209
        %v2212 = vunpack.c.l.s4 1966171168
        %v2213 = vunpack.c.0.s8 %v2212
        %v2214 = vlaneseq
        %v2215 = vshrl.u32 %v2214, 7
        %v2216 = vsub.s32 %v2213, %v2215
        %v2217 = vrot.slane %v2195, %v2216
        %v2219 = vunpack.c.l.s4 1966171168
        %v2220 = vunpack.c.0.s8 %v2219
        %v2221 = vlaneseq
        %v2222 = vshrl.u32 %v2221, 7
        %v2223 = vsub.s32 %v2220, %v2222
        %v2224 = vrot.slane %v2196, %v2223
        %v2225 = vcombine.low %v2203, %v2210
        %v2226 = vcombine.low %v2217, %v2224
        %v2228 = vunpack.c.l.s4 1966171168
        %v2229 = vunpack.c.0.s8 %v2228
        %v2230 = vlaneseq
        %v2231 = vshrl.u32 %v2230, 7
        %v2232 = vsub.s32 %v2229, %v2231
        %v2233 = vrot.slane %v2225, %v2232
        %v2235 = vunpack.c.l.s4 1966171168
        %v2236 = vunpack.c.0.s8 %v2235
        %v2237 = vlaneseq
        %v2238 = vshrl.u32 %v2237, 7
        %v2239 = vsub.s32 %v2236, %v2238
        %v2240 = vrot.slane %v2226, %v2239
        %v2241 = vcombine.low %v2233, %v2240
        %v2243 = vunpack.c.l.s4 1966171168
        %v2244 = vunpack.c.0.s8 %v2243
        %v2245 = vlaneseq
        %v2246 = vshrl.u32 %v2245, 7
        %v2247 = vsub.s32 %v2244, %v2246
        %v2248 = vrot.slane %v1932, %v2247
        %v2250 = vunpack.c.l.s4 1966171168
        %v2251 = vunpack.c.0.s8 %v2250
        %v2252 = vlaneseq
        %v2253 = vshrl.u32 %v2252, 7
        %v2254 = vsub.s32 %v2251, %v2253
        %v2255 = vrot.slane %v2248, %v2254
        %2256 = vrot.lane.b32.xlu0 %v2192, 96
        %v2257 = vpop.permute.xlu0 %2256
        %2258 = vrot.lane.b32.xlu0 %v2241, 96
        %v2259 = vpop.permute.xlu0 %2258
        %2260 = vrot.lane.b32.xlu0 %v2255, 96
        %v2261 = vpop.permute.xlu0 %2260
        %v2262 = vsel %vm2051, %v2192, 0
        %v2264 = vsel %vm2051, %v2241, 0
        %v2266 = vsel %vm2051, %v2255, 0
        %v2268 = vsel %vm2051, %v2257, 0
        %v2270 = vsel %vm2051, %v2259, 0
        %v2272 = vsel %vm2051, %v2261, 0
        %2274 = vmatprep.subr.mxu0 0.0
        %2275 = vmatpush1.xpose.msra.mxu0 %v2268
        %2276 = vmatprep.subr.mxu0 0.0
        %2277 = vmatpush1.xpose.msra.mxu0 %v2270
        %2278 = vmatprep.subr.mxu0 0.0
        %2279 = vmatpush1.xpose.msra.mxu0 %v2272
        %2280 = vmatprep.subr.mxu0 0.0
        %2281 = vmatpush1.xpose.msra.mxu0 0.0
        %2282 = vmatprep.subr.mxu0 0.0
        %2283 = vmatpush1.xpose.msra.mxu0 0.0
        %2284 = vmatprep.subr.mxu0 0.0
        %2285 = vmatpush1.xpose.msra.mxu0 0.0
        %2286 = vmatprep.subr.mxu0 0.0
        %2287 = vmatpush1.xpose.msra.mxu0 0.0
        %2288 = vmatprep.subr.mxu0 0.0
        %2289 = vmatpush1.xpose.msra.mxu0 0.0
        %2290 = vmatprep.subr.mxu0 0.0
        %2291 = vmatpush1.xpose.msra.mxu0 0.0
        %2292 = vmatprep.subr.mxu0 0.0
        %2293 = vmatpush1.xpose.msra.mxu0 0.0
        %2294 = vmatprep.subr.mxu0 0.0
        %2295 = vmatpush1.xpose.msra.mxu0 0.0
        %2296 = vmatprep.subr.mxu0 0.0
        %2297 = vmatpush1.xpose.msra.mxu0 0.0
        %2298 = vmatprep.subr.mxu0 0.0
        %2299 = vmatpush1.xpose.msra.mxu0 0.0
        %2300 = vmatprep.subr.mxu0 0.0
        %2301 = vmatpush1.xpose.msra.mxu0 0.0
        %2302 = vmatprep.subr.mxu0 0.0
        %2303 = vmatpush1.xpose.msra.mxu0 0.0
        %2304 = vmatprep.subr.mxu0 0.0
        %2305 = vmatpush1.xpose.msra.mxu0 0.0
        %2306 = vmatprep.subr.mxu0 0.0
        %2307 = vmatpush1.xpose.msra.mxu0 0.0
        %2308 = vmatprep.subr.mxu0 0.0
        %2309 = vmatpush1.xpose.msra.mxu0 0.0
        %2310 = vmatprep.subr.mxu0 0.0
        %2311 = vmatpush1.xpose.msra.mxu0 0.0
        %2312 = vmatprep.subr.mxu0 0.0
        %2313 = vmatpush1.xpose.msra.mxu0 0.0
        %2314 = vmatprep.subr.mxu0 0.0
        %2315 = vmatpush1.xpose.msra.mxu0 0.0
        %2316 = vmatprep.subr.mxu0 0.0
        %2317 = vmatpush1.xpose.msra.mxu0 0.0
        %2318 = vmatprep.subr.mxu0 0.0
        %2319 = vmatpush1.xpose.msra.mxu0 0.0
        %2320 = vmatprep.subr.mxu0 0.0
        %2321 = vmatpush1.xpose.msra.mxu0 0.0
        %2322 = vmatprep.subr.mxu0 0.0
        %2323 = vmatpush1.xpose.msra.mxu0 0.0
        %2324 = vmatprep.subr.mxu0 0.0
        %2325 = vmatpush1.xpose.msra.mxu0 0.0
        %2326 = vmatprep.subr.mxu0 0.0
        %2327 = vmatpush1.xpose.msra.mxu0 0.0
        %2328 = vmatprep.subr.mxu0 0.0
        %2329 = vmatpush1.xpose.msra.mxu0 0.0
        %2330 = vmatprep.subr.mxu0 0.0
        %2331 = vmatpush1.xpose.msra.mxu0 0.0
        %2332 = vmatprep.subr.mxu0 0.0
        %2333 = vmatpush1.xpose.msra.mxu0 0.0
        %2334 = vmatprep.subr.mxu0 0.0
        %2335 = vmatpush1.xpose.msra.mxu0 0.0
        %2336 = vmatprep.subr.mxu0 0.0
        %2337 = vmatpush1.xpose.msra.mxu0 0.0
        %2338 = vmatprep.mubr.f32.mxu0 0.0
        %2339 = vmatmul.mubr.f32.gmra.mrb[0].mxu0 %v2262
        %v2340 = vpop.f32.mrb[0].mxu0
        %v2341 = vadd.f32 0.0, %v2340
        %v2342 = vpop.f32.mrb[0].mxu0
        %2343 = vmatprep.mubr.f32.mxu0 0.0
        %2344 = vmatmul.mubr.f32.gmra.mrb[0].mxu0 %v2264
        %v2345 = vpop.f32.mrb[0].mxu0
        %v2346 = vadd.f32 0.0, %v2345
        %v2347 = vpop.f32.mrb[0].mxu0
        %2348 = vmatprep.mubr.f32.mxu0 0.0
        %2349 = vmatmul.mubr.f32.gmra.mrb[0].mxu0 %v2266
        %v2350 = vpop.f32.mrb[0].mxu0
        %v2351 = vadd.f32 0.0, %v2350
        %v2352 = vpop.f32.mrb[0].mxu0
        %2353 = vdwg.mxu0
        %vm2354 = vcmask 138240
        %v2355 = vsel %vm2354, %v2131, -inf
        %2356 = vmax.xlane.f32.xlu0 %v2355
        %v2357 = vpop.xlane.xlu0 %2356
        %v2358 = vsel %vm2354, %v2136, -inf
        %2359 = vmax.xlane.f32.xlu0 %v2358
        %v2360 = vpop.xlane.xlu0 %2359
        %vm2361 = vcmask 131072
        %v2362 = vsel %vm2361, %v2141, -inf
        %2363 = vmax.xlane.f32.xlu0 %v2362
        %v2364 = vpop.xlane.xlu0 %2363
        %v2365 = vsel %vm2354, %v2341, -inf
        %2366 = vmax.xlane.f32.xlu0 %v2365
        %v2367 = vpop.xlane.xlu0 %2366
        %v2368 = vsel %vm2354, %v2346, -inf
        %2369 = vmax.xlane.f32.xlu0 %v2368
        %v2370 = vpop.xlane.xlu0 %2369
        %v2371 = vsel %vm2361, %v2351, -inf
        %2372 = vmax.xlane.f32.xlu0 %v2371
        %v2373 = vpop.xlane.xlu0 %2372
        %v2374 = vsub.f32 %v2131, %v2357
        %v2375 = vsub.f32 %v2136, %v2360
        %v2376 = vsub.f32 %v2141, %v2364
        %v2377 = vsub.f32 %v2341, %v2367
        %v2378 = vsub.f32 %v2346, %v2370
        %v2379 = vsub.f32 %v2351, %v2373
        %v2380 = vmul.f32 %v2374, 1.442695
        %v2381 = vpow.pop %v2380
        %v2382 = vmul.f32 %v2375, 1.442695
        %v2383 = vpow.pop %v2382
        %v2384 = vmul.f32 %v2376, 1.442695
        %v2385 = vpow.pop %v2384
        %v2386 = vmul.f32 %v2377, 1.442695
        %v2387 = vpow.pop %v2386
        %v2388 = vmul.f32 %v2378, 1.442695
        %v2389 = vpow.pop %v2388
        %v2390 = vmul.f32 %v2379, 1.442695
        %v2391 = vpow.pop %v2390
        %v2392 = vsel %vm2354, %v2381, 0.0
        %2393 = vadd.xlane.f32.xlu0 %v2392
        %v2394 = vpop.xlane.xlu0 %2393
        %v2395 = vsel %vm2354, %v2383, 0.0
        %2396 = vadd.xlane.f32.xlu0 %v2395
        %v2397 = vpop.xlane.xlu0 %2396
        %v2398 = vsel %vm2361, %v2385, 0.0
        %2399 = vadd.xlane.f32.xlu0 %v2398
        %v2400 = vpop.xlane.xlu0 %2399
        %v2401 = vsel %vm2354, %v2387, 0.0
        %2402 = vadd.xlane.f32.xlu0 %v2401
        %v2403 = vpop.xlane.xlu0 %2402
        %v2404 = vsel %vm2354, %v2389, 0.0
        %2405 = vadd.xlane.f32.xlu0 %v2404
        %v2406 = vpop.xlane.xlu0 %2405
        %v2407 = vsel %vm2361, %v2391, 0.0
        %2408 = vadd.xlane.f32.xlu0 %v2407
        %v2409 = vpop.xlane.xlu0 %2408
        %v2410 = vrcp.pop %v2394
        %v2411 = vrcp.pop %v2397
        %v2412 = vrcp.pop %v2400
        %v2413 = vrcp.pop %v2403
        %v2414 = vrcp.pop %v2406
        %v2415 = vrcp.pop %v2409
        %v2416 = vmul.f32 %v2381, %v2410
        %v2417 = vmul.f32 %v2383, %v2411
        %v2418 = vmul.f32 %v2385, %v2412
        %v2419 = vmul.f32 %v2387, %v2413
        %v2420 = vmul.f32 %v2389, %v2414
        %v2421 = vmul.f32 %v2391, %v2415
        %2422 = vrot.lane.b32.xlu0 %v1981, 64
        %v2423 = vpop.permute.xlu0 %2422
        %2424 = vrot.lane.b32.xlu0 %v2030, 64
        %v2425 = vpop.permute.xlu0 %2424
        %2426 = vrot.lane.b32.xlu0 %v2044, 64
        %v2427 = vpop.permute.xlu0 %2426
        %v2431 = vsel %vm2354, %v2416, 0
        %v2434 = vsel %vm2354, %v2417, 0
        %v2437 = vsel %vm2354, %v2418, 0
        %vm2439 = vcmask 1040384
        %v2440 = vsel %vm2439, %v2427, 0
        %2442 = vmatprep.subr.mxu0 0.0
        %2443 = vmatpush1.msra.mxu0 %v2423
        %2444 = vmatprep.subr.mxu0 0.0
        %2445 = vmatpush1.msra.mxu0 %v2425
        %2446 = vmatprep.subr.mxu0 0.0
        %2447 = vmatpush1.msra.mxu0 %v2440
        %2448 = vmatprep.subr.mxu0 0.0
        %2449 = vmatpush1.msra.mxu0 0.0
        %2450 = vmatprep.subr.mxu0 0.0
        %2451 = vmatpush1.msra.mxu0 0.0
        %2452 = vmatprep.subr.mxu0 0.0
        %2453 = vmatpush1.msra.mxu0 0.0
        %2454 = vmatprep.subr.mxu0 0.0
        %2455 = vmatpush1.msra.mxu0 0.0
        %2456 = vmatprep.subr.mxu0 0.0
        %2457 = vmatpush1.msra.mxu0 0.0
        %2458 = vmatprep.subr.mxu0 0.0
        %2459 = vmatpush1.msra.mxu0 0.0
        %2460 = vmatprep.subr.mxu0 0.0
        %2461 = vmatpush1.msra.mxu0 0.0
        %2462 = vmatprep.subr.mxu0 0.0
        %2463 = vmatpush1.msra.mxu0 0.0
        %2464 = vmatprep.subr.mxu0 0.0
        %2465 = vmatpush1.msra.mxu0 0.0
        %2466 = vmatprep.subr.mxu0 0.0
        %2467 = vmatpush1.msra.mxu0 0.0
        %2468 = vmatprep.subr.mxu0 0.0
        %2469 = vmatpush1.msra.mxu0 0.0
        %2470 = vmatprep.subr.mxu0 0.0
        %2471 = vmatpush1.msra.mxu0 0.0
        %2472 = vmatprep.subr.mxu0 0.0
        %2473 = vmatpush1.msra.mxu0 0.0
        %2474 = vmatprep.subr.mxu0 0.0
        %2475 = vmatpush1.msra.mxu0 0.0
        %2476 = vmatprep.subr.mxu0 0.0
        %2477 = vmatpush1.msra.mxu0 0.0
        %2478 = vmatprep.subr.mxu0 0.0
        %2479 = vmatpush1.msra.mxu0 0.0
        %2480 = vmatprep.subr.mxu0 0.0
        %2481 = vmatpush1.msra.mxu0 0.0
        %2482 = vmatprep.subr.mxu0 0.0
        %2483 = vmatpush1.msra.mxu0 0.0
        %2484 = vmatprep.subr.mxu0 0.0
        %2485 = vmatpush1.msra.mxu0 0.0
        %2486 = vmatprep.subr.mxu0 0.0
        %2487 = vmatpush1.msra.mxu0 0.0
        %2488 = vmatprep.subr.mxu0 0.0
        %2489 = vmatpush1.msra.mxu0 0.0
        %2490 = vmatprep.subr.mxu0 0.0
        %2491 = vmatpush1.msra.mxu0 0.0
        %2492 = vmatprep.subr.mxu0 0.0
        %2493 = vmatpush1.msra.mxu0 0.0
        %2494 = vmatprep.subr.mxu0 0.0
        %2495 = vmatpush1.msra.mxu0 0.0
        %2496 = vmatprep.subr.mxu0 0.0
        %2497 = vmatpush1.msra.mxu0 0.0
        %2498 = vmatprep.subr.mxu0 0.0
        %2499 = vmatpush1.msra.mxu0 0.0
        %2500 = vmatprep.subr.mxu0 0.0
        %2501 = vmatpush1.msra.mxu0 0.0
        %2502 = vmatprep.subr.mxu0 0.0
        %2503 = vmatpush1.msra.mxu0 0.0
        %2504 = vmatprep.subr.mxu0 0.0
        %2505 = vmatpush1.msra.mxu0 0.0
        %2506 = vmatprep.mubr.f32.mxu0 0.0
        %2507 = vmatmul.mubr.f32.gmra.mrb[0].mxu0 %v2431
        %v2508 = vpop.f32.mrb[0].mxu0
        %v2509 = vadd.f32 0.0, %v2508
        %v2510 = vpop.f32.mrb[0].mxu0
        %2511 = vmatprep.mubr.f32.mxu0 0.0
        %2512 = vmatmul.mubr.f32.gmra.mrb[0].mxu0 %v2434
        %v2513 = vpop.f32.mrb[0].mxu0
        %v2514 = vadd.f32 0.0, %v2513
        %v2515 = vpop.f32.mrb[0].mxu0
        %2516 = vmatprep.mubr.f32.mxu0 0.0
        %2517 = vmatmul.mubr.f32.gmra.mrb[0].mxu0 %v2437
        %v2518 = vpop.f32.mrb[0].mxu0
        %v2519 = vadd.f32 0.0, %v2518
        %v2520 = vpop.f32.mrb[0].mxu0
        %2521 = vdwg.mxu0
        %2522 = vrot.lane.b32.xlu0 %v2192, 64
        %v2523 = vpop.permute.xlu0 %2522
        %2524 = vrot.lane.b32.xlu0 %v2241, 64
        %v2525 = vpop.permute.xlu0 %2524
        %2526 = vrot.lane.b32.xlu0 %v2255, 64
        %v2527 = vpop.permute.xlu0 %2526
        %v2531 = vsel %vm2354, %v2419, 0
        %v2534 = vsel %vm2354, %v2420, 0
        %v2537 = vsel %vm2354, %v2421, 0
        %v2539 = vsel %vm2439, %v2527, 0
        %2541 = vmatprep.subr.mxu0 0.0
        %2542 = vmatpush1.msra.mxu0 %v2523
        %2543 = vmatprep.subr.mxu0 0.0
        %2544 = vmatpush1.msra.mxu0 %v2525
        %2545 = vmatprep.subr.mxu0 0.0
        %2546 = vmatpush1.msra.mxu0 %v2539
        %2547 = vmatprep.subr.mxu0 0.0
        %2548 = vmatpush1.msra.mxu0 0.0
        %2549 = vmatprep.subr.mxu0 0.0
        %2550 = vmatpush1.msra.mxu0 0.0
        %2551 = vmatprep.subr.mxu0 0.0
        %2552 = vmatpush1.msra.mxu0 0.0
        %2553 = vmatprep.subr.mxu0 0.0
        %2554 = vmatpush1.msra.mxu0 0.0
        %2555 = vmatprep.subr.mxu0 0.0
        %2556 = vmatpush1.msra.mxu0 0.0
        %2557 = vmatprep.subr.mxu0 0.0
        %2558 = vmatpush1.msra.mxu0 0.0
        %2559 = vmatprep.subr.mxu0 0.0
        %2560 = vmatpush1.msra.mxu0 0.0
        %2561 = vmatprep.subr.mxu0 0.0
        %2562 = vmatpush1.msra.mxu0 0.0
        %2563 = vmatprep.subr.mxu0 0.0
        %2564 = vmatpush1.msra.mxu0 0.0
        %2565 = vmatprep.subr.mxu0 0.0
        %2566 = vmatpush1.msra.mxu0 0.0
        %2567 = vmatprep.subr.mxu0 0.0
        %2568 = vmatpush1.msra.mxu0 0.0
        %2569 = vmatprep.subr.mxu0 0.0
        %2570 = vmatpush1.msra.mxu0 0.0
        %2571 = vmatprep.subr.mxu0 0.0
        %2572 = vmatpush1.msra.mxu0 0.0
        %2573 = vmatprep.subr.mxu0 0.0
        %2574 = vmatpush1.msra.mxu0 0.0
        %2575 = vmatprep.subr.mxu0 0.0
        %2576 = vmatpush1.msra.mxu0 0.0
        %2577 = vmatprep.subr.mxu0 0.0
        %2578 = vmatpush1.msra.mxu0 0.0
        %2579 = vmatprep.subr.mxu0 0.0
        %2580 = vmatpush1.msra.mxu0 0.0
        %2581 = vmatprep.subr.mxu0 0.0
        %2582 = vmatpush1.msra.mxu0 0.0
        %2583 = vmatprep.subr.mxu0 0.0
        %2584 = vmatpush1.msra.mxu0 0.0
        %2585 = vmatprep.subr.mxu0 0.0
        %2586 = vmatpush1.msra.mxu0 0.0
        %2587 = vmatprep.subr.mxu0 0.0
        %2588 = vmatpush1.msra.mxu0 0.0
        %2589 = vmatprep.subr.mxu0 0.0
        %2590 = vmatpush1.msra.mxu0 0.0
        %2591 = vmatprep.subr.mxu0 0.0
        %2592 = vmatpush1.msra.mxu0 0.0
        %2593 = vmatprep.subr.mxu0 0.0
        %2594 = vmatpush1.msra.mxu0 0.0
        %2595 = vmatprep.subr.mxu0 0.0
        %2596 = vmatpush1.msra.mxu0 0.0
        %2597 = vmatprep.subr.mxu0 0.0
        %2598 = vmatpush1.msra.mxu0 0.0
        %2599 = vmatprep.subr.mxu0 0.0
        %2600 = vmatpush1.msra.mxu0 0.0
        %2601 = vmatprep.subr.mxu0 0.0
        %2602 = vmatpush1.msra.mxu0 0.0
        %2603 = vmatprep.subr.mxu0 0.0
        %2604 = vmatpush1.msra.mxu0 0.0
        %2605 = vmatprep.mubr.f32.mxu0 0.0
        %2606 = vmatmul.mubr.f32.gmra.mrb[0].mxu0 %v2531
        %v2607 = vpop.f32.mrb[0].mxu0
        %v2608 = vadd.f32 0.0, %v2607
        %v2609 = vpop.f32.mrb[0].mxu0
        %2610 = vmatprep.mubr.f32.mxu0 0.0
        %2611 = vmatmul.mubr.f32.gmra.mrb[0].mxu0 %v2534
        %v2612 = vpop.f32.mrb[0].mxu0
        %v2613 = vadd.f32 0.0, %v2612
        %v2614 = vpop.f32.mrb[0].mxu0
        %2615 = vmatprep.mubr.f32.mxu0 0.0
        %2616 = vmatmul.mubr.f32.gmra.mrb[0].mxu0 %v2537
        %v2617 = vpop.f32.mrb[0].mxu0
        %v2618 = vadd.f32 0.0, %v2617
        %v2619 = vpop.f32.mrb[0].mxu0
        %2620 = vdwg.mxu0
        %2621 = vrot.lane.b32.xlu0 %v1981, 120
        %v2622 = vpop.permute.xlu0 %2621
        %2623 = vrot.lane.b32.xlu0 %v2030, 120
        %v2624 = vpop.permute.xlu0 %2623
        %2625 = vrot.lane.b32.xlu0 %v2044, 120
        %v2626 = vpop.permute.xlu0 %2625
        %2627 = vrot.lane.b32.xlu0 %v1981, 88
        %v2628 = vpop.permute.xlu0 %2627
        %2629 = vrot.lane.b32.xlu0 %v2030, 88
        %v2630 = vpop.permute.xlu0 %2629
        %2631 = vrot.lane.b32.xlu0 %v2044, 88
        %v2632 = vpop.permute.xlu0 %2631
        %v2633 = vsel %vm2051, %v2622, 0
        %v2635 = vsel %vm2051, %v2624, 0
        %v2637 = vsel %vm2051, %v2626, 0
        %v2639 = vsel %vm2051, %v2628, 0
        %v2641 = vsel %vm2051, %v2630, 0
        %v2643 = vsel %vm2051, %v2632, 0
        %2645 = vmatprep.subr.mxu0 0.0
        %2646 = vmatpush1.xpose.msra.mxu0 %v2639
        %2647 = vmatprep.subr.mxu0 0.0
        %2648 = vmatpush1.xpose.msra.mxu0 %v2641
        %2649 = vmatprep.subr.mxu0 0.0
        %2650 = vmatpush1.xpose.msra.mxu0 %v2643
        %2651 = vmatprep.subr.mxu0 0.0
        %2652 = vmatpush1.xpose.msra.mxu0 0.0
        %2653 = vmatprep.subr.mxu0 0.0
        %2654 = vmatpush1.xpose.msra.mxu0 0.0
        %2655 = vmatprep.subr.mxu0 0.0
        %2656 = vmatpush1.xpose.msra.mxu0 0.0
        %2657 = vmatprep.subr.mxu0 0.0
        %2658 = vmatpush1.xpose.msra.mxu0 0.0
        %2659 = vmatprep.subr.mxu0 0.0
        %2660 = vmatpush1.xpose.msra.mxu0 0.0
        %2661 = vmatprep.subr.mxu0 0.0
        %2662 = vmatpush1.xpose.msra.mxu0 0.0
        %2663 = vmatprep.subr.mxu0 0.0
        %2664 = vmatpush1.xpose.msra.mxu0 0.0
        %2665 = vmatprep.subr.mxu0 0.0
        %2666 = vmatpush1.xpose.msra.mxu0 0.0
        %2667 = vmatprep.subr.mxu0 0.0
        %2668 = vmatpush1.xpose.msra.mxu0 0.0
        %2669 = vmatprep.subr.mxu0 0.0
        %2670 = vmatpush1.xpose.msra.mxu0 0.0
        %2671 = vmatprep.subr.mxu0 0.0
        %2672 = vmatpush1.xpose.msra.mxu0 0.0
        %2673 = vmatprep.subr.mxu0 0.0
        %2674 = vmatpush1.xpose.msra.mxu0 0.0
        %2675 = vmatprep.subr.mxu0 0.0
        %2676 = vmatpush1.xpose.msra.mxu0 0.0
        %2677 = vmatprep.subr.mxu0 0.0
        %2678 = vmatpush1.xpose.msra.mxu0 0.0
        %2679 = vmatprep.subr.mxu0 0.0
        %2680 = vmatpush1.xpose.msra.mxu0 0.0
        %2681 = vmatprep.subr.mxu0 0.0
        %2682 = vmatpush1.xpose.msra.mxu0 0.0
        %2683 = vmatprep.subr.mxu0 0.0
        %2684 = vmatpush1.xpose.msra.mxu0 0.0
        %2685 = vmatprep.subr.mxu0 0.0
        %2686 = vmatpush1.xpose.msra.mxu0 0.0
        %2687 = vmatprep.subr.mxu0 0.0
        %2688 = vmatpush1.xpose.msra.mxu0 0.0
        %2689 = vmatprep.subr.mxu0 0.0
        %2690 = vmatpush1.xpose.msra.mxu0 0.0
        %2691 = vmatprep.subr.mxu0 0.0
        %2692 = vmatpush1.xpose.msra.mxu0 0.0
        %2693 = vmatprep.subr.mxu0 0.0
        %2694 = vmatpush1.xpose.msra.mxu0 0.0
        %2695 = vmatprep.subr.mxu0 0.0
        %2696 = vmatpush1.xpose.msra.mxu0 0.0
        %2697 = vmatprep.subr.mxu0 0.0
        %2698 = vmatpush1.xpose.msra.mxu0 0.0
        %2699 = vmatprep.subr.mxu0 0.0
        %2700 = vmatpush1.xpose.msra.mxu0 0.0
        %2701 = vmatprep.subr.mxu0 0.0
        %2702 = vmatpush1.xpose.msra.mxu0 0.0
        %2703 = vmatprep.subr.mxu0 0.0
        %2704 = vmatpush1.xpose.msra.mxu0 0.0
        %2705 = vmatprep.subr.mxu0 0.0
        %2706 = vmatpush1.xpose.msra.mxu0 0.0
        %2707 = vmatprep.subr.mxu0 0.0
        %2708 = vmatpush1.xpose.msra.mxu0 0.0
        %2709 = vmatprep.mubr.f32.mxu0 0.0
        %2710 = vmatmul.mubr.f32.gmra.mrb[0].mxu0 %v2633
        %v2711 = vpop.f32.mrb[0].mxu0
        %v2712 = vadd.f32 0.0, %v2711
        %v2713 = vpop.f32.mrb[0].mxu0
        %2714 = vmatprep.mubr.f32.mxu0 0.0
        %2715 = vmatmul.mubr.f32.gmra.mrb[0].mxu0 %v2635
        %v2716 = vpop.f32.mrb[0].mxu0
        %v2717 = vadd.f32 0.0, %v2716
        %v2718 = vpop.f32.mrb[0].mxu0
        %2719 = vmatprep.mubr.f32.mxu0 0.0
        %2720 = vmatmul.mubr.f32.gmra.mrb[0].mxu0 %v2637
        %v2721 = vpop.f32.mrb[0].mxu0
        %v2722 = vadd.f32 0.0, %v2721
        %v2723 = vpop.f32.mrb[0].mxu0
        %2724 = vdwg.mxu0
        %2725 = vrot.lane.b32.xlu0 %v2192, 120
        %v2726 = vpop.permute.xlu0 %2725
        %2727 = vrot.lane.b32.xlu0 %v2241, 120
        %v2728 = vpop.permute.xlu0 %2727
        %2729 = vrot.lane.b32.xlu0 %v2255, 120
        %v2730 = vpop.permute.xlu0 %2729
        %2731 = vrot.lane.b32.xlu0 %v2192, 88
        %v2732 = vpop.permute.xlu0 %2731
        %2733 = vrot.lane.b32.xlu0 %v2241, 88
        %v2734 = vpop.permute.xlu0 %2733
        %2735 = vrot.lane.b32.xlu0 %v2255, 88
        %v2736 = vpop.permute.xlu0 %2735
        %v2737 = vsel %vm2051, %v2726, 0
        %v2739 = vsel %vm2051, %v2728, 0
        %v2741 = vsel %vm2051, %v2730, 0
        %v2743 = vsel %vm2051, %v2732, 0
        %v2745 = vsel %vm2051, %v2734, 0
        %v2747 = vsel %vm2051, %v2736, 0
        %2749 = vmatprep.subr.mxu0 0.0
        %2750 = vmatpush1.xpose.msra.mxu0 %v2743
        %2751 = vmatprep.subr.mxu0 0.0
        %2752 = vmatpush1.xpose.msra.mxu0 %v2745
        %2753 = vmatprep.subr.mxu0 0.0
        %2754 = vmatpush1.xpose.msra.mxu0 %v2747
        %2755 = vmatprep.subr.mxu0 0.0
        %2756 = vmatpush1.xpose.msra.mxu0 0.0
        %2757 = vmatprep.subr.mxu0 0.0
        %2758 = vmatpush1.xpose.msra.mxu0 0.0
        %2759 = vmatprep.subr.mxu0 0.0
        %2760 = vmatpush1.xpose.msra.mxu0 0.0
        %2761 = vmatprep.subr.mxu0 0.0
        %2762 = vmatpush1.xpose.msra.mxu0 0.0
        %2763 = vmatprep.subr.mxu0 0.0
        %2764 = vmatpush1.xpose.msra.mxu0 0.0
        %2765 = vmatprep.subr.mxu0 0.0
        %2766 = vmatpush1.xpose.msra.mxu0 0.0
        %2767 = vmatprep.subr.mxu0 0.0
        %2768 = vmatpush1.xpose.msra.mxu0 0.0
        %2769 = vmatprep.subr.mxu0 0.0
        %2770 = vmatpush1.xpose.msra.mxu0 0.0
        %2771 = vmatprep.subr.mxu0 0.0
        %2772 = vmatpush1.xpose.msra.mxu0 0.0
        %2773 = vmatprep.subr.mxu0 0.0
        %2774 = vmatpush1.xpose.msra.mxu0 0.0
        %2775 = vmatprep.subr.mxu0 0.0
        %2776 = vmatpush1.xpose.msra.mxu0 0.0
        %2777 = vmatprep.subr.mxu0 0.0
        %2778 = vmatpush1.xpose.msra.mxu0 0.0
        %2779 = vmatprep.subr.mxu0 0.0
        %2780 = vmatpush1.xpose.msra.mxu0 0.0
        %2781 = vmatprep.subr.mxu0 0.0
        %2782 = vmatpush1.xpose.msra.mxu0 0.0
        %2783 = vmatprep.subr.mxu0 0.0
        %2784 = vmatpush1.xpose.msra.mxu0 0.0
        %2785 = vmatprep.subr.mxu0 0.0
        %2786 = vmatpush1.xpose.msra.mxu0 0.0
        %2787 = vmatprep.subr.mxu0 0.0
        %2788 = vmatpush1.xpose.msra.mxu0 0.0
        %2789 = vmatprep.subr.mxu0 0.0
        %2790 = vmatpush1.xpose.msra.mxu0 0.0
        %2791 = vmatprep.subr.mxu0 0.0
        %2792 = vmatpush1.xpose.msra.mxu0 0.0
        %2793 = vmatprep.subr.mxu0 0.0
        %2794 = vmatpush1.xpose.msra.mxu0 0.0
        %2795 = vmatprep.subr.mxu0 0.0
        %2796 = vmatpush1.xpose.msra.mxu0 0.0
        %2797 = vmatprep.subr.mxu0 0.0
        %2798 = vmatpush1.xpose.msra.mxu0 0.0
        %2799 = vmatprep.subr.mxu0 0.0
        %2800 = vmatpush1.xpose.msra.mxu0 0.0
        %2801 = vmatprep.subr.mxu0 0.0
        %2802 = vmatpush1.xpose.msra.mxu0 0.0
        %2803 = vmatprep.subr.mxu0 0.0
        %2804 = vmatpush1.xpose.msra.mxu0 0.0
        %2805 = vmatprep.subr.mxu0 0.0
        %2806 = vmatpush1.xpose.msra.mxu0 0.0
        %2807 = vmatprep.subr.mxu0 0.0
        %2808 = vmatpush1.xpose.msra.mxu0 0.0
        %2809 = vmatprep.subr.mxu0 0.0
        %2810 = vmatpush1.xpose.msra.mxu0 0.0
        %2811 = vmatprep.subr.mxu0 0.0
        %2812 = vmatpush1.xpose.msra.mxu0 0.0
        %2813 = vmatprep.mubr.f32.mxu0 0.0
        %2814 = vmatmul.mubr.f32.gmra.mrb[0].mxu0 %v2737
        %v2815 = vpop.f32.mrb[0].mxu0
        %v2816 = vadd.f32 0.0, %v2815
        %v2817 = vpop.f32.mrb[0].mxu0
        %2818 = vmatprep.mubr.f32.mxu0 0.0
        %2819 = vmatmul.mubr.f32.gmra.mrb[0].mxu0 %v2739
        %v2820 = vpop.f32.mrb[0].mxu0
        %v2821 = vadd.f32 0.0, %v2820
        %v2822 = vpop.f32.mrb[0].mxu0
        %2823 = vmatprep.mubr.f32.mxu0 0.0
        %2824 = vmatmul.mubr.f32.gmra.mrb[0].mxu0 %v2741
        %v2825 = vpop.f32.mrb[0].mxu0
        %v2826 = vadd.f32 0.0, %v2825
        %v2827 = vpop.f32.mrb[0].mxu0
        %2828 = vdwg.mxu0
        %v2829 = vsel %vm2354, %v2712, -inf
        %2830 = vmax.xlane.f32.xlu0 %v2829
        %v2831 = vpop.xlane.xlu0 %2830
        %v2832 = vsel %vm2354, %v2717, -inf
        %2833 = vmax.xlane.f32.xlu0 %v2832
        %v2834 = vpop.xlane.xlu0 %2833
        %v2835 = vsel %vm2361, %v2722, -inf
        %2836 = vmax.xlane.f32.xlu0 %v2835
        %v2837 = vpop.xlane.xlu0 %2836
        %v2838 = vsel %vm2354, %v2816, -inf
        %2839 = vmax.xlane.f32.xlu0 %v2838
        %v2840 = vpop.xlane.xlu0 %2839
        %v2841 = vsel %vm2354, %v2821, -inf
        %2842 = vmax.xlane.f32.xlu0 %v2841
        %v2843 = vpop.xlane.xlu0 %2842
        %v2844 = vsel %vm2361, %v2826, -inf
        %2845 = vmax.xlane.f32.xlu0 %v2844
        %v2846 = vpop.xlane.xlu0 %2845
        %v2847 = vsub.f32 %v2712, %v2831
        %v2848 = vsub.f32 %v2717, %v2834
        %v2849 = vsub.f32 %v2722, %v2837
        %v2850 = vsub.f32 %v2816, %v2840
        %v2851 = vsub.f32 %v2821, %v2843
        %v2852 = vsub.f32 %v2826, %v2846
        %v2853 = vmul.f32 %v2847, 1.442695
        %v2854 = vpow.pop %v2853
        %v2855 = vmul.f32 %v2848, 1.442695
        %v2856 = vpow.pop %v2855
        %v2857 = vmul.f32 %v2849, 1.442695
        %v2858 = vpow.pop %v2857
        %v2859 = vmul.f32 %v2850, 1.442695
        %v2860 = vpow.pop %v2859
        %v2861 = vmul.f32 %v2851, 1.442695
        %v2862 = vpow.pop %v2861
        %v2863 = vmul.f32 %v2852, 1.442695
        %v2864 = vpow.pop %v2863
        %v2865 = vsel %vm2354, %v2854, 0.0
        %2866 = vadd.xlane.f32.xlu0 %v2865
        %v2867 = vpop.xlane.xlu0 %2866
        %v2868 = vsel %vm2354, %v2856, 0.0
        %2869 = vadd.xlane.f32.xlu0 %v2868
        %v2870 = vpop.xlane.xlu0 %2869
        %v2871 = vsel %vm2361, %v2858, 0.0
        %2872 = vadd.xlane.f32.xlu0 %v2871
        %v2873 = vpop.xlane.xlu0 %2872
        %v2874 = vsel %vm2354, %v2860, 0.0
        %2875 = vadd.xlane.f32.xlu0 %v2874
        %v2876 = vpop.xlane.xlu0 %2875
        %v2877 = vsel %vm2354, %v2862, 0.0
        %2878 = vadd.xlane.f32.xlu0 %v2877
        %v2879 = vpop.xlane.xlu0 %2878
        %v2880 = vsel %vm2361, %v2864, 0.0
        %2881 = vadd.xlane.f32.xlu0 %v2880
        %v2882 = vpop.xlane.xlu0 %2881
        %v2883 = vrcp.pop %v2867
        %v2884 = vrcp.pop %v2870
        %v2885 = vrcp.pop %v2873
        %v2886 = vrcp.pop %v2876
        %v2887 = vrcp.pop %v2879
        %v2888 = vrcp.pop %v2882
        %v2889 = vmul.f32 %v2854, %v2883
        %v2890 = vmul.f32 %v2856, %v2884
        %v2891 = vmul.f32 %v2858, %v2885
        %v2892 = vmul.f32 %v2860, %v2886
        %v2893 = vmul.f32 %v2862, %v2887
        %v2894 = vmul.f32 %v2864, %v2888
        %2895 = vrot.lane.b32.xlu0 %v1981, 56
        %v2896 = vpop.permute.xlu0 %2895
        %2897 = vrot.lane.b32.xlu0 %v2030, 56
        %v2898 = vpop.permute.xlu0 %2897
        %2899 = vrot.lane.b32.xlu0 %v2044, 56
        %v2900 = vpop.permute.xlu0 %2899
        %v2904 = vsel %vm2354, %v2889, 0
        %v2907 = vsel %vm2354, %v2890, 0
        %v2910 = vsel %vm2354, %v2891, 0
        %v2912 = vsel %vm2439, %v2900, 0
        %2914 = vmatprep.subr.mxu0 0.0
        %2915 = vmatpush1.msra.mxu0 %v2896
        %2916 = vmatprep.subr.mxu0 0.0
        %2917 = vmatpush1.msra.mxu0 %v2898
        %2918 = vmatprep.subr.mxu0 0.0
        %2919 = vmatpush1.msra.mxu0 %v2912
        %2920 = vmatprep.subr.mxu0 0.0
        %2921 = vmatpush1.msra.mxu0 0.0
        %2922 = vmatprep.subr.mxu0 0.0
        %2923 = vmatpush1.msra.mxu0 0.0
        %2924 = vmatprep.subr.mxu0 0.0
        %2925 = vmatpush1.msra.mxu0 0.0
        %2926 = vmatprep.subr.mxu0 0.0
        %2927 = vmatpush1.msra.mxu0 0.0
        %2928 = vmatprep.subr.mxu0 0.0
        %2929 = vmatpush1.msra.mxu0 0.0
        %2930 = vmatprep.subr.mxu0 0.0
        %2931 = vmatpush1.msra.mxu0 0.0
        %2932 = vmatprep.subr.mxu0 0.0
        %2933 = vmatpush1.msra.mxu0 0.0
        %2934 = vmatprep.subr.mxu0 0.0
        %2935 = vmatpush1.msra.mxu0 0.0
        %2936 = vmatprep.subr.mxu0 0.0
        %2937 = vmatpush1.msra.mxu0 0.0
        %2938 = vmatprep.subr.mxu0 0.0
        %2939 = vmatpush1.msra.mxu0 0.0
        %2940 = vmatprep.subr.mxu0 0.0
        %2941 = vmatpush1.msra.mxu0 0.0
        %2942 = vmatprep.subr.mxu0 0.0
        %2943 = vmatpush1.msra.mxu0 0.0
        %2944 = vmatprep.subr.mxu0 0.0
        %2945 = vmatpush1.msra.mxu0 0.0
        %2946 = vmatprep.subr.mxu0 0.0
        %2947 = vmatpush1.msra.mxu0 0.0
        %2948 = vmatprep.subr.mxu0 0.0
        %2949 = vmatpush1.msra.mxu0 0.0
        %2950 = vmatprep.subr.mxu0 0.0
        %2951 = vmatpush1.msra.mxu0 0.0
        %2952 = vmatprep.subr.mxu0 0.0
        %2953 = vmatpush1.msra.mxu0 0.0
        %2954 = vmatprep.subr.mxu0 0.0
        %2955 = vmatpush1.msra.mxu0 0.0
        %2956 = vmatprep.subr.mxu0 0.0
        %2957 = vmatpush1.msra.mxu0 0.0
        %2958 = vmatprep.subr.mxu0 0.0
        %2959 = vmatpush1.msra.mxu0 0.0
        %2960 = vmatprep.subr.mxu0 0.0
        %2961 = vmatpush1.msra.mxu0 0.0
        %2962 = vmatprep.subr.mxu0 0.0
        %2963 = vmatpush1.msra.mxu0 0.0
        %2964 = vmatprep.subr.mxu0 0.0
        %2965 = vmatpush1.msra.mxu0 0.0
        %2966 = vmatprep.subr.mxu0 0.0
        %2967 = vmatpush1.msra.mxu0 0.0
        %2968 = vmatprep.subr.mxu0 0.0
        %2969 = vmatpush1.msra.mxu0 0.0
        %2970 = vmatprep.subr.mxu0 0.0
        %2971 = vmatpush1.msra.mxu0 0.0
        %2972 = vmatprep.subr.mxu0 0.0
        %2973 = vmatpush1.msra.mxu0 0.0
        %2974 = vmatprep.subr.mxu0 0.0
        %2975 = vmatpush1.msra.mxu0 0.0
        %2976 = vmatprep.subr.mxu0 0.0
        %2977 = vmatpush1.msra.mxu0 0.0
        %2978 = vmatprep.mubr.f32.mxu0 0.0
        %2979 = vmatmul.mubr.f32.gmra.mrb[0].mxu0 %v2904
        %v2980 = vpop.f32.mrb[0].mxu0
        %v2981 = vadd.f32 0.0, %v2980
        %v2982 = vpop.f32.mrb[0].mxu0
        %2983 = vmatprep.mubr.f32.mxu0 0.0
        %2984 = vmatmul.mubr.f32.gmra.mrb[0].mxu0 %v2907
        %v2985 = vpop.f32.mrb[0].mxu0
        %v2986 = vadd.f32 0.0, %v2985
        %v2987 = vpop.f32.mrb[0].mxu0
        %2988 = vmatprep.mubr.f32.mxu0 0.0
        %2989 = vmatmul.mubr.f32.gmra.mrb[0].mxu0 %v2910
        %v2990 = vpop.f32.mrb[0].mxu0
        %v2991 = vadd.f32 0.0, %v2990
        %v2992 = vpop.f32.mrb[0].mxu0
        %2993 = vdwg.mxu0
        %2994 = vrot.lane.b32.xlu0 %v2192, 56
        %v2995 = vpop.permute.xlu0 %2994
        %2996 = vrot.lane.b32.xlu0 %v2241, 56
        %v2997 = vpop.permute.xlu0 %2996
        %2998 = vrot.lane.b32.xlu0 %v2255, 56
        %v2999 = vpop.permute.xlu0 %2998
        %v3003 = vsel %vm2354, %v2892, 0
        %v3006 = vsel %vm2354, %v2893, 0
        %v3009 = vsel %vm2354, %v2894, 0
        %v3011 = vsel %vm2439, %v2999, 0
        %3013 = vmatprep.subr.mxu0 0.0
        %3014 = vmatpush1.msra.mxu0 %v2995
        %3015 = vmatprep.subr.mxu0 0.0
        %3016 = vmatpush1.msra.mxu0 %v2997
        %3017 = vmatprep.subr.mxu0 0.0
        %3018 = vmatpush1.msra.mxu0 %v3011
        %3019 = vmatprep.subr.mxu0 0.0
        %3020 = vmatpush1.msra.mxu0 0.0
        %3021 = vmatprep.subr.mxu0 0.0
        %3022 = vmatpush1.msra.mxu0 0.0
        %3023 = vmatprep.subr.mxu0 0.0
        %3024 = vmatpush1.msra.mxu0 0.0
        %3025 = vmatprep.subr.mxu0 0.0
        %3026 = vmatpush1.msra.mxu0 0.0
        %3027 = vmatprep.subr.mxu0 0.0
        %3028 = vmatpush1.msra.mxu0 0.0
        %3029 = vmatprep.subr.mxu0 0.0
        %3030 = vmatpush1.msra.mxu0 0.0
        %3031 = vmatprep.subr.mxu0 0.0
        %3032 = vmatpush1.msra.mxu0 0.0
        %3033 = vmatprep.subr.mxu0 0.0
        %3034 = vmatpush1.msra.mxu0 0.0
        %3035 = vmatprep.subr.mxu0 0.0
        %3036 = vmatpush1.msra.mxu0 0.0
        %3037 = vmatprep.subr.mxu0 0.0
        %3038 = vmatpush1.msra.mxu0 0.0
        %3039 = vmatprep.subr.mxu0 0.0
        %3040 = vmatpush1.msra.mxu0 0.0
        %3041 = vmatprep.subr.mxu0 0.0
        %3042 = vmatpush1.msra.mxu0 0.0
        %3043 = vmatprep.subr.mxu0 0.0
        %3044 = vmatpush1.msra.mxu0 0.0
        %3045 = vmatprep.subr.mxu0 0.0
        %3046 = vmatpush1.msra.mxu0 0.0
        %3047 = vmatprep.subr.mxu0 0.0
        %3048 = vmatpush1.msra.mxu0 0.0
        %3049 = vmatprep.subr.mxu0 0.0
        %3050 = vmatpush1.msra.mxu0 0.0
        %3051 = vmatprep.subr.mxu0 0.0
        %3052 = vmatpush1.msra.mxu0 0.0
        %3053 = vmatprep.subr.mxu0 0.0
        %3054 = vmatpush1.msra.mxu0 0.0
        %3055 = vmatprep.subr.mxu0 0.0
        %3056 = vmatpush1.msra.mxu0 0.0
        %3057 = vmatprep.subr.mxu0 0.0
        %3058 = vmatpush1.msra.mxu0 0.0
        %3059 = vmatprep.subr.mxu0 0.0
        %3060 = vmatpush1.msra.mxu0 0.0
        %3061 = vmatprep.subr.mxu0 0.0
        %3062 = vmatpush1.msra.mxu0 0.0
        %3063 = vmatprep.subr.mxu0 0.0
        %3064 = vmatpush1.msra.mxu0 0.0
        %3065 = vmatprep.subr.mxu0 0.0
        %3066 = vmatpush1.msra.mxu0 0.0
        %3067 = vmatprep.subr.mxu0 0.0
        %3068 = vmatpush1.msra.mxu0 0.0
        %3069 = vmatprep.subr.mxu0 0.0
        %3070 = vmatpush1.msra.mxu0 0.0
        %3071 = vmatprep.subr.mxu0 0.0
        %3072 = vmatpush1.msra.mxu0 0.0
        %3073 = vmatprep.subr.mxu0 0.0
        %3074 = vmatpush1.msra.mxu0 0.0
        %3075 = vmatprep.subr.mxu0 0.0
        %3076 = vmatpush1.msra.mxu0 0.0
        %3077 = vmatprep.mubr.f32.mxu0 0.0
        %3078 = vmatmul.mubr.f32.gmra.mrb[0].mxu0 %v3003
        %v3079 = vpop.f32.mrb[0].mxu0
        %v3080 = vadd.f32 0.0, %v3079
        %v3081 = vpop.f32.mrb[0].mxu0
        %3082 = vmatprep.mubr.f32.mxu0 0.0
        %3083 = vmatmul.mubr.f32.gmra.mrb[0].mxu0 %v3006
        %v3084 = vpop.f32.mrb[0].mxu0
        %v3085 = vadd.f32 0.0, %v3084
        %v3086 = vpop.f32.mrb[0].mxu0
        %3087 = vmatprep.mubr.f32.mxu0 0.0
        %3088 = vmatmul.mubr.f32.gmra.mrb[0].mxu0 %v3009
        %v3089 = vpop.f32.mrb[0].mxu0
        %v3090 = vadd.f32 0.0, %v3089
        %v3091 = vpop.f32.mrb[0].mxu0
        %3092 = vdwg.mxu0
        %3093 = vrot.lane.b32.xlu0 %v1981, 112
        %v3094 = vpop.permute.xlu0 %3093
        %3095 = vrot.lane.b32.xlu0 %v2030, 112
        %v3096 = vpop.permute.xlu0 %3095
        %3097 = vrot.lane.b32.xlu0 %v2044, 112
        %v3098 = vpop.permute.xlu0 %3097
        %3099 = vrot.lane.b32.xlu0 %v1981, 80
        %v3100 = vpop.permute.xlu0 %3099
        %3101 = vrot.lane.b32.xlu0 %v2030, 80
        %v3102 = vpop.permute.xlu0 %3101
        %3103 = vrot.lane.b32.xlu0 %v2044, 80
        %v3104 = vpop.permute.xlu0 %3103
        %v3105 = vsel %vm2051, %v3094, 0
        %v3107 = vsel %vm2051, %v3096, 0
        %v3109 = vsel %vm2051, %v3098, 0
        %v3111 = vsel %vm2051, %v3100, 0
        %v3113 = vsel %vm2051, %v3102, 0
        %v3115 = vsel %vm2051, %v3104, 0
        %3117 = vmatprep.subr.mxu0 0.0
        %3118 = vmatpush1.xpose.msra.mxu0 %v3111
        %3119 = vmatprep.subr.mxu0 0.0
        %3120 = vmatpush1.xpose.msra.mxu0 %v3113
        %3121 = vmatprep.subr.mxu0 0.0
        %3122 = vmatpush1.xpose.msra.mxu0 %v3115
        %3123 = vmatprep.subr.mxu0 0.0
        %3124 = vmatpush1.xpose.msra.mxu0 0.0
        %3125 = vmatprep.subr.mxu0 0.0
        %3126 = vmatpush1.xpose.msra.mxu0 0.0
        %3127 = vmatprep.subr.mxu0 0.0
        %3128 = vmatpush1.xpose.msra.mxu0 0.0
        %3129 = vmatprep.subr.mxu0 0.0
        %3130 = vmatpush1.xpose.msra.mxu0 0.0
        %3131 = vmatprep.subr.mxu0 0.0
        %3132 = vmatpush1.xpose.msra.mxu0 0.0
        %3133 = vmatprep.subr.mxu0 0.0
        %3134 = vmatpush1.xpose.msra.mxu0 0.0
        %3135 = vmatprep.subr.mxu0 0.0
        %3136 = vmatpush1.xpose.msra.mxu0 0.0
        %3137 = vmatprep.subr.mxu0 0.0
        %3138 = vmatpush1.xpose.msra.mxu0 0.0
        %3139 = vmatprep.subr.mxu0 0.0
        %3140 = vmatpush1.xpose.msra.mxu0 0.0
        %3141 = vmatprep.subr.mxu0 0.0
        %3142 = vmatpush1.xpose.msra.mxu0 0.0
        %3143 = vmatprep.subr.mxu0 0.0
        %3144 = vmatpush1.xpose.msra.mxu0 0.0
        %3145 = vmatprep.subr.mxu0 0.0
        %3146 = vmatpush1.xpose.msra.mxu0 0.0
        %3147 = vmatprep.subr.mxu0 0.0
        %3148 = vmatpush1.xpose.msra.mxu0 0.0
        %3149 = vmatprep.subr.mxu0 0.0
        %3150 = vmatpush1.xpose.msra.mxu0 0.0
        %3151 = vmatprep.subr.mxu0 0.0
        %3152 = vmatpush1.xpose.msra.mxu0 0.0
        %3153 = vmatprep.subr.mxu0 0.0
        %3154 = vmatpush1.xpose.msra.mxu0 0.0
        %3155 = vmatprep.subr.mxu0 0.0
        %3156 = vmatpush1.xpose.msra.mxu0 0.0
        %3157 = vmatprep.subr.mxu0 0.0
        %3158 = vmatpush1.xpose.msra.mxu0 0.0
        %3159 = vmatprep.subr.mxu0 0.0
        %3160 = vmatpush1.xpose.msra.mxu0 0.0
        %3161 = vmatprep.subr.mxu0 0.0
        %3162 = vmatpush1.xpose.msra.mxu0 0.0
        %3163 = vmatprep.subr.mxu0 0.0
        %3164 = vmatpush1.xpose.msra.mxu0 0.0
        %3165 = vmatprep.subr.mxu0 0.0
        %3166 = vmatpush1.xpose.msra.mxu0 0.0
        %3167 = vmatprep.subr.mxu0 0.0
        %3168 = vmatpush1.xpose.msra.mxu0 0.0
        %3169 = vmatprep.subr.mxu0 0.0
        %3170 = vmatpush1.xpose.msra.mxu0 0.0
        %3171 = vmatprep.subr.mxu0 0.0
        %3172 = vmatpush1.xpose.msra.mxu0 0.0
        %3173 = vmatprep.subr.mxu0 0.0
        %3174 = vmatpush1.xpose.msra.mxu0 0.0
        %3175 = vmatprep.subr.mxu0 0.0
        %3176 = vmatpush1.xpose.msra.mxu0 0.0
        %3177 = vmatprep.subr.mxu0 0.0
        %3178 = vmatpush1.xpose.msra.mxu0 0.0
        %3179 = vmatprep.subr.mxu0 0.0
        %3180 = vmatpush1.xpose.msra.mxu0 0.0
        %3181 = vmatprep.mubr.f32.mxu0 0.0
        %3182 = vmatmul.mubr.f32.gmra.mrb[0].mxu0 %v3105
        %v3183 = vpop.f32.mrb[0].mxu0
        %v3184 = vadd.f32 0.0, %v3183
        %v3185 = vpop.f32.mrb[0].mxu0
        %3186 = vmatprep.mubr.f32.mxu0 0.0
        %3187 = vmatmul.mubr.f32.gmra.mrb[0].mxu0 %v3107
        %v3188 = vpop.f32.mrb[0].mxu0
        %v3189 = vadd.f32 0.0, %v3188
        %v3190 = vpop.f32.mrb[0].mxu0
        %3191 = vmatprep.mubr.f32.mxu0 0.0
        %3192 = vmatmul.mubr.f32.gmra.mrb[0].mxu0 %v3109
        %v3193 = vpop.f32.mrb[0].mxu0
        %v3194 = vadd.f32 0.0, %v3193
        %v3195 = vpop.f32.mrb[0].mxu0
        %3196 = vdwg.mxu0
        %3197 = vrot.lane.b32.xlu0 %v2192, 112
        %v3198 = vpop.permute.xlu0 %3197
        %3199 = vrot.lane.b32.xlu0 %v2241, 112
        %v3200 = vpop.permute.xlu0 %3199
        %3201 = vrot.lane.b32.xlu0 %v2255, 112
        %v3202 = vpop.permute.xlu0 %3201
        %3203 = vrot.lane.b32.xlu0 %v2192, 80
        %v3204 = vpop.permute.xlu0 %3203
        %3205 = vrot.lane.b32.xlu0 %v2241, 80
        %v3206 = vpop.permute.xlu0 %3205
        %3207 = vrot.lane.b32.xlu0 %v2255, 80
        %v3208 = vpop.permute.xlu0 %3207
        %v3209 = vsel %vm2051, %v3198, 0
        %v3211 = vsel %vm2051, %v3200, 0
        %v3213 = vsel %vm2051, %v3202, 0
        %v3215 = vsel %vm2051, %v3204, 0
        %v3217 = vsel %vm2051, %v3206, 0
        %v3219 = vsel %vm2051, %v3208, 0
        %3221 = vmatprep.subr.mxu0 0.0
        %3222 = vmatpush1.xpose.msra.mxu0 %v3215
        %3223 = vmatprep.subr.mxu0 0.0
        %3224 = vmatpush1.xpose.msra.mxu0 %v3217
        %3225 = vmatprep.subr.mxu0 0.0
        %3226 = vmatpush1.xpose.msra.mxu0 %v3219
        %3227 = vmatprep.subr.mxu0 0.0
        %3228 = vmatpush1.xpose.msra.mxu0 0.0
        %3229 = vmatprep.subr.mxu0 0.0
        %3230 = vmatpush1.xpose.msra.mxu0 0.0
        %3231 = vmatprep.subr.mxu0 0.0
        %3232 = vmatpush1.xpose.msra.mxu0 0.0
        %3233 = vmatprep.subr.mxu0 0.0
        %3234 = vmatpush1.xpose.msra.mxu0 0.0
        %3235 = vmatprep.subr.mxu0 0.0
        %3236 = vmatpush1.xpose.msra.mxu0 0.0
        %3237 = vmatprep.subr.mxu0 0.0
        %3238 = vmatpush1.xpose.msra.mxu0 0.0
        %3239 = vmatprep.subr.mxu0 0.0
        %3240 = vmatpush1.xpose.msra.mxu0 0.0
        %3241 = vmatprep.subr.mxu0 0.0
        %3242 = vmatpush1.xpose.msra.mxu0 0.0
        %3243 = vmatprep.subr.mxu0 0.0
        %3244 = vmatpush1.xpose.msra.mxu0 0.0
        %3245 = vmatprep.subr.mxu0 0.0
        %3246 = vmatpush1.xpose.msra.mxu0 0.0
        %3247 = vmatprep.subr.mxu0 0.0
        %3248 = vmatpush1.xpose.msra.mxu0 0.0
        %3249 = vmatprep.subr.mxu0 0.0
        %3250 = vmatpush1.xpose.msra.mxu0 0.0
        %3251 = vmatprep.subr.mxu0 0.0
        %3252 = vmatpush1.xpose.msra.mxu0 0.0
        %3253 = vmatprep.subr.mxu0 0.0
        %3254 = vmatpush1.xpose.msra.mxu0 0.0
        %3255 = vmatprep.subr.mxu0 0.0
        %3256 = vmatpush1.xpose.msra.mxu0 0.0
        %3257 = vmatprep.subr.mxu0 0.0
        %3258 = vmatpush1.xpose.msra.mxu0 0.0
        %3259 = vmatprep.subr.mxu0 0.0
        %3260 = vmatpush1.xpose.msra.mxu0 0.0
        %3261 = vmatprep.subr.mxu0 0.0
        %3262 = vmatpush1.xpose.msra.mxu0 0.0
        %3263 = vmatprep.subr.mxu0 0.0
        %3264 = vmatpush1.xpose.msra.mxu0 0.0
        %3265 = vmatprep.subr.mxu0 0.0
        %3266 = vmatpush1.xpose.msra.mxu0 0.0
        %3267 = vmatprep.subr.mxu0 0.0
        %3268 = vmatpush1.xpose.msra.mxu0 0.0
        %3269 = vmatprep.subr.mxu0 0.0
        %3270 = vmatpush1.xpose.msra.mxu0 0.0
        %3271 = vmatprep.subr.mxu0 0.0
        %3272 = vmatpush1.xpose.msra.mxu0 0.0
        %3273 = vmatprep.subr.mxu0 0.0
        %3274 = vmatpush1.xpose.msra.mxu0 0.0
        %3275 = vmatprep.subr.mxu0 0.0
        %3276 = vmatpush1.xpose.msra.mxu0 0.0
        %3277 = vmatprep.subr.mxu0 0.0
        %3278 = vmatpush1.xpose.msra.mxu0 0.0
        %3279 = vmatprep.subr.mxu0 0.0
        %3280 = vmatpush1.xpose.msra.mxu0 0.0
        %3281 = vmatprep.subr.mxu0 0.0
        %3282 = vmatpush1.xpose.msra.mxu0 0.0
        %3283 = vmatprep.subr.mxu0 0.0
        %3284 = vmatpush1.xpose.msra.mxu0 0.0
        %3285 = vmatprep.mubr.f32.mxu0 0.0
        %3286 = vmatmul.mubr.f32.gmra.mrb[0].mxu0 %v3209
        %v3287 = vpop.f32.mrb[0].mxu0
        %v3288 = vadd.f32 0.0, %v3287
        %v3289 = vpop.f32.mrb[0].mxu0
        %3290 = vmatprep.mubr.f32.mxu0 0.0
        %3291 = vmatmul.mubr.f32.gmra.mrb[0].mxu0 %v3211
        %v3292 = vpop.f32.mrb[0].mxu0
        %v3293 = vadd.f32 0.0, %v3292
        %v3294 = vpop.f32.mrb[0].mxu0
        %3295 = vmatprep.mubr.f32.mxu0 0.0
        %3296 = vmatmul.mubr.f32.gmra.mrb[0].mxu0 %v3213
        %v3297 = vpop.f32.mrb[0].mxu0
        %v3298 = vadd.f32 0.0, %v3297
        %v3299 = vpop.f32.mrb[0].mxu0
        %3300 = vdwg.mxu0
        %v3301 = vsel %vm2354, %v3184, -inf
        %3302 = vmax.xlane.f32.xlu0 %v3301
        %v3303 = vpop.xlane.xlu0 %3302
        %v3304 = vsel %vm2354, %v3189, -inf
        %3305 = vmax.xlane.f32.xlu0 %v3304
        %v3306 = vpop.xlane.xlu0 %3305
        %v3307 = vsel %vm2361, %v3194, -inf
        %3308 = vmax.xlane.f32.xlu0 %v3307
        %v3309 = vpop.xlane.xlu0 %3308
        %v3310 = vsel %vm2354, %v3288, -inf
        %3311 = vmax.xlane.f32.xlu0 %v3310
        %v3312 = vpop.xlane.xlu0 %3311
        %v3313 = vsel %vm2354, %v3293, -inf
        %3314 = vmax.xlane.f32.xlu0 %v3313
        %v3315 = vpop.xlane.xlu0 %3314
        %v3316 = vsel %vm2361, %v3298, -inf
        %3317 = vmax.xlane.f32.xlu0 %v3316
        %v3318 = vpop.xlane.xlu0 %3317
        %v3319 = vsub.f32 %v3184, %v3303
        %v3320 = vsub.f32 %v3189, %v3306
        %v3321 = vsub.f32 %v3194, %v3309
        %v3322 = vsub.f32 %v3288, %v3312
        %v3323 = vsub.f32 %v3293, %v3315
        %v3324 = vsub.f32 %v3298, %v3318
        %v3325 = vmul.f32 %v3319, 1.442695
        %v3326 = vpow.pop %v3325
        %v3327 = vmul.f32 %v3320, 1.442695
        %v3328 = vpow.pop %v3327
        %v3329 = vmul.f32 %v3321, 1.442695
        %v3330 = vpow.pop %v3329
        %v3331 = vmul.f32 %v3322, 1.442695
        %v3332 = vpow.pop %v3331
        %v3333 = vmul.f32 %v3323, 1.442695
        %v3334 = vpow.pop %v3333
        %v3335 = vmul.f32 %v3324, 1.442695
        %v3336 = vpow.pop %v3335
        %v3337 = vsel %vm2354, %v3326, 0.0
        %3338 = vadd.xlane.f32.xlu0 %v3337
        %v3339 = vpop.xlane.xlu0 %3338
        %v3340 = vsel %vm2354, %v3328, 0.0
        %3341 = vadd.xlane.f32.xlu0 %v3340
        %v3342 = vpop.xlane.xlu0 %3341
        %v3343 = vsel %vm2361, %v3330, 0.0
        %3344 = vadd.xlane.f32.xlu0 %v3343
        %v3345 = vpop.xlane.xlu0 %3344
        %v3346 = vsel %vm2354, %v3332, 0.0
        %3347 = vadd.xlane.f32.xlu0 %v3346
        %v3348 = vpop.xlane.xlu0 %3347
        %v3349 = vsel %vm2354, %v3334, 0.0
        %3350 = vadd.xlane.f32.xlu0 %v3349
        %v3351 = vpop.xlane.xlu0 %3350
        %v3352 = vsel %vm2361, %v3336, 0.0
        %3353 = vadd.xlane.f32.xlu0 %v3352
        %v3354 = vpop.xlane.xlu0 %3353
        %v3355 = vrcp.pop %v3339
        %v3356 = vrcp.pop %v3342
        %v3357 = vrcp.pop %v3345
        %v3358 = vrcp.pop %v3348
        %v3359 = vrcp.pop %v3351
        %v3360 = vrcp.pop %v3354
        %v3361 = vmul.f32 %v3326, %v3355
        %v3362 = vmul.f32 %v3328, %v3356
        %v3363 = vmul.f32 %v3330, %v3357
        %v3364 = vmul.f32 %v3332, %v3358
        %v3365 = vmul.f32 %v3334, %v3359
        %v3366 = vmul.f32 %v3336, %v3360
        %3367 = vrot.lane.b32.xlu0 %v1981, 48
        %v3368 = vpop.permute.xlu0 %3367
        %3369 = vrot.lane.b32.xlu0 %v2030, 48
        %v3370 = vpop.permute.xlu0 %3369
        %3371 = vrot.lane.b32.xlu0 %v2044, 48
        %v3372 = vpop.permute.xlu0 %3371
        %v3376 = vsel %vm2354, %v3361, 0
        %v3379 = vsel %vm2354, %v3362, 0
        %v3382 = vsel %vm2354, %v3363, 0
        %v3384 = vsel %vm2439, %v3372, 0
        %3386 = vmatprep.subr.mxu0 0.0
        %3387 = vmatpush1.msra.mxu0 %v3368
        %3388 = vmatprep.subr.mxu0 0.0
        %3389 = vmatpush1.msra.mxu0 %v3370
        %3390 = vmatprep.subr.mxu0 0.0
        %3391 = vmatpush1.msra.mxu0 %v3384
        %3392 = vmatprep.subr.mxu0 0.0
        %3393 = vmatpush1.msra.mxu0 0.0
        %3394 = vmatprep.subr.mxu0 0.0
        %3395 = vmatpush1.msra.mxu0 0.0
        %3396 = vmatprep.subr.mxu0 0.0
        %3397 = vmatpush1.msra.mxu0 0.0
        %3398 = vmatprep.subr.mxu0 0.0
        %3399 = vmatpush1.msra.mxu0 0.0
        %3400 = vmatprep.subr.mxu0 0.0
        %3401 = vmatpush1.msra.mxu0 0.0
        %3402 = vmatprep.subr.mxu0 0.0
        %3403 = vmatpush1.msra.mxu0 0.0
        %3404 = vmatprep.subr.mxu0 0.0
        %3405 = vmatpush1.msra.mxu0 0.0
        %3406 = vmatprep.subr.mxu0 0.0
        %3407 = vmatpush1.msra.mxu0 0.0
        %3408 = vmatprep.subr.mxu0 0.0
        %3409 = vmatpush1.msra.mxu0 0.0
        %3410 = vmatprep.subr.mxu0 0.0
        %3411 = vmatpush1.msra.mxu0 0.0
        %3412 = vmatprep.subr.mxu0 0.0
        %3413 = vmatpush1.msra.mxu0 0.0
        %3414 = vmatprep.subr.mxu0 0.0
        %3415 = vmatpush1.msra.mxu0 0.0
        %3416 = vmatprep.subr.mxu0 0.0
        %3417 = vmatpush1.msra.mxu0 0.0
        %3418 = vmatprep.subr.mxu0 0.0
        %3419 = vmatpush1.msra.mxu0 0.0
        %3420 = vmatprep.subr.mxu0 0.0
        %3421 = vmatpush1.msra.mxu0 0.0
        %3422 = vmatprep.subr.mxu0 0.0
        %3423 = vmatpush1.msra.mxu0 0.0
        %3424 = vmatprep.subr.mxu0 0.0
        %3425 = vmatpush1.msra.mxu0 0.0
        %3426 = vmatprep.subr.mxu0 0.0
        %3427 = vmatpush1.msra.mxu0 0.0
        %3428 = vmatprep.subr.mxu0 0.0
        %3429 = vmatpush1.msra.mxu0 0.0
        %3430 = vmatprep.subr.mxu0 0.0
        %3431 = vmatpush1.msra.mxu0 0.0
        %3432 = vmatprep.subr.mxu0 0.0
        %3433 = vmatpush1.msra.mxu0 0.0
        %3434 = vmatprep.subr.mxu0 0.0
        %3435 = vmatpush1.msra.mxu0 0.0
        %3436 = vmatprep.subr.mxu0 0.0
        %3437 = vmatpush1.msra.mxu0 0.0
        %3438 = vmatprep.subr.mxu0 0.0
        %3439 = vmatpush1.msra.mxu0 0.0
        %3440 = vmatprep.subr.mxu0 0.0
        %3441 = vmatpush1.msra.mxu0 0.0
        %3442 = vmatprep.subr.mxu0 0.0
        %3443 = vmatpush1.msra.mxu0 0.0
        %3444 = vmatprep.subr.mxu0 0.0
        %3445 = vmatpush1.msra.mxu0 0.0
        %3446 = vmatprep.subr.mxu0 0.0
        %3447 = vmatpush1.msra.mxu0 0.0
        %3448 = vmatprep.subr.mxu0 0.0
        %3449 = vmatpush1.msra.mxu0 0.0
        %3450 = vmatprep.mubr.f32.mxu0 0.0
        %3451 = vmatmul.mubr.f32.gmra.mrb[0].mxu0 %v3376
        %v3452 = vpop.f32.mrb[0].mxu0
        %v3453 = vadd.f32 0.0, %v3452
        %v3454 = vpop.f32.mrb[0].mxu0
        %3455 = vmatprep.mubr.f32.mxu0 0.0
        %3456 = vmatmul.mubr.f32.gmra.mrb[0].mxu0 %v3379
        %v3457 = vpop.f32.mrb[0].mxu0
        %v3458 = vadd.f32 0.0, %v3457
        %v3459 = vpop.f32.mrb[0].mxu0
        %3460 = vmatprep.mubr.f32.mxu0 0.0
        %3461 = vmatmul.mubr.f32.gmra.mrb[0].mxu0 %v3382
        %v3462 = vpop.f32.mrb[0].mxu0
        %v3463 = vadd.f32 0.0, %v3462
        %v3464 = vpop.f32.mrb[0].mxu0
        %3465 = vdwg.mxu0
        %3466 = vrot.lane.b32.xlu0 %v2192, 48
        %v3467 = vpop.permute.xlu0 %3466
        %3468 = vrot.lane.b32.xlu0 %v2241, 48
        %v3469 = vpop.permute.xlu0 %3468
        %3470 = vrot.lane.b32.xlu0 %v2255, 48
        %v3471 = vpop.permute.xlu0 %3470
        %v3475 = vsel %vm2354, %v3364, 0
        %v3478 = vsel %vm2354, %v3365, 0
        %v3481 = vsel %vm2354, %v3366, 0
        %v3483 = vsel %vm2439, %v3471, 0
        %3485 = vmatprep.subr.mxu0 0.0
        %3486 = vmatpush1.msra.mxu0 %v3467
        %3487 = vmatprep.subr.mxu0 0.0
        %3488 = vmatpush1.msra.mxu0 %v3469
        %3489 = vmatprep.subr.mxu0 0.0
        %3490 = vmatpush1.msra.mxu0 %v3483
        %3491 = vmatprep.subr.mxu0 0.0
        %3492 = vmatpush1.msra.mxu0 0.0
        %3493 = vmatprep.subr.mxu0 0.0
        %3494 = vmatpush1.msra.mxu0 0.0
        %3495 = vmatprep.subr.mxu0 0.0
        %3496 = vmatpush1.msra.mxu0 0.0
        %3497 = vmatprep.subr.mxu0 0.0
        %3498 = vmatpush1.msra.mxu0 0.0
        %3499 = vmatprep.subr.mxu0 0.0
        %3500 = vmatpush1.msra.mxu0 0.0
        %3501 = vmatprep.subr.mxu0 0.0
        %3502 = vmatpush1.msra.mxu0 0.0
        %3503 = vmatprep.subr.mxu0 0.0
        %3504 = vmatpush1.msra.mxu0 0.0
        %3505 = vmatprep.subr.mxu0 0.0
        %3506 = vmatpush1.msra.mxu0 0.0
        %3507 = vmatprep.subr.mxu0 0.0
        %3508 = vmatpush1.msra.mxu0 0.0
        %3509 = vmatprep.subr.mxu0 0.0
        %3510 = vmatpush1.msra.mxu0 0.0
        %3511 = vmatprep.subr.mxu0 0.0
        %3512 = vmatpush1.msra.mxu0 0.0
        %3513 = vmatprep.subr.mxu0 0.0
        %3514 = vmatpush1.msra.mxu0 0.0
        %3515 = vmatprep.subr.mxu0 0.0
        %3516 = vmatpush1.msra.mxu0 0.0
        %3517 = vmatprep.subr.mxu0 0.0
        %3518 = vmatpush1.msra.mxu0 0.0
        %3519 = vmatprep.subr.mxu0 0.0
        %3520 = vmatpush1.msra.mxu0 0.0
        %3521 = vmatprep.subr.mxu0 0.0
        %3522 = vmatpush1.msra.mxu0 0.0
        %3523 = vmatprep.subr.mxu0 0.0
        %3524 = vmatpush1.msra.mxu0 0.0
        %3525 = vmatprep.subr.mxu0 0.0
        %3526 = vmatpush1.msra.mxu0 0.0
        %3527 = vmatprep.subr.mxu0 0.0
        %3528 = vmatpush1.msra.mxu0 0.0
        %3529 = vmatprep.subr.mxu0 0.0
        %3530 = vmatpush1.msra.mxu0 0.0
        %3531 = vmatprep.subr.mxu0 0.0
        %3532 = vmatpush1.msra.mxu0 0.0
        %3533 = vmatprep.subr.mxu0 0.0
        %3534 = vmatpush1.msra.mxu0 0.0
        %3535 = vmatprep.subr.mxu0 0.0
        %3536 = vmatpush1.msra.mxu0 0.0
        %3537 = vmatprep.subr.mxu0 0.0
        %3538 = vmatpush1.msra.mxu0 0.0
        %3539 = vmatprep.subr.mxu0 0.0
        %3540 = vmatpush1.msra.mxu0 0.0
        %3541 = vmatprep.subr.mxu0 0.0
        %3542 = vmatpush1.msra.mxu0 0.0
        %3543 = vmatprep.subr.mxu0 0.0
        %3544 = vmatpush1.msra.mxu0 0.0
        %3545 = vmatprep.subr.mxu0 0.0
        %3546 = vmatpush1.msra.mxu0 0.0
        %3547 = vmatprep.subr.mxu0 0.0
        %3548 = vmatpush1.msra.mxu0 0.0
        %3549 = vmatprep.mubr.f32.mxu0 0.0
        %3550 = vmatmul.mubr.f32.gmra.mrb[0].mxu0 %v3475
        %v3551 = vpop.f32.mrb[0].mxu0
        %v3552 = vadd.f32 0.0, %v3551
        %v3553 = vpop.f32.mrb[0].mxu0
        %3554 = vmatprep.mubr.f32.mxu0 0.0
        %3555 = vmatmul.mubr.f32.gmra.mrb[0].mxu0 %v3478
        %v3556 = vpop.f32.mrb[0].mxu0
        %v3557 = vadd.f32 0.0, %v3556
        %v3558 = vpop.f32.mrb[0].mxu0
        %3559 = vmatprep.mubr.f32.mxu0 0.0
        %3560 = vmatmul.mubr.f32.gmra.mrb[0].mxu0 %v3481
        %v3561 = vpop.f32.mrb[0].mxu0
        %v3562 = vadd.f32 0.0, %v3561
        %v3563 = vpop.f32.mrb[0].mxu0
        %3564 = vdwg.mxu0
        %3565 = vrot.lane.b32.xlu0 %v1981, 104
        %v3566 = vpop.permute.xlu0 %3565
        %3567 = vrot.lane.b32.xlu0 %v2030, 104
        %v3568 = vpop.permute.xlu0 %3567
        %3569 = vrot.lane.b32.xlu0 %v2044, 104
        %v3570 = vpop.permute.xlu0 %3569
        %3571 = vrot.lane.b32.xlu0 %v1981, 72
        %v3572 = vpop.permute.xlu0 %3571
        %3573 = vrot.lane.b32.xlu0 %v2030, 72
        %v3574 = vpop.permute.xlu0 %3573
        %3575 = vrot.lane.b32.xlu0 %v2044, 72
        %v3576 = vpop.permute.xlu0 %3575
        %v3577 = vsel %vm2051, %v3566, 0
        %v3579 = vsel %vm2051, %v3568, 0
        %v3581 = vsel %vm2051, %v3570, 0
        %v3583 = vsel %vm2051, %v3572, 0
        %v3585 = vsel %vm2051, %v3574, 0
        %v3587 = vsel %vm2051, %v3576, 0
        %3589 = vmatprep.subr.mxu0 0.0
        %3590 = vmatpush1.xpose.msra.mxu0 %v3583
        %3591 = vmatprep.subr.mxu0 0.0
        %3592 = vmatpush1.xpose.msra.mxu0 %v3585
        %3593 = vmatprep.subr.mxu0 0.0
        %3594 = vmatpush1.xpose.msra.mxu0 %v3587
        %3595 = vmatprep.subr.mxu0 0.0
        %3596 = vmatpush1.xpose.msra.mxu0 0.0
        %3597 = vmatprep.subr.mxu0 0.0
        %3598 = vmatpush1.xpose.msra.mxu0 0.0
        %3599 = vmatprep.subr.mxu0 0.0
        %3600 = vmatpush1.xpose.msra.mxu0 0.0
        %3601 = vmatprep.subr.mxu0 0.0
        %3602 = vmatpush1.xpose.msra.mxu0 0.0
        %3603 = vmatprep.subr.mxu0 0.0
        %3604 = vmatpush1.xpose.msra.mxu0 0.0
        %3605 = vmatprep.subr.mxu0 0.0
        %3606 = vmatpush1.xpose.msra.mxu0 0.0
        %3607 = vmatprep.subr.mxu0 0.0
        %3608 = vmatpush1.xpose.msra.mxu0 0.0
        %3609 = vmatprep.subr.mxu0 0.0
        %3610 = vmatpush1.xpose.msra.mxu0 0.0
        %3611 = vmatprep.subr.mxu0 0.0
        %3612 = vmatpush1.xpose.msra.mxu0 0.0
        %3613 = vmatprep.subr.mxu0 0.0
        %3614 = vmatpush1.xpose.msra.mxu0 0.0
        %3615 = vmatprep.subr.mxu0 0.0
        %3616 = vmatpush1.xpose.msra.mxu0 0.0
        %3617 = vmatprep.subr.mxu0 0.0
        %3618 = vmatpush1.xpose.msra.mxu0 0.0
        %3619 = vmatprep.subr.mxu0 0.0
        %3620 = vmatpush1.xpose.msra.mxu0 0.0
        %3621 = vmatprep.subr.mxu0 0.0
        %3622 = vmatpush1.xpose.msra.mxu0 0.0
        %3623 = vmatprep.subr.mxu0 0.0
        %3624 = vmatpush1.xpose.msra.mxu0 0.0
        %3625 = vmatprep.subr.mxu0 0.0
        %3626 = vmatpush1.xpose.msra.mxu0 0.0
        %3627 = vmatprep.subr.mxu0 0.0
        %3628 = vmatpush1.xpose.msra.mxu0 0.0
        %3629 = vmatprep.subr.mxu0 0.0
        %3630 = vmatpush1.xpose.msra.mxu0 0.0
        %3631 = vmatprep.subr.mxu0 0.0
        %3632 = vmatpush1.xpose.msra.mxu0 0.0
        %3633 = vmatprep.subr.mxu0 0.0
        %3634 = vmatpush1.xpose.msra.mxu0 0.0
        %3635 = vmatprep.subr.mxu0 0.0
        %3636 = vmatpush1.xpose.msra.mxu0 0.0
        %3637 = vmatprep.subr.mxu0 0.0
        %3638 = vmatpush1.xpose.msra.mxu0 0.0
        %3639 = vmatprep.subr.mxu0 0.0
        %3640 = vmatpush1.xpose.msra.mxu0 0.0
        %3641 = vmatprep.subr.mxu0 0.0
        %3642 = vmatpush1.xpose.msra.mxu0 0.0
        %3643 = vmatprep.subr.mxu0 0.0
        %3644 = vmatpush1.xpose.msra.mxu0 0.0
        %3645 = vmatprep.subr.mxu0 0.0
        %3646 = vmatpush1.xpose.msra.mxu0 0.0
        %3647 = vmatprep.subr.mxu0 0.0
        %3648 = vmatpush1.xpose.msra.mxu0 0.0
        %3649 = vmatprep.subr.mxu0 0.0
        %3650 = vmatpush1.xpose.msra.mxu0 0.0
        %3651 = vmatprep.subr.mxu0 0.0
        %3652 = vmatpush1.xpose.msra.mxu0 0.0
        %3653 = vmatprep.mubr.f32.mxu0 0.0
        %3654 = vmatmul.mubr.f32.gmra.mrb[0].mxu0 %v3577
        %v3655 = vpop.f32.mrb[0].mxu0
        %v3656 = vadd.f32 0.0, %v3655
        %v3657 = vpop.f32.mrb[0].mxu0
        %3658 = vmatprep.mubr.f32.mxu0 0.0
        %3659 = vmatmul.mubr.f32.gmra.mrb[0].mxu0 %v3579
        %v3660 = vpop.f32.mrb[0].mxu0
        %v3661 = vadd.f32 0.0, %v3660
        %v3662 = vpop.f32.mrb[0].mxu0
        %3663 = vmatprep.mubr.f32.mxu0 0.0
        %3664 = vmatmul.mubr.f32.gmra.mrb[0].mxu0 %v3581
        %v3665 = vpop.f32.mrb[0].mxu0
        %v3666 = vadd.f32 0.0, %v3665
        %v3667 = vpop.f32.mrb[0].mxu0
        %3668 = vdwg.mxu0
        %3669 = vrot.lane.b32.xlu0 %v2192, 104
        %v3670 = vpop.permute.xlu0 %3669
        %3671 = vrot.lane.b32.xlu0 %v2241, 104
        %v3672 = vpop.permute.xlu0 %3671
        %3673 = vrot.lane.b32.xlu0 %v2255, 104
        %v3674 = vpop.permute.xlu0 %3673
        %3675 = vrot.lane.b32.xlu0 %v2192, 72
        %v3676 = vpop.permute.xlu0 %3675
        %3677 = vrot.lane.b32.xlu0 %v2241, 72
        %v3678 = vpop.permute.xlu0 %3677
        %3679 = vrot.lane.b32.xlu0 %v2255, 72
        %v3680 = vpop.permute.xlu0 %3679
        %v3681 = vsel %vm2051, %v3670, 0
        %v3683 = vsel %vm2051, %v3672, 0
        %v3685 = vsel %vm2051, %v3674, 0
        %v3687 = vsel %vm2051, %v3676, 0
        %v3689 = vsel %vm2051, %v3678, 0
        %v3691 = vsel %vm2051, %v3680, 0
        %3693 = vmatprep.subr.mxu0 0.0
        %3694 = vmatpush1.xpose.msra.mxu0 %v3687
        %3695 = vmatprep.subr.mxu0 0.0
        %3696 = vmatpush1.xpose.msra.mxu0 %v3689
        %3697 = vmatprep.subr.mxu0 0.0
        %3698 = vmatpush1.xpose.msra.mxu0 %v3691
        %3699 = vmatprep.subr.mxu0 0.0
        %3700 = vmatpush1.xpose.msra.mxu0 0.0
        %3701 = vmatprep.subr.mxu0 0.0
        %3702 = vmatpush1.xpose.msra.mxu0 0.0
        %3703 = vmatprep.subr.mxu0 0.0
        %3704 = vmatpush1.xpose.msra.mxu0 0.0
        %3705 = vmatprep.subr.mxu0 0.0
        %3706 = vmatpush1.xpose.msra.mxu0 0.0
        %3707 = vmatprep.subr.mxu0 0.0
        %3708 = vmatpush1.xpose.msra.mxu0 0.0
        %3709 = vmatprep.subr.mxu0 0.0
        %3710 = vmatpush1.xpose.msra.mxu0 0.0
        %3711 = vmatprep.subr.mxu0 0.0
        %3712 = vmatpush1.xpose.msra.mxu0 0.0
        %3713 = vmatprep.subr.mxu0 0.0
        %3714 = vmatpush1.xpose.msra.mxu0 0.0
        %3715 = vmatprep.subr.mxu0 0.0
        %3716 = vmatpush1.xpose.msra.mxu0 0.0
        %3717 = vmatprep.subr.mxu0 0.0
        %3718 = vmatpush1.xpose.msra.mxu0 0.0
        %3719 = vmatprep.subr.mxu0 0.0
        %3720 = vmatpush1.xpose.msra.mxu0 0.0
        %3721 = vmatprep.subr.mxu0 0.0
        %3722 = vmatpush1.xpose.msra.mxu0 0.0
        %3723 = vmatprep.subr.mxu0 0.0
        %3724 = vmatpush1.xpose.msra.mxu0 0.0
        %3725 = vmatprep.subr.mxu0 0.0
        %3726 = vmatpush1.xpose.msra.mxu0 0.0
        %3727 = vmatprep.subr.mxu0 0.0
        %3728 = vmatpush1.xpose.msra.mxu0 0.0
        %3729 = vmatprep.subr.mxu0 0.0
        %3730 = vmatpush1.xpose.msra.mxu0 0.0
        %3731 = vmatprep.subr.mxu0 0.0
        %3732 = vmatpush1.xpose.msra.mxu0 0.0
        %3733 = vmatprep.subr.mxu0 0.0
        %3734 = vmatpush1.xpose.msra.mxu0 0.0
        %3735 = vmatprep.subr.mxu0 0.0
        %3736 = vmatpush1.xpose.msra.mxu0 0.0
        %3737 = vmatprep.subr.mxu0 0.0
        %3738 = vmatpush1.xpose.msra.mxu0 0.0
        %3739 = vmatprep.subr.mxu0 0.0
        %3740 = vmatpush1.xpose.msra.mxu0 0.0
        %3741 = vmatprep.subr.mxu0 0.0
        %3742 = vmatpush1.xpose.msra.mxu0 0.0
        %3743 = vmatprep.subr.mxu0 0.0
        %3744 = vmatpush1.xpose.msra.mxu0 0.0
        %3745 = vmatprep.subr.mxu0 0.0
        %3746 = vmatpush1.xpose.msra.mxu0 0.0
        %3747 = vmatprep.subr.mxu0 0.0
        %3748 = vmatpush1.xpose.msra.mxu0 0.0
        %3749 = vmatprep.subr.mxu0 0.0
        %3750 = vmatpush1.xpose.msra.mxu0 0.0
        %3751 = vmatprep.subr.mxu0 0.0
        %3752 = vmatpush1.xpose.msra.mxu0 0.0
        %3753 = vmatprep.subr.mxu0 0.0
        %3754 = vmatpush1.xpose.msra.mxu0 0.0
        %3755 = vmatprep.subr.mxu0 0.0
        %3756 = vmatpush1.xpose.msra.mxu0 0.0
        %3757 = vmatprep.mubr.f32.mxu0 0.0
        %3758 = vmatmul.mubr.f32.gmra.mrb[0].mxu0 %v3681
        %v3759 = vpop.f32.mrb[0].mxu0
        %v3760 = vadd.f32 0.0, %v3759
        %v3761 = vpop.f32.mrb[0].mxu0
        %3762 = vmatprep.mubr.f32.mxu0 0.0
        %3763 = vmatmul.mubr.f32.gmra.mrb[0].mxu0 %v3683
        %v3764 = vpop.f32.mrb[0].mxu0
        %v3765 = vadd.f32 0.0, %v3764
        %v3766 = vpop.f32.mrb[0].mxu0
        %3767 = vmatprep.mubr.f32.mxu0 0.0
        %3768 = vmatmul.mubr.f32.gmra.mrb[0].mxu0 %v3685
        %v3769 = vpop.f32.mrb[0].mxu0
        %v3770 = vadd.f32 0.0, %v3769
        %v3771 = vpop.f32.mrb[0].mxu0
        %3772 = vdwg.mxu0
        %v3773 = vsel %vm2354, %v3656, -inf
        %3774 = vmax.xlane.f32.xlu0 %v3773
        %v3775 = vpop.xlane.xlu0 %3774
        %v3776 = vsel %vm2354, %v3661, -inf
        %3777 = vmax.xlane.f32.xlu0 %v3776
        %v3778 = vpop.xlane.xlu0 %3777
        %v3779 = vsel %vm2361, %v3666, -inf
        %3780 = vmax.xlane.f32.xlu0 %v3779
        %v3781 = vpop.xlane.xlu0 %3780
        %v3782 = vsel %vm2354, %v3760, -inf
        %3783 = vmax.xlane.f32.xlu0 %v3782
        %v3784 = vpop.xlane.xlu0 %3783
        %v3785 = vsel %vm2354, %v3765, -inf
        %3786 = vmax.xlane.f32.xlu0 %v3785
        %v3787 = vpop.xlane.xlu0 %3786
        %v3788 = vsel %vm2361, %v3770, -inf
        %3789 = vmax.xlane.f32.xlu0 %v3788
        %v3790 = vpop.xlane.xlu0 %3789
        %v3791 = vsub.f32 %v3656, %v3775
        %v3792 = vsub.f32 %v3661, %v3778
        %v3793 = vsub.f32 %v3666, %v3781
        %v3794 = vsub.f32 %v3760, %v3784
        %v3795 = vsub.f32 %v3765, %v3787
        %v3796 = vsub.f32 %v3770, %v3790
        %v3797 = vmul.f32 %v3791, 1.442695
        %v3798 = vpow.pop %v3797
        %v3799 = vmul.f32 %v3792, 1.442695
        %v3800 = vpow.pop %v3799
        %v3801 = vmul.f32 %v3793, 1.442695
        %v3802 = vpow.pop %v3801
        %v3803 = vmul.f32 %v3794, 1.442695
        %v3804 = vpow.pop %v3803
        %v3805 = vmul.f32 %v3795, 1.442695
        %v3806 = vpow.pop %v3805
        %v3807 = vmul.f32 %v3796, 1.442695
        %v3808 = vpow.pop %v3807
        %v3809 = vsel %vm2354, %v3798, 0.0
        %3810 = vadd.xlane.f32.xlu0 %v3809
        %v3811 = vpop.xlane.xlu0 %3810
        %v3812 = vsel %vm2354, %v3800, 0.0
        %3813 = vadd.xlane.f32.xlu0 %v3812
        %v3814 = vpop.xlane.xlu0 %3813
        %v3815 = vsel %vm2361, %v3802, 0.0
        %3816 = vadd.xlane.f32.xlu0 %v3815
        %v3817 = vpop.xlane.xlu0 %3816
        %v3818 = vsel %vm2354, %v3804, 0.0
        %3819 = vadd.xlane.f32.xlu0 %v3818
        %v3820 = vpop.xlane.xlu0 %3819
        %v3821 = vsel %vm2354, %v3806, 0.0
        %3822 = vadd.xlane.f32.xlu0 %v3821
        %v3823 = vpop.xlane.xlu0 %3822
        %v3824 = vsel %vm2361, %v3808, 0.0
        %3825 = vadd.xlane.f32.xlu0 %v3824
        %v3826 = vpop.xlane.xlu0 %3825
        %v3827 = vrcp.pop %v3811
        %v3828 = vrcp.pop %v3814
        %v3829 = vrcp.pop %v3817
        %v3830 = vrcp.pop %v3820
        %v3831 = vrcp.pop %v3823
        %v3832 = vrcp.pop %v3826
        %v3833 = vmul.f32 %v3798, %v3827
        %v3834 = vmul.f32 %v3800, %v3828
        %v3835 = vmul.f32 %v3802, %v3829
        %v3836 = vmul.f32 %v3804, %v3830
        %v3837 = vmul.f32 %v3806, %v3831
        %v3838 = vmul.f32 %v3808, %v3832
        %3839 = vrot.lane.b32.xlu0 %v1981, 40
        %v3840 = vpop.permute.xlu0 %3839
        %3841 = vrot.lane.b32.xlu0 %v2030, 40
        %v3842 = vpop.permute.xlu0 %3841
        %3843 = vrot.lane.b32.xlu0 %v2044, 40
        %v3844 = vpop.permute.xlu0 %3843
        %v3848 = vsel %vm2354, %v3833, 0
        %v3851 = vsel %vm2354, %v3834, 0
        %v3854 = vsel %vm2354, %v3835, 0
        %v3856 = vsel %vm2439, %v3844, 0
        %3858 = vmatprep.subr.mxu0 0.0
        %3859 = vmatpush1.msra.mxu0 %v3840
        %3860 = vmatprep.subr.mxu0 0.0
        %3861 = vmatpush1.msra.mxu0 %v3842
        %3862 = vmatprep.subr.mxu0 0.0
        %3863 = vmatpush1.msra.mxu0 %v3856
        %3864 = vmatprep.subr.mxu0 0.0
        %3865 = vmatpush1.msra.mxu0 0.0
        %3866 = vmatprep.subr.mxu0 0.0
        %3867 = vmatpush1.msra.mxu0 0.0
        %3868 = vmatprep.subr.mxu0 0.0
        %3869 = vmatpush1.msra.mxu0 0.0
        %3870 = vmatprep.subr.mxu0 0.0
        %3871 = vmatpush1.msra.mxu0 0.0
        %3872 = vmatprep.subr.mxu0 0.0
        %3873 = vmatpush1.msra.mxu0 0.0
        %3874 = vmatprep.subr.mxu0 0.0
        %3875 = vmatpush1.msra.mxu0 0.0
        %3876 = vmatprep.subr.mxu0 0.0
        %3877 = vmatpush1.msra.mxu0 0.0
        %3878 = vmatprep.subr.mxu0 0.0
        %3879 = vmatpush1.msra.mxu0 0.0
        %3880 = vmatprep.subr.mxu0 0.0
        %3881 = vmatpush1.msra.mxu0 0.0
        %3882 = vmatprep.subr.mxu0 0.0
        %3883 = vmatpush1.msra.mxu0 0.0
        %3884 = vmatprep.subr.mxu0 0.0
        %3885 = vmatpush1.msra.mxu0 0.0
        %3886 = vmatprep.subr.mxu0 0.0
        %3887 = vmatpush1.msra.mxu0 0.0
        %3888 = vmatprep.subr.mxu0 0.0
        %3889 = vmatpush1.msra.mxu0 0.0
        %3890 = vmatprep.subr.mxu0 0.0
        %3891 = vmatpush1.msra.mxu0 0.0
        %3892 = vmatprep.subr.mxu0 0.0
        %3893 = vmatpush1.msra.mxu0 0.0
        %3894 = vmatprep.subr.mxu0 0.0
        %3895 = vmatpush1.msra.mxu0 0.0
        %3896 = vmatprep.subr.mxu0 0.0
        %3897 = vmatpush1.msra.mxu0 0.0
        %3898 = vmatprep.subr.mxu0 0.0
        %3899 = vmatpush1.msra.mxu0 0.0
        %3900 = vmatprep.subr.mxu0 0.0
        %3901 = vmatpush1.msra.mxu0 0.0
        %3902 = vmatprep.subr.mxu0 0.0
        %3903 = vmatpush1.msra.mxu0 0.0
        %3904 = vmatprep.subr.mxu0 0.0
        %3905 = vmatpush1.msra.mxu0 0.0
        %3906 = vmatprep.subr.mxu0 0.0
        %3907 = vmatpush1.msra.mxu0 0.0
        %3908 = vmatprep.subr.mxu0 0.0
        %3909 = vmatpush1.msra.mxu0 0.0
        %3910 = vmatprep.subr.mxu0 0.0
        %3911 = vmatpush1.msra.mxu0 0.0
        %3912 = vmatprep.subr.mxu0 0.0
        %3913 = vmatpush1.msra.mxu0 0.0
        %3914 = vmatprep.subr.mxu0 0.0
        %3915 = vmatpush1.msra.mxu0 0.0
        %3916 = vmatprep.subr.mxu0 0.0
        %3917 = vmatpush1.msra.mxu0 0.0
        %3918 = vmatprep.subr.mxu0 0.0
        %3919 = vmatpush1.msra.mxu0 0.0
        %3920 = vmatprep.subr.mxu0 0.0
        %3921 = vmatpush1.msra.mxu0 0.0
        %3922 = vmatprep.mubr.f32.mxu0 0.0
        %3923 = vmatmul.mubr.f32.gmra.mrb[0].mxu0 %v3848
        %v3924 = vpop.f32.mrb[0].mxu0
        %v3925 = vadd.f32 0.0, %v3924
        %v3926 = vpop.f32.mrb[0].mxu0
        %3927 = vmatprep.mubr.f32.mxu0 0.0
        %3928 = vmatmul.mubr.f32.gmra.mrb[0].mxu0 %v3851
        %v3929 = vpop.f32.mrb[0].mxu0
        %v3930 = vadd.f32 0.0, %v3929
        %v3931 = vpop.f32.mrb[0].mxu0
        %3932 = vmatprep.mubr.f32.mxu0 0.0
        %3933 = vmatmul.mubr.f32.gmra.mrb[0].mxu0 %v3854
        %v3934 = vpop.f32.mrb[0].mxu0
        %v3935 = vadd.f32 0.0, %v3934
        %v3936 = vpop.f32.mrb[0].mxu0
        %3937 = vdwg.mxu0
        %3938 = vrot.lane.b32.xlu0 %v2192, 40
        %v3939 = vpop.permute.xlu0 %3938
        %3940 = vrot.lane.b32.xlu0 %v2241, 40
        %v3941 = vpop.permute.xlu0 %3940
        %3942 = vrot.lane.b32.xlu0 %v2255, 40
        %v3943 = vpop.permute.xlu0 %3942
        %v3947 = vsel %vm2354, %v3836, 0
        %v3950 = vsel %vm2354, %v3837, 0
        %v3953 = vsel %vm2354, %v3838, 0
        %v3955 = vsel %vm2439, %v3943, 0
        %3957 = vmatprep.subr.mxu0 0.0
        %3958 = vmatpush1.msra.mxu0 %v3939
        %3959 = vmatprep.subr.mxu0 0.0
        %3960 = vmatpush1.msra.mxu0 %v3941
        %3961 = vmatprep.subr.mxu0 0.0
        %3962 = vmatpush1.msra.mxu0 %v3955
        %3963 = vmatprep.subr.mxu0 0.0
        %3964 = vmatpush1.msra.mxu0 0.0
        %3965 = vmatprep.subr.mxu0 0.0
        %3966 = vmatpush1.msra.mxu0 0.0
        %3967 = vmatprep.subr.mxu0 0.0
        %3968 = vmatpush1.msra.mxu0 0.0
        %3969 = vmatprep.subr.mxu0 0.0
        %3970 = vmatpush1.msra.mxu0 0.0
        %3971 = vmatprep.subr.mxu0 0.0
        %3972 = vmatpush1.msra.mxu0 0.0
        %3973 = vmatprep.subr.mxu0 0.0
        %3974 = vmatpush1.msra.mxu0 0.0
        %3975 = vmatprep.subr.mxu0 0.0
        %3976 = vmatpush1.msra.mxu0 0.0
        %3977 = vmatprep.subr.mxu0 0.0
        %3978 = vmatpush1.msra.mxu0 0.0
        %3979 = vmatprep.subr.mxu0 0.0
        %3980 = vmatpush1.msra.mxu0 0.0
        %3981 = vmatprep.subr.mxu0 0.0
        %3982 = vmatpush1.msra.mxu0 0.0
        %3983 = vmatprep.subr.mxu0 0.0
        %3984 = vmatpush1.msra.mxu0 0.0
        %3985 = vmatprep.subr.mxu0 0.0
        %3986 = vmatpush1.msra.mxu0 0.0
        %3987 = vmatprep.subr.mxu0 0.0
        %3988 = vmatpush1.msra.mxu0 0.0
        %3989 = vmatprep.subr.mxu0 0.0
        %3990 = vmatpush1.msra.mxu0 0.0
        %3991 = vmatprep.subr.mxu0 0.0
        %3992 = vmatpush1.msra.mxu0 0.0
        %3993 = vmatprep.subr.mxu0 0.0
        %3994 = vmatpush1.msra.mxu0 0.0
        %3995 = vmatprep.subr.mxu0 0.0
        %3996 = vmatpush1.msra.mxu0 0.0
        %3997 = vmatprep.subr.mxu0 0.0
        %3998 = vmatpush1.msra.mxu0 0.0
        %3999 = vmatprep.subr.mxu0 0.0
        %4000 = vmatpush1.msra.mxu0 0.0
        %4001 = vmatprep.subr.mxu0 0.0
        %4002 = vmatpush1.msra.mxu0 0.0
        %4003 = vmatprep.subr.mxu0 0.0
        %4004 = vmatpush1.msra.mxu0 0.0
        %4005 = vmatprep.subr.mxu0 0.0
        %4006 = vmatpush1.msra.mxu0 0.0
        %4007 = vmatprep.subr.mxu0 0.0
        %4008 = vmatpush1.msra.mxu0 0.0
        %4009 = vmatprep.subr.mxu0 0.0
        %4010 = vmatpush1.msra.mxu0 0.0
        %4011 = vmatprep.subr.mxu0 0.0
        %4012 = vmatpush1.msra.mxu0 0.0
        %4013 = vmatprep.subr.mxu0 0.0
        %4014 = vmatpush1.msra.mxu0 0.0
        %4015 = vmatprep.subr.mxu0 0.0
        %4016 = vmatpush1.msra.mxu0 0.0
        %4017 = vmatprep.subr.mxu0 0.0
        %4018 = vmatpush1.msra.mxu0 0.0
        %4019 = vmatprep.subr.mxu0 0.0
        %4020 = vmatpush1.msra.mxu0 0.0
        %4021 = vmatprep.mubr.f32.mxu0 0.0
        %4022 = vmatmul.mubr.f32.gmra.mrb[0].mxu0 %v3947
        %v4023 = vpop.f32.mrb[0].mxu0
        %v4024 = vadd.f32 0.0, %v4023
        %v4025 = vpop.f32.mrb[0].mxu0
        %4026 = vmatprep.mubr.f32.mxu0 0.0
        %4027 = vmatmul.mubr.f32.gmra.mrb[0].mxu0 %v3950
        %v4028 = vpop.f32.mrb[0].mxu0
        %v4029 = vadd.f32 0.0, %v4028
        %v4030 = vpop.f32.mrb[0].mxu0
        %4031 = vmatprep.mubr.f32.mxu0 0.0
        %4032 = vmatmul.mubr.f32.gmra.mrb[0].mxu0 %v3953
        %v4033 = vpop.f32.mrb[0].mxu0
        %v4034 = vadd.f32 0.0, %v4033
        %v4035 = vpop.f32.mrb[0].mxu0
        %4036 = vdwg.mxu0
        %4043 = vrot.lane.b32.xlu0 %v2981, 8
        %v4044 = vpop.permute.xlu0 %4043
        %4045 = vrot.lane.b32.xlu0 %v2986, 8
        %v4046 = vpop.permute.xlu0 %4045
        %4047 = vrot.lane.b32.xlu0 %v2991, 8
        %v4048 = vpop.permute.xlu0 %4047
        %4049 = vrot.lane.b32.xlu0 %v3080, 8
        %v4050 = vpop.permute.xlu0 %4049
        %4051 = vrot.lane.b32.xlu0 %v3085, 8
        %v4052 = vpop.permute.xlu0 %4051
        %4053 = vrot.lane.b32.xlu0 %v3090, 8
        %v4054 = vpop.permute.xlu0 %4053
        %4067 = vrot.lane.b32.xlu0 %v3453, 16
        %v4068 = vpop.permute.xlu0 %4067
        %4069 = vrot.lane.b32.xlu0 %v3458, 16
        %v4070 = vpop.permute.xlu0 %4069
        %4071 = vrot.lane.b32.xlu0 %v3463, 16
        %v4072 = vpop.permute.xlu0 %4071
        %4073 = vrot.lane.b32.xlu0 %v3552, 16
        %v4074 = vpop.permute.xlu0 %4073
        %4075 = vrot.lane.b32.xlu0 %v3557, 16
        %v4076 = vpop.permute.xlu0 %4075
        %4077 = vrot.lane.b32.xlu0 %v3562, 16
        %v4078 = vpop.permute.xlu0 %4077
        %4091 = vrot.lane.b32.xlu0 %v3925, 24
        %v4092 = vpop.permute.xlu0 %4091
        %4093 = vrot.lane.b32.xlu0 %v3930, 24
        %v4094 = vpop.permute.xlu0 %4093
        %4095 = vrot.lane.b32.xlu0 %v3935, 24
        %v4096 = vpop.permute.xlu0 %4095
        %4097 = vrot.lane.b32.xlu0 %v4024, 24
        %v4098 = vpop.permute.xlu0 %4097
        %4099 = vrot.lane.b32.xlu0 %v4029, 24
        %v4100 = vpop.permute.xlu0 %4099
        %4101 = vrot.lane.b32.xlu0 %v4034, 24
        %v4102 = vpop.permute.xlu0 %4101
        %v4109 = vsel %vm2051, %v2509, %v4044
        %v4110 = vsel %vm2051, %v2514, %v4046
        %v4111 = vsel %vm2051, %v2519, %v4048
        %v4112 = vsel %vm2051, %v2608, %v4050
        %v4113 = vsel %vm2051, %v2613, %v4052
        %v4114 = vsel %vm2051, %v2618, %v4054
        %vm4115 = vcmask 130048
        %v4116 = vsel %vm4115, %v4109, %v4068
        %v4117 = vsel %vm4115, %v4110, %v4070
        %v4118 = vsel %vm4115, %v4111, %v4072
        %v4119 = vsel %vm4115, %v4112, %v4074
        %v4120 = vsel %vm4115, %v4113, %v4076
        %v4121 = vsel %vm4115, %v4114, %v4078
        %vm4122 = vcmask 195584
        %v4123 = vsel %vm4122, %v4116, %v4092
        %v4124 = vsel %vm4122, %v4117, %v4094
        %v4125 = vsel %vm4122, %v4118, %v4096
        %v4126 = vsel %vm4122, %v4119, %v4098
        %v4127 = vsel %vm4122, %v4120, %v4100
        %v4128 = vsel %vm4122, %v4121, %v4102
        %v4129 = vld [vmem:[%s716] sm:$0x1]
        %v4131 = vlaneseq
        %v4132 = vshrl.u32 %v4131, 7
        %v4133 = vsub.s32 0, %v4132
        %v4134 = vrot.slane %v4129, %v4133
        %v4136 = vadd.f32 %v871, %v4134
        %v4137 = vadd.f32 %v872, %v4134
        %v4138 = vadd.f32 %v873, %v4134
        %v4139 = vadd.f32 %v874, %v4134
        %v4140 = vadd.f32 %v875, %v4134
        %v4141 = vadd.f32 %v876, %v4134
        %v4142 = vld [vmem:[%s713] sm:$0xff]
        %v4143 = vld [vmem:[%s713 + $0x8] sm:$0xff]
        %v4144 = vld [vmem:[%s713 + $0x10] sm:$0xff]
        %v4145 = vld [vmem:[%s713 + $0x18] sm:$0xff]
        %v4152 = vcombine.high %v4123, %v4123
        %v4154 = vunpack.c.l.s4 1966171168
        %v4155 = vunpack.c.0.s8 %v4154
        %v4156 = vlaneseq
        %v4157 = vshrl.u32 %v4156, 7
        %v4158 = vsub.s32 %v4155, %v4157
        %v4159 = vrot.slane %v4123, %v4158
        %v4161 = vunpack.c.l.s4 1966171168
        %v4162 = vunpack.c.0.s8 %v4161
        %v4163 = vlaneseq
        %v4164 = vshrl.u32 %v4163, 7
        %v4165 = vsub.s32 %v4162, %v4164
        %v4166 = vrot.slane %v4152, %v4165
        %v4167 = vcombine.high %v4159, %v4159
        %v4168 = vcombine.high %v4166, %v4166
        %v4170 = vunpack.c.l.s4 1966171168
        %v4171 = vunpack.c.0.s8 %v4170
        %v4172 = vlaneseq
        %v4173 = vshrl.u32 %v4172, 7
        %v4174 = vsub.s32 %v4171, %v4173
        %v4175 = vrot.slane %v4159, %v4174
        %v4177 = vunpack.c.l.s4 1966171168
        %v4178 = vunpack.c.0.s8 %v4177
        %v4179 = vlaneseq
        %v4180 = vshrl.u32 %v4179, 7
        %v4181 = vsub.s32 %v4178, %v4180
        %v4182 = vrot.slane %v4166, %v4181
        %v4184 = vunpack.c.l.s4 1966171168
        %v4185 = vunpack.c.0.s8 %v4184
        %v4186 = vlaneseq
        %v4187 = vshrl.u32 %v4186, 7
        %v4188 = vsub.s32 %v4185, %v4187
        %v4189 = vrot.slane %v4167, %v4188
        %v4191 = vunpack.c.l.s4 1966171168
        %v4192 = vunpack.c.0.s8 %v4191
        %v4193 = vlaneseq
        %v4194 = vshrl.u32 %v4193, 7
        %v4195 = vsub.s32 %v4192, %v4194
        %v4196 = vrot.slane %v4168, %v4195
        %v4197 = vcombine.high %v4175, %v4175
        %v4198 = vcombine.high %v4182, %v4182
        %v4199 = vcombine.high %v4189, %v4189
        %v4200 = vcombine.high %v4196, %v4196
        %v4201 = vcombine.high %v4124, %v4124
        %v4203 = vunpack.c.l.s4 1966171168
        %v4204 = vunpack.c.0.s8 %v4203
        %v4205 = vlaneseq
        %v4206 = vshrl.u32 %v4205, 7
        %v4207 = vsub.s32 %v4204, %v4206
        %v4208 = vrot.slane %v4124, %v4207
        %v4210 = vunpack.c.l.s4 1966171168
        %v4211 = vunpack.c.0.s8 %v4210
        %v4212 = vlaneseq
        %v4213 = vshrl.u32 %v4212, 7
        %v4214 = vsub.s32 %v4211, %v4213
        %v4215 = vrot.slane %v4201, %v4214
        %v4216 = vcombine.high %v4208, %v4208
        %v4217 = vcombine.high %v4215, %v4215
        %v4219 = vunpack.c.l.s4 1966171168
        %v4220 = vunpack.c.0.s8 %v4219
        %v4221 = vlaneseq
        %v4222 = vshrl.u32 %v4221, 7
        %v4223 = vsub.s32 %v4220, %v4222
        %v4224 = vrot.slane %v4208, %v4223
        %v4226 = vunpack.c.l.s4 1966171168
        %v4227 = vunpack.c.0.s8 %v4226
        %v4228 = vlaneseq
        %v4229 = vshrl.u32 %v4228, 7
        %v4230 = vsub.s32 %v4227, %v4229
        %v4231 = vrot.slane %v4215, %v4230
        %v4233 = vunpack.c.l.s4 1966171168
        %v4234 = vunpack.c.0.s8 %v4233
        %v4235 = vlaneseq
        %v4236 = vshrl.u32 %v4235, 7
        %v4237 = vsub.s32 %v4234, %v4236
        %v4238 = vrot.slane %v4216, %v4237
        %v4240 = vunpack.c.l.s4 1966171168
        %v4241 = vunpack.c.0.s8 %v4240
        %v4242 = vlaneseq
        %v4243 = vshrl.u32 %v4242, 7
        %v4244 = vsub.s32 %v4241, %v4243
        %v4245 = vrot.slane %v4217, %v4244
        %v4246 = vcombine.high %v4224, %v4224
        %v4247 = vcombine.high %v4231, %v4231
        %v4248 = vcombine.high %v4238, %v4238
        %v4249 = vcombine.high %v4245, %v4245
        %v4251 = vunpack.c.l.s4 1966171168
        %v4252 = vunpack.c.0.s8 %v4251
        %v4253 = vlaneseq
        %v4254 = vshrl.u32 %v4253, 7
        %v4255 = vsub.s32 %v4252, %v4254
        %v4256 = vrot.slane %v4125, %v4255
        %v4258 = vunpack.c.l.s4 1966171168
        %v4259 = vunpack.c.0.s8 %v4258
        %v4260 = vlaneseq
        %v4261 = vshrl.u32 %v4260, 7
        %v4262 = vsub.s32 %v4259, %v4261
        %v4263 = vrot.slane %v4256, %v4262
        %v4264 = vcombine.high %v4126, %v4126
        %v4266 = vunpack.c.l.s4 1966171168
        %v4267 = vunpack.c.0.s8 %v4266
        %v4268 = vlaneseq
        %v4269 = vshrl.u32 %v4268, 7
        %v4270 = vsub.s32 %v4267, %v4269
        %v4271 = vrot.slane %v4126, %v4270
        %v4273 = vunpack.c.l.s4 1966171168
        %v4274 = vunpack.c.0.s8 %v4273
        %v4275 = vlaneseq
        %v4276 = vshrl.u32 %v4275, 7
        %v4277 = vsub.s32 %v4274, %v4276
        %v4278 = vrot.slane %v4264, %v4277
        %v4279 = vcombine.high %v4271, %v4271
        %v4280 = vcombine.high %v4278, %v4278
        %v4282 = vunpack.c.l.s4 1966171168
        %v4283 = vunpack.c.0.s8 %v4282
        %v4284 = vlaneseq
        %v4285 = vshrl.u32 %v4284, 7
        %v4286 = vsub.s32 %v4283, %v4285
        %v4287 = vrot.slane %v4271, %v4286
        %v4289 = vunpack.c.l.s4 1966171168
        %v4290 = vunpack.c.0.s8 %v4289
        %v4291 = vlaneseq
        %v4292 = vshrl.u32 %v4291, 7
        %v4293 = vsub.s32 %v4290, %v4292
        %v4294 = vrot.slane %v4278, %v4293
        %v4296 = vunpack.c.l.s4 1966171168
        %v4297 = vunpack.c.0.s8 %v4296
        %v4298 = vlaneseq
        %v4299 = vshrl.u32 %v4298, 7
        %v4300 = vsub.s32 %v4297, %v4299
        %v4301 = vrot.slane %v4279, %v4300
        %v4303 = vunpack.c.l.s4 1966171168
        %v4304 = vunpack.c.0.s8 %v4303
        %v4305 = vlaneseq
        %v4306 = vshrl.u32 %v4305, 7
        %v4307 = vsub.s32 %v4304, %v4306
        %v4308 = vrot.slane %v4280, %v4307
        %v4309 = vcombine.high %v4287, %v4287
        %v4310 = vcombine.high %v4294, %v4294
        %v4311 = vcombine.high %v4301, %v4301
        %v4312 = vcombine.high %v4308, %v4308
        %v4313 = vcombine.high %v4127, %v4127
        %v4315 = vunpack.c.l.s4 1966171168
        %v4316 = vunpack.c.0.s8 %v4315
        %v4317 = vlaneseq
        %v4318 = vshrl.u32 %v4317, 7
        %v4319 = vsub.s32 %v4316, %v4318
        %v4320 = vrot.slane %v4127, %v4319
        %v4322 = vunpack.c.l.s4 1966171168
        %v4323 = vunpack.c.0.s8 %v4322
        %v4324 = vlaneseq
        %v4325 = vshrl.u32 %v4324, 7
        %v4326 = vsub.s32 %v4323, %v4325
        %v4327 = vrot.slane %v4313, %v4326
        %v4328 = vcombine.high %v4320, %v4320
        %v4329 = vcombine.high %v4327, %v4327
        %v4331 = vunpack.c.l.s4 1966171168
        %v4332 = vunpack.c.0.s8 %v4331
        %v4333 = vlaneseq
        %v4334 = vshrl.u32 %v4333, 7
        %v4335 = vsub.s32 %v4332, %v4334
        %v4336 = vrot.slane %v4320, %v4335
        %v4338 = vunpack.c.l.s4 1966171168
        %v4339 = vunpack.c.0.s8 %v4338
        %v4340 = vlaneseq
        %v4341 = vshrl.u32 %v4340, 7
        %v4342 = vsub.s32 %v4339, %v4341
        %v4343 = vrot.slane %v4327, %v4342
        %v4345 = vunpack.c.l.s4 1966171168
        %v4346 = vunpack.c.0.s8 %v4345
        %v4347 = vlaneseq
        %v4348 = vshrl.u32 %v4347, 7
        %v4349 = vsub.s32 %v4346, %v4348
        %v4350 = vrot.slane %v4328, %v4349
        %v4352 = vunpack.c.l.s4 1966171168
        %v4353 = vunpack.c.0.s8 %v4352
        %v4354 = vlaneseq
        %v4355 = vshrl.u32 %v4354, 7
        %v4356 = vsub.s32 %v4353, %v4355
        %v4357 = vrot.slane %v4329, %v4356
        %v4358 = vcombine.high %v4336, %v4336
        %v4359 = vcombine.high %v4343, %v4343
        %v4360 = vcombine.high %v4350, %v4350
        %v4361 = vcombine.high %v4357, %v4357
        %v4363 = vunpack.c.l.s4 1966171168
        %v4364 = vunpack.c.0.s8 %v4363
        %v4365 = vlaneseq
        %v4366 = vshrl.u32 %v4365, 7
        %v4367 = vsub.s32 %v4364, %v4366
        %v4368 = vrot.slane %v4128, %v4367
        %v4370 = vunpack.c.l.s4 1966171168
        %v4371 = vunpack.c.0.s8 %v4370
        %v4372 = vlaneseq
        %v4373 = vshrl.u32 %v4372, 7
        %v4374 = vsub.s32 %v4371, %v4373
        %v4375 = vrot.slane %v4368, %v4374
        %v4376 = vcombine.low %v4175, %v4189
        %v4377 = vcombine.low %v4197, %v4199
        %v4378 = vcombine.low %v4182, %v4196
        %v4379 = vcombine.low %v4198, %v4200
        %v4381 = vunpack.c.l.s4 1966171168
        %v4382 = vunpack.c.0.s8 %v4381
        %v4383 = vlaneseq
        %v4384 = vshrl.u32 %v4383, 7
        %v4385 = vsub.s32 %v4382, %v4384
        %v4386 = vrot.slane %v4376, %v4385
        %v4388 = vunpack.c.l.s4 1966171168
        %v4389 = vunpack.c.0.s8 %v4388
        %v4390 = vlaneseq
        %v4391 = vshrl.u32 %v4390, 7
        %v4392 = vsub.s32 %v4389, %v4391
        %v4393 = vrot.slane %v4377, %v4392
        %v4395 = vunpack.c.l.s4 1966171168
        %v4396 = vunpack.c.0.s8 %v4395
        %v4397 = vlaneseq
        %v4398 = vshrl.u32 %v4397, 7
        %v4399 = vsub.s32 %v4396, %v4398
        %v4400 = vrot.slane %v4378, %v4399
        %v4402 = vunpack.c.l.s4 1966171168
        %v4403 = vunpack.c.0.s8 %v4402
        %v4404 = vlaneseq
        %v4405 = vshrl.u32 %v4404, 7
        %v4406 = vsub.s32 %v4403, %v4405
        %v4407 = vrot.slane %v4379, %v4406
        %v4408 = vcombine.low %v4386, %v4393
        %v4409 = vcombine.low %v4400, %v4407
        %v4411 = vunpack.c.l.s4 1966171168
        %v4412 = vunpack.c.0.s8 %v4411
        %v4413 = vlaneseq
        %v4414 = vshrl.u32 %v4413, 7
        %v4415 = vsub.s32 %v4412, %v4414
        %v4416 = vrot.slane %v4408, %v4415
        %v4418 = vunpack.c.l.s4 1966171168
        %v4419 = vunpack.c.0.s8 %v4418
        %v4420 = vlaneseq
        %v4421 = vshrl.u32 %v4420, 7
        %v4422 = vsub.s32 %v4419, %v4421
        %v4423 = vrot.slane %v4409, %v4422
        %v4424 = vcombine.low %v4416, %v4423
        %v4425 = vcombine.low %v4224, %v4238
        %v4426 = vcombine.low %v4246, %v4248
        %v4427 = vcombine.low %v4231, %v4245
        %v4428 = vcombine.low %v4247, %v4249
        %v4430 = vunpack.c.l.s4 1966171168
        %v4431 = vunpack.c.0.s8 %v4430
        %v4432 = vlaneseq
        %v4433 = vshrl.u32 %v4432, 7
        %v4434 = vsub.s32 %v4431, %v4433
        %v4435 = vrot.slane %v4425, %v4434
        %v4437 = vunpack.c.l.s4 1966171168
        %v4438 = vunpack.c.0.s8 %v4437
        %v4439 = vlaneseq
        %v4440 = vshrl.u32 %v4439, 7
        %v4441 = vsub.s32 %v4438, %v4440
        %v4442 = vrot.slane %v4426, %v4441
        %v4444 = vunpack.c.l.s4 1966171168
        %v4445 = vunpack.c.0.s8 %v4444
        %v4446 = vlaneseq
        %v4447 = vshrl.u32 %v4446, 7
        %v4448 = vsub.s32 %v4445, %v4447
        %v4449 = vrot.slane %v4427, %v4448
        %v4451 = vunpack.c.l.s4 1966171168
        %v4452 = vunpack.c.0.s8 %v4451
        %v4453 = vlaneseq
        %v4454 = vshrl.u32 %v4453, 7
        %v4455 = vsub.s32 %v4452, %v4454
        %v4456 = vrot.slane %v4428, %v4455
        %v4457 = vcombine.low %v4435, %v4442
        %v4458 = vcombine.low %v4449, %v4456
        %v4460 = vunpack.c.l.s4 1966171168
        %v4461 = vunpack.c.0.s8 %v4460
        %v4462 = vlaneseq
        %v4463 = vshrl.u32 %v4462, 7
        %v4464 = vsub.s32 %v4461, %v4463
        %v4465 = vrot.slane %v4457, %v4464
        %v4467 = vunpack.c.l.s4 1966171168
        %v4468 = vunpack.c.0.s8 %v4467
        %v4469 = vlaneseq
        %v4470 = vshrl.u32 %v4469, 7
        %v4471 = vsub.s32 %v4468, %v4470
        %v4472 = vrot.slane %v4458, %v4471
        %v4473 = vcombine.low %v4465, %v4472
        %v4474 = vcombine.low %v4263, %v4287
        %v4475 = vcombine.low %v4301, %v4309
        %v4476 = vcombine.low %v4311, %v4294
        %v4477 = vcombine.low %v4308, %v4310
        %v4479 = vunpack.c.l.s4 1966171168
        %v4480 = vunpack.c.0.s8 %v4479
        %v4481 = vlaneseq
        %v4482 = vshrl.u32 %v4481, 7
        %v4483 = vsub.s32 %v4480, %v4482
        %v4484 = vrot.slane %v4474, %v4483
        %v4486 = vunpack.c.l.s4 1966171168
        %v4487 = vunpack.c.0.s8 %v4486
        %v4488 = vlaneseq
        %v4489 = vshrl.u32 %v4488, 7
        %v4490 = vsub.s32 %v4487, %v4489
        %v4491 = vrot.slane %v4475, %v4490
        %v4493 = vunpack.c.l.s4 1966171168
        %v4494 = vunpack.c.0.s8 %v4493
        %v4495 = vlaneseq
        %v4496 = vshrl.u32 %v4495, 7
        %v4497 = vsub.s32 %v4494, %v4496
        %v4498 = vrot.slane %v4476, %v4497
        %v4500 = vunpack.c.l.s4 1966171168
        %v4501 = vunpack.c.0.s8 %v4500
        %v4502 = vlaneseq
        %v4503 = vshrl.u32 %v4502, 7
        %v4504 = vsub.s32 %v4501, %v4503
        %v4505 = vrot.slane %v4477, %v4504
        %v4506 = vcombine.low %v4484, %v4491
        %v4507 = vcombine.low %v4498, %v4505
        %v4509 = vunpack.c.l.s4 1966171168
        %v4510 = vunpack.c.0.s8 %v4509
        %v4511 = vlaneseq
        %v4512 = vshrl.u32 %v4511, 7
        %v4513 = vsub.s32 %v4510, %v4512
        %v4514 = vrot.slane %v4506, %v4513
        %v4516 = vunpack.c.l.s4 1966171168
        %v4517 = vunpack.c.0.s8 %v4516
        %v4518 = vlaneseq
        %v4519 = vshrl.u32 %v4518, 7
        %v4520 = vsub.s32 %v4517, %v4519
        %v4521 = vrot.slane %v4507, %v4520
        %v4522 = vcombine.low %v4514, %v4521
        %v4523 = vcombine.low %v4312, %v4336
        %v4524 = vcombine.low %v4350, %v4358
        %v4525 = vcombine.low %v4360, %v4343
        %v4526 = vcombine.low %v4357, %v4359
        %v4528 = vunpack.c.l.s4 1966171168
        %v4529 = vunpack.c.0.s8 %v4528
        %v4530 = vlaneseq
        %v4531 = vshrl.u32 %v4530, 7
        %v4532 = vsub.s32 %v4529, %v4531
        %v4533 = vrot.slane %v4523, %v4532
        %v4535 = vunpack.c.l.s4 1966171168
        %v4536 = vunpack.c.0.s8 %v4535
        %v4537 = vlaneseq
        %v4538 = vshrl.u32 %v4537, 7
        %v4539 = vsub.s32 %v4536, %v4538
        %v4540 = vrot.slane %v4524, %v4539
        %v4542 = vunpack.c.l.s4 1966171168
        %v4543 = vunpack.c.0.s8 %v4542
        %v4544 = vlaneseq
        %v4545 = vshrl.u32 %v4544, 7
        %v4546 = vsub.s32 %v4543, %v4545
        %v4547 = vrot.slane %v4525, %v4546
        %v4549 = vunpack.c.l.s4 1966171168
        %v4550 = vunpack.c.0.s8 %v4549
        %v4551 = vlaneseq
        %v4552 = vshrl.u32 %v4551, 7
        %v4553 = vsub.s32 %v4550, %v4552
        %v4554 = vrot.slane %v4526, %v4553
        %v4555 = vcombine.low %v4533, %v4540
        %v4556 = vcombine.low %v4547, %v4554
        %v4558 = vunpack.c.l.s4 1966171168
        %v4559 = vunpack.c.0.s8 %v4558
        %v4560 = vlaneseq
        %v4561 = vshrl.u32 %v4560, 7
        %v4562 = vsub.s32 %v4559, %v4561
        %v4563 = vrot.slane %v4555, %v4562
        %v4565 = vunpack.c.l.s4 1966171168
        %v4566 = vunpack.c.0.s8 %v4565
        %v4567 = vlaneseq
        %v4568 = vshrl.u32 %v4567, 7
        %v4569 = vsub.s32 %v4566, %v4568
        %v4570 = vrot.slane %v4556, %v4569
        %v4571 = vcombine.low %v4563, %v4570
        %v4572 = vcombine.low %v4361, %v4375
        %v4574 = vunpack.c.l.s4 1966171168
        %v4575 = vunpack.c.0.s8 %v4574
        %v4576 = vlaneseq
        %v4577 = vshrl.u32 %v4576, 7
        %v4578 = vsub.s32 %v4575, %v4577
        %v4579 = vrot.slane %v4572, %v4578
        %v4581 = vunpack.c.l.s4 1966171168
        %v4582 = vunpack.c.0.s8 %v4581
        %v4583 = vlaneseq
        %v4584 = vshrl.u32 %v4583, 7
        %v4585 = vsub.s32 %v4582, %v4584
        %v4586 = vrot.slane %v4579, %v4585
        %v4587 = vsel %vm891, %v4424, 0
        %v4589 = vsel %vm891, %v4473, 0
        %v4591 = vsel %vm891, %v4522, 0
        %v4593 = vsel %vm891, %v4571, 0
        %v4595 = vsel %vm891, %v4586, 0
        %4597 = vmatprep.subr.mxu0 0.0
        %4598 = vmatpush1.msra.mxu0 %v4142
        %4599 = vmatprep.subr.mxu0 0.0
        %4600 = vmatpush1.msra.mxu0 %v4143
        %4601 = vmatprep.subr.mxu0 0.0
        %4602 = vmatpush1.msra.mxu0 %v4144
        %4603 = vmatprep.subr.mxu0 0.0
        %4604 = vmatpush1.msra.mxu0 %v4145
        %4605 = vmatprep.subr.mxu0 0.0
        %4606 = vmatpush1.msra.mxu0 0.0
        %4607 = vmatprep.subr.mxu0 0.0
        %4608 = vmatpush1.msra.mxu0 0.0
        %4609 = vmatprep.subr.mxu0 0.0
        %4610 = vmatpush1.msra.mxu0 0.0
        %4611 = vmatprep.subr.mxu0 0.0
        %4612 = vmatpush1.msra.mxu0 0.0
        %4613 = vmatprep.subr.mxu0 0.0
        %4614 = vmatpush1.msra.mxu0 0.0
        %4615 = vmatprep.subr.mxu0 0.0
        %4616 = vmatpush1.msra.mxu0 0.0
        %4617 = vmatprep.subr.mxu0 0.0
        %4618 = vmatpush1.msra.mxu0 0.0
        %4619 = vmatprep.subr.mxu0 0.0
        %4620 = vmatpush1.msra.mxu0 0.0
        %4621 = vmatprep.subr.mxu0 0.0
        %4622 = vmatpush1.msra.mxu0 0.0
        %4623 = vmatprep.subr.mxu0 0.0
        %4624 = vmatpush1.msra.mxu0 0.0
        %4625 = vmatprep.subr.mxu0 0.0
        %4626 = vmatpush1.msra.mxu0 0.0
        %4627 = vmatprep.subr.mxu0 0.0
        %4628 = vmatpush1.msra.mxu0 0.0
        %4629 = vmatprep.subr.mxu0 0.0
        %4630 = vmatpush1.msra.mxu0 0.0
        %4631 = vmatprep.subr.mxu0 0.0
        %4632 = vmatpush1.msra.mxu0 0.0
        %4633 = vmatprep.subr.mxu0 0.0
        %4634 = vmatpush1.msra.mxu0 0.0
        %4635 = vmatprep.subr.mxu0 0.0
        %4636 = vmatpush1.msra.mxu0 0.0
        %4637 = vmatprep.subr.mxu0 0.0
        %4638 = vmatpush1.msra.mxu0 0.0
        %4639 = vmatprep.subr.mxu0 0.0
        %4640 = vmatpush1.msra.mxu0 0.0
        %4641 = vmatprep.subr.mxu0 0.0
        %4642 = vmatpush1.msra.mxu0 0.0
        %4643 = vmatprep.subr.mxu0 0.0
        %4644 = vmatpush1.msra.mxu0 0.0
        %4645 = vmatprep.subr.mxu0 0.0
        %4646 = vmatpush1.msra.mxu0 0.0
        %4647 = vmatprep.subr.mxu0 0.0
        %4648 = vmatpush1.msra.mxu0 0.0
        %4649 = vmatprep.subr.mxu0 0.0
        %4650 = vmatpush1.msra.mxu0 0.0
        %4651 = vmatprep.subr.mxu0 0.0
        %4652 = vmatpush1.msra.mxu0 0.0
        %4653 = vmatprep.subr.mxu0 0.0
        %4654 = vmatpush1.msra.mxu0 0.0
        %4655 = vmatprep.subr.mxu0 0.0
        %4656 = vmatpush1.msra.mxu0 0.0
        %4657 = vmatprep.subr.mxu0 0.0
        %4658 = vmatpush1.msra.mxu0 0.0
        %4659 = vmatprep.subr.mxu0 0.0
        %4660 = vmatpush1.msra.mxu0 0.0
        %4661 = vmatprep.mubr.f32.mxu0 0.0
        %4662 = vmatmul.mubr.f32.gmra.mrb[0].mxu0 %v4587
        %v4663 = vpop.f32.mrb[0].mxu0
        %v4664 = vadd.f32 0.0, %v4663
        %v4665 = vpop.f32.mrb[0].mxu0
        %4666 = vmatprep.mubr.f32.mxu0 0.0
        %4667 = vmatmul.mubr.f32.gmra.mrb[0].mxu0 %v4589
        %v4668 = vpop.f32.mrb[0].mxu0
        %v4669 = vadd.f32 0.0, %v4668
        %v4670 = vpop.f32.mrb[0].mxu0
        %4671 = vmatprep.mubr.f32.mxu0 0.0
        %4672 = vmatmul.mubr.f32.gmra.mrb[0].mxu0 %v4591
        %v4673 = vpop.f32.mrb[0].mxu0
        %v4674 = vadd.f32 0.0, %v4673
        %v4675 = vpop.f32.mrb[0].mxu0
        %4676 = vmatprep.mubr.f32.mxu0 0.0
        %4677 = vmatmul.mubr.f32.gmra.mrb[0].mxu0 %v4593
        %v4678 = vpop.f32.mrb[0].mxu0
        %v4679 = vadd.f32 0.0, %v4678
        %v4680 = vpop.f32.mrb[0].mxu0
        %4681 = vmatprep.mubr.f32.mxu0 0.0
        %4682 = vmatmul.mubr.f32.gmra.mrb[0].mxu0 %v4595
        %v4683 = vpop.f32.mrb[0].mxu0
        %v4684 = vadd.f32 0.0, %v4683
        %v4685 = vpop.f32.mrb[0].mxu0
        %4686 = vdwg.mxu0
        %v4692 = vcombine.high %v4664, %v4664
        %v4694 = vunpack.c.l.s4 1966171168
        %v4695 = vunpack.c.0.s8 %v4694
        %v4696 = vlaneseq
        %v4697 = vshrl.u32 %v4696, 7
        %v4698 = vsub.s32 %v4695, %v4697
        %v4699 = vrot.slane %v4664, %v4698
        %v4701 = vunpack.c.l.s4 1966171168
        %v4702 = vunpack.c.0.s8 %v4701
        %v4703 = vlaneseq
        %v4704 = vshrl.u32 %v4703, 7
        %v4705 = vsub.s32 %v4702, %v4704
        %v4706 = vrot.slane %v4692, %v4705
        %v4707 = vcombine.high %v4699, %v4699
        %v4708 = vcombine.high %v4706, %v4706
        %v4710 = vunpack.c.l.s4 1966171168
        %v4711 = vunpack.c.0.s8 %v4710
        %v4712 = vlaneseq
        %v4713 = vshrl.u32 %v4712, 7
        %v4714 = vsub.s32 %v4711, %v4713
        %v4715 = vrot.slane %v4699, %v4714
        %v4717 = vunpack.c.l.s4 1966171168
        %v4718 = vunpack.c.0.s8 %v4717
        %v4719 = vlaneseq
        %v4720 = vshrl.u32 %v4719, 7
        %v4721 = vsub.s32 %v4718, %v4720
        %v4722 = vrot.slane %v4706, %v4721
        %v4724 = vunpack.c.l.s4 1966171168
        %v4725 = vunpack.c.0.s8 %v4724
        %v4726 = vlaneseq
        %v4727 = vshrl.u32 %v4726, 7
        %v4728 = vsub.s32 %v4725, %v4727
        %v4729 = vrot.slane %v4707, %v4728
        %v4731 = vunpack.c.l.s4 1966171168
        %v4732 = vunpack.c.0.s8 %v4731
        %v4733 = vlaneseq
        %v4734 = vshrl.u32 %v4733, 7
        %v4735 = vsub.s32 %v4732, %v4734
        %v4736 = vrot.slane %v4708, %v4735
        %v4737 = vcombine.high %v4715, %v4715
        %v4738 = vcombine.high %v4722, %v4722
        %v4739 = vcombine.high %v4729, %v4729
        %v4740 = vcombine.high %v4736, %v4736
        %v4741 = vcombine.high %v4669, %v4669
        %v4743 = vunpack.c.l.s4 1966171168
        %v4744 = vunpack.c.0.s8 %v4743
        %v4745 = vlaneseq
        %v4746 = vshrl.u32 %v4745, 7
        %v4747 = vsub.s32 %v4744, %v4746
        %v4748 = vrot.slane %v4669, %v4747
        %v4750 = vunpack.c.l.s4 1966171168
        %v4751 = vunpack.c.0.s8 %v4750
        %v4752 = vlaneseq
        %v4753 = vshrl.u32 %v4752, 7
        %v4754 = vsub.s32 %v4751, %v4753
        %v4755 = vrot.slane %v4741, %v4754
        %v4756 = vcombine.high %v4748, %v4748
        %v4757 = vcombine.high %v4755, %v4755
        %v4759 = vunpack.c.l.s4 1966171168
        %v4760 = vunpack.c.0.s8 %v4759
        %v4761 = vlaneseq
        %v4762 = vshrl.u32 %v4761, 7
        %v4763 = vsub.s32 %v4760, %v4762
        %v4764 = vrot.slane %v4748, %v4763
        %v4766 = vunpack.c.l.s4 1966171168
        %v4767 = vunpack.c.0.s8 %v4766
        %v4768 = vlaneseq
        %v4769 = vshrl.u32 %v4768, 7
        %v4770 = vsub.s32 %v4767, %v4769
        %v4771 = vrot.slane %v4755, %v4770
        %v4773 = vunpack.c.l.s4 1966171168
        %v4774 = vunpack.c.0.s8 %v4773
        %v4775 = vlaneseq
        %v4776 = vshrl.u32 %v4775, 7
        %v4777 = vsub.s32 %v4774, %v4776
        %v4778 = vrot.slane %v4756, %v4777
        %v4780 = vunpack.c.l.s4 1966171168
        %v4781 = vunpack.c.0.s8 %v4780
        %v4782 = vlaneseq
        %v4783 = vshrl.u32 %v4782, 7
        %v4784 = vsub.s32 %v4781, %v4783
        %v4785 = vrot.slane %v4757, %v4784
        %v4786 = vcombine.high %v4764, %v4764
        %v4787 = vcombine.high %v4771, %v4771
        %v4788 = vcombine.high %v4778, %v4778
        %v4789 = vcombine.high %v4785, %v4785
        %v4790 = vcombine.high %v4674, %v4674
        %v4792 = vunpack.c.l.s4 1966171168
        %v4793 = vunpack.c.0.s8 %v4792
        %v4794 = vlaneseq
        %v4795 = vshrl.u32 %v4794, 7
        %v4796 = vsub.s32 %v4793, %v4795
        %v4797 = vrot.slane %v4674, %v4796
        %v4799 = vunpack.c.l.s4 1966171168
        %v4800 = vunpack.c.0.s8 %v4799
        %v4801 = vlaneseq
        %v4802 = vshrl.u32 %v4801, 7
        %v4803 = vsub.s32 %v4800, %v4802
        %v4804 = vrot.slane %v4790, %v4803
        %v4805 = vcombine.high %v4797, %v4797
        %v4806 = vcombine.high %v4804, %v4804
        %v4808 = vunpack.c.l.s4 1966171168
        %v4809 = vunpack.c.0.s8 %v4808
        %v4810 = vlaneseq
        %v4811 = vshrl.u32 %v4810, 7
        %v4812 = vsub.s32 %v4809, %v4811
        %v4813 = vrot.slane %v4797, %v4812
        %v4815 = vunpack.c.l.s4 1966171168
        %v4816 = vunpack.c.0.s8 %v4815
        %v4817 = vlaneseq
        %v4818 = vshrl.u32 %v4817, 7
        %v4819 = vsub.s32 %v4816, %v4818
        %v4820 = vrot.slane %v4804, %v4819
        %v4822 = vunpack.c.l.s4 1966171168
        %v4823 = vunpack.c.0.s8 %v4822
        %v4824 = vlaneseq
        %v4825 = vshrl.u32 %v4824, 7
        %v4826 = vsub.s32 %v4823, %v4825
        %v4827 = vrot.slane %v4805, %v4826
        %v4829 = vunpack.c.l.s4 1966171168
        %v4830 = vunpack.c.0.s8 %v4829
        %v4831 = vlaneseq
        %v4832 = vshrl.u32 %v4831, 7
        %v4833 = vsub.s32 %v4830, %v4832
        %v4834 = vrot.slane %v4806, %v4833
        %v4835 = vcombine.high %v4813, %v4813
        %v4836 = vcombine.high %v4820, %v4820
        %v4837 = vcombine.high %v4827, %v4827
        %v4838 = vcombine.high %v4834, %v4834
        %v4839 = vcombine.high %v4679, %v4679
        %v4841 = vunpack.c.l.s4 1966171168
        %v4842 = vunpack.c.0.s8 %v4841
        %v4843 = vlaneseq
        %v4844 = vshrl.u32 %v4843, 7
        %v4845 = vsub.s32 %v4842, %v4844
        %v4846 = vrot.slane %v4679, %v4845
        %v4848 = vunpack.c.l.s4 1966171168
        %v4849 = vunpack.c.0.s8 %v4848
        %v4850 = vlaneseq
        %v4851 = vshrl.u32 %v4850, 7
        %v4852 = vsub.s32 %v4849, %v4851
        %v4853 = vrot.slane %v4839, %v4852
        %v4854 = vcombine.high %v4846, %v4846
        %v4855 = vcombine.high %v4853, %v4853
        %v4857 = vunpack.c.l.s4 1966171168
        %v4858 = vunpack.c.0.s8 %v4857
        %v4859 = vlaneseq
        %v4860 = vshrl.u32 %v4859, 7
        %v4861 = vsub.s32 %v4858, %v4860
        %v4862 = vrot.slane %v4846, %v4861
        %v4864 = vunpack.c.l.s4 1966171168
        %v4865 = vunpack.c.0.s8 %v4864
        %v4866 = vlaneseq
        %v4867 = vshrl.u32 %v4866, 7
        %v4868 = vsub.s32 %v4865, %v4867
        %v4869 = vrot.slane %v4853, %v4868
        %v4871 = vunpack.c.l.s4 1966171168
        %v4872 = vunpack.c.0.s8 %v4871
        %v4873 = vlaneseq
        %v4874 = vshrl.u32 %v4873, 7
        %v4875 = vsub.s32 %v4872, %v4874
        %v4876 = vrot.slane %v4854, %v4875
        %v4878 = vunpack.c.l.s4 1966171168
        %v4879 = vunpack.c.0.s8 %v4878
        %v4880 = vlaneseq
        %v4881 = vshrl.u32 %v4880, 7
        %v4882 = vsub.s32 %v4879, %v4881
        %v4883 = vrot.slane %v4855, %v4882
        %v4884 = vcombine.high %v4862, %v4862
        %v4885 = vcombine.high %v4869, %v4869
        %v4886 = vcombine.high %v4876, %v4876
        %v4887 = vcombine.high %v4883, %v4883
        %v4889 = vunpack.c.l.s4 1966171168
        %v4890 = vunpack.c.0.s8 %v4889
        %v4891 = vlaneseq
        %v4892 = vshrl.u32 %v4891, 7
        %v4893 = vsub.s32 %v4890, %v4892
        %v4894 = vrot.slane %v4684, %v4893
        %v4895 = vcombine.high %v4894, %v4894
        %v4897 = vunpack.c.l.s4 1966171168
        %v4898 = vunpack.c.0.s8 %v4897
        %v4899 = vlaneseq
        %v4900 = vshrl.u32 %v4899, 7
        %v4901 = vsub.s32 %v4898, %v4900
        %v4902 = vrot.slane %v4894, %v4901
        %v4904 = vunpack.c.l.s4 1966171168
        %v4905 = vunpack.c.0.s8 %v4904
        %v4906 = vlaneseq
        %v4907 = vshrl.u32 %v4906, 7
        %v4908 = vsub.s32 %v4905, %v4907
        %v4909 = vrot.slane %v4895, %v4908
        %v4910 = vcombine.low %v4715, %v4729
        %v4911 = vcombine.low %v4737, %v4739
        %v4912 = vcombine.low %v4722, %v4736
        %v4913 = vcombine.low %v4738, %v4740
        %v4915 = vunpack.c.l.s4 1966171168
        %v4916 = vunpack.c.0.s8 %v4915
        %v4917 = vlaneseq
        %v4918 = vshrl.u32 %v4917, 7
        %v4919 = vsub.s32 %v4916, %v4918
        %v4920 = vrot.slane %v4910, %v4919
        %v4922 = vunpack.c.l.s4 1966171168
        %v4923 = vunpack.c.0.s8 %v4922
        %v4924 = vlaneseq
        %v4925 = vshrl.u32 %v4924, 7
        %v4926 = vsub.s32 %v4923, %v4925
        %v4927 = vrot.slane %v4911, %v4926
        %v4929 = vunpack.c.l.s4 1966171168
        %v4930 = vunpack.c.0.s8 %v4929
        %v4931 = vlaneseq
        %v4932 = vshrl.u32 %v4931, 7
        %v4933 = vsub.s32 %v4930, %v4932
        %v4934 = vrot.slane %v4912, %v4933
        %v4936 = vunpack.c.l.s4 1966171168
        %v4937 = vunpack.c.0.s8 %v4936
        %v4938 = vlaneseq
        %v4939 = vshrl.u32 %v4938, 7
        %v4940 = vsub.s32 %v4937, %v4939
        %v4941 = vrot.slane %v4913, %v4940
        %v4942 = vcombine.low %v4920, %v4927
        %v4943 = vcombine.low %v4934, %v4941
        %v4945 = vunpack.c.l.s4 1966171168
        %v4946 = vunpack.c.0.s8 %v4945
        %v4947 = vlaneseq
        %v4948 = vshrl.u32 %v4947, 7
        %v4949 = vsub.s32 %v4946, %v4948
        %v4950 = vrot.slane %v4942, %v4949
        %v4952 = vunpack.c.l.s4 1966171168
        %v4953 = vunpack.c.0.s8 %v4952
        %v4954 = vlaneseq
        %v4955 = vshrl.u32 %v4954, 7
        %v4956 = vsub.s32 %v4953, %v4955
        %v4957 = vrot.slane %v4943, %v4956
        %v4958 = vcombine.low %v4950, %v4957
        %v4959 = vcombine.low %v4764, %v4778
        %v4960 = vcombine.low %v4786, %v4788
        %v4961 = vcombine.low %v4771, %v4785
        %v4962 = vcombine.low %v4787, %v4789
        %v4964 = vunpack.c.l.s4 1966171168
        %v4965 = vunpack.c.0.s8 %v4964
        %v4966 = vlaneseq
        %v4967 = vshrl.u32 %v4966, 7
        %v4968 = vsub.s32 %v4965, %v4967
        %v4969 = vrot.slane %v4959, %v4968
        %v4971 = vunpack.c.l.s4 1966171168
        %v4972 = vunpack.c.0.s8 %v4971
        %v4973 = vlaneseq
        %v4974 = vshrl.u32 %v4973, 7
        %v4975 = vsub.s32 %v4972, %v4974
        %v4976 = vrot.slane %v4960, %v4975
        %v4978 = vunpack.c.l.s4 1966171168
        %v4979 = vunpack.c.0.s8 %v4978
        %v4980 = vlaneseq
        %v4981 = vshrl.u32 %v4980, 7
        %v4982 = vsub.s32 %v4979, %v4981
        %v4983 = vrot.slane %v4961, %v4982
        %v4985 = vunpack.c.l.s4 1966171168
        %v4986 = vunpack.c.0.s8 %v4985
        %v4987 = vlaneseq
        %v4988 = vshrl.u32 %v4987, 7
        %v4989 = vsub.s32 %v4986, %v4988
        %v4990 = vrot.slane %v4962, %v4989
        %v4991 = vcombine.low %v4969, %v4976
        %v4992 = vcombine.low %v4983, %v4990
        %v4994 = vunpack.c.l.s4 1966171168
        %v4995 = vunpack.c.0.s8 %v4994
        %v4996 = vlaneseq
        %v4997 = vshrl.u32 %v4996, 7
        %v4998 = vsub.s32 %v4995, %v4997
        %v4999 = vrot.slane %v4991, %v4998
        %v5001 = vunpack.c.l.s4 1966171168
        %v5002 = vunpack.c.0.s8 %v5001
        %v5003 = vlaneseq
        %v5004 = vshrl.u32 %v5003, 7
        %v5005 = vsub.s32 %v5002, %v5004
        %v5006 = vrot.slane %v4992, %v5005
        %v5007 = vcombine.low %v4999, %v5006
        %v5009 = vunpack.c.l.s4 1966171168
        %v5010 = vunpack.c.0.s8 %v5009
        %v5011 = vlaneseq
        %v5012 = vshrl.u32 %v5011, 7
        %v5013 = vsub.s32 %v5010, %v5012
        %v5014 = vrot.slane %v4813, %v5013
        %v5016 = vunpack.c.l.s4 1966171168
        %v5017 = vunpack.c.0.s8 %v5016
        %v5018 = vlaneseq
        %v5019 = vshrl.u32 %v5018, 7
        %v5020 = vsub.s32 %v5017, %v5019
        %v5021 = vrot.slane %v5014, %v5020
        %v5022 = vcombine.low %v4827, %v4835
        %v5023 = vcombine.low %v4837, %v4820
        %v5024 = vcombine.low %v4834, %v4836
        %v5025 = vcombine.low %v4838, %v4862
        %v5027 = vunpack.c.l.s4 1966171168
        %v5028 = vunpack.c.0.s8 %v5027
        %v5029 = vlaneseq
        %v5030 = vshrl.u32 %v5029, 7
        %v5031 = vsub.s32 %v5028, %v5030
        %v5032 = vrot.slane %v5022, %v5031
        %v5034 = vunpack.c.l.s4 1966171168
        %v5035 = vunpack.c.0.s8 %v5034
        %v5036 = vlaneseq
        %v5037 = vshrl.u32 %v5036, 7
        %v5038 = vsub.s32 %v5035, %v5037
        %v5039 = vrot.slane %v5023, %v5038
        %v5041 = vunpack.c.l.s4 1966171168
        %v5042 = vunpack.c.0.s8 %v5041
        %v5043 = vlaneseq
        %v5044 = vshrl.u32 %v5043, 7
        %v5045 = vsub.s32 %v5042, %v5044
        %v5046 = vrot.slane %v5024, %v5045
        %v5048 = vunpack.c.l.s4 1966171168
        %v5049 = vunpack.c.0.s8 %v5048
        %v5050 = vlaneseq
        %v5051 = vshrl.u32 %v5050, 7
        %v5052 = vsub.s32 %v5049, %v5051
        %v5053 = vrot.slane %v5025, %v5052
        %v5054 = vcombine.low %v5032, %v5039
        %v5055 = vcombine.low %v5046, %v5053
        %v5057 = vunpack.c.l.s4 1966171168
        %v5058 = vunpack.c.0.s8 %v5057
        %v5059 = vlaneseq
        %v5060 = vshrl.u32 %v5059, 7
        %v5061 = vsub.s32 %v5058, %v5060
        %v5062 = vrot.slane %v5054, %v5061
        %v5064 = vunpack.c.l.s4 1966171168
        %v5065 = vunpack.c.0.s8 %v5064
        %v5066 = vlaneseq
        %v5067 = vshrl.u32 %v5066, 7
        %v5068 = vsub.s32 %v5065, %v5067
        %v5069 = vrot.slane %v5055, %v5068
        %v5070 = vcombine.low %v5062, %v5069
        %v5071 = vcombine.low %v4876, %v4884
        %v5072 = vcombine.low %v4886, %v4869
        %v5073 = vcombine.low %v4883, %v4885
        %v5074 = vcombine.low %v4887, %v4902
        %v5076 = vunpack.c.l.s4 1966171168
        %v5077 = vunpack.c.0.s8 %v5076
        %v5078 = vlaneseq
        %v5079 = vshrl.u32 %v5078, 7
        %v5080 = vsub.s32 %v5077, %v5079
        %v5081 = vrot.slane %v5071, %v5080
        %v5083 = vunpack.c.l.s4 1966171168
        %v5084 = vunpack.c.0.s8 %v5083
        %v5085 = vlaneseq
        %v5086 = vshrl.u32 %v5085, 7
        %v5087 = vsub.s32 %v5084, %v5086
        %v5088 = vrot.slane %v5072, %v5087
        %v5090 = vunpack.c.l.s4 1966171168
        %v5091 = vunpack.c.0.s8 %v5090
        %v5092 = vlaneseq
        %v5093 = vshrl.u32 %v5092, 7
        %v5094 = vsub.s32 %v5091, %v5093
        %v5095 = vrot.slane %v5073, %v5094
        %v5097 = vunpack.c.l.s4 1966171168
        %v5098 = vunpack.c.0.s8 %v5097
        %v5099 = vlaneseq
        %v5100 = vshrl.u32 %v5099, 7
        %v5101 = vsub.s32 %v5098, %v5100
        %v5102 = vrot.slane %v5074, %v5101
        %v5103 = vcombine.low %v5081, %v5088
        %v5104 = vcombine.low %v5095, %v5102
        %v5106 = vunpack.c.l.s4 1966171168
        %v5107 = vunpack.c.0.s8 %v5106
        %v5108 = vlaneseq
        %v5109 = vshrl.u32 %v5108, 7
        %v5110 = vsub.s32 %v5107, %v5109
        %v5111 = vrot.slane %v5103, %v5110
        %v5113 = vunpack.c.l.s4 1966171168
        %v5114 = vunpack.c.0.s8 %v5113
        %v5115 = vlaneseq
        %v5116 = vshrl.u32 %v5115, 7
        %v5117 = vsub.s32 %v5114, %v5116
        %v5118 = vrot.slane %v5104, %v5117
        %v5119 = vcombine.low %v5111, %v5118
        %v5121 = vunpack.c.l.s4 1966171168
        %v5122 = vunpack.c.0.s8 %v5121
        %v5123 = vlaneseq
        %v5124 = vshrl.u32 %v5123, 7
        %v5125 = vsub.s32 %v5122, %v5124
        %v5126 = vrot.slane %v4909, %v5125
        %v5128 = vunpack.c.l.s4 1966171168
        %v5129 = vunpack.c.0.s8 %v5128
        %v5130 = vlaneseq
        %v5131 = vshrl.u32 %v5130, 7
        %v5132 = vsub.s32 %v5129, %v5131
        %v5133 = vrot.slane %v5126, %v5132
        %v5140 = vadd.f32 %v4136, %v4958
        %v5141 = vadd.f32 %v4137, %v5007
        %v5142 = vadd.f32 %v4138, %v5021
        %v5143 = vadd.f32 %v4139, %v5070
        %v5144 = vadd.f32 %v4140, %v5119
        %v5145 = vadd.f32 %v4141, %v5133
        %v5146 = vsel %vm891, %v5140, 0.0
        %5147 = vadd.xlane.f32.xlu0 %v5146
        %v5148 = vpop.xlane.xlu0 %5147
        %v5149 = vsel %vm891, %v5141, 0.0
        %5150 = vadd.xlane.f32.xlu0 %v5149
        %v5151 = vpop.xlane.xlu0 %5150
        %v5152 = vsel %vm898, %v5142, 0.0
        %5153 = vadd.xlane.f32.xlu0 %v5152
        %v5154 = vpop.xlane.xlu0 %5153
        %v5155 = vsel %vm891, %v5143, 0.0
        %5156 = vadd.xlane.f32.xlu0 %v5155
        %v5157 = vpop.xlane.xlu0 %5156
        %v5158 = vsel %vm891, %v5144, 0.0
        %5159 = vadd.xlane.f32.xlu0 %v5158
        %v5160 = vpop.xlane.xlu0 %5159
        %v5161 = vsel %vm898, %v5145, 0.0
        %5162 = vadd.xlane.f32.xlu0 %v5161
        %v5163 = vpop.xlane.xlu0 %5162
        %v5164 = vmul.f32 %v5148, %v911
        %v5165 = vmul.f32 %v5151, %v911
        %v5166 = vmul.f32 %v5154, %v911
        %v5167 = vmul.f32 %v5157, %v911
        %v5168 = vmul.f32 %v5160, %v911
        %v5169 = vmul.f32 %v5163, %v911
        %v5170 = vsub.f32 %v5140, %v5164
        %v5171 = vsub.f32 %v5141, %v5165
        %v5172 = vsub.f32 %v5142, %v5166
        %v5173 = vsub.f32 %v5143, %v5167
        %v5174 = vsub.f32 %v5144, %v5168
        %v5175 = vsub.f32 %v5145, %v5169
        %v5176 = vmul.f32 %v5170, %v5170
        %v5177 = vmul.f32 %v5171, %v5171
        %v5178 = vmul.f32 %v5172, %v5172
        %v5179 = vmul.f32 %v5173, %v5173
        %v5180 = vmul.f32 %v5174, %v5174
        %v5181 = vmul.f32 %v5175, %v5175
        %v5182 = vsel %vm891, %v5176, 0.0
        %5183 = vadd.xlane.f32.xlu0 %v5182
        %v5184 = vpop.xlane.xlu0 %5183
        %v5185 = vsel %vm891, %v5177, 0.0
        %5186 = vadd.xlane.f32.xlu0 %v5185
        %v5187 = vpop.xlane.xlu0 %5186
        %v5188 = vsel %vm898, %v5178, 0.0
        %5189 = vadd.xlane.f32.xlu0 %v5188
        %v5190 = vpop.xlane.xlu0 %5189
        %v5191 = vsel %vm891, %v5179, 0.0
        %5192 = vadd.xlane.f32.xlu0 %v5191
        %v5193 = vpop.xlane.xlu0 %5192
        %v5194 = vsel %vm891, %v5180, 0.0
        %5195 = vadd.xlane.f32.xlu0 %v5194
        %v5196 = vpop.xlane.xlu0 %5195
        %v5197 = vsel %vm898, %v5181, 0.0
        %5198 = vadd.xlane.f32.xlu0 %v5197
        %v5199 = vpop.xlane.xlu0 %5198
        %v5200 = vmul.f32 %v5184, %v911
        %v5201 = vmul.f32 %v5187, %v911
        %v5202 = vmul.f32 %v5190, %v911
        %v5203 = vmul.f32 %v5193, %v911
        %v5204 = vmul.f32 %v5196, %v911
        %v5205 = vmul.f32 %v5199, %v911
        %v5206 = vadd.f32 %v5200, 1e-05
        %v5207 = vadd.f32 %v5201, 1e-05
        %v5208 = vadd.f32 %v5202, 1e-05
        %v5209 = vadd.f32 %v5203, 1e-05
        %v5210 = vadd.f32 %v5204, 1e-05
        %v5211 = vadd.f32 %v5205, 1e-05
        %v5212 = vrsqrt.pop %v5206
        %v5213 = vrsqrt.pop %v5207
        %v5214 = vrsqrt.pop %v5208
        %v5215 = vrsqrt.pop %v5209
        %v5216 = vrsqrt.pop %v5210
        %v5217 = vrsqrt.pop %v5211
        %v5218 = vmul.f32 %v5170, %v5212
        %v5219 = vmul.f32 %v5171, %v5213
        %v5220 = vmul.f32 %v5172, %v5214
        %v5221 = vmul.f32 %v5173, %v5215
        %v5222 = vmul.f32 %v5174, %v5216
        %v5223 = vmul.f32 %v5175, %v5217
        %v5224 = vmul.f32 %v5218, %v882
        %v5225 = vmul.f32 %v5219, %v882
        %v5226 = vmul.f32 %v5220, %v882
        %v5227 = vmul.f32 %v5221, %v882
        %v5228 = vmul.f32 %v5222, %v882
        %v5229 = vmul.f32 %v5223, %v882
        %v5230 = vadd.f32 %v5224, %v889
        %v5231 = vadd.f32 %v5225, %v889
        %v5232 = vadd.f32 %v5226, %v889
        %v5233 = vadd.f32 %v5227, %v889
        %v5234 = vadd.f32 %v5228, %v889
        %v5235 = vadd.f32 %v5229, %v889
        %v5236 = vld [vmem:[%s721] sm:$0xff]
        %v5237 = vld [vmem:[%s721 + $0x8] sm:$0xff]
        %v5238 = vld [vmem:[%s721 + $0x10] sm:$0xff]
        %v5239 = vld [vmem:[%s721 + $0x18] sm:$0xff]
        %v5240 = vld [vmem:[%s724] sm:$0x1]
        %v5242 = vlaneseq
        %v5243 = vshrl.u32 %v5242, 7
        %v5244 = vsub.s32 0, %v5243
        %v5245 = vrot.slane %v5240, %v5244
        %v5252 = vcombine.high %v5230, %v5230
        %v5254 = vunpack.c.l.s4 1966171168
        %v5255 = vunpack.c.0.s8 %v5254
        %v5256 = vlaneseq
        %v5257 = vshrl.u32 %v5256, 7
        %v5258 = vsub.s32 %v5255, %v5257
        %v5259 = vrot.slane %v5230, %v5258
        %v5261 = vunpack.c.l.s4 1966171168
        %v5262 = vunpack.c.0.s8 %v5261
        %v5263 = vlaneseq
        %v5264 = vshrl.u32 %v5263, 7
        %v5265 = vsub.s32 %v5262, %v5264
        %v5266 = vrot.slane %v5252, %v5265
        %v5267 = vcombine.high %v5259, %v5259
        %v5268 = vcombine.high %v5266, %v5266
        %v5270 = vunpack.c.l.s4 1966171168
        %v5271 = vunpack.c.0.s8 %v5270
        %v5272 = vlaneseq
        %v5273 = vshrl.u32 %v5272, 7
        %v5274 = vsub.s32 %v5271, %v5273
        %v5275 = vrot.slane %v5259, %v5274
        %v5277 = vunpack.c.l.s4 1966171168
        %v5278 = vunpack.c.0.s8 %v5277
        %v5279 = vlaneseq
        %v5280 = vshrl.u32 %v5279, 7
        %v5281 = vsub.s32 %v5278, %v5280
        %v5282 = vrot.slane %v5266, %v5281
        %v5284 = vunpack.c.l.s4 1966171168
        %v5285 = vunpack.c.0.s8 %v5284
        %v5286 = vlaneseq
        %v5287 = vshrl.u32 %v5286, 7
        %v5288 = vsub.s32 %v5285, %v5287
        %v5289 = vrot.slane %v5267, %v5288
        %v5291 = vunpack.c.l.s4 1966171168
        %v5292 = vunpack.c.0.s8 %v5291
        %v5293 = vlaneseq
        %v5294 = vshrl.u32 %v5293, 7
        %v5295 = vsub.s32 %v5292, %v5294
        %v5296 = vrot.slane %v5268, %v5295
        %v5297 = vcombine.high %v5275, %v5275
        %v5298 = vcombine.high %v5282, %v5282
        %v5299 = vcombine.high %v5289, %v5289
        %v5300 = vcombine.high %v5296, %v5296
        %v5301 = vcombine.high %v5231, %v5231
        %v5303 = vunpack.c.l.s4 1966171168
        %v5304 = vunpack.c.0.s8 %v5303
        %v5305 = vlaneseq
        %v5306 = vshrl.u32 %v5305, 7
        %v5307 = vsub.s32 %v5304, %v5306
        %v5308 = vrot.slane %v5231, %v5307
        %v5310 = vunpack.c.l.s4 1966171168
        %v5311 = vunpack.c.0.s8 %v5310
        %v5312 = vlaneseq
        %v5313 = vshrl.u32 %v5312, 7
        %v5314 = vsub.s32 %v5311, %v5313
        %v5315 = vrot.slane %v5301, %v5314
        %v5316 = vcombine.high %v5308, %v5308
        %v5317 = vcombine.high %v5315, %v5315
        %v5319 = vunpack.c.l.s4 1966171168
        %v5320 = vunpack.c.0.s8 %v5319
        %v5321 = vlaneseq
        %v5322 = vshrl.u32 %v5321, 7
        %v5323 = vsub.s32 %v5320, %v5322
        %v5324 = vrot.slane %v5308, %v5323
        %v5326 = vunpack.c.l.s4 1966171168
        %v5327 = vunpack.c.0.s8 %v5326
        %v5328 = vlaneseq
        %v5329 = vshrl.u32 %v5328, 7
        %v5330 = vsub.s32 %v5327, %v5329
        %v5331 = vrot.slane %v5315, %v5330
        %v5333 = vunpack.c.l.s4 1966171168
        %v5334 = vunpack.c.0.s8 %v5333
        %v5335 = vlaneseq
        %v5336 = vshrl.u32 %v5335, 7
        %v5337 = vsub.s32 %v5334, %v5336
        %v5338 = vrot.slane %v5316, %v5337
        %v5340 = vunpack.c.l.s4 1966171168
        %v5341 = vunpack.c.0.s8 %v5340
        %v5342 = vlaneseq
        %v5343 = vshrl.u32 %v5342, 7
        %v5344 = vsub.s32 %v5341, %v5343
        %v5345 = vrot.slane %v5317, %v5344
        %v5346 = vcombine.high %v5324, %v5324
        %v5347 = vcombine.high %v5331, %v5331
        %v5348 = vcombine.high %v5338, %v5338
        %v5349 = vcombine.high %v5345, %v5345
        %v5351 = vunpack.c.l.s4 1966171168
        %v5352 = vunpack.c.0.s8 %v5351
        %v5353 = vlaneseq
        %v5354 = vshrl.u32 %v5353, 7
        %v5355 = vsub.s32 %v5352, %v5354
        %v5356 = vrot.slane %v5232, %v5355
        %v5358 = vunpack.c.l.s4 1966171168
        %v5359 = vunpack.c.0.s8 %v5358
        %v5360 = vlaneseq
        %v5361 = vshrl.u32 %v5360, 7
        %v5362 = vsub.s32 %v5359, %v5361
        %v5363 = vrot.slane %v5356, %v5362
        %v5364 = vcombine.high %v5233, %v5233
        %v5366 = vunpack.c.l.s4 1966171168
        %v5367 = vunpack.c.0.s8 %v5366
        %v5368 = vlaneseq
        %v5369 = vshrl.u32 %v5368, 7
        %v5370 = vsub.s32 %v5367, %v5369
        %v5371 = vrot.slane %v5233, %v5370
        %v5373 = vunpack.c.l.s4 1966171168
        %v5374 = vunpack.c.0.s8 %v5373
        %v5375 = vlaneseq
        %v5376 = vshrl.u32 %v5375, 7
        %v5377 = vsub.s32 %v5374, %v5376
        %v5378 = vrot.slane %v5364, %v5377
        %v5379 = vcombine.high %v5371, %v5371
        %v5380 = vcombine.high %v5378, %v5378
        %v5382 = vunpack.c.l.s4 1966171168
        %v5383 = vunpack.c.0.s8 %v5382
        %v5384 = vlaneseq
        %v5385 = vshrl.u32 %v5384, 7
        %v5386 = vsub.s32 %v5383, %v5385
        %v5387 = vrot.slane %v5371, %v5386
        %v5389 = vunpack.c.l.s4 1966171168
        %v5390 = vunpack.c.0.s8 %v5389
        %v5391 = vlaneseq
        %v5392 = vshrl.u32 %v5391, 7
        %v5393 = vsub.s32 %v5390, %v5392
        %v5394 = vrot.slane %v5378, %v5393
        %v5396 = vunpack.c.l.s4 1966171168
        %v5397 = vunpack.c.0.s8 %v5396
        %v5398 = vlaneseq
        %v5399 = vshrl.u32 %v5398, 7
        %v5400 = vsub.s32 %v5397, %v5399
        %v5401 = vrot.slane %v5379, %v5400
        %v5403 = vunpack.c.l.s4 1966171168
        %v5404 = vunpack.c.0.s8 %v5403
        %v5405 = vlaneseq
        %v5406 = vshrl.u32 %v5405, 7
        %v5407 = vsub.s32 %v5404, %v5406
        %v5408 = vrot.slane %v5380, %v5407
        %v5409 = vcombine.high %v5387, %v5387
        %v5410 = vcombine.high %v5394, %v5394
        %v5411 = vcombine.high %v5401, %v5401
        %v5412 = vcombine.high %v5408, %v5408
        %v5413 = vcombine.high %v5234, %v5234
        %v5415 = vunpack.c.l.s4 1966171168
        %v5416 = vunpack.c.0.s8 %v5415
        %v5417 = vlaneseq
        %v5418 = vshrl.u32 %v5417, 7
        %v5419 = vsub.s32 %v5416, %v5418
        %v5420 = vrot.slane %v5234, %v5419
        %v5422 = vunpack.c.l.s4 1966171168
        %v5423 = vunpack.c.0.s8 %v5422
        %v5424 = vlaneseq
        %v5425 = vshrl.u32 %v5424, 7
        %v5426 = vsub.s32 %v5423, %v5425
        %v5427 = vrot.slane %v5413, %v5426
        %v5428 = vcombine.high %v5420, %v5420
        %v5429 = vcombine.high %v5427, %v5427
        %v5431 = vunpack.c.l.s4 1966171168
        %v5432 = vunpack.c.0.s8 %v5431
        %v5433 = vlaneseq
        %v5434 = vshrl.u32 %v5433, 7
        %v5435 = vsub.s32 %v5432, %v5434
        %v5436 = vrot.slane %v5420, %v5435
        %v5438 = vunpack.c.l.s4 1966171168
        %v5439 = vunpack.c.0.s8 %v5438
        %v5440 = vlaneseq
        %v5441 = vshrl.u32 %v5440, 7
        %v5442 = vsub.s32 %v5439, %v5441
        %v5443 = vrot.slane %v5427, %v5442
        %v5445 = vunpack.c.l.s4 1966171168
        %v5446 = vunpack.c.0.s8 %v5445
        %v5447 = vlaneseq
        %v5448 = vshrl.u32 %v5447, 7
        %v5449 = vsub.s32 %v5446, %v5448
        %v5450 = vrot.slane %v5428, %v5449
        %v5452 = vunpack.c.l.s4 1966171168
        %v5453 = vunpack.c.0.s8 %v5452
        %v5454 = vlaneseq
        %v5455 = vshrl.u32 %v5454, 7
        %v5456 = vsub.s32 %v5453, %v5455
        %v5457 = vrot.slane %v5429, %v5456
        %v5458 = vcombine.high %v5436, %v5436
        %v5459 = vcombine.high %v5443, %v5443
        %v5460 = vcombine.high %v5450, %v5450
        %v5461 = vcombine.high %v5457, %v5457
        %v5463 = vunpack.c.l.s4 1966171168
        %v5464 = vunpack.c.0.s8 %v5463
        %v5465 = vlaneseq
        %v5466 = vshrl.u32 %v5465, 7
        %v5467 = vsub.s32 %v5464, %v5466
        %v5468 = vrot.slane %v5235, %v5467
        %v5470 = vunpack.c.l.s4 1966171168
        %v5471 = vunpack.c.0.s8 %v5470
        %v5472 = vlaneseq
        %v5473 = vshrl.u32 %v5472, 7
        %v5474 = vsub.s32 %v5471, %v5473
        %v5475 = vrot.slane %v5468, %v5474
        %v5476 = vcombine.high %v5245, %v5245
        %v5478 = vunpack.c.l.s4 1966171168
        %v5479 = vunpack.c.0.s8 %v5478
        %v5480 = vlaneseq
        %v5481 = vshrl.u32 %v5480, 7
        %v5482 = vsub.s32 %v5479, %v5481
        %v5483 = vrot.slane %v5245, %v5482
        %v5485 = vunpack.c.l.s4 1966171168
        %v5486 = vunpack.c.0.s8 %v5485
        %v5487 = vlaneseq
        %v5488 = vshrl.u32 %v5487, 7
        %v5489 = vsub.s32 %v5486, %v5488
        %v5490 = vrot.slane %v5476, %v5489
        %v5491 = vcombine.high %v5483, %v5483
        %v5492 = vcombine.high %v5490, %v5490
        %v5494 = vunpack.c.l.s4 1966171168
        %v5495 = vunpack.c.0.s8 %v5494
        %v5496 = vlaneseq
        %v5497 = vshrl.u32 %v5496, 7
        %v5498 = vsub.s32 %v5495, %v5497
        %v5499 = vrot.slane %v5483, %v5498
        %v5501 = vunpack.c.l.s4 1966171168
        %v5502 = vunpack.c.0.s8 %v5501
        %v5503 = vlaneseq
        %v5504 = vshrl.u32 %v5503, 7
        %v5505 = vsub.s32 %v5502, %v5504
        %v5506 = vrot.slane %v5490, %v5505
        %v5508 = vunpack.c.l.s4 1966171168
        %v5509 = vunpack.c.0.s8 %v5508
        %v5510 = vlaneseq
        %v5511 = vshrl.u32 %v5510, 7
        %v5512 = vsub.s32 %v5509, %v5511
        %v5513 = vrot.slane %v5491, %v5512
        %v5515 = vunpack.c.l.s4 1966171168
        %v5516 = vunpack.c.0.s8 %v5515
        %v5517 = vlaneseq
        %v5518 = vshrl.u32 %v5517, 7
        %v5519 = vsub.s32 %v5516, %v5518
        %v5520 = vrot.slane %v5492, %v5519
        %v5521 = vcombine.high %v5499, %v5499
        %v5522 = vcombine.high %v5506, %v5506
        %v5523 = vcombine.high %v5513, %v5513
        %v5524 = vcombine.high %v5520, %v5520
        %v5525 = vcombine.low %v5275, %v5289
        %v5526 = vcombine.low %v5297, %v5299
        %v5527 = vcombine.low %v5282, %v5296
        %v5528 = vcombine.low %v5298, %v5300
        %v5530 = vunpack.c.l.s4 1966171168
        %v5531 = vunpack.c.0.s8 %v5530
        %v5532 = vlaneseq
        %v5533 = vshrl.u32 %v5532, 7
        %v5534 = vsub.s32 %v5531, %v5533
        %v5535 = vrot.slane %v5525, %v5534
        %v5537 = vunpack.c.l.s4 1966171168
        %v5538 = vunpack.c.0.s8 %v5537
        %v5539 = vlaneseq
        %v5540 = vshrl.u32 %v5539, 7
        %v5541 = vsub.s32 %v5538, %v5540
        %v5542 = vrot.slane %v5526, %v5541
        %v5544 = vunpack.c.l.s4 1966171168
        %v5545 = vunpack.c.0.s8 %v5544
        %v5546 = vlaneseq
        %v5547 = vshrl.u32 %v5546, 7
        %v5548 = vsub.s32 %v5545, %v5547
        %v5549 = vrot.slane %v5527, %v5548
        %v5551 = vunpack.c.l.s4 1966171168
        %v5552 = vunpack.c.0.s8 %v5551
        %v5553 = vlaneseq
        %v5554 = vshrl.u32 %v5553, 7
        %v5555 = vsub.s32 %v5552, %v5554
        %v5556 = vrot.slane %v5528, %v5555
        %v5557 = vcombine.low %v5535, %v5542
        %v5558 = vcombine.low %v5549, %v5556
        %v5560 = vunpack.c.l.s4 1966171168
        %v5561 = vunpack.c.0.s8 %v5560
        %v5562 = vlaneseq
        %v5563 = vshrl.u32 %v5562, 7
        %v5564 = vsub.s32 %v5561, %v5563
        %v5565 = vrot.slane %v5557, %v5564
        %v5567 = vunpack.c.l.s4 1966171168
        %v5568 = vunpack.c.0.s8 %v5567
        %v5569 = vlaneseq
        %v5570 = vshrl.u32 %v5569, 7
        %v5571 = vsub.s32 %v5568, %v5570
        %v5572 = vrot.slane %v5558, %v5571
        %v5573 = vcombine.low %v5565, %v5572
        %v5574 = vcombine.low %v5324, %v5338
        %v5575 = vcombine.low %v5346, %v5348
        %v5576 = vcombine.low %v5331, %v5345
        %v5577 = vcombine.low %v5347, %v5349
        %v5579 = vunpack.c.l.s4 1966171168
        %v5580 = vunpack.c.0.s8 %v5579
        %v5581 = vlaneseq
        %v5582 = vshrl.u32 %v5581, 7
        %v5583 = vsub.s32 %v5580, %v5582
        %v5584 = vrot.slane %v5574, %v5583
        %v5586 = vunpack.c.l.s4 1966171168
        %v5587 = vunpack.c.0.s8 %v5586
        %v5588 = vlaneseq
        %v5589 = vshrl.u32 %v5588, 7
        %v5590 = vsub.s32 %v5587, %v5589
        %v5591 = vrot.slane %v5575, %v5590
        %v5593 = vunpack.c.l.s4 1966171168
        %v5594 = vunpack.c.0.s8 %v5593
        %v5595 = vlaneseq
        %v5596 = vshrl.u32 %v5595, 7
        %v5597 = vsub.s32 %v5594, %v5596
        %v5598 = vrot.slane %v5576, %v5597
        %v5600 = vunpack.c.l.s4 1966171168
        %v5601 = vunpack.c.0.s8 %v5600
        %v5602 = vlaneseq
        %v5603 = vshrl.u32 %v5602, 7
        %v5604 = vsub.s32 %v5601, %v5603
        %v5605 = vrot.slane %v5577, %v5604
        %v5606 = vcombine.low %v5584, %v5591
        %v5607 = vcombine.low %v5598, %v5605
        %v5609 = vunpack.c.l.s4 1966171168
        %v5610 = vunpack.c.0.s8 %v5609
        %v5611 = vlaneseq
        %v5612 = vshrl.u32 %v5611, 7
        %v5613 = vsub.s32 %v5610, %v5612
        %v5614 = vrot.slane %v5606, %v5613
        %v5616 = vunpack.c.l.s4 1966171168
        %v5617 = vunpack.c.0.s8 %v5616
        %v5618 = vlaneseq
        %v5619 = vshrl.u32 %v5618, 7
        %v5620 = vsub.s32 %v5617, %v5619
        %v5621 = vrot.slane %v5607, %v5620
        %v5622 = vcombine.low %v5614, %v5621
        %v5623 = vcombine.low %v5363, %v5387
        %v5624 = vcombine.low %v5401, %v5409
        %v5625 = vcombine.low %v5411, %v5394
        %v5626 = vcombine.low %v5408, %v5410
        %v5628 = vunpack.c.l.s4 1966171168
        %v5629 = vunpack.c.0.s8 %v5628
        %v5630 = vlaneseq
        %v5631 = vshrl.u32 %v5630, 7
        %v5632 = vsub.s32 %v5629, %v5631
        %v5633 = vrot.slane %v5623, %v5632
        %v5635 = vunpack.c.l.s4 1966171168
        %v5636 = vunpack.c.0.s8 %v5635
        %v5637 = vlaneseq
        %v5638 = vshrl.u32 %v5637, 7
        %v5639 = vsub.s32 %v5636, %v5638
        %v5640 = vrot.slane %v5624, %v5639
        %v5642 = vunpack.c.l.s4 1966171168
        %v5643 = vunpack.c.0.s8 %v5642
        %v5644 = vlaneseq
        %v5645 = vshrl.u32 %v5644, 7
        %v5646 = vsub.s32 %v5643, %v5645
        %v5647 = vrot.slane %v5625, %v5646
        %v5649 = vunpack.c.l.s4 1966171168
        %v5650 = vunpack.c.0.s8 %v5649
        %v5651 = vlaneseq
        %v5652 = vshrl.u32 %v5651, 7
        %v5653 = vsub.s32 %v5650, %v5652
        %v5654 = vrot.slane %v5626, %v5653
        %v5655 = vcombine.low %v5633, %v5640
        %v5656 = vcombine.low %v5647, %v5654
        %v5658 = vunpack.c.l.s4 1966171168
        %v5659 = vunpack.c.0.s8 %v5658
        %v5660 = vlaneseq
        %v5661 = vshrl.u32 %v5660, 7
        %v5662 = vsub.s32 %v5659, %v5661
        %v5663 = vrot.slane %v5655, %v5662
        %v5665 = vunpack.c.l.s4 1966171168
        %v5666 = vunpack.c.0.s8 %v5665
        %v5667 = vlaneseq
        %v5668 = vshrl.u32 %v5667, 7
        %v5669 = vsub.s32 %v5666, %v5668
        %v5670 = vrot.slane %v5656, %v5669
        %v5671 = vcombine.low %v5663, %v5670
        %v5672 = vcombine.low %v5412, %v5436
        %v5673 = vcombine.low %v5450, %v5458
        %v5674 = vcombine.low %v5460, %v5443
        %v5675 = vcombine.low %v5457, %v5459
        %v5677 = vunpack.c.l.s4 1966171168
        %v5678 = vunpack.c.0.s8 %v5677
        %v5679 = vlaneseq
        %v5680 = vshrl.u32 %v5679, 7
        %v5681 = vsub.s32 %v5678, %v5680
        %v5682 = vrot.slane %v5672, %v5681
        %v5684 = vunpack.c.l.s4 1966171168
        %v5685 = vunpack.c.0.s8 %v5684
        %v5686 = vlaneseq
        %v5687 = vshrl.u32 %v5686, 7
        %v5688 = vsub.s32 %v5685, %v5687
        %v5689 = vrot.slane %v5673, %v5688
        %v5691 = vunpack.c.l.s4 1966171168
        %v5692 = vunpack.c.0.s8 %v5691
        %v5693 = vlaneseq
        %v5694 = vshrl.u32 %v5693, 7
        %v5695 = vsub.s32 %v5692, %v5694
        %v5696 = vrot.slane %v5674, %v5695
        %v5698 = vunpack.c.l.s4 1966171168
        %v5699 = vunpack.c.0.s8 %v5698
        %v5700 = vlaneseq
        %v5701 = vshrl.u32 %v5700, 7
        %v5702 = vsub.s32 %v5699, %v5701
        %v5703 = vrot.slane %v5675, %v5702
        %v5704 = vcombine.low %v5682, %v5689
        %v5705 = vcombine.low %v5696, %v5703
        %v5707 = vunpack.c.l.s4 1966171168
        %v5708 = vunpack.c.0.s8 %v5707
        %v5709 = vlaneseq
        %v5710 = vshrl.u32 %v5709, 7
        %v5711 = vsub.s32 %v5708, %v5710
        %v5712 = vrot.slane %v5704, %v5711
        %v5714 = vunpack.c.l.s4 1966171168
        %v5715 = vunpack.c.0.s8 %v5714
        %v5716 = vlaneseq
        %v5717 = vshrl.u32 %v5716, 7
        %v5718 = vsub.s32 %v5715, %v5717
        %v5719 = vrot.slane %v5705, %v5718
        %v5720 = vcombine.low %v5712, %v5719
        %v5721 = vcombine.low %v5461, %v5475
        %v5723 = vunpack.c.l.s4 1966171168
        %v5724 = vunpack.c.0.s8 %v5723
        %v5725 = vlaneseq
        %v5726 = vshrl.u32 %v5725, 7
        %v5727 = vsub.s32 %v5724, %v5726
        %v5728 = vrot.slane %v5721, %v5727
        %v5730 = vunpack.c.l.s4 1966171168
        %v5731 = vunpack.c.0.s8 %v5730
        %v5732 = vlaneseq
        %v5733 = vshrl.u32 %v5732, 7
        %v5734 = vsub.s32 %v5731, %v5733
        %v5735 = vrot.slane %v5728, %v5734
        %v5736 = vcombine.low %v5499, %v5513
        %v5737 = vcombine.low %v5521, %v5523
        %v5738 = vcombine.low %v5506, %v5520
        %v5739 = vcombine.low %v5522, %v5524
        %v5741 = vunpack.c.l.s4 1966171168
        %v5742 = vunpack.c.0.s8 %v5741
        %v5743 = vlaneseq
        %v5744 = vshrl.u32 %v5743, 7
        %v5745 = vsub.s32 %v5742, %v5744
        %v5746 = vrot.slane %v5736, %v5745
        %v5748 = vunpack.c.l.s4 1966171168
        %v5749 = vunpack.c.0.s8 %v5748
        %v5750 = vlaneseq
        %v5751 = vshrl.u32 %v5750, 7
        %v5752 = vsub.s32 %v5749, %v5751
        %v5753 = vrot.slane %v5737, %v5752
        %v5755 = vunpack.c.l.s4 1966171168
        %v5756 = vunpack.c.0.s8 %v5755
        %v5757 = vlaneseq
        %v5758 = vshrl.u32 %v5757, 7
        %v5759 = vsub.s32 %v5756, %v5758
        %v5760 = vrot.slane %v5738, %v5759
        %v5762 = vunpack.c.l.s4 1966171168
        %v5763 = vunpack.c.0.s8 %v5762
        %v5764 = vlaneseq
        %v5765 = vshrl.u32 %v5764, 7
        %v5766 = vsub.s32 %v5763, %v5765
        %v5767 = vrot.slane %v5739, %v5766
        %v5768 = vcombine.low %v5746, %v5753
        %v5769 = vcombine.low %v5760, %v5767
        %v5771 = vunpack.c.l.s4 1966171168
        %v5772 = vunpack.c.0.s8 %v5771
        %v5773 = vlaneseq
        %v5774 = vshrl.u32 %v5773, 7
        %v5775 = vsub.s32 %v5772, %v5774
        %v5776 = vrot.slane %v5768, %v5775
        %v5778 = vunpack.c.l.s4 1966171168
        %v5779 = vunpack.c.0.s8 %v5778
        %v5780 = vlaneseq
        %v5781 = vshrl.u32 %v5780, 7
        %v5782 = vsub.s32 %v5779, %v5781
        %v5783 = vrot.slane %v5769, %v5782
        %v5784 = vcombine.low %v5776, %v5783
        %v5785 = vcombine.low %v5499, %v5499
        %v5786 = vcombine.low %v5513, %v5521
        %v5787 = vcombine.low %v5523, %v5506
        %v5788 = vcombine.low %v5520, %v5522
        %v5790 = vunpack.c.l.s4 1966171168
        %v5791 = vunpack.c.0.s8 %v5790
        %v5792 = vlaneseq
        %v5793 = vshrl.u32 %v5792, 7
        %v5794 = vsub.s32 %v5791, %v5793
        %v5795 = vrot.slane %v5785, %v5794
        %v5797 = vunpack.c.l.s4 1966171168
        %v5798 = vunpack.c.0.s8 %v5797
        %v5799 = vlaneseq
        %v5800 = vshrl.u32 %v5799, 7
        %v5801 = vsub.s32 %v5798, %v5800
        %v5802 = vrot.slane %v5786, %v5801
        %v5804 = vunpack.c.l.s4 1966171168
        %v5805 = vunpack.c.0.s8 %v5804
        %v5806 = vlaneseq
        %v5807 = vshrl.u32 %v5806, 7
        %v5808 = vsub.s32 %v5805, %v5807
        %v5809 = vrot.slane %v5787, %v5808
        %v5811 = vunpack.c.l.s4 1966171168
        %v5812 = vunpack.c.0.s8 %v5811
        %v5813 = vlaneseq
        %v5814 = vshrl.u32 %v5813, 7
        %v5815 = vsub.s32 %v5812, %v5814
        %v5816 = vrot.slane %v5788, %v5815
        %v5817 = vcombine.low %v5795, %v5802
        %v5818 = vcombine.low %v5809, %v5816
        %v5820 = vunpack.c.l.s4 1966171168
        %v5821 = vunpack.c.0.s8 %v5820
        %v5822 = vlaneseq
        %v5823 = vshrl.u32 %v5822, 7
        %v5824 = vsub.s32 %v5821, %v5823
        %v5825 = vrot.slane %v5817, %v5824
        %v5827 = vunpack.c.l.s4 1966171168
        %v5828 = vunpack.c.0.s8 %v5827
        %v5829 = vlaneseq
        %v5830 = vshrl.u32 %v5829, 7
        %v5831 = vsub.s32 %v5828, %v5830
        %v5832 = vrot.slane %v5818, %v5831
        %v5833 = vcombine.low %v5825, %v5832
        %v5834 = vcombine.low %v5524, %v5499
        %v5836 = vunpack.c.l.s4 1966171168
        %v5837 = vunpack.c.0.s8 %v5836
        %v5838 = vlaneseq
        %v5839 = vshrl.u32 %v5838, 7
        %v5840 = vsub.s32 %v5837, %v5839
        %v5841 = vrot.slane %v5834, %v5840
        %v5842 = vcombine.low %v5841, %v5802
        %v5844 = vunpack.c.l.s4 1966171168
        %v5845 = vunpack.c.0.s8 %v5844
        %v5846 = vlaneseq
        %v5847 = vshrl.u32 %v5846, 7
        %v5848 = vsub.s32 %v5845, %v5847
        %v5849 = vrot.slane %v5842, %v5848
        %v5850 = vcombine.low %v5849, %v5832
        %v5852 = vunpack.c.l.s4 1966171168
        %v5853 = vunpack.c.0.s8 %v5852
        %v5854 = vlaneseq
        %v5855 = vshrl.u32 %v5854, 7
        %v5856 = vsub.s32 %v5853, %v5855
        %v5857 = vrot.slane %v5841, %v5856
        %v5862 = vsel %vm891, %v5573, 0
        %v5864 = vsel %vm891, %v5622, 0
        %v5866 = vsel %vm891, %v5671, 0
        %v5868 = vsel %vm891, %v5720, 0
        %v5870 = vsel %vm891, %v5735, 0
        %5872 = vmatprep.subr.mxu0 0.0
        %5873 = vmatpush1.msra.mxu0 %v5236
        %5874 = vmatprep.subr.mxu0 0.0
        %5875 = vmatpush1.msra.mxu0 %v5237
        %5876 = vmatprep.subr.mxu0 0.0
        %5877 = vmatpush1.msra.mxu0 %v5238
        %5878 = vmatprep.subr.mxu0 0.0
        %5879 = vmatpush1.msra.mxu0 %v5239
        %5880 = vmatprep.subr.mxu0 0.0
        %5881 = vmatpush1.msra.mxu0 0.0
        %5882 = vmatprep.subr.mxu0 0.0
        %5883 = vmatpush1.msra.mxu0 0.0
        %5884 = vmatprep.subr.mxu0 0.0
        %5885 = vmatpush1.msra.mxu0 0.0
        %5886 = vmatprep.subr.mxu0 0.0
        %5887 = vmatpush1.msra.mxu0 0.0
        %5888 = vmatprep.subr.mxu0 0.0
        %5889 = vmatpush1.msra.mxu0 0.0
        %5890 = vmatprep.subr.mxu0 0.0
        %5891 = vmatpush1.msra.mxu0 0.0
        %5892 = vmatprep.subr.mxu0 0.0
        %5893 = vmatpush1.msra.mxu0 0.0
        %5894 = vmatprep.subr.mxu0 0.0
        %5895 = vmatpush1.msra.mxu0 0.0
        %5896 = vmatprep.subr.mxu0 0.0
        %5897 = vmatpush1.msra.mxu0 0.0
        %5898 = vmatprep.subr.mxu0 0.0
        %5899 = vmatpush1.msra.mxu0 0.0
        %5900 = vmatprep.subr.mxu0 0.0
        %5901 = vmatpush1.msra.mxu0 0.0
        %5902 = vmatprep.subr.mxu0 0.0
        %5903 = vmatpush1.msra.mxu0 0.0
        %5904 = vmatprep.subr.mxu0 0.0
        %5905 = vmatpush1.msra.mxu0 0.0
        %5906 = vmatprep.subr.mxu0 0.0
        %5907 = vmatpush1.msra.mxu0 0.0
        %5908 = vmatprep.subr.mxu0 0.0
        %5909 = vmatpush1.msra.mxu0 0.0
        %5910 = vmatprep.subr.mxu0 0.0
        %5911 = vmatpush1.msra.mxu0 0.0
        %5912 = vmatprep.subr.mxu0 0.0
        %5913 = vmatpush1.msra.mxu0 0.0
        %5914 = vmatprep.subr.mxu0 0.0
        %5915 = vmatpush1.msra.mxu0 0.0
        %5916 = vmatprep.subr.mxu0 0.0
        %5917 = vmatpush1.msra.mxu0 0.0
        %5918 = vmatprep.subr.mxu0 0.0
        %5919 = vmatpush1.msra.mxu0 0.0
        %5920 = vmatprep.subr.mxu0 0.0
        %5921 = vmatpush1.msra.mxu0 0.0
        %5922 = vmatprep.subr.mxu0 0.0
        %5923 = vmatpush1.msra.mxu0 0.0
        %5924 = vmatprep.subr.mxu0 0.0
        %5925 = vmatpush1.msra.mxu0 0.0
        %5926 = vmatprep.subr.mxu0 0.0
        %5927 = vmatpush1.msra.mxu0 0.0
        %5928 = vmatprep.subr.mxu0 0.0
        %5929 = vmatpush1.msra.mxu0 0.0
        %5930 = vmatprep.subr.mxu0 0.0
        %5931 = vmatpush1.msra.mxu0 0.0
        %5932 = vmatprep.subr.mxu0 0.0
        %5933 = vmatpush1.msra.mxu0 0.0
        %5934 = vmatprep.subr.mxu0 0.0
        %5935 = vmatpush1.msra.mxu0 0.0
        %5936 = vmatprep.mubr.f32.mxu0 0.0
        %5937 = vmatmul.mubr.f32.gmra.mrb[0].mxu0 %v5862
        %v5938 = vpop.f32.mrb[0].mxu0
        %v5939 = vadd.f32 %v5784, %v5938
        %v5940 = vpop.f32.mrb[0].mxu0
        %5941 = vmatprep.mubr.f32.mxu0 0.0
        %5942 = vmatmul.mubr.f32.gmra.mrb[0].mxu0 %v5864
        %v5943 = vpop.f32.mrb[0].mxu0
        %v5944 = vadd.f32 %v5784, %v5943
        %v5945 = vpop.f32.mrb[0].mxu0
        %5946 = vmatprep.mubr.f32.mxu0 0.0
        %5947 = vmatmul.mubr.f32.gmra.mrb[0].mxu0 %v5866
        %v5948 = vpop.f32.mrb[0].mxu0
        %v5949 = vadd.f32 %v5833, %v5948
        %v5950 = vpop.f32.mrb[0].mxu0
        %5951 = vmatprep.mubr.f32.mxu0 0.0
        %5952 = vmatmul.mubr.f32.gmra.mrb[0].mxu0 %v5868
        %v5953 = vpop.f32.mrb[0].mxu0
        %v5954 = vadd.f32 %v5850, %v5953
        %v5955 = vpop.f32.mrb[0].mxu0
        %5956 = vmatprep.mubr.f32.mxu0 0.0
        %5957 = vmatmul.mubr.f32.gmra.mrb[0].mxu0 %v5870
        %v5958 = vpop.f32.mrb[0].mxu0
        %v5959 = vadd.f32 %v5857, %v5958
        %v5960 = vpop.f32.mrb[0].mxu0
        %5961 = vdwg.mxu0
        %v5967 = vcombine.high %v5939, %v5939
        %v5969 = vunpack.c.l.s4 1966171168
        %v5970 = vunpack.c.0.s8 %v5969
        %v5971 = vlaneseq
        %v5972 = vshrl.u32 %v5971, 7
        %v5973 = vsub.s32 %v5970, %v5972
        %v5974 = vrot.slane %v5939, %v5973
        %v5976 = vunpack.c.l.s4 1966171168
        %v5977 = vunpack.c.0.s8 %v5976
        %v5978 = vlaneseq
        %v5979 = vshrl.u32 %v5978, 7
        %v5980 = vsub.s32 %v5977, %v5979
        %v5981 = vrot.slane %v5967, %v5980
        %v5982 = vcombine.high %v5974, %v5974
        %v5983 = vcombine.high %v5981, %v5981
        %v5985 = vunpack.c.l.s4 1966171168
        %v5986 = vunpack.c.0.s8 %v5985
        %v5987 = vlaneseq
        %v5988 = vshrl.u32 %v5987, 7
        %v5989 = vsub.s32 %v5986, %v5988
        %v5990 = vrot.slane %v5974, %v5989
        %v5992 = vunpack.c.l.s4 1966171168
        %v5993 = vunpack.c.0.s8 %v5992
        %v5994 = vlaneseq
        %v5995 = vshrl.u32 %v5994, 7
        %v5996 = vsub.s32 %v5993, %v5995
        %v5997 = vrot.slane %v5981, %v5996
        %v5999 = vunpack.c.l.s4 1966171168
        %v6000 = vunpack.c.0.s8 %v5999
        %v6001 = vlaneseq
        %v6002 = vshrl.u32 %v6001, 7
        %v6003 = vsub.s32 %v6000, %v6002
        %v6004 = vrot.slane %v5982, %v6003
        %v6006 = vunpack.c.l.s4 1966171168
        %v6007 = vunpack.c.0.s8 %v6006
        %v6008 = vlaneseq
        %v6009 = vshrl.u32 %v6008, 7
        %v6010 = vsub.s32 %v6007, %v6009
        %v6011 = vrot.slane %v5983, %v6010
        %v6012 = vcombine.high %v5990, %v5990
        %v6013 = vcombine.high %v5997, %v5997
        %v6014 = vcombine.high %v6004, %v6004
        %v6015 = vcombine.high %v6011, %v6011
        %v6016 = vcombine.high %v5944, %v5944
        %v6018 = vunpack.c.l.s4 1966171168
        %v6019 = vunpack.c.0.s8 %v6018
        %v6020 = vlaneseq
        %v6021 = vshrl.u32 %v6020, 7
        %v6022 = vsub.s32 %v6019, %v6021
        %v6023 = vrot.slane %v5944, %v6022
        %v6025 = vunpack.c.l.s4 1966171168
        %v6026 = vunpack.c.0.s8 %v6025
        %v6027 = vlaneseq
        %v6028 = vshrl.u32 %v6027, 7
        %v6029 = vsub.s32 %v6026, %v6028
        %v6030 = vrot.slane %v6016, %v6029
        %v6031 = vcombine.high %v6023, %v6023
        %v6032 = vcombine.high %v6030, %v6030
        %v6034 = vunpack.c.l.s4 1966171168
        %v6035 = vunpack.c.0.s8 %v6034
        %v6036 = vlaneseq
        %v6037 = vshrl.u32 %v6036, 7
        %v6038 = vsub.s32 %v6035, %v6037
        %v6039 = vrot.slane %v6023, %v6038
        %v6041 = vunpack.c.l.s4 1966171168
        %v6042 = vunpack.c.0.s8 %v6041
        %v6043 = vlaneseq
        %v6044 = vshrl.u32 %v6043, 7
        %v6045 = vsub.s32 %v6042, %v6044
        %v6046 = vrot.slane %v6030, %v6045
        %v6048 = vunpack.c.l.s4 1966171168
        %v6049 = vunpack.c.0.s8 %v6048
        %v6050 = vlaneseq
        %v6051 = vshrl.u32 %v6050, 7
        %v6052 = vsub.s32 %v6049, %v6051
        %v6053 = vrot.slane %v6031, %v6052
        %v6055 = vunpack.c.l.s4 1966171168
        %v6056 = vunpack.c.0.s8 %v6055
        %v6057 = vlaneseq
        %v6058 = vshrl.u32 %v6057, 7
        %v6059 = vsub.s32 %v6056, %v6058
        %v6060 = vrot.slane %v6032, %v6059
        %v6061 = vcombine.high %v6039, %v6039
        %v6062 = vcombine.high %v6046, %v6046
        %v6063 = vcombine.high %v6053, %v6053
        %v6064 = vcombine.high %v6060, %v6060
        %v6065 = vcombine.high %v5949, %v5949
        %v6067 = vunpack.c.l.s4 1966171168
        %v6068 = vunpack.c.0.s8 %v6067
        %v6069 = vlaneseq
        %v6070 = vshrl.u32 %v6069, 7
        %v6071 = vsub.s32 %v6068, %v6070
        %v6072 = vrot.slane %v5949, %v6071
        %v6074 = vunpack.c.l.s4 1966171168
        %v6075 = vunpack.c.0.s8 %v6074
        %v6076 = vlaneseq
        %v6077 = vshrl.u32 %v6076, 7
        %v6078 = vsub.s32 %v6075, %v6077
        %v6079 = vrot.slane %v6065, %v6078
        %v6080 = vcombine.high %v6072, %v6072
        %v6081 = vcombine.high %v6079, %v6079
        %v6083 = vunpack.c.l.s4 1966171168
        %v6084 = vunpack.c.0.s8 %v6083
        %v6085 = vlaneseq
        %v6086 = vshrl.u32 %v6085, 7
        %v6087 = vsub.s32 %v6084, %v6086
        %v6088 = vrot.slane %v6072, %v6087
        %v6090 = vunpack.c.l.s4 1966171168
        %v6091 = vunpack.c.0.s8 %v6090
        %v6092 = vlaneseq
        %v6093 = vshrl.u32 %v6092, 7
        %v6094 = vsub.s32 %v6091, %v6093
        %v6095 = vrot.slane %v6079, %v6094
        %v6097 = vunpack.c.l.s4 1966171168
        %v6098 = vunpack.c.0.s8 %v6097
        %v6099 = vlaneseq
        %v6100 = vshrl.u32 %v6099, 7
        %v6101 = vsub.s32 %v6098, %v6100
        %v6102 = vrot.slane %v6080, %v6101
        %v6104 = vunpack.c.l.s4 1966171168
        %v6105 = vunpack.c.0.s8 %v6104
        %v6106 = vlaneseq
        %v6107 = vshrl.u32 %v6106, 7
        %v6108 = vsub.s32 %v6105, %v6107
        %v6109 = vrot.slane %v6081, %v6108
        %v6110 = vcombine.high %v6088, %v6088
        %v6111 = vcombine.high %v6095, %v6095
        %v6112 = vcombine.high %v6102, %v6102
        %v6113 = vcombine.high %v6109, %v6109
        %v6114 = vcombine.high %v5954, %v5954
        %v6116 = vunpack.c.l.s4 1966171168
        %v6117 = vunpack.c.0.s8 %v6116
        %v6118 = vlaneseq
        %v6119 = vshrl.u32 %v6118, 7
        %v6120 = vsub.s32 %v6117, %v6119
        %v6121 = vrot.slane %v5954, %v6120
        %v6123 = vunpack.c.l.s4 1966171168
        %v6124 = vunpack.c.0.s8 %v6123
        %v6125 = vlaneseq
        %v6126 = vshrl.u32 %v6125, 7
        %v6127 = vsub.s32 %v6124, %v6126
        %v6128 = vrot.slane %v6114, %v6127
        %v6129 = vcombine.high %v6121, %v6121
        %v6130 = vcombine.high %v6128, %v6128
        %v6132 = vunpack.c.l.s4 1966171168
        %v6133 = vunpack.c.0.s8 %v6132
        %v6134 = vlaneseq
        %v6135 = vshrl.u32 %v6134, 7
        %v6136 = vsub.s32 %v6133, %v6135
        %v6137 = vrot.slane %v6121, %v6136
        %v6139 = vunpack.c.l.s4 1966171168
        %v6140 = vunpack.c.0.s8 %v6139
        %v6141 = vlaneseq
        %v6142 = vshrl.u32 %v6141, 7
        %v6143 = vsub.s32 %v6140, %v6142
        %v6144 = vrot.slane %v6128, %v6143
        %v6146 = vunpack.c.l.s4 1966171168
        %v6147 = vunpack.c.0.s8 %v6146
        %v6148 = vlaneseq
        %v6149 = vshrl.u32 %v6148, 7
        %v6150 = vsub.s32 %v6147, %v6149
        %v6151 = vrot.slane %v6129, %v6150
        %v6153 = vunpack.c.l.s4 1966171168
        %v6154 = vunpack.c.0.s8 %v6153
        %v6155 = vlaneseq
        %v6156 = vshrl.u32 %v6155, 7
        %v6157 = vsub.s32 %v6154, %v6156
        %v6158 = vrot.slane %v6130, %v6157
        %v6159 = vcombine.high %v6137, %v6137
        %v6160 = vcombine.high %v6144, %v6144
        %v6161 = vcombine.high %v6151, %v6151
        %v6162 = vcombine.high %v6158, %v6158
        %v6164 = vunpack.c.l.s4 1966171168
        %v6165 = vunpack.c.0.s8 %v6164
        %v6166 = vlaneseq
        %v6167 = vshrl.u32 %v6166, 7
        %v6168 = vsub.s32 %v6165, %v6167
        %v6169 = vrot.slane %v5959, %v6168
        %v6170 = vcombine.high %v6169, %v6169
        %v6172 = vunpack.c.l.s4 1966171168
        %v6173 = vunpack.c.0.s8 %v6172
        %v6174 = vlaneseq
        %v6175 = vshrl.u32 %v6174, 7
        %v6176 = vsub.s32 %v6173, %v6175
        %v6177 = vrot.slane %v6169, %v6176
        %v6179 = vunpack.c.l.s4 1966171168
        %v6180 = vunpack.c.0.s8 %v6179
        %v6181 = vlaneseq
        %v6182 = vshrl.u32 %v6181, 7
        %v6183 = vsub.s32 %v6180, %v6182
        %v6184 = vrot.slane %v6170, %v6183
        %v6219 = vmul.f32 %v5990, 0.5
        %v6220 = vmul.f32 %v6004, 0.5
        %v6221 = vmul.f32 %v6012, 0.5
        %v6222 = vmul.f32 %v6014, 0.5
        %v6223 = vmul.f32 %v5997, 0.5
        %v6224 = vmul.f32 %v6011, 0.5
        %v6225 = vmul.f32 %v6013, 0.5
        %v6226 = vmul.f32 %v6015, 0.5
        %v6227 = vmul.f32 %v6039, 0.5
        %v6228 = vmul.f32 %v6053, 0.5
        %v6229 = vmul.f32 %v6061, 0.5
        %v6230 = vmul.f32 %v6063, 0.5
        %v6231 = vmul.f32 %v6046, 0.5
        %v6232 = vmul.f32 %v6060, 0.5
        %v6233 = vmul.f32 %v6062, 0.5
        %v6234 = vmul.f32 %v6064, 0.5
        %v6235 = vmul.f32 %v6088, 0.5
        %v6236 = vmul.f32 %v6102, 0.5
        %v6237 = vmul.f32 %v6110, 0.5
        %v6238 = vmul.f32 %v6112, 0.5
        %v6239 = vmul.f32 %v6095, 0.5
        %v6240 = vmul.f32 %v6109, 0.5
        %v6241 = vmul.f32 %v6111, 0.5
        %v6242 = vmul.f32 %v6113, 0.5
        %v6243 = vmul.f32 %v6137, 0.5
        %v6244 = vmul.f32 %v6151, 0.5
        %v6245 = vmul.f32 %v6159, 0.5
        %v6246 = vmul.f32 %v6161, 0.5
        %v6247 = vmul.f32 %v6144, 0.5
        %v6248 = vmul.f32 %v6158, 0.5
        %v6249 = vmul.f32 %v6160, 0.5
        %v6250 = vmul.f32 %v6162, 0.5
        %v6251 = vmul.f32 %v6177, 0.5
        %v6252 = vmul.f32 %v6184, 0.5
        %v6253 = vmul.f32 %v5990, 0.70710677
        %v6254 = vmul.f32 %v6004, 0.70710677
        %v6255 = vmul.f32 %v6012, 0.70710677
        %v6256 = vmul.f32 %v6014, 0.70710677
        %v6257 = vmul.f32 %v5997, 0.70710677
        %v6258 = vmul.f32 %v6011, 0.70710677
        %v6259 = vmul.f32 %v6013, 0.70710677
        %v6260 = vmul.f32 %v6015, 0.70710677
        %v6261 = vmul.f32 %v6039, 0.70710677
        %v6262 = vmul.f32 %v6053, 0.70710677
        %v6263 = vmul.f32 %v6061, 0.70710677
        %v6264 = vmul.f32 %v6063, 0.70710677
        %v6265 = vmul.f32 %v6046, 0.70710677
        %v6266 = vmul.f32 %v6060, 0.70710677
        %v6267 = vmul.f32 %v6062, 0.70710677
        %v6268 = vmul.f32 %v6064, 0.70710677
        %v6269 = vmul.f32 %v6088, 0.70710677
        %v6270 = vmul.f32 %v6102, 0.70710677
        %v6271 = vmul.f32 %v6110, 0.70710677
        %v6272 = vmul.f32 %v6112, 0.70710677
        %v6273 = vmul.f32 %v6095, 0.70710677
        %v6274 = vmul.f32 %v6109, 0.70710677
        %v6275 = vmul.f32 %v6111, 0.70710677
        %v6276 = vmul.f32 %v6113, 0.70710677
        %v6277 = vmul.f32 %v6137, 0.70710677
        %v6278 = vmul.f32 %v6151, 0.70710677
        %v6279 = vmul.f32 %v6159, 0.70710677
        %v6280 = vmul.f32 %v6161, 0.70710677
        %v6281 = vmul.f32 %v6144, 0.70710677
        %v6282 = vmul.f32 %v6158, 0.70710677
        %v6283 = vmul.f32 %v6160, 0.70710677
        %v6284 = vmul.f32 %v6162, 0.70710677
        %v6285 = vmul.f32 %v6177, 0.70710677
        %v6286 = vmul.f32 %v6184, 0.70710677
        %v6287 = verf.f32.pop %v6253
        %v6288 = verf.f32.pop %v6254
        %v6289 = verf.f32.pop %v6255
        %v6290 = verf.f32.pop %v6256
        %v6291 = verf.f32.pop %v6257
        %v6292 = verf.f32.pop %v6258
        %v6293 = verf.f32.pop %v6259
        %v6294 = verf.f32.pop %v6260
        %v6295 = verf.f32.pop %v6261
        %v6296 = verf.f32.pop %v6262
        %v6297 = verf.f32.pop %v6263
        %v6298 = verf.f32.pop %v6264
        %v6299 = verf.f32.pop %v6265
        %v6300 = verf.f32.pop %v6266
        %v6301 = verf.f32.pop %v6267
        %v6302 = verf.f32.pop %v6268
        %v6303 = verf.f32.pop %v6269
        %v6304 = verf.f32.pop %v6270
        %v6305 = verf.f32.pop %v6271
        %v6306 = verf.f32.pop %v6272
        %v6307 = verf.f32.pop %v6273
        %v6308 = verf.f32.pop %v6274
        %v6309 = verf.f32.pop %v6275
        %v6310 = verf.f32.pop %v6276
        %v6311 = verf.f32.pop %v6277
        %v6312 = verf.f32.pop %v6278
        %v6313 = verf.f32.pop %v6279
        %v6314 = verf.f32.pop %v6280
        %v6315 = verf.f32.pop %v6281
        %v6316 = verf.f32.pop %v6282
        %v6317 = verf.f32.pop %v6283
        %v6318 = verf.f32.pop %v6284
        %v6319 = verf.f32.pop %v6285
        %v6320 = verf.f32.pop %v6286
        %v6321 = vadd.f32 %v6287, 1.0
        %v6322 = vadd.f32 %v6288, 1.0
        %v6323 = vadd.f32 %v6289, 1.0
        %v6324 = vadd.f32 %v6290, 1.0
        %v6325 = vadd.f32 %v6291, 1.0
        %v6326 = vadd.f32 %v6292, 1.0
        %v6327 = vadd.f32 %v6293, 1.0
        %v6328 = vadd.f32 %v6294, 1.0
        %v6329 = vadd.f32 %v6295, 1.0
        %v6330 = vadd.f32 %v6296, 1.0
        %v6331 = vadd.f32 %v6297, 1.0
        %v6332 = vadd.f32 %v6298, 1.0
        %v6333 = vadd.f32 %v6299, 1.0
        %v6334 = vadd.f32 %v6300, 1.0
        %v6335 = vadd.f32 %v6301, 1.0
        %v6336 = vadd.f32 %v6302, 1.0
        %v6337 = vadd.f32 %v6303, 1.0
        %v6338 = vadd.f32 %v6304, 1.0
        %v6339 = vadd.f32 %v6305, 1.0
        %v6340 = vadd.f32 %v6306, 1.0
        %v6341 = vadd.f32 %v6307, 1.0
        %v6342 = vadd.f32 %v6308, 1.0
        %v6343 = vadd.f32 %v6309, 1.0
        %v6344 = vadd.f32 %v6310, 1.0
        %v6345 = vadd.f32 %v6311, 1.0
        %v6346 = vadd.f32 %v6312, 1.0
        %v6347 = vadd.f32 %v6313, 1.0
        %v6348 = vadd.f32 %v6314, 1.0
        %v6349 = vadd.f32 %v6315, 1.0
        %v6350 = vadd.f32 %v6316, 1.0
        %v6351 = vadd.f32 %v6317, 1.0
        %v6352 = vadd.f32 %v6318, 1.0
        %v6353 = vadd.f32 %v6319, 1.0
        %v6354 = vadd.f32 %v6320, 1.0
        %v6355 = vmul.f32 %v6219, %v6321
        %v6356 = vmul.f32 %v6220, %v6322
        %v6357 = vmul.f32 %v6221, %v6323
        %v6358 = vmul.f32 %v6222, %v6324
        %v6359 = vmul.f32 %v6223, %v6325
        %v6360 = vmul.f32 %v6224, %v6326
        %v6361 = vmul.f32 %v6225, %v6327
        %v6362 = vmul.f32 %v6226, %v6328
        %v6363 = vmul.f32 %v6227, %v6329
        %v6364 = vmul.f32 %v6228, %v6330
        %v6365 = vmul.f32 %v6229, %v6331
        %v6366 = vmul.f32 %v6230, %v6332
        %v6367 = vmul.f32 %v6231, %v6333
        %v6368 = vmul.f32 %v6232, %v6334
        %v6369 = vmul.f32 %v6233, %v6335
        %v6370 = vmul.f32 %v6234, %v6336
        %v6371 = vmul.f32 %v6235, %v6337
        %v6372 = vmul.f32 %v6236, %v6338
        %v6373 = vmul.f32 %v6237, %v6339
        %v6374 = vmul.f32 %v6238, %v6340
        %v6375 = vmul.f32 %v6239, %v6341
        %v6376 = vmul.f32 %v6240, %v6342
        %v6377 = vmul.f32 %v6241, %v6343
        %v6378 = vmul.f32 %v6242, %v6344
        %v6379 = vmul.f32 %v6243, %v6345
        %v6380 = vmul.f32 %v6244, %v6346
        %v6381 = vmul.f32 %v6245, %v6347
        %v6382 = vmul.f32 %v6246, %v6348
        %v6383 = vmul.f32 %v6247, %v6349
        %v6384 = vmul.f32 %v6248, %v6350
        %v6385 = vmul.f32 %v6249, %v6351
        %v6386 = vmul.f32 %v6250, %v6352
        %v6387 = vmul.f32 %v6251, %v6353
        %v6388 = vmul.f32 %v6252, %v6354
        %v6389 = vld [vmem:[%s729] sm:$0xff]
        %v6390 = vld [vmem:[%s729 + $0x8] sm:$0xff]
        %v6391 = vld [vmem:[%s729 + $0x10] sm:$0xff]
        %v6392 = vld [vmem:[%s729 + $0x18] sm:$0xff]
        %v6393 = vld [vmem:[%s729 + $0x20] sm:$0xff]
        %v6394 = vld [vmem:[%s729 + $0x28] sm:$0xff]
        %v6395 = vld [vmem:[%s729 + $0x30] sm:$0xff]
        %v6396 = vld [vmem:[%s729 + $0x38] sm:$0xff]
        %v6431 = vcombine.low %v6355, %v6356
        %v6432 = vcombine.low %v6357, %v6358
        %v6433 = vcombine.low %v6359, %v6360
        %v6434 = vcombine.low %v6361, %v6362
        %v6436 = vunpack.c.l.s4 1966171168
        %v6437 = vunpack.c.0.s8 %v6436
        %v6438 = vlaneseq
        %v6439 = vshrl.u32 %v6438, 7
        %v6440 = vsub.s32 %v6437, %v6439
        %v6441 = vrot.slane %v6431, %v6440
        %v6443 = vunpack.c.l.s4 1966171168
        %v6444 = vunpack.c.0.s8 %v6443
        %v6445 = vlaneseq
        %v6446 = vshrl.u32 %v6445, 7
        %v6447 = vsub.s32 %v6444, %v6446
        %v6448 = vrot.slane %v6432, %v6447
        %v6450 = vunpack.c.l.s4 1966171168
        %v6451 = vunpack.c.0.s8 %v6450
        %v6452 = vlaneseq
        %v6453 = vshrl.u32 %v6452, 7
        %v6454 = vsub.s32 %v6451, %v6453
        %v6455 = vrot.slane %v6433, %v6454
        %v6457 = vunpack.c.l.s4 1966171168
        %v6458 = vunpack.c.0.s8 %v6457
        %v6459 = vlaneseq
        %v6460 = vshrl.u32 %v6459, 7
        %v6461 = vsub.s32 %v6458, %v6460
        %v6462 = vrot.slane %v6434, %v6461
        %v6463 = vcombine.low %v6441, %v6448
        %v6464 = vcombine.low %v6455, %v6462
        %v6466 = vunpack.c.l.s4 1966171168
        %v6467 = vunpack.c.0.s8 %v6466
        %v6468 = vlaneseq
        %v6469 = vshrl.u32 %v6468, 7
        %v6470 = vsub.s32 %v6467, %v6469
        %v6471 = vrot.slane %v6463, %v6470
        %v6473 = vunpack.c.l.s4 1966171168
        %v6474 = vunpack.c.0.s8 %v6473
        %v6475 = vlaneseq
        %v6476 = vshrl.u32 %v6475, 7
        %v6477 = vsub.s32 %v6474, %v6476
        %v6478 = vrot.slane %v6464, %v6477
        %v6479 = vcombine.low %v6471, %v6478
        %v6480 = vcombine.low %v6363, %v6364
        %v6481 = vcombine.low %v6365, %v6366
        %v6482 = vcombine.low %v6367, %v6368
        %v6483 = vcombine.low %v6369, %v6370
        %v6485 = vunpack.c.l.s4 1966171168
        %v6486 = vunpack.c.0.s8 %v6485
        %v6487 = vlaneseq
        %v6488 = vshrl.u32 %v6487, 7
        %v6489 = vsub.s32 %v6486, %v6488
        %v6490 = vrot.slane %v6480, %v6489
        %v6492 = vunpack.c.l.s4 1966171168
        %v6493 = vunpack.c.0.s8 %v6492
        %v6494 = vlaneseq
        %v6495 = vshrl.u32 %v6494, 7
        %v6496 = vsub.s32 %v6493, %v6495
        %v6497 = vrot.slane %v6481, %v6496
        %v6499 = vunpack.c.l.s4 1966171168
        %v6500 = vunpack.c.0.s8 %v6499
        %v6501 = vlaneseq
        %v6502 = vshrl.u32 %v6501, 7
        %v6503 = vsub.s32 %v6500, %v6502
        %v6504 = vrot.slane %v6482, %v6503
        %v6506 = vunpack.c.l.s4 1966171168
        %v6507 = vunpack.c.0.s8 %v6506
        %v6508 = vlaneseq
        %v6509 = vshrl.u32 %v6508, 7
        %v6510 = vsub.s32 %v6507, %v6509
        %v6511 = vrot.slane %v6483, %v6510
        %v6512 = vcombine.low %v6490, %v6497
        %v6513 = vcombine.low %v6504, %v6511
        %v6515 = vunpack.c.l.s4 1966171168
        %v6516 = vunpack.c.0.s8 %v6515
        %v6517 = vlaneseq
        %v6518 = vshrl.u32 %v6517, 7
        %v6519 = vsub.s32 %v6516, %v6518
        %v6520 = vrot.slane %v6512, %v6519
        %v6522 = vunpack.c.l.s4 1966171168
        %v6523 = vunpack.c.0.s8 %v6522
        %v6524 = vlaneseq
        %v6525 = vshrl.u32 %v6524, 7
        %v6526 = vsub.s32 %v6523, %v6525
        %v6527 = vrot.slane %v6513, %v6526
        %v6528 = vcombine.low %v6520, %v6527
        %v6529 = vcombine.low %v6371, %v6372
        %v6530 = vcombine.low %v6373, %v6374
        %v6531 = vcombine.low %v6375, %v6376
        %v6532 = vcombine.low %v6377, %v6378
        %v6534 = vunpack.c.l.s4 1966171168
        %v6535 = vunpack.c.0.s8 %v6534
        %v6536 = vlaneseq
        %v6537 = vshrl.u32 %v6536, 7
        %v6538 = vsub.s32 %v6535, %v6537
        %v6539 = vrot.slane %v6529, %v6538
        %v6541 = vunpack.c.l.s4 1966171168
        %v6542 = vunpack.c.0.s8 %v6541
        %v6543 = vlaneseq
        %v6544 = vshrl.u32 %v6543, 7
        %v6545 = vsub.s32 %v6542, %v6544
        %v6546 = vrot.slane %v6530, %v6545
        %v6548 = vunpack.c.l.s4 1966171168
        %v6549 = vunpack.c.0.s8 %v6548
        %v6550 = vlaneseq
        %v6551 = vshrl.u32 %v6550, 7
        %v6552 = vsub.s32 %v6549, %v6551
        %v6553 = vrot.slane %v6531, %v6552
        %v6555 = vunpack.c.l.s4 1966171168
        %v6556 = vunpack.c.0.s8 %v6555
        %v6557 = vlaneseq
        %v6558 = vshrl.u32 %v6557, 7
        %v6559 = vsub.s32 %v6556, %v6558
        %v6560 = vrot.slane %v6532, %v6559
        %v6561 = vcombine.low %v6539, %v6546
        %v6562 = vcombine.low %v6553, %v6560
        %v6564 = vunpack.c.l.s4 1966171168
        %v6565 = vunpack.c.0.s8 %v6564
        %v6566 = vlaneseq
        %v6567 = vshrl.u32 %v6566, 7
        %v6568 = vsub.s32 %v6565, %v6567
        %v6569 = vrot.slane %v6561, %v6568
        %v6571 = vunpack.c.l.s4 1966171168
        %v6572 = vunpack.c.0.s8 %v6571
        %v6573 = vlaneseq
        %v6574 = vshrl.u32 %v6573, 7
        %v6575 = vsub.s32 %v6572, %v6574
        %v6576 = vrot.slane %v6562, %v6575
        %v6577 = vcombine.low %v6569, %v6576
        %v6578 = vcombine.low %v6379, %v6380
        %v6579 = vcombine.low %v6381, %v6382
        %v6580 = vcombine.low %v6383, %v6384
        %v6581 = vcombine.low %v6385, %v6386
        %v6583 = vunpack.c.l.s4 1966171168
        %v6584 = vunpack.c.0.s8 %v6583
        %v6585 = vlaneseq
        %v6586 = vshrl.u32 %v6585, 7
        %v6587 = vsub.s32 %v6584, %v6586
        %v6588 = vrot.slane %v6578, %v6587
        %v6590 = vunpack.c.l.s4 1966171168
        %v6591 = vunpack.c.0.s8 %v6590
        %v6592 = vlaneseq
        %v6593 = vshrl.u32 %v6592, 7
        %v6594 = vsub.s32 %v6591, %v6593
        %v6595 = vrot.slane %v6579, %v6594
        %v6597 = vunpack.c.l.s4 1966171168
        %v6598 = vunpack.c.0.s8 %v6597
        %v6599 = vlaneseq
        %v6600 = vshrl.u32 %v6599, 7
        %v6601 = vsub.s32 %v6598, %v6600
        %v6602 = vrot.slane %v6580, %v6601
        %v6604 = vunpack.c.l.s4 1966171168
        %v6605 = vunpack.c.0.s8 %v6604
        %v6606 = vlaneseq
        %v6607 = vshrl.u32 %v6606, 7
        %v6608 = vsub.s32 %v6605, %v6607
        %v6609 = vrot.slane %v6581, %v6608
        %v6610 = vcombine.low %v6588, %v6595
        %v6611 = vcombine.low %v6602, %v6609
        %v6613 = vunpack.c.l.s4 1966171168
        %v6614 = vunpack.c.0.s8 %v6613
        %v6615 = vlaneseq
        %v6616 = vshrl.u32 %v6615, 7
        %v6617 = vsub.s32 %v6614, %v6616
        %v6618 = vrot.slane %v6610, %v6617
        %v6620 = vunpack.c.l.s4 1966171168
        %v6621 = vunpack.c.0.s8 %v6620
        %v6622 = vlaneseq
        %v6623 = vshrl.u32 %v6622, 7
        %v6624 = vsub.s32 %v6621, %v6623
        %v6625 = vrot.slane %v6611, %v6624
        %v6626 = vcombine.low %v6618, %v6625
        %v6627 = vcombine.low %v6387, %v6388
        %v6629 = vunpack.c.l.s4 1966171168
        %v6630 = vunpack.c.0.s8 %v6629
        %v6631 = vlaneseq
        %v6632 = vshrl.u32 %v6631, 7
        %v6633 = vsub.s32 %v6630, %v6632
        %v6634 = vrot.slane %v6627, %v6633
        %v6636 = vunpack.c.l.s4 1966171168
        %v6637 = vunpack.c.0.s8 %v6636
        %v6638 = vlaneseq
        %v6639 = vshrl.u32 %v6638, 7
        %v6640 = vsub.s32 %v6637, %v6639
        %v6641 = vrot.slane %v6634, %v6640
        %vm6642 = vcmask 523264
        %v6643 = vsel %vm6642, %v6479, 0
        %v6645 = vsel %vm6642, %v6528, 0
        %v6647 = vsel %vm6642, %v6577, 0
        %v6649 = vsel %vm6642, %v6626, 0
        %v6651 = vsel %vm6642, %v6641, 0
        %6653 = vmatprep.subr.mxu0 0.0
        %6654 = vmatpush1.msra.mxu0 %v6389
        %6655 = vmatprep.subr.mxu0 0.0
        %6656 = vmatpush1.msra.mxu0 %v6390
        %6657 = vmatprep.subr.mxu0 0.0
        %6658 = vmatpush1.msra.mxu0 %v6391
        %6659 = vmatprep.subr.mxu0 0.0
        %6660 = vmatpush1.msra.mxu0 %v6392
        %6661 = vmatprep.subr.mxu0 0.0
        %6662 = vmatpush1.msra.mxu0 %v6393
        %6663 = vmatprep.subr.mxu0 0.0
        %6664 = vmatpush1.msra.mxu0 %v6394
        %6665 = vmatprep.subr.mxu0 0.0
        %6666 = vmatpush1.msra.mxu0 %v6395
        %6667 = vmatprep.subr.mxu0 0.0
        %6668 = vmatpush1.msra.mxu0 %v6396
        %6669 = vmatprep.subr.mxu0 0.0
        %6670 = vmatpush1.msra.mxu0 0.0
        %6671 = vmatprep.subr.mxu0 0.0
        %6672 = vmatpush1.msra.mxu0 0.0
        %6673 = vmatprep.subr.mxu0 0.0
        %6674 = vmatpush1.msra.mxu0 0.0
        %6675 = vmatprep.subr.mxu0 0.0
        %6676 = vmatpush1.msra.mxu0 0.0
        %6677 = vmatprep.subr.mxu0 0.0
        %6678 = vmatpush1.msra.mxu0 0.0
        %6679 = vmatprep.subr.mxu0 0.0
        %6680 = vmatpush1.msra.mxu0 0.0
        %6681 = vmatprep.subr.mxu0 0.0
        %6682 = vmatpush1.msra.mxu0 0.0
        %6683 = vmatprep.subr.mxu0 0.0
        %6684 = vmatpush1.msra.mxu0 0.0
        %6685 = vmatprep.subr.mxu0 0.0
        %6686 = vmatpush1.msra.mxu0 0.0
        %6687 = vmatprep.subr.mxu0 0.0
        %6688 = vmatpush1.msra.mxu0 0.0
        %6689 = vmatprep.subr.mxu0 0.0
        %6690 = vmatpush1.msra.mxu0 0.0
        %6691 = vmatprep.subr.mxu0 0.0
        %6692 = vmatpush1.msra.mxu0 0.0
        %6693 = vmatprep.subr.mxu0 0.0
        %6694 = vmatpush1.msra.mxu0 0.0
        %6695 = vmatprep.subr.mxu0 0.0
        %6696 = vmatpush1.msra.mxu0 0.0
        %6697 = vmatprep.subr.mxu0 0.0
        %6698 = vmatpush1.msra.mxu0 0.0
        %6699 = vmatprep.subr.mxu0 0.0
        %6700 = vmatpush1.msra.mxu0 0.0
        %6701 = vmatprep.subr.mxu0 0.0
        %6702 = vmatpush1.msra.mxu0 0.0
        %6703 = vmatprep.subr.mxu0 0.0
        %6704 = vmatpush1.msra.mxu0 0.0
        %6705 = vmatprep.subr.mxu0 0.0
        %6706 = vmatpush1.msra.mxu0 0.0
        %6707 = vmatprep.subr.mxu0 0.0
        %6708 = vmatpush1.msra.mxu0 0.0
        %6709 = vmatprep.subr.mxu0 0.0
        %6710 = vmatpush1.msra.mxu0 0.0
        %6711 = vmatprep.subr.mxu0 0.0
        %6712 = vmatpush1.msra.mxu0 0.0
        %6713 = vmatprep.subr.mxu0 0.0
        %6714 = vmatpush1.msra.mxu0 0.0
        %6715 = vmatprep.subr.mxu0 0.0
        %6716 = vmatpush1.msra.mxu0 0.0
        %6717 = vmatprep.mubr.f32.mxu0 0.0
        %6718 = vmatmul.mubr.f32.gmra.mrb[0].mxu0 %v6643
        %v6719 = vpop.f32.mrb[0].mxu0
        %v6720 = vadd.f32 0.0, %v6719
        %v6721 = vpop.f32.mrb[0].mxu0
        %6722 = vmatprep.mubr.f32.mxu0 0.0
        %6723 = vmatmul.mubr.f32.gmra.mrb[0].mxu0 %v6645
        %v6724 = vpop.f32.mrb[0].mxu0
        %v6725 = vadd.f32 0.0, %v6724
        %v6726 = vpop.f32.mrb[0].mxu0
        %6727 = vmatprep.mubr.f32.mxu0 0.0
        %6728 = vmatmul.mubr.f32.gmra.mrb[0].mxu0 %v6647
        %v6729 = vpop.f32.mrb[0].mxu0
        %v6730 = vadd.f32 0.0, %v6729
        %v6731 = vpop.f32.mrb[0].mxu0
        %6732 = vmatprep.mubr.f32.mxu0 0.0
        %6733 = vmatmul.mubr.f32.gmra.mrb[0].mxu0 %v6649
        %v6734 = vpop.f32.mrb[0].mxu0
        %v6735 = vadd.f32 0.0, %v6734
        %v6736 = vpop.f32.mrb[0].mxu0
        %6737 = vmatprep.mubr.f32.mxu0 0.0
        %6738 = vmatmul.mubr.f32.gmra.mrb[0].mxu0 %v6651
        %v6739 = vpop.f32.mrb[0].mxu0
        %v6740 = vadd.f32 0.0, %v6739
        %v6741 = vpop.f32.mrb[0].mxu0
        %6742 = vdwg.mxu0
        %v6748 = vcombine.high %v6720, %v6720
        %v6750 = vunpack.c.l.s4 1966171168
        %v6751 = vunpack.c.0.s8 %v6750
        %v6752 = vlaneseq
        %v6753 = vshrl.u32 %v6752, 7
        %v6754 = vsub.s32 %v6751, %v6753
        %v6755 = vrot.slane %v6720, %v6754
        %v6757 = vunpack.c.l.s4 1966171168
        %v6758 = vunpack.c.0.s8 %v6757
        %v6759 = vlaneseq
        %v6760 = vshrl.u32 %v6759, 7
        %v6761 = vsub.s32 %v6758, %v6760
        %v6762 = vrot.slane %v6748, %v6761
        %v6763 = vcombine.high %v6755, %v6755
        %v6764 = vcombine.high %v6762, %v6762
        %v6766 = vunpack.c.l.s4 1966171168
        %v6767 = vunpack.c.0.s8 %v6766
        %v6768 = vlaneseq
        %v6769 = vshrl.u32 %v6768, 7
        %v6770 = vsub.s32 %v6767, %v6769
        %v6771 = vrot.slane %v6755, %v6770
        %v6773 = vunpack.c.l.s4 1966171168
        %v6774 = vunpack.c.0.s8 %v6773
        %v6775 = vlaneseq
        %v6776 = vshrl.u32 %v6775, 7
        %v6777 = vsub.s32 %v6774, %v6776
        %v6778 = vrot.slane %v6762, %v6777
        %v6780 = vunpack.c.l.s4 1966171168
        %v6781 = vunpack.c.0.s8 %v6780
        %v6782 = vlaneseq
        %v6783 = vshrl.u32 %v6782, 7
        %v6784 = vsub.s32 %v6781, %v6783
        %v6785 = vrot.slane %v6763, %v6784
        %v6787 = vunpack.c.l.s4 1966171168
        %v6788 = vunpack.c.0.s8 %v6787
        %v6789 = vlaneseq
        %v6790 = vshrl.u32 %v6789, 7
        %v6791 = vsub.s32 %v6788, %v6790
        %v6792 = vrot.slane %v6764, %v6791
        %v6793 = vcombine.high %v6771, %v6771
        %v6794 = vcombine.high %v6778, %v6778
        %v6795 = vcombine.high %v6785, %v6785
        %v6796 = vcombine.high %v6792, %v6792
        %v6797 = vcombine.high %v6725, %v6725
        %v6799 = vunpack.c.l.s4 1966171168
        %v6800 = vunpack.c.0.s8 %v6799
        %v6801 = vlaneseq
        %v6802 = vshrl.u32 %v6801, 7
        %v6803 = vsub.s32 %v6800, %v6802
        %v6804 = vrot.slane %v6725, %v6803
        %v6806 = vunpack.c.l.s4 1966171168
        %v6807 = vunpack.c.0.s8 %v6806
        %v6808 = vlaneseq
        %v6809 = vshrl.u32 %v6808, 7
        %v6810 = vsub.s32 %v6807, %v6809
        %v6811 = vrot.slane %v6797, %v6810
        %v6812 = vcombine.high %v6804, %v6804
        %v6813 = vcombine.high %v6811, %v6811
        %v6815 = vunpack.c.l.s4 1966171168
        %v6816 = vunpack.c.0.s8 %v6815
        %v6817 = vlaneseq
        %v6818 = vshrl.u32 %v6817, 7
        %v6819 = vsub.s32 %v6816, %v6818
        %v6820 = vrot.slane %v6804, %v6819
        %v6822 = vunpack.c.l.s4 1966171168
        %v6823 = vunpack.c.0.s8 %v6822
        %v6824 = vlaneseq
        %v6825 = vshrl.u32 %v6824, 7
        %v6826 = vsub.s32 %v6823, %v6825
        %v6827 = vrot.slane %v6811, %v6826
        %v6829 = vunpack.c.l.s4 1966171168
        %v6830 = vunpack.c.0.s8 %v6829
        %v6831 = vlaneseq
        %v6832 = vshrl.u32 %v6831, 7
        %v6833 = vsub.s32 %v6830, %v6832
        %v6834 = vrot.slane %v6812, %v6833
        %v6836 = vunpack.c.l.s4 1966171168
        %v6837 = vunpack.c.0.s8 %v6836
        %v6838 = vlaneseq
        %v6839 = vshrl.u32 %v6838, 7
        %v6840 = vsub.s32 %v6837, %v6839
        %v6841 = vrot.slane %v6813, %v6840
        %v6842 = vcombine.high %v6820, %v6820
        %v6843 = vcombine.high %v6827, %v6827
        %v6844 = vcombine.high %v6834, %v6834
        %v6845 = vcombine.high %v6841, %v6841
        %v6846 = vcombine.high %v6730, %v6730
        %v6848 = vunpack.c.l.s4 1966171168
        %v6849 = vunpack.c.0.s8 %v6848
        %v6850 = vlaneseq
        %v6851 = vshrl.u32 %v6850, 7
        %v6852 = vsub.s32 %v6849, %v6851
        %v6853 = vrot.slane %v6730, %v6852
        %v6855 = vunpack.c.l.s4 1966171168
        %v6856 = vunpack.c.0.s8 %v6855
        %v6857 = vlaneseq
        %v6858 = vshrl.u32 %v6857, 7
        %v6859 = vsub.s32 %v6856, %v6858
        %v6860 = vrot.slane %v6846, %v6859
        %v6861 = vcombine.high %v6853, %v6853
        %v6862 = vcombine.high %v6860, %v6860
        %v6864 = vunpack.c.l.s4 1966171168
        %v6865 = vunpack.c.0.s8 %v6864
        %v6866 = vlaneseq
        %v6867 = vshrl.u32 %v6866, 7
        %v6868 = vsub.s32 %v6865, %v6867
        %v6869 = vrot.slane %v6853, %v6868
        %v6871 = vunpack.c.l.s4 1966171168
        %v6872 = vunpack.c.0.s8 %v6871
        %v6873 = vlaneseq
        %v6874 = vshrl.u32 %v6873, 7
        %v6875 = vsub.s32 %v6872, %v6874
        %v6876 = vrot.slane %v6860, %v6875
        %v6878 = vunpack.c.l.s4 1966171168
        %v6879 = vunpack.c.0.s8 %v6878
        %v6880 = vlaneseq
        %v6881 = vshrl.u32 %v6880, 7
        %v6882 = vsub.s32 %v6879, %v6881
        %v6883 = vrot.slane %v6861, %v6882
        %v6885 = vunpack.c.l.s4 1966171168
        %v6886 = vunpack.c.0.s8 %v6885
        %v6887 = vlaneseq
        %v6888 = vshrl.u32 %v6887, 7
        %v6889 = vsub.s32 %v6886, %v6888
        %v6890 = vrot.slane %v6862, %v6889
        %v6891 = vcombine.high %v6869, %v6869
        %v6892 = vcombine.high %v6876, %v6876
        %v6893 = vcombine.high %v6883, %v6883
        %v6894 = vcombine.high %v6890, %v6890
        %v6895 = vcombine.high %v6735, %v6735
        %v6897 = vunpack.c.l.s4 1966171168
        %v6898 = vunpack.c.0.s8 %v6897
        %v6899 = vlaneseq
        %v6900 = vshrl.u32 %v6899, 7
        %v6901 = vsub.s32 %v6898, %v6900
        %v6902 = vrot.slane %v6735, %v6901
        %v6904 = vunpack.c.l.s4 1966171168
        %v6905 = vunpack.c.0.s8 %v6904
        %v6906 = vlaneseq
        %v6907 = vshrl.u32 %v6906, 7
        %v6908 = vsub.s32 %v6905, %v6907
        %v6909 = vrot.slane %v6895, %v6908
        %v6910 = vcombine.high %v6902, %v6902
        %v6911 = vcombine.high %v6909, %v6909
        %v6913 = vunpack.c.l.s4 1966171168
        %v6914 = vunpack.c.0.s8 %v6913
        %v6915 = vlaneseq
        %v6916 = vshrl.u32 %v6915, 7
        %v6917 = vsub.s32 %v6914, %v6916
        %v6918 = vrot.slane %v6902, %v6917
        %v6920 = vunpack.c.l.s4 1966171168
        %v6921 = vunpack.c.0.s8 %v6920
        %v6922 = vlaneseq
        %v6923 = vshrl.u32 %v6922, 7
        %v6924 = vsub.s32 %v6921, %v6923
        %v6925 = vrot.slane %v6909, %v6924
        %v6927 = vunpack.c.l.s4 1966171168
        %v6928 = vunpack.c.0.s8 %v6927
        %v6929 = vlaneseq
        %v6930 = vshrl.u32 %v6929, 7
        %v6931 = vsub.s32 %v6928, %v6930
        %v6932 = vrot.slane %v6910, %v6931
        %v6934 = vunpack.c.l.s4 1966171168
        %v6935 = vunpack.c.0.s8 %v6934
        %v6936 = vlaneseq
        %v6937 = vshrl.u32 %v6936, 7
        %v6938 = vsub.s32 %v6935, %v6937
        %v6939 = vrot.slane %v6911, %v6938
        %v6940 = vcombine.high %v6918, %v6918
        %v6941 = vcombine.high %v6925, %v6925
        %v6942 = vcombine.high %v6932, %v6932
        %v6943 = vcombine.high %v6939, %v6939
        %v6945 = vunpack.c.l.s4 1966171168
        %v6946 = vunpack.c.0.s8 %v6945
        %v6947 = vlaneseq
        %v6948 = vshrl.u32 %v6947, 7
        %v6949 = vsub.s32 %v6946, %v6948
        %v6950 = vrot.slane %v6740, %v6949
        %v6951 = vcombine.high %v6950, %v6950
        %v6953 = vunpack.c.l.s4 1966171168
        %v6954 = vunpack.c.0.s8 %v6953
        %v6955 = vlaneseq
        %v6956 = vshrl.u32 %v6955, 7
        %v6957 = vsub.s32 %v6954, %v6956
        %v6958 = vrot.slane %v6950, %v6957
        %v6960 = vunpack.c.l.s4 1966171168
        %v6961 = vunpack.c.0.s8 %v6960
        %v6962 = vlaneseq
        %v6963 = vshrl.u32 %v6962, 7
        %v6964 = vsub.s32 %v6961, %v6963
        %v6965 = vrot.slane %v6951, %v6964
        %v6966 = vcombine.low %v6771, %v6785
        %v6967 = vcombine.low %v6793, %v6795
        %v6968 = vcombine.low %v6778, %v6792
        %v6969 = vcombine.low %v6794, %v6796
        %v6971 = vunpack.c.l.s4 1966171168
        %v6972 = vunpack.c.0.s8 %v6971
        %v6973 = vlaneseq
        %v6974 = vshrl.u32 %v6973, 7
        %v6975 = vsub.s32 %v6972, %v6974
        %v6976 = vrot.slane %v6966, %v6975
        %v6978 = vunpack.c.l.s4 1966171168
        %v6979 = vunpack.c.0.s8 %v6978
        %v6980 = vlaneseq
        %v6981 = vshrl.u32 %v6980, 7
        %v6982 = vsub.s32 %v6979, %v6981
        %v6983 = vrot.slane %v6967, %v6982
        %v6985 = vunpack.c.l.s4 1966171168
        %v6986 = vunpack.c.0.s8 %v6985
        %v6987 = vlaneseq
        %v6988 = vshrl.u32 %v6987, 7
        %v6989 = vsub.s32 %v6986, %v6988
        %v6990 = vrot.slane %v6968, %v6989
        %v6992 = vunpack.c.l.s4 1966171168
        %v6993 = vunpack.c.0.s8 %v6992
        %v6994 = vlaneseq
        %v6995 = vshrl.u32 %v6994, 7
        %v6996 = vsub.s32 %v6993, %v6995
        %v6997 = vrot.slane %v6969, %v6996
        %v6998 = vcombine.low %v6976, %v6983
        %v6999 = vcombine.low %v6990, %v6997
        %v7001 = vunpack.c.l.s4 1966171168
        %v7002 = vunpack.c.0.s8 %v7001
        %v7003 = vlaneseq
        %v7004 = vshrl.u32 %v7003, 7
        %v7005 = vsub.s32 %v7002, %v7004
        %v7006 = vrot.slane %v6998, %v7005
        %v7008 = vunpack.c.l.s4 1966171168
        %v7009 = vunpack.c.0.s8 %v7008
        %v7010 = vlaneseq
        %v7011 = vshrl.u32 %v7010, 7
        %v7012 = vsub.s32 %v7009, %v7011
        %v7013 = vrot.slane %v6999, %v7012
        %v7014 = vcombine.low %v7006, %v7013
        %v7015 = vcombine.low %v6820, %v6834
        %v7016 = vcombine.low %v6842, %v6844
        %v7017 = vcombine.low %v6827, %v6841
        %v7018 = vcombine.low %v6843, %v6845
        %v7020 = vunpack.c.l.s4 1966171168
        %v7021 = vunpack.c.0.s8 %v7020
        %v7022 = vlaneseq
        %v7023 = vshrl.u32 %v7022, 7
        %v7024 = vsub.s32 %v7021, %v7023
        %v7025 = vrot.slane %v7015, %v7024
        %v7027 = vunpack.c.l.s4 1966171168
        %v7028 = vunpack.c.0.s8 %v7027
        %v7029 = vlaneseq
        %v7030 = vshrl.u32 %v7029, 7
        %v7031 = vsub.s32 %v7028, %v7030
        %v7032 = vrot.slane %v7016, %v7031
        %v7034 = vunpack.c.l.s4 1966171168
        %v7035 = vunpack.c.0.s8 %v7034
        %v7036 = vlaneseq
        %v7037 = vshrl.u32 %v7036, 7
        %v7038 = vsub.s32 %v7035, %v7037
        %v7039 = vrot.slane %v7017, %v7038
        %v7041 = vunpack.c.l.s4 1966171168
        %v7042 = vunpack.c.0.s8 %v7041
        %v7043 = vlaneseq
        %v7044 = vshrl.u32 %v7043, 7
        %v7045 = vsub.s32 %v7042, %v7044
        %v7046 = vrot.slane %v7018, %v7045
        %v7047 = vcombine.low %v7025, %v7032
        %v7048 = vcombine.low %v7039, %v7046
        %v7050 = vunpack.c.l.s4 1966171168
        %v7051 = vunpack.c.0.s8 %v7050
        %v7052 = vlaneseq
        %v7053 = vshrl.u32 %v7052, 7
        %v7054 = vsub.s32 %v7051, %v7053
        %v7055 = vrot.slane %v7047, %v7054
        %v7057 = vunpack.c.l.s4 1966171168
        %v7058 = vunpack.c.0.s8 %v7057
        %v7059 = vlaneseq
        %v7060 = vshrl.u32 %v7059, 7
        %v7061 = vsub.s32 %v7058, %v7060
        %v7062 = vrot.slane %v7048, %v7061
        %v7063 = vcombine.low %v7055, %v7062
        %v7065 = vunpack.c.l.s4 1966171168
        %v7066 = vunpack.c.0.s8 %v7065
        %v7067 = vlaneseq
        %v7068 = vshrl.u32 %v7067, 7
        %v7069 = vsub.s32 %v7066, %v7068
        %v7070 = vrot.slane %v6869, %v7069
        %v7072 = vunpack.c.l.s4 1966171168
        %v7073 = vunpack.c.0.s8 %v7072
        %v7074 = vlaneseq
        %v7075 = vshrl.u32 %v7074, 7
        %v7076 = vsub.s32 %v7073, %v7075
        %v7077 = vrot.slane %v7070, %v7076
        %v7078 = vcombine.low %v6883, %v6891
        %v7079 = vcombine.low %v6893, %v6876
        %v7080 = vcombine.low %v6890, %v6892
        %v7081 = vcombine.low %v6894, %v6918
        %v7083 = vunpack.c.l.s4 1966171168
        %v7084 = vunpack.c.0.s8 %v7083
        %v7085 = vlaneseq
        %v7086 = vshrl.u32 %v7085, 7
        %v7087 = vsub.s32 %v7084, %v7086
        %v7088 = vrot.slane %v7078, %v7087
        %v7090 = vunpack.c.l.s4 1966171168
        %v7091 = vunpack.c.0.s8 %v7090
        %v7092 = vlaneseq
        %v7093 = vshrl.u32 %v7092, 7
        %v7094 = vsub.s32 %v7091, %v7093
        %v7095 = vrot.slane %v7079, %v7094
        %v7097 = vunpack.c.l.s4 1966171168
        %v7098 = vunpack.c.0.s8 %v7097
        %v7099 = vlaneseq
        %v7100 = vshrl.u32 %v7099, 7
        %v7101 = vsub.s32 %v7098, %v7100
        %v7102 = vrot.slane %v7080, %v7101
        %v7104 = vunpack.c.l.s4 1966171168
        %v7105 = vunpack.c.0.s8 %v7104
        %v7106 = vlaneseq
        %v7107 = vshrl.u32 %v7106, 7
        %v7108 = vsub.s32 %v7105, %v7107
        %v7109 = vrot.slane %v7081, %v7108
        %v7110 = vcombine.low %v7088, %v7095
        %v7111 = vcombine.low %v7102, %v7109
        %v7113 = vunpack.c.l.s4 1966171168
        %v7114 = vunpack.c.0.s8 %v7113
        %v7115 = vlaneseq
        %v7116 = vshrl.u32 %v7115, 7
        %v7117 = vsub.s32 %v7114, %v7116
        %v7118 = vrot.slane %v7110, %v7117
        %v7120 = vunpack.c.l.s4 1966171168
        %v7121 = vunpack.c.0.s8 %v7120
        %v7122 = vlaneseq
        %v7123 = vshrl.u32 %v7122, 7
        %v7124 = vsub.s32 %v7121, %v7123
        %v7125 = vrot.slane %v7111, %v7124
        %v7126 = vcombine.low %v7118, %v7125
        %v7127 = vcombine.low %v6932, %v6940
        %v7128 = vcombine.low %v6942, %v6925
        %v7129 = vcombine.low %v6939, %v6941
        %v7130 = vcombine.low %v6943, %v6958
        %v7132 = vunpack.c.l.s4 1966171168
        %v7133 = vunpack.c.0.s8 %v7132
        %v7134 = vlaneseq
        %v7135 = vshrl.u32 %v7134, 7
        %v7136 = vsub.s32 %v7133, %v7135
        %v7137 = vrot.slane %v7127, %v7136
        %v7139 = vunpack.c.l.s4 1966171168
        %v7140 = vunpack.c.0.s8 %v7139
        %v7141 = vlaneseq
        %v7142 = vshrl.u32 %v7141, 7
        %v7143 = vsub.s32 %v7140, %v7142
        %v7144 = vrot.slane %v7128, %v7143
        %v7146 = vunpack.c.l.s4 1966171168
        %v7147 = vunpack.c.0.s8 %v7146
        %v7148 = vlaneseq
        %v7149 = vshrl.u32 %v7148, 7
        %v7150 = vsub.s32 %v7147, %v7149
        %v7151 = vrot.slane %v7129, %v7150
        %v7153 = vunpack.c.l.s4 1966171168
        %v7154 = vunpack.c.0.s8 %v7153
        %v7155 = vlaneseq
        %v7156 = vshrl.u32 %v7155, 7
        %v7157 = vsub.s32 %v7154, %v7156
        %v7158 = vrot.slane %v7130, %v7157
        %v7159 = vcombine.low %v7137, %v7144
        %v7160 = vcombine.low %v7151, %v7158
        %v7162 = vunpack.c.l.s4 1966171168
        %v7163 = vunpack.c.0.s8 %v7162
        %v7164 = vlaneseq
        %v7165 = vshrl.u32 %v7164, 7
        %v7166 = vsub.s32 %v7163, %v7165
        %v7167 = vrot.slane %v7159, %v7166
        %v7169 = vunpack.c.l.s4 1966171168
        %v7170 = vunpack.c.0.s8 %v7169
        %v7171 = vlaneseq
        %v7172 = vshrl.u32 %v7171, 7
        %v7173 = vsub.s32 %v7170, %v7172
        %v7174 = vrot.slane %v7160, %v7173
        %v7175 = vcombine.low %v7167, %v7174
        %v7177 = vunpack.c.l.s4 1966171168
        %v7178 = vunpack.c.0.s8 %v7177
        %v7179 = vlaneseq
        %v7180 = vshrl.u32 %v7179, 7
        %v7181 = vsub.s32 %v7178, %v7180
        %v7182 = vrot.slane %v6965, %v7181
        %v7184 = vunpack.c.l.s4 1966171168
        %v7185 = vunpack.c.0.s8 %v7184
        %v7186 = vlaneseq
        %v7187 = vshrl.u32 %v7186, 7
        %v7188 = vsub.s32 %v7185, %v7187
        %v7189 = vrot.slane %v7182, %v7188
        %v7196 = vadd.f32 %v5230, %v7014
        %v7197 = vadd.f32 %v5231, %v7063
        %v7198 = vadd.f32 %v5232, %v7077
        %v7199 = vadd.f32 %v5233, %v7126
        %v7200 = vadd.f32 %v5234, %v7175
        %v7201 = vadd.f32 %v5235, %v7189
        %v7202 = vld [vmem:[%s732] sm:$0x1]
        %v7204 = vlaneseq
        %v7205 = vshrl.u32 %v7204, 7
        %v7206 = vsub.s32 0, %v7205
        %v7207 = vrot.slane %v7202, %v7206
        %v7209 = vadd.f32 %v7196, %v7207
        %v7210 = vadd.f32 %v7197, %v7207
        %v7211 = vadd.f32 %v7198, %v7207
        %v7212 = vadd.f32 %v7199, %v7207
        %v7213 = vadd.f32 %v7200, %v7207
        %v7214 = vadd.f32 %v7201, %v7207
        %7215 = vst.msk [vmem:[#allocation2] sm:$0xff] %vm891, %v7209
        %7216 = vst.msk [vmem:[#allocation2 + $0x8] sm:$0xff] %vm891, %v7210
        %7217 = vst.msk [vmem:[#allocation2 + $0x10] sm:$0x1] %vm898, %v7211
        %7218 = vst.msk [vmem:[#allocation2 + $0x18] sm:$0xff] %vm891, %v7212
        %7219 = vst.msk [vmem:[#allocation2 + $0x20] sm:$0xff] %vm891, %v7213
        %7220 = vst.msk [vmem:[#allocation2 + $0x28] sm:$0x1] %vm898, %v7214
        %p7221 = scmp.eq.s32.totalorder %s31, 1
        // Predicated region
        $region101: #{vision_transformer_forward.1} parent=95 // pred_check
          %p7222 = pneg %p7221
        $region102: #{vision_transformer_forward.1} parent=95 // pred_check_branch
          %7224 = sbr.rel (%p7222) target = $region104
        $region103: #{vision_transformer_forward.1} parent=95 // pred_region
          %v7225 = vsel %vm898, %v7209, 0.0
          %7226 = vadd.xlane.f32.xlu0 %v7225
          %v7227 = vpop.xlane.xlu0 %7226
          %v7228 = vsel %vm898, %v7212, 0.0
          %7229 = vadd.xlane.f32.xlu0 %v7228
          %v7230 = vpop.xlane.xlu0 %7229
          %v7231 = vmul.f32 %v7227, %v911
          %v7232 = vmul.f32 %v7230, %v911
          %v7233 = vsub.f32 %v7209, %v7231
          %v7234 = vsub.f32 %v7212, %v7232
          %v7235 = vmul.f32 %v7233, %v7233
          %v7236 = vmul.f32 %v7234, %v7234
          %v7237 = vsel %vm898, %v7235, 0.0
          %7238 = vadd.xlane.f32.xlu0 %v7237
          %v7239 = vpop.xlane.xlu0 %7238
          %v7240 = vsel %vm898, %v7236, 0.0
          %7241 = vadd.xlane.f32.xlu0 %v7240
          %v7242 = vpop.xlane.xlu0 %7241
          %v7243 = vmul.f32 %v7239, %v911
          %v7244 = vmul.f32 %v7242, %v911
          %v7245 = vadd.f32 %v7243, 1e-05
          %v7246 = vadd.f32 %v7244, 1e-05
          %v7247 = vrsqrt.pop %v7245
          %v7248 = vrsqrt.pop %v7246
          %v7249 = vmul.f32 %v7233, %v7247
          %v7250 = vmul.f32 %v7234, %v7248
          %v7251 = vld [vmem:[%s5] sm:$0x1]
          %v7252 = vmul.f32 %v7249, %v7251
          %v7253 = vmul.f32 %v7250, %v7251
          %v7254 = vld [vmem:[%s6] sm:$0x1]
          %v7255 = vadd.f32 %v7252, %v7254
          %v7256 = vadd.f32 %v7253, %v7254
          %v7257 = vld [vmem:[%s7] sm:$0xff]
          %v7258 = vld [vmem:[%s7 + $0x8] sm:$0xff]
          %v7259 = vld [vmem:[%s7 + $0x10] sm:$0xff]
          %v7260 = vld [vmem:[%s7 + $0x18] sm:$0xff]
          %v7261 = vld [vmem:[%s8] sm:$0x1]
          %v7264 = vrot.slane %v7256, 7
          %vm7265 = vcmask 1041409
          %v7266 = vsel %vm7265, %v7264, %v7255
          %v7268 = vcombine.low %v7261, %v7261
          %v7270 = vunpack.c.l.s4 1966171168
          %v7271 = vunpack.c.0.s8 %v7270
          %v7272 = vlaneseq
          %v7273 = vshrl.u32 %v7272, 7
          %v7274 = vsub.s32 %v7271, %v7273
          %v7275 = vrot.slane %v7268, %v7274
          %v7277 = vunpack.c.l.s4 1966171168
          %v7278 = vunpack.c.0.s8 %v7277
          %v7279 = vlaneseq
          %v7280 = vshrl.u32 %v7279, 7
          %v7281 = vsub.s32 %v7278, %v7280
          %v7282 = vrot.slane %v7275, %v7281
          %v7284 = vsel %vm891, %v7266, 0
          %7286 = vmatprep.subr.mxu0 0.0
          %7287 = vmatpush1.msra.mxu0 %v7257
          %7288 = vmatprep.subr.mxu0 0.0
          %7289 = vmatpush1.msra.mxu0 %v7258
          %7290 = vmatprep.subr.mxu0 0.0
          %7291 = vmatpush1.msra.mxu0 %v7259
          %7292 = vmatprep.subr.mxu0 0.0
          %7293 = vmatpush1.msra.mxu0 %v7260
          %7294 = vmatprep.subr.mxu0 0.0
          %7295 = vmatpush1.msra.mxu0 0.0
          %7296 = vmatprep.subr.mxu0 0.0
          %7297 = vmatpush1.msra.mxu0 0.0
          %7298 = vmatprep.subr.mxu0 0.0
          %7299 = vmatpush1.msra.mxu0 0.0
          %7300 = vmatprep.subr.mxu0 0.0
          %7301 = vmatpush1.msra.mxu0 0.0
          %7302 = vmatprep.subr.mxu0 0.0
          %7303 = vmatpush1.msra.mxu0 0.0
          %7304 = vmatprep.subr.mxu0 0.0
          %7305 = vmatpush1.msra.mxu0 0.0
          %7306 = vmatprep.subr.mxu0 0.0
          %7307 = vmatpush1.msra.mxu0 0.0
          %7308 = vmatprep.subr.mxu0 0.0
          %7309 = vmatpush1.msra.mxu0 0.0
          %7310 = vmatprep.subr.mxu0 0.0
          %7311 = vmatpush1.msra.mxu0 0.0
          %7312 = vmatprep.subr.mxu0 0.0
          %7313 = vmatpush1.msra.mxu0 0.0
          %7314 = vmatprep.subr.mxu0 0.0
          %7315 = vmatpush1.msra.mxu0 0.0
          %7316 = vmatprep.subr.mxu0 0.0
          %7317 = vmatpush1.msra.mxu0 0.0
          %7318 = vmatprep.subr.mxu0 0.0
          %7319 = vmatpush1.msra.mxu0 0.0
          %7320 = vmatprep.subr.mxu0 0.0
          %7321 = vmatpush1.msra.mxu0 0.0
          %7322 = vmatprep.subr.mxu0 0.0
          %7323 = vmatpush1.msra.mxu0 0.0
          %7324 = vmatprep.subr.mxu0 0.0
          %7325 = vmatpush1.msra.mxu0 0.0
          %7326 = vmatprep.subr.mxu0 0.0
          %7327 = vmatpush1.msra.mxu0 0.0
          %7328 = vmatprep.subr.mxu0 0.0
          %7329 = vmatpush1.msra.mxu0 0.0
          %7330 = vmatprep.subr.mxu0 0.0
          %7331 = vmatpush1.msra.mxu0 0.0
          %7332 = vmatprep.subr.mxu0 0.0
          %7333 = vmatpush1.msra.mxu0 0.0
          %7334 = vmatprep.subr.mxu0 0.0
          %7335 = vmatpush1.msra.mxu0 0.0
          %7336 = vmatprep.subr.mxu0 0.0
          %7337 = vmatpush1.msra.mxu0 0.0
          %7338 = vmatprep.subr.mxu0 0.0
          %7339 = vmatpush1.msra.mxu0 0.0
          %7340 = vmatprep.subr.mxu0 0.0
          %7341 = vmatpush1.msra.mxu0 0.0
          %7342 = vmatprep.subr.mxu0 0.0
          %7343 = vmatpush1.msra.mxu0 0.0
          %7344 = vmatprep.subr.mxu0 0.0
          %7345 = vmatpush1.msra.mxu0 0.0
          %7346 = vmatprep.subr.mxu0 0.0
          %7347 = vmatpush1.msra.mxu0 0.0
          %7348 = vmatprep.subr.mxu0 0.0
          %7349 = vmatpush1.msra.mxu0 0.0
          %7350 = vmatprep.mubr.f32.mxu0 0.0
          %7351 = vmatmul.mubr.f32.gmra.mrb[0].mxu0 %v7284
          %v7352 = vpop.f32.mrb[0].mxu0
          %v7353 = vadd.f32 %v7282, %v7352
          %v7354 = vpop.f32.mrb[0].mxu0
          %7355 = vdwg.mxu0
          %v7358 = vunpack.c.l.s4 1966171168
          %v7359 = vunpack.c.0.s8 %v7358
          %v7360 = vlaneseq
          %v7361 = vshrl.u32 %v7360, 7
          %v7362 = vsub.s32 %v7359, %v7361
          %v7363 = vrot.slane %v7353, %v7362
          %v7364 = vcombine.high %v7363, %v7363
          %v7366 = vunpack.c.l.s4 1966171168
          %v7367 = vunpack.c.0.s8 %v7366
          %v7368 = vlaneseq
          %v7369 = vshrl.u32 %v7368, 7
          %v7370 = vsub.s32 %v7367, %v7369
          %v7371 = vrot.slane %v7363, %v7370
          %v7373 = vunpack.c.l.s4 1966171168
          %v7374 = vunpack.c.0.s8 %v7373
          %v7375 = vlaneseq
          %v7376 = vshrl.u32 %v7375, 7
          %v7377 = vsub.s32 %v7374, %v7376
          %v7378 = vrot.slane %v7364, %v7377
          %vm7381 = vcmask 73728
          %7382 = vst.msk [vmem:[#allocation3] sm:$0x1] %vm7381, %v7371
          %7383 = vst.msk [vmem:[#allocation3 + $0x1] sm:$0x1] %vm7381, %v7378
        $region104: #{vision_transformer_forward.1} parent=95 // pred_fallthru
          _
        // Predicated region
        $region105: #{vision_transformer_forward.1} parent=95 // pred_check
          %p7384 = pneg %p493
        $region106: #{vision_transformer_forward.1} parent=95 // pred_check_branch
          %7386 = sbr.rel (%p7384) target = $region108
        $region107: #{vision_transformer_forward.1} parent=95 // pred_region
          %s7388 = ssub.s32 32, 32
          %7389 = vsyncadd [#allocation4], %s7388
          %s7390 = sshll.u32 [#allocation3], 4
          %s7391 = int_to_ptr.vmem [resolvable:$true] %s7390
          %7396 = dma.vmem_to_hbm [thread:$0]  %s7391, 32, %s19, [#allocation4], 16, 16, 1
        $region108: #{vision_transformer_forward.1} parent=95 // pred_fallthru
          _
        // Predicated region
        $region109: #{vision_transformer_forward.1} parent=95 // pred_check
          %p7397 = pneg %p493
        $region110: #{vision_transformer_forward.1} parent=95 // pred_check_branch
          %7399 = sbr.rel (%p7397) target = $region112
        $region111: #{vision_transformer_forward.1} parent=95 // pred_region
          %7400 = dma.done [#allocation4], 32
        $region112: #{vision_transformer_forward.1} parent=95 // pred_fallthru
          _
      $region96: #{vision_transformer_forward.1} parent=5 // pred_fallthru
        _
      %p7401 = scmp.le.s32.totalorder 2, %s26
      // Predicated region
      $region113: #{vision_transformer_forward.1} parent=5 // pred_check
        %p7402 = pneg %p7401
      $region114: #{vision_transformer_forward.1} parent=5 // pred_check_branch
        %7404 = sbr.rel (%p7402) target = $region116
      $region115: #{vision_transformer_forward.1} parent=5 // pred_region
        %s7405 = ssub.s32 %s26, 2
      $region116: #{vision_transformer_forward.1} parent=5 // pred_fallthru
        _
    $region6: #{vision_transformer_forward.1} parent=1 // loop_footer
      %s30 = sadd.s32 1, %s26
    $region7: #{vision_transformer_forward.1} parent=1 // loop_footer_branch
      %25 = sbr.rel target = $region3
    $region8: #{vision_transformer_forward.1} parent=1 // loop_exit
      _
    %7406 = vsyncpa [#allocation4], 1
    %s7407 = scalar_lea.sflag [#allocation4], 1
    %7408 = vsyncpa %s7407, 1

</llo_original>
